<compile_context>
chip_gen: v7x
topology: tpu7x:2x2x1
jax: 0.10.0
libtpu: 0.0.40
codegen_flags: <defaults>
</compile_context>

<pallas_src>
import functools

import jax
import jax.numpy as jnp
import numpy as np
from jax.experimental import pallas as pl
from jax.experimental.pallas import tpu as pltpu


# ----------------------------- Pallas kernels --------------------------------
def _upconv_kernel(x_ref, w_ref, b_ref, o_ref):
    """First ConvTranspose2d(2,2) as a channels-first GEMM.

    x: (1, Cin, S)   w: (4*Cout, Cin) rows ordered (kh*2+kw)*Cout+oc
    b: (4*Cout, 1)   o: (1, 4*Cout, S)
    """
    y = jnp.dot(w_ref[...], x_ref[0], preferred_element_type=jnp.float32)
    o_ref[0] = (y + b_ref[...]).astype(o_ref.dtype)


def _stage_kernel(z_ref, w1_ref, b1_ref, w2_ref, b2_ref, *rest, Wz, S, fuse_up):
    """Fused decoder stage: conv1(3x3,valid)+ReLU -> conv2(3x3,valid)
    [-> next stage's ConvTranspose2d GEMM], all in VMEM, channels-first.

    z:  (1, Ccat, S + 4*Wz + 4)   flattened (Hz*Wz) spatial on lanes + zero tail pad
    w1: (9, C1, Ccat)  w2: (9, C2, C1)   (index k = dh*3+dw)
    b1: (C1, 1)        b2: (C2, 1)
    if fuse_up: wu (4*Cn, C2), bu (4*Cn, 1), out (1, 4*Cn, S)
    else:       out (1, C2, S)

    Valid outputs live at flattened positions r = i*Wz + j with i<=Hz-5, j<=Wz-5;
    all other positions hold finite garbage (row-wrap / tail-pad) that the wrapper
    discards.  Garbage never contaminates valid positions because a valid conv2
    output only reads valid conv1 positions, which only read real z pixels.
    """
    if fuse_up:
        wu_ref, bu_ref, o_ref = rest
    else:
        (o_ref,) = rest

    z = z_ref[0]                      # (Ccat, S + 4*Wz + 4)
    S1 = S + 2 * Wz + 2               # conv1 computed a bit past S so conv2 can shift

    # conv1: 9 shifted-row MXU dots (in-kernel im2col), f32 accumulate, then bias+ReLU.
    acc1 = None
    for dh in range(3):
        for dw in range(3):
            off = dh * Wz + dw
            p = jnp.dot(w1_ref[dh * 3 + dw], z[:, off:off + S1],
                        preferred_element_type=jnp.float32)
            acc1 = p if acc1 is None else acc1 + p
    h1 = jnp.maximum(acc1 + b1_ref[...], 0.0)        # (C1, S1)

    # conv2: same trick on the VMEM-resident conv1 output.
    acc2 = None
    for dh in range(3):
        for dw in range(3):
            off = dh * Wz + dw
            p = jnp.dot(w2_ref[dh * 3 + dw], h1[:, off:off + S],
                        preferred_element_type=jnp.float32)
            acc2 = p if acc2 is None else acc2 + p
    y2 = acc2 + b2_ref[...]                          # (C2, S)

    if fuse_up:
        # Next stage's ConvTranspose2d(2,2) is a per-pixel GEMM -> fuse it here so the
        # conv2 activation never leaves VMEM.
        up = jnp.dot(wu_ref[...], y2, preferred_element_type=jnp.float32) + bu_ref[...]
        o_ref[0] = up.astype(o_ref.dtype)
    else:
        o_ref[0] = y2.astype(o_ref.dtype)


# ------------------------------- wrappers -------------------------------------
def upconv_first(x_nchw, w_iohw, b):
    """ConvTranspose2d(2,2) on the decoder input; returns pre-interleave (N,4*Cout,H,W)."""
    N, Cin, H, W = x_nchw.shape
    Cout = w_iohw.shape[1]
    S = H * W
    x2 = x_nchw.reshape(N, Cin, S)
    wt = jnp.transpose(w_iohw, (2, 3, 1, 0)).reshape(4 * Cout, Cin)   # rows (kh,kw,oc)
    bt = jnp.tile(b, 4).reshape(4 * Cout, 1)
    out = pl.pallas_call(
        _upconv_kernel,
        out_shape=jax.ShapeDtypeStruct((N, 4 * Cout, S), jnp.float32),
        grid=(N,),
        in_specs=[
            pl.BlockSpec((1, Cin, S), lambda n: (n, 0, 0)),
            pl.BlockSpec((4 * Cout, Cin), lambda n: (0, 0)),
            pl.BlockSpec((4 * Cout, 1), lambda n: (0, 0)),
        ],
        out_specs=pl.BlockSpec((1, 4 * Cout, S), lambda n: (n, 0, 0)),
        compiler_params=pltpu.CompilerParams(dimension_semantics=("parallel",)),
    )(x2, wt, bt)
    return out.reshape(N, 4 * Cout, H, W)


def decoder_stage(z_nchw, c1_w, c1_b, c2_w, c2_b, up_next=None):
    """One fused decoder stage on the concatenated NCHW input z.

    Returns:
      final stage (up_next is None): (N, C2, Hz-4, Wz-4)  -- the UnetBlock output.
      otherwise: (N, 4*Cn, Hz-4, Wz-4) -- the NEXT stage's pre-interleave upconv output.
    """
    N, Ccat, Hz, Wz = z_nchw.shape
    C1 = c1_w.shape[0]
    C2 = c2_w.shape[0]
    S = Hz * Wz
    pad = 4 * Wz + 4                                   # tail pad so shifted reads stay in-bounds

    z = z_nchw.reshape(N, Ccat, S)
    z = jnp.pad(z, ((0, 0), (0, 0), (0, pad)))

    w1t = jnp.transpose(c1_w, (2, 3, 0, 1)).reshape(9, C1, Ccat)
    w2t = jnp.transpose(c2_w, (2, 3, 0, 1)).reshape(9, C2, C1)
    b1t = c1_b.reshape(C1, 1)
    b2t = c2_b.reshape(C2, 1)

    fuse_up = up_next is not None
    inputs = [z, w1t, b1t, w2t, b2t]
    in_specs = [
        pl.BlockSpec((1, Ccat, S + pad), lambda n: (n, 0, 0)),
        pl.BlockSpec((9, C1, Ccat), lambda n: (0, 0, 0)),
        pl.BlockSpec((C1, 1), lambda n: (0, 0)),
        pl.BlockSpec((9, C2, C1), lambda n: (0, 0, 0)),
        pl.BlockSpec((C2, 1), lambda n: (0, 0)),
    ]
    if fuse_up:
        upw, upb = up_next                              # (C2, Cn, 2, 2), (Cn,)
        Cn = upw.shape[1]
        wut = jnp.transpose(upw, (2, 3, 1, 0)).reshape(4 * Cn, C2)
        but = jnp.tile(upb, 4).reshape(4 * Cn, 1)
        inputs += [wut, but]
        in_specs += [
            pl.BlockSpec((4 * Cn, C2), lambda n: (0, 0)),
            pl.BlockSpec((4 * Cn, 1), lambda n: (0, 0)),
        ]
        Co = 4 * Cn
    else:
        Co = C2

    out = pl.pallas_call(
        functools.partial(_stage_kernel, Wz=Wz, S=S, fuse_up=fuse_up),
        out_shape=jax.ShapeDtypeStruct((N, Co, S), jnp.float32),
        grid=(N,),
        in_specs=in_specs,
        out_specs=pl.BlockSpec((1, Co, S), lambda n: (n, 0, 0)),
        compiler_params=pltpu.CompilerParams(dimension_semantics=("parallel",)),
    )(*inputs)

    # keep only the valid (Hz-4, Wz-4) block of the flattened-width conv outputs
    return out.reshape(N, Co, Hz, Wz)[:, :, :Hz - 4, :Wz - 4]


def _interleave_2x2(up4, cout):
    """(N, 4*cout, Hv, Wv) with rows ordered (kh,kw,oc) -> interleaved (N, cout, 2Hv, 2Wv)."""
    N, _, Hv, Wv = up4.shape
    y = up4.reshape(N, 2, 2, cout, Hv, Wv)
    y = jnp.transpose(y, (0, 3, 4, 1, 5, 2))            # (n, c, i, kh, j, kw)
    return y.reshape(N, cout, 2 * Hv, 2 * Wv)


def _center_crop_nchw(e, H, W):
    """torchvision CenterCrop (crop only; inputs assumed >= target)."""
    He, We = e.shape[2], e.shape[3]
    top = int(round((He - H) / 2.0))
    left = int(round((We - W) / 2.0))
    return e[:, :, top:top + H, left:left + W]


# ------------------------------ UnetDecoder ----------------------------------
def init_params(key, channels):
    params = {"up": [], "dec": []}
    for i in range(len(channels) - 1):
        cin, cout = channels[i], channels[i + 1]
        key, k0, k1, k2, k3, k4, k5 = jax.random.split(key, 7)
        # ConvTranspose2d weight: (in, out, 2, 2);  Conv2d weight: (out, in, 3, 3)
        params["up"].append((
            jax.random.normal(k0, (cin, cout, 2, 2), jnp.float32) * 0.1,
            jax.random.normal(k1, (cout,), jnp.float32) * 0.1,
        ))
        params["dec"].append((
            jax.random.normal(k2, (cout, cin, 3, 3), jnp.float32) * 0.1,
            jax.random.normal(k3, (cout,), jnp.float32) * 0.1,
            jax.random.normal(k4, (cout, cout, 3, 3), jnp.float32) * 0.1,
            jax.random.normal(k5, (cout,), jnp.float32) * 0.1,
        ))
    return params


def unet_decoder_forward(params, x_nchw, enc_feats_nchw, channels):
    nstage = len(channels) - 1
    up_w0, up_b0 = params["up"][0]
    up4 = upconv_first(x_nchw, up_w0, up_b0)             # (N, 4*C1, H, W), all valid
    out = None
    for i in range(nstage):
        cout = channels[i + 1]
        up = _interleave_2x2(up4, cout)                   # upconv output, NCHW
        enc = _center_crop_nchw(enc_feats_nchw[i], up.shape[2], up.shape[3])
        z = jnp.concatenate([up, enc], axis=1)            # cat([x, enc], dim=1)
        c1_w, c1_b, c2_w, c2_b = params["dec"][i]
        if i + 1 < nstage:
            up4 = decoder_stage(z, c1_w, c1_b, c2_w, c2_b, up_next=params["up"][i + 1])
        else:
            out = decoder_stage(z, c1_w, c1_b, c2_w, c2_b, up_next=None)
    return out                                            # NCHW


# ---------------------------- pure-JAX reference ------------------------------
def _ref_conv2d(x, w, b):          # NCHW, w: OIHW
    y = jax.lax.conv_general_dilated(
        x, w, window_strides=(1, 1), padding="VALID",
        dimension_numbers=("NCHW", "OIHW", "NCHW"),
        precision=jax.lax.Precision.HIGHEST)
    return y + b.reshape(1, -1, 1, 1)


def _ref_conv_transpose(x, w, b):  # NCHW, w: (in, out, 2, 2)
    w_flip = w[:, :, ::-1, ::-1]
    y = jax.lax.conv_general_dilated(
        x, w_flip, window_strides=(1, 1), padding=((1, 1), (1, 1)),
        lhs_dilation=(2, 2), dimension_numbers=("NCHW", "IOHW", "NCHW"),
        precision=jax.lax.Precision.HIGHEST)
    return y + b.reshape(1, -1, 1, 1)


def ref_forward(params, x, enc_feats, channels):
    for i in range(len(channels) - 1):
        up_w, up_b = params["up"][i]
        c1_w, c1_b, c2_w, c2_b = params["dec"][i]
        x = _ref_conv_transpose(x, up_w, up_b)
        enc = _center_crop_nchw(enc_feats[i], x.shape[2], x.shape[3])
        x = jnp.concatenate([x, enc], axis=1)
        x = jax.nn.relu(_ref_conv2d(x, c1_w, c1_b))
        x = _ref_conv2d(x, c2_w, c2_b)
    return x


# ----------------------------------- main -------------------------------------
if __name__ == "__main__":
    channels = (16, 8, 4)
    key = jax.random.PRNGKey(0)
    kp, kx, ke0, ke1 = jax.random.split(key, 4)
    params = init_params(kp, channels)

    # PyTorch-style NCHW inputs
    x = jax.random.normal(kx, (2, 16, 8, 8), jnp.float32)
    enc_feats = [
        jax.random.normal(ke0, (2, 8, 20, 20), jnp.float32),  # skip for stage 0
        jax.random.normal(ke1, (2, 4, 26, 26), jnp.float32),  # skip for stage 1
    ]

    fwd = jax.jit(functools.partial(unet_decoder_forward, channels=channels))
    out = jax.block_until_ready(fwd(params, x, enc_feats))
    assert out.shape == (2, 4, 20, 20), out.shape

    ref = ref_forward(params, x, enc_feats, channels)
    np.testing.assert_allclose(np.asarray(out), np.asarray(ref), rtol=1e-4, atol=1e-4)

    print("KERNEL_OK")
</pallas_src>

<mosaic_0001>
module attributes {stable_mosaic.version = 11 : i64} {
  func.func @_upconv_kernel(%arg0: i32, %arg1: memref<1x16x64xf32, #tpu.memory_space<vmem>>, %arg2: memref<32x16xf32, #tpu.memory_space<vmem>>, %arg3: memref<32x1xf32, #tpu.memory_space<vmem>>, %arg4: memref<1x32x64xf32, #tpu.memory_space<vmem>>) attributes {dimension_semantics = [#tpu.dimension_semantics<parallel>], iteration_bounds = array<i64: 2>, scalar_prefetch = 0 : i64, scratch_operands = 0 : i64, tpu.core_type = #tpu.core_type<tc>, window_params = [{transform_indices = @transform_0, window_bounds = array<i64: 1, 16, 64>}, {pipeline_mode = #tpu.pipeline_mode<synchronous>, transform_indices = @transform_1, window_bounds = array<i64: 32, 16>}, {pipeline_mode = #tpu.pipeline_mode<synchronous>, transform_indices = @transform_2, window_bounds = array<i64: 32, 1>}, {transform_indices = @transform_3, window_bounds = array<i64: 1, 32, 64>}]} {
    %c0 = arith.constant 0 : index
    %c0_0 = arith.constant 0 : index
    %0 = vector.load %arg2[%c0, %c0_0] : memref<32x16xf32, #tpu.memory_space<vmem>>, vector<32x16xf32>
    %c0_1 = arith.constant 0 : index
    %c0_2 = arith.constant 0 : index
    %c0_3 = arith.constant 0 : index
    %1 = vector.load %arg1[%c0_1, %c0_2, %c0_3] : memref<1x16x64xf32, #tpu.memory_space<vmem>>, vector<1x16x64xf32>
    %2 = vector.shape_cast %1 : vector<1x16x64xf32> to vector<16x64xf32>
    %cst = arith.constant dense<0.000000e+00> : vector<32x64xf32>
    %3 = tpu.matmul %0, %2, %cst {dimension_numbers = #tpu.dot_dimension_numbers<[1], [0], [0], [1], [0, 0, 1, 1], [], []>} : vector<32x16xf32>, vector<16x64xf32>, vector<32x64xf32> -> vector<32x64xf32>
    %c0_4 = arith.constant 0 : index
    %c0_5 = arith.constant 0 : index
    %4 = vector.load %arg3[%c0_4, %c0_5] : memref<32x1xf32, #tpu.memory_space<vmem>>, vector<32x1xf32>
    %5 = vector.broadcast %4 : vector<32x1xf32> to vector<32x64xf32>
    %6 = arith.addf %3, %5 : vector<32x64xf32>
    %c0_6 = arith.constant 0 : index
    %c0_7 = arith.constant 0 : index
    %c0_8 = arith.constant 0 : index
    %7 = vector.load %arg4[%c0_6, %c0_7, %c0_8] : memref<1x32x64xf32, #tpu.memory_space<vmem>>, vector<1x32x64xf32>
    %8 = vector.shape_cast %7 : vector<1x32x64xf32> to vector<32x64xf32>
    %9 = vector.shape_cast %6 : vector<32x64xf32> to vector<1x32x64xf32>
    tpu.vector_store %arg4[%c0_6, %c0_7, %c0_8], %9 {strides = array<i32>} : memref<1x32x64xf32, #tpu.memory_space<vmem>>, vector<1x32x64xf32>,
    return
  }
  func.func @transform_0(%arg0: i32) -> (i32, i32, i32) {
    %c0_i32 = arith.constant 0 : i32
    %c0_i32_0 = arith.constant 0 : i32
    %c0_i32_1 = arith.constant 0 : i32
    return %arg0, %c0_i32, %c0_i32_0 : i32, i32, i32
  }
  func.func @transform_1(%arg0: i32) -> (i32, i32) {
    %c0_i32 = arith.constant 0 : i32
    %c0_i32_0 = arith.constant 0 : i32
    %c0_i32_1 = arith.constant 0 : i32
    return %c0_i32, %c0_i32_0 : i32, i32
  }
  func.func @transform_2(%arg0: i32) -> (i32, i32) {
    %c0_i32 = arith.constant 0 : i32
    %c0_i32_0 = arith.constant 0 : i32
    %c0_i32_1 = arith.constant 0 : i32
    return %c0_i32, %c0_i32_0 : i32, i32
  }
  func.func @transform_3(%arg0: i32) -> (i32, i32, i32) {
    %c0_i32 = arith.constant 0 : i32
    %c0_i32_0 = arith.constant 0 : i32
    %c0_i32_1 = arith.constant 0 : i32
    return %arg0, %c0_i32, %c0_i32_0 : i32, i32, i32
  }
}

module attributes {stable_mosaic.version = 11 : i64} {
  func.func @_stage_kernel(%arg0: i32, %arg1: memref<1x16x324xf32, #tpu.memory_space<vmem>>, %arg2: memref<9x8x16xf32, #tpu.memory_space<vmem>>, %arg3: memref<8x1xf32, #tpu.memory_space<vmem>>, %arg4: memref<9x8x8xf32, #tpu.memory_space<vmem>>, %arg5: memref<8x1xf32, #tpu.memory_space<vmem>>, %arg6: memref<16x8xf32, #tpu.memory_space<vmem>>, %arg7: memref<16x1xf32, #tpu.memory_space<vmem>>, %arg8: memref<1x16x256xf32, #tpu.memory_space<vmem>>) attributes {dimension_semantics = [#tpu.dimension_semantics<parallel>], iteration_bounds = array<i64: 2>, scalar_prefetch = 0 : i64, scratch_operands = 0 : i64, tpu.core_type = #tpu.core_type<tc>, window_params = [{transform_indices = @transform_0, window_bounds = array<i64: 1, 16, 324>}, {pipeline_mode = #tpu.pipeline_mode<synchronous>, transform_indices = @transform_1, window_bounds = array<i64: 9, 8, 16>}, {pipeline_mode = #tpu.pipeline_mode<synchronous>, transform_indices = @transform_2, window_bounds = array<i64: 8, 1>}, {pipeline_mode = #tpu.pipeline_mode<synchronous>, transform_indices = @transform_3, window_bounds = array<i64: 9, 8, 8>}, {pipeline_mode = #tpu.pipeline_mode<synchronous>, transform_indices = @transform_4, window_bounds = array<i64: 8, 1>}, {pipeline_mode = #tpu.pipeline_mode<synchronous>, transform_indices = @transform_5, window_bounds = array<i64: 16, 8>}, {pipeline_mode = #tpu.pipeline_mode<synchronous>, transform_indices = @transform_6, window_bounds = array<i64: 16, 1>}, {transform_indices = @transform_7, window_bounds = array<i64: 1, 16, 256>}]} {
    %c0 = arith.constant 0 : index
    %c0_0 = arith.constant 0 : index
    %c0_1 = arith.constant 0 : index
    %0 = vector.load %arg1[%c0, %c0_0, %c0_1] : memref<1x16x324xf32, #tpu.memory_space<vmem>>, vector<1x16x324xf32>
    %1 = vector.shape_cast %0 : vector<1x16x324xf32> to vector<16x324xf32>
    %c0_2 = arith.constant 0 : index
    %c0_3 = arith.constant 0 : index
    %c0_4 = arith.constant 0 : index
    %2 = vector.load %arg2[%c0_2, %c0_3, %c0_4] : memref<9x8x16xf32, #tpu.memory_space<vmem>>, vector<1x8x16xf32>
    %3 = vector.shape_cast %2 : vector<1x8x16xf32> to vector<8x16xf32>
    %4 = vector.extract_strided_slice %1 {offsets = [0, 0], sizes = [16, 290], strides = [1, 1]} : vector<16x324xf32> to vector<16x290xf32>
    %cst = arith.constant dense<0.000000e+00> : vector<8x290xf32>
    %5 = tpu.matmul %3, %4, %cst {dimension_numbers = #tpu.dot_dimension_numbers<[1], [0], [0], [1], [0, 0, 1, 1], [], []>} : vector<8x16xf32>, vector<16x290xf32>, vector<8x290xf32> -> vector<8x290xf32>
    %c1 = arith.constant 1 : index
    %c0_5 = arith.constant 0 : index
    %c0_6 = arith.constant 0 : index
    %6 = vector.load %arg2[%c1, %c0_5, %c0_6] : memref<9x8x16xf32, #tpu.memory_space<vmem>>, vector<1x8x16xf32>
    %7 = vector.shape_cast %6 : vector<1x8x16xf32> to vector<8x16xf32>
    %8 = vector.extract_strided_slice %1 {offsets = [0, 1], sizes = [16, 290], strides = [1, 1]} : vector<16x324xf32> to vector<16x290xf32>
    %cst_7 = arith.constant dense<0.000000e+00> : vector<8x290xf32>
    %9 = tpu.matmul %7, %8, %cst_7 {dimension_numbers = #tpu.dot_dimension_numbers<[1], [0], [0], [1], [0, 0, 1, 1], [], []>} : vector<8x16xf32>, vector<16x290xf32>, vector<8x290xf32> -> vector<8x290xf32>
    %10 = arith.addf %5, %9 : vector<8x290xf32>
    %c2 = arith.constant 2 : index
    %c0_8 = arith.constant 0 : index
    %c0_9 = arith.constant 0 : index
    %11 = vector.load %arg2[%c2, %c0_8, %c0_9] : memref<9x8x16xf32, #tpu.memory_space<vmem>>, vector<1x8x16xf32>
    %12 = vector.shape_cast %11 : vector<1x8x16xf32> to vector<8x16xf32>
    %13 = vector.extract_strided_slice %1 {offsets = [0, 2], sizes = [16, 290], strides = [1, 1]} : vector<16x324xf32> to vector<16x290xf32>
    %cst_10 = arith.constant dense<0.000000e+00> : vector<8x290xf32>
    %14 = tpu.matmul %12, %13, %cst_10 {dimension_numbers = #tpu.dot_dimension_numbers<[1], [0], [0], [1], [0, 0, 1, 1], [], []>} : vector<8x16xf32>, vector<16x290xf32>, vector<8x290xf32> -> vector<8x290xf32>
    %15 = arith.addf %10, %14 : vector<8x290xf32>
    %c3 = arith.constant 3 : index
    %c0_11 = arith.constant 0 : index
    %c0_12 = arith.constant 0 : index
    %16 = vector.load %arg2[%c3, %c0_11, %c0_12] : memref<9x8x16xf32, #tpu.memory_space<vmem>>, vector<1x8x16xf32>
    %17 = vector.shape_cast %16 : vector<1x8x16xf32> to vector<8x16xf32>
    %18 = vector.extract_strided_slice %1 {offsets = [0, 16], sizes = [16, 290], strides = [1, 1]} : vector<16x324xf32> to vector<16x290xf32>
    %cst_13 = arith.constant dense<0.000000e+00> : vector<8x290xf32>
    %19 = tpu.matmul %17, %18, %cst_13 {dimension_numbers = #tpu.dot_dimension_numbers<[1], [0], [0], [1], [0, 0, 1, 1], [], []>} : vector<8x16xf32>, vector<16x290xf32>, vector<8x290xf32> -> vector<8x290xf32>
    %20 = arith.addf %15, %19 : vector<8x290xf32>
    %c4 = arith.constant 4 : index
    %c0_14 = arith.constant 0 : index
    %c0_15 = arith.constant 0 : index
    %21 = vector.load %arg2[%c4, %c0_14, %c0_15] : memref<9x8x16xf32, #tpu.memory_space<vmem>>, vector<1x8x16xf32>
    %22 = vector.shape_cast %21 : vector<1x8x16xf32> to vector<8x16xf32>
    %23 = vector.extract_strided_slice %1 {offsets = [0, 17], sizes = [16, 290], strides = [1, 1]} : vector<16x324xf32> to vector<16x290xf32>
    %cst_16 = arith.constant dense<0.000000e+00> : vector<8x290xf32>
    %24 = tpu.matmul %22, %23, %cst_16 {dimension_numbers = #tpu.dot_dimension_numbers<[1], [0], [0], [1], [0, 0, 1, 1], [], []>} : vector<8x16xf32>, vector<16x290xf32>, vector<8x290xf32> -> vector<8x290xf32>
    %25 = arith.addf %20, %24 : vector<8x290xf32>
    %c5 = arith.constant 5 : index
    %c0_17 = arith.constant 0 : index
    %c0_18 = arith.constant 0 : index
    %26 = vector.load %arg2[%c5, %c0_17, %c0_18] : memref<9x8x16xf32, #tpu.memory_space<vmem>>, vector<1x8x16xf32>
    %27 = vector.shape_cast %26 : vector<1x8x16xf32> to vector<8x16xf32>
    %28 = vector.extract_strided_slice %1 {offsets = [0, 18], sizes = [16, 290], strides = [1, 1]} : vector<16x324xf32> to vector<16x290xf32>
    %cst_19 = arith.constant dense<0.000000e+00> : vector<8x290xf32>
    %29 = tpu.matmul %27, %28, %cst_19 {dimension_numbers = #tpu.dot_dimension_numbers<[1], [0], [0], [1], [0, 0, 1, 1], [], []>} : vector<8x16xf32>, vector<16x290xf32>, vector<8x290xf32> -> vector<8x290xf32>
    %30 = arith.addf %25, %29 : vector<8x290xf32>
    %c6 = arith.constant 6 : index
    %c0_20 = arith.constant 0 : index
    %c0_21 = arith.constant 0 : index
    %31 = vector.load %arg2[%c6, %c0_20, %c0_21] : memref<9x8x16xf32, #tpu.memory_space<vmem>>, vector<1x8x16xf32>
    %32 = vector.shape_cast %31 : vector<1x8x16xf32> to vector<8x16xf32>
    %33 = vector.extract_strided_slice %1 {offsets = [0, 32], sizes = [16, 290], strides = [1, 1]} : vector<16x324xf32> to vector<16x290xf32>
    %cst_22 = arith.constant dense<0.000000e+00> : vector<8x290xf32>
    %34 = tpu.matmul %32, %33, %cst_22 {dimension_numbers = #tpu.dot_dimension_numbers<[1], [0], [0], [1], [0, 0, 1, 1], [], []>} : vector<8x16xf32>, vector<16x290xf32>, vector<8x290xf32> -> vector<8x290xf32>
    %35 = arith.addf %30, %34 : vector<8x290xf32>
    %c7 = arith.constant 7 : index
    %c0_23 = arith.constant 0 : index
    %c0_24 = arith.constant 0 : index
    %36 = vector.load %arg2[%c7, %c0_23, %c0_24] : memref<9x8x16xf32, #tpu.memory_space<vmem>>, vector<1x8x16xf32>
    %37 = vector.shape_cast %36 : vector<1x8x16xf32> to vector<8x16xf32>
    %38 = vector.extract_strided_slice %1 {offsets = [0, 33], sizes = [16, 290], strides = [1, 1]} : vector<16x324xf32> to vector<16x290xf32>
    %cst_25 = arith.constant dense<0.000000e+00> : vector<8x290xf32>
    %39 = tpu.matmul %37, %38, %cst_25 {dimension_numbers = #tpu.dot_dimension_numbers<[1], [0], [0], [1], [0, 0, 1, 1], [], []>} : vector<8x16xf32>, vector<16x290xf32>, vector<8x290xf32> -> vector<8x290xf32>
    %40 = arith.addf %35, %39 : vector<8x290xf32>
    %c8 = arith.constant 8 : index
    %c0_26 = arith.constant 0 : index
    %c0_27 = arith.constant 0 : index
    %41 = vector.load %arg2[%c8, %c0_26, %c0_27] : memref<9x8x16xf32, #tpu.memory_space<vmem>>, vector<1x8x16xf32>
    %42 = vector.shape_cast %41 : vector<1x8x16xf32> to vector<8x16xf32>
    %43 = vector.extract_strided_slice %1 {offsets = [0, 34], sizes = [16, 290], strides = [1, 1]} : vector<16x324xf32> to vector<16x290xf32>
    %cst_28 = arith.constant dense<0.000000e+00> : vector<8x290xf32>
    %44 = tpu.matmul %42, %43, %cst_28 {dimension_numbers = #tpu.dot_dimension_numbers<[1], [0], [0], [1], [0, 0, 1, 1], [], []>} : vector<8x16xf32>, vector<16x290xf32>, vector<8x290xf32> -> vector<8x290xf32>
    %45 = arith.addf %40, %44 : vector<8x290xf32>
    %c0_29 = arith.constant 0 : index
    %c0_30 = arith.constant 0 : index
    %46 = vector.load %arg3[%c0_29, %c0_30] : memref<8x1xf32, #tpu.memory_space<vmem>>, vector<8x1xf32>
    %47 = vector.broadcast %46 : vector<8x1xf32> to vector<8x290xf32>
    %48 = arith.addf %45, %47 : vector<8x290xf32>
    %cst_31 = arith.constant 0.000000e+00 : f32
    %49 = vector.broadcast %cst_31 : f32 to vector<8x290xf32>
    %50 = arith.maximumf %48, %49 : vector<8x290xf32>
    %c0_32 = arith.constant 0 : index
    %c0_33 = arith.constant 0 : index
    %c0_34 = arith.constant 0 : index
    %51 = vector.load %arg4[%c0_32, %c0_33, %c0_34] : memref<9x8x8xf32, #tpu.memory_space<vmem>>, vector<1x8x8xf32>
    %52 = vector.shape_cast %51 : vector<1x8x8xf32> to vector<8x8xf32>
    %53 = vector.extract_strided_slice %50 {offsets = [0, 0], sizes = [8, 256], strides = [1, 1]} : vector<8x290xf32> to vector<8x256xf32>
    %cst_35 = arith.constant dense<0.000000e+00> : vector<8x256xf32>
    %54 = tpu.matmul %52, %53, %cst_35 {dimension_numbers = #tpu.dot_dimension_numbers<[1], [0], [0], [1], [0, 0, 1, 1], [], []>} : vector<8x8xf32>, vector<8x256xf32>, vector<8x256xf32> -> vector<8x256xf32>
    %c1_36 = arith.constant 1 : index
    %c0_37 = arith.constant 0 : index
    %c0_38 = arith.constant 0 : index
    %55 = vector.load %arg4[%c1_36, %c0_37, %c0_38] : memref<9x8x8xf32, #tpu.memory_space<vmem>>, vector<1x8x8xf32>
    %56 = vector.shape_cast %55 : vector<1x8x8xf32> to vector<8x8xf32>
    %57 = vector.extract_strided_slice %50 {offsets = [0, 1], sizes = [8, 256], strides = [1, 1]} : vector<8x290xf32> to vector<8x256xf32>
    %cst_39 = arith.constant dense<0.000000e+00> : vector<8x256xf32>
    %58 = tpu.matmul %56, %57, %cst_39 {dimension_numbers = #tpu.dot_dimension_numbers<[1], [0], [0], [1], [0, 0, 1, 1], [], []>} : vector<8x8xf32>, vector<8x256xf32>, vector<8x256xf32> -> vector<8x256xf32>
    %59 = arith.addf %54, %58 : vector<8x256xf32>
    %c2_40 = arith.constant 2 : index
    %c0_41 = arith.constant 0 : index
    %c0_42 = arith.constant 0 : index
    %60 = vector.load %arg4[%c2_40, %c0_41, %c0_42] : memref<9x8x8xf32, #tpu.memory_space<vmem>>, vector<1x8x8xf32>
    %61 = vector.shape_cast %60 : vector<1x8x8xf32> to vector<8x8xf32>
    %62 = vector.extract_strided_slice %50 {offsets = [0, 2], sizes = [8, 256], strides = [1, 1]} : vector<8x290xf32> to vector<8x256xf32>
    %cst_43 = arith.constant dense<0.000000e+00> : vector<8x256xf32>
    %63 = tpu.matmul %61, %62, %cst_43 {dimension_numbers = #tpu.dot_dimension_numbers<[1], [0], [0], [1], [0, 0, 1, 1], [], []>} : vector<8x8xf32>, vector<8x256xf32>, vector<8x256xf32> -> vector<8x256xf32>
    %64 = arith.addf %59, %63 : vector<8x256xf32>
    %c3_44 = arith.constant 3 : index
    %c0_45 = arith.constant 0 : index
    %c0_46 = arith.constant 0 : index
    %65 = vector.load %arg4[%c3_44, %c0_45, %c0_46] : memref<9x8x8xf32, #tpu.memory_space<vmem>>, vector<1x8x8xf32>
    %66 = vector.shape_cast %65 : vector<1x8x8xf32> to vector<8x8xf32>
    %67 = vector.extract_strided_slice %50 {offsets = [0, 16], sizes = [8, 256], strides = [1, 1]} : vector<8x290xf32> to vector<8x256xf32>
    %cst_47 = arith.constant dense<0.000000e+00> : vector<8x256xf32>
    %68 = tpu.matmul %66, %67, %cst_47 {dimension_numbers = #tpu.dot_dimension_numbers<[1], [0], [0], [1], [0, 0, 1, 1], [], []>} : vector<8x8xf32>, vector<8x256xf32>, vector<8x256xf32> -> vector<8x256xf32>
    %69 = arith.addf %64, %68 : vector<8x256xf32>
    %c4_48 = arith.constant 4 : index
    %c0_49 = arith.constant 0 : index
    %c0_50 = arith.constant 0 : index
    %70 = vector.load %arg4[%c4_48, %c0_49, %c0_50] : memref<9x8x8xf32, #tpu.memory_space<vmem>>, vector<1x8x8xf32>
    %71 = vector.shape_cast %70 : vector<1x8x8xf32> to vector<8x8xf32>
    %72 = vector.extract_strided_slice %50 {offsets = [0, 17], sizes = [8, 256], strides = [1, 1]} : vector<8x290xf32> to vector<8x256xf32>
    %cst_51 = arith.constant dense<0.000000e+00> : vector<8x256xf32>
    %73 = tpu.matmul %71, %72, %cst_51 {dimension_numbers = #tpu.dot_dimension_numbers<[1], [0], [0], [1], [0, 0, 1, 1], [], []>} : vector<8x8xf32>, vector<8x256xf32>, vector<8x256xf32> -> vector<8x256xf32>
    %74 = arith.addf %69, %73 : vector<8x256xf32>
    %c5_52 = arith.constant 5 : index
    %c0_53 = arith.constant 0 : index
    %c0_54 = arith.constant 0 : index
    %75 = vector.load %arg4[%c5_52, %c0_53, %c0_54] : memref<9x8x8xf32, #tpu.memory_space<vmem>>, vector<1x8x8xf32>
    %76 = vector.shape_cast %75 : vector<1x8x8xf32> to vector<8x8xf32>
    %77 = vector.extract_strided_slice %50 {offsets = [0, 18], sizes = [8, 256], strides = [1, 1]} : vector<8x290xf32> to vector<8x256xf32>
    %cst_55 = arith.constant dense<0.000000e+00> : vector<8x256xf32>
    %78 = tpu.matmul %76, %77, %cst_55 {dimension_numbers = #tpu.dot_dimension_numbers<[1], [0], [0], [1], [0, 0, 1, 1], [], []>} : vector<8x8xf32>, vector<8x256xf32>, vector<8x256xf32> -> vector<8x256xf32>
    %79 = arith.addf %74, %78 : vector<8x256xf32>
    %c6_56 = arith.constant 6 : index
    %c0_57 = arith.constant 0 : index
    %c0_58 = arith.constant 0 : index
    %80 = vector.load %arg4[%c6_56, %c0_57, %c0_58] : memref<9x8x8xf32, #tpu.memory_space<vmem>>, vector<1x8x8xf32>
    %81 = vector.shape_cast %80 : vector<1x8x8xf32> to vector<8x8xf32>
    %82 = vector.extract_strided_slice %50 {offsets = [0, 32], sizes = [8, 256], strides = [1, 1]} : vector<8x290xf32> to vector<8x256xf32>
    %cst_59 = arith.constant dense<0.000000e+00> : vector<8x256xf32>
    %83 = tpu.matmul %81, %82, %cst_59 {dimension_numbers = #tpu.dot_dimension_numbers<[1], [0], [0], [1], [0, 0, 1, 1], [], []>} : vector<8x8xf32>, vector<8x256xf32>, vector<8x256xf32> -> vector<8x256xf32>
    %84 = arith.addf %79, %83 : vector<8x256xf32>
    %c7_60 = arith.constant 7 : index
    %c0_61 = arith.constant 0 : index
    %c0_62 = arith.constant 0 : index
    %85 = vector.load %arg4[%c7_60, %c0_61, %c0_62] : memref<9x8x8xf32, #tpu.memory_space<vmem>>, vector<1x8x8xf32>
    %86 = vector.shape_cast %85 : vector<1x8x8xf32> to vector<8x8xf32>
    %87 = vector.extract_strided_slice %50 {offsets = [0, 33], sizes = [8, 256], strides = [1, 1]} : vector<8x290xf32> to vector<8x256xf32>
    %cst_63 = arith.constant dense<0.000000e+00> : vector<8x256xf32>
    %88 = tpu.matmul %86, %87, %cst_63 {dimension_numbers = #tpu.dot_dimension_numbers<[1], [0], [0], [1], [0, 0, 1, 1], [], []>} : vector<8x8xf32>, vector<8x256xf32>, vector<8x256xf32> -> vector<8x256xf32>
    %89 = arith.addf %84, %88 : vector<8x256xf32>
    %c8_64 = arith.constant 8 : index
    %c0_65 = arith.constant 0 : index
    %c0_66 = arith.constant 0 : index
    %90 = vector.load %arg4[%c8_64, %c0_65, %c0_66] : memref<9x8x8xf32, #tpu.memory_space<vmem>>, vector<1x8x8xf32>
    %91 = vector.shape_cast %90 : vector<1x8x8xf32> to vector<8x8xf32>
    %92 = vector.extract_strided_slice %50 {offsets = [0, 34], sizes = [8, 256], strides = [1, 1]} : vector<8x290xf32> to vector<8x256xf32>
    %cst_67 = arith.constant dense<0.000000e+00> : vector<8x256xf32>
    %93 = tpu.matmul %91, %92, %cst_67 {dimension_numbers = #tpu.dot_dimension_numbers<[1], [0], [0], [1], [0, 0, 1, 1], [], []>} : vector<8x8xf32>, vector<8x256xf32>, vector<8x256xf32> -> vector<8x256xf32>
    %94 = arith.addf %89, %93 : vector<8x256xf32>
    %c0_68 = arith.constant 0 : index
    %c0_69 = arith.constant 0 : index
    %95 = vector.load %arg5[%c0_68, %c0_69] : memref<8x1xf32, #tpu.memory_space<vmem>>, vector<8x1xf32>
    %96 = vector.broadcast %95 : vector<8x1xf32> to vector<8x256xf32>
    %97 = arith.addf %94, %96 : vector<8x256xf32>
    %c0_70 = arith.constant 0 : index
    %c0_71 = arith.constant 0 : index
    %98 = vector.load %arg6[%c0_70, %c0_71] : memref<16x8xf32, #tpu.memory_space<vmem>>, vector<16x8xf32>
    %cst_72 = arith.constant dense<0.000000e+00> : vector<16x256xf32>
    %99 = tpu.matmul %98, %97, %cst_72 {dimension_numbers = #tpu.dot_dimension_numbers<[1], [0], [0], [1], [0, 0, 1, 1], [], []>} : vector<16x8xf32>, vector<8x256xf32>, vector<16x256xf32> -> vector<16x256xf32>
    %c0_73 = arith.constant 0 : index
    %c0_74 = arith.constant 0 : index
    %100 = vector.load %arg7[%c0_73, %c0_74] : memref<16x1xf32, #tpu.memory_space<vmem>>, vector<16x1xf32>
    %101 = vector.broadcast %100 : vector<16x1xf32> to vector<16x256xf32>
    %102 = arith.addf %99, %101 : vector<16x256xf32>
    %c0_75 = arith.constant 0 : index
    %c0_76 = arith.constant 0 : index
    %c0_77 = arith.constant 0 : index
    %103 = vector.load %arg8[%c0_75, %c0_76, %c0_77] : memref<1x16x256xf32, #tpu.memory_space<vmem>>, vector<1x16x256xf32>
    %104 = vector.shape_cast %103 : vector<1x16x256xf32> to vector<16x256xf32>
    %105 = vector.shape_cast %102 : vector<16x256xf32> to vector<1x16x256xf32>
    tpu.vector_store %arg8[%c0_75, %c0_76, %c0_77], %105 {strides = array<i32>} : memref<1x16x256xf32, #tpu.memory_space<vmem>>, vector<1x16x256xf32>,
    return
  }
  func.func @transform_0(%arg0: i32) -> (i32, i32, i32) {
    %c0_i32 = arith.constant 0 : i32
    %c0_i32_0 = arith.constant 0 : i32
    %c0_i32_1 = arith.constant 0 : i32
    return %arg0, %c0_i32, %c0_i32_0 : i32, i32, i32
  }
  func.func @transform_1(%arg0: i32) -> (i32, i32, i32) {
    %c0_i32 = arith.constant 0 : i32
    %c0_i32_0 = arith.constant 0 : i32
    %c0_i32_1 = arith.constant 0 : i32
    %c0_i32_2 = arith.constant 0 : i32
    return %c0_i32, %c0_i32_0, %c0_i32_1 : i32, i32, i32
  }
  func.func @transform_2(%arg0: i32) -> (i32, i32) {
    %c0_i32 = arith.constant 0 : i32
    %c0_i32_0 = arith.constant 0 : i32
    %c0_i32_1 = arith.constant 0 : i32
    return %c0_i32, %c0_i32_0 : i32, i32
  }
  func.func @transform_3(%arg0: i32) -> (i32, i32, i32) {
    %c0_i32 = arith.constant 0 : i32
    %c0_i32_0 = arith.constant 0 : i32
    %c0_i32_1 = arith.constant 0 : i32
    %c0_i32_2 = arith.constant 0 : i32
    return %c0_i32, %c0_i32_0, %c0_i32_1 : i32, i32, i32
  }
  func.func @transform_4(%arg0: i32) -> (i32, i32) {
    %c0_i32 = arith.constant 0 : i32
    %c0_i32_0 = arith.constant 0 : i32
    %c0_i32_1 = arith.constant 0 : i32
    return %c0_i32, %c0_i32_0 : i32, i32
  }
  func.func @transform_5(%arg0: i32) -> (i32, i32) {
    %c0_i32 = arith.constant 0 : i32
    %c0_i32_0 = arith.constant 0 : i32
    %c0_i32_1 = arith.constant 0 : i32
    return %c0_i32, %c0_i32_0 : i32, i32
  }
  func.func @transform_6(%arg0: i32) -> (i32, i32) {
    %c0_i32 = arith.constant 0 : i32
    %c0_i32_0 = arith.constant 0 : i32
    %c0_i32_1 = arith.constant 0 : i32
    return %c0_i32, %c0_i32_0 : i32, i32
  }
  func.func @transform_7(%arg0: i32) -> (i32, i32, i32) {
    %c0_i32 = arith.constant 0 : i32
    %c0_i32_0 = arith.constant 0 : i32
    %c0_i32_1 = arith.constant 0 : i32
    return %arg0, %c0_i32, %c0_i32_0 : i32, i32, i32
  }
}

module attributes {stable_mosaic.version = 11 : i64} {
  func.func @_stage_kernel(%arg0: i32, %arg1: memref<1x8x676xf32, #tpu.memory_space<vmem>>, %arg2: memref<9x4x8xf32, #tpu.memory_space<vmem>>, %arg3: memref<4x1xf32, #tpu.memory_space<vmem>>, %arg4: memref<9x4x4xf32, #tpu.memory_space<vmem>>, %arg5: memref<4x1xf32, #tpu.memory_space<vmem>>, %arg6: memref<1x4x576xf32, #tpu.memory_space<vmem>>) attributes {dimension_semantics = [#tpu.dimension_semantics<parallel>], iteration_bounds = array<i64: 2>, scalar_prefetch = 0 : i64, scratch_operands = 0 : i64, tpu.core_type = #tpu.core_type<tc>, window_params = [{transform_indices = @transform_0, window_bounds = array<i64: 1, 8, 676>}, {pipeline_mode = #tpu.pipeline_mode<synchronous>, transform_indices = @transform_1, window_bounds = array<i64: 9, 4, 8>}, {pipeline_mode = #tpu.pipeline_mode<synchronous>, transform_indices = @transform_2, window_bounds = array<i64: 4, 1>}, {pipeline_mode = #tpu.pipeline_mode<synchronous>, transform_indices = @transform_3, window_bounds = array<i64: 9, 4, 4>}, {pipeline_mode = #tpu.pipeline_mode<synchronous>, transform_indices = @transform_4, window_bounds = array<i64: 4, 1>}, {transform_indices = @transform_5, window_bounds = array<i64: 1, 4, 576>}]} {
    %c0 = arith.constant 0 : index
    %c0_0 = arith.constant 0 : index
    %c0_1 = arith.constant 0 : index
    %0 = vector.load %arg1[%c0, %c0_0, %c0_1] : memref<1x8x676xf32, #tpu.memory_space<vmem>>, vector<1x8x676xf32>
    %1 = vector.shape_cast %0 : vector<1x8x676xf32> to vector<8x676xf32>
    %c0_2 = arith.constant 0 : index
    %c0_3 = arith.constant 0 : index
    %c0_4 = arith.constant 0 : index
    %2 = vector.load %arg2[%c0_2, %c0_3, %c0_4] : memref<9x4x8xf32, #tpu.memory_space<vmem>>, vector<1x4x8xf32>
    %3 = vector.shape_cast %2 : vector<1x4x8xf32> to vector<4x8xf32>
    %4 = vector.extract_strided_slice %1 {offsets = [0, 0], sizes = [8, 626], strides = [1, 1]} : vector<8x676xf32> to vector<8x626xf32>
    %cst = arith.constant dense<0.000000e+00> : vector<4x626xf32>
    %5 = tpu.matmul %3, %4, %cst {dimension_numbers = #tpu.dot_dimension_numbers<[1], [0], [0], [1], [0, 0, 1, 1], [], []>} : vector<4x8xf32>, vector<8x626xf32>, vector<4x626xf32> -> vector<4x626xf32>
    %c1 = arith.constant 1 : index
    %c0_5 = arith.constant 0 : index
    %c0_6 = arith.constant 0 : index
    %6 = vector.load %arg2[%c1, %c0_5, %c0_6] : memref<9x4x8xf32, #tpu.memory_space<vmem>>, vector<1x4x8xf32>
    %7 = vector.shape_cast %6 : vector<1x4x8xf32> to vector<4x8xf32>
    %8 = vector.extract_strided_slice %1 {offsets = [0, 1], sizes = [8, 626], strides = [1, 1]} : vector<8x676xf32> to vector<8x626xf32>
    %cst_7 = arith.constant dense<0.000000e+00> : vector<4x626xf32>
    %9 = tpu.matmul %7, %8, %cst_7 {dimension_numbers = #tpu.dot_dimension_numbers<[1], [0], [0], [1], [0, 0, 1, 1], [], []>} : vector<4x8xf32>, vector<8x626xf32>, vector<4x626xf32> -> vector<4x626xf32>
    %10 = arith.addf %5, %9 : vector<4x626xf32>
    %c2 = arith.constant 2 : index
    %c0_8 = arith.constant 0 : index
    %c0_9 = arith.constant 0 : index
    %11 = vector.load %arg2[%c2, %c0_8, %c0_9] : memref<9x4x8xf32, #tpu.memory_space<vmem>>, vector<1x4x8xf32>
    %12 = vector.shape_cast %11 : vector<1x4x8xf32> to vector<4x8xf32>
    %13 = vector.extract_strided_slice %1 {offsets = [0, 2], sizes = [8, 626], strides = [1, 1]} : vector<8x676xf32> to vector<8x626xf32>
    %cst_10 = arith.constant dense<0.000000e+00> : vector<4x626xf32>
    %14 = tpu.matmul %12, %13, %cst_10 {dimension_numbers = #tpu.dot_dimension_numbers<[1], [0], [0], [1], [0, 0, 1, 1], [], []>} : vector<4x8xf32>, vector<8x626xf32>, vector<4x626xf32> -> vector<4x626xf32>
    %15 = arith.addf %10, %14 : vector<4x626xf32>
    %c3 = arith.constant 3 : index
    %c0_11 = arith.constant 0 : index
    %c0_12 = arith.constant 0 : index
    %16 = vector.load %arg2[%c3, %c0_11, %c0_12] : memref<9x4x8xf32, #tpu.memory_space<vmem>>, vector<1x4x8xf32>
    %17 = vector.shape_cast %16 : vector<1x4x8xf32> to vector<4x8xf32>
    %18 = vector.extract_strided_slice %1 {offsets = [0, 24], sizes = [8, 626], strides = [1, 1]} : vector<8x676xf32> to vector<8x626xf32>
    %cst_13 = arith.constant dense<0.000000e+00> : vector<4x626xf32>
    %19 = tpu.matmul %17, %18, %cst_13 {dimension_numbers = #tpu.dot_dimension_numbers<[1], [0], [0], [1], [0, 0, 1, 1], [], []>} : vector<4x8xf32>, vector<8x626xf32>, vector<4x626xf32> -> vector<4x626xf32>
    %20 = arith.addf %15, %19 : vector<4x626xf32>
    %c4 = arith.constant 4 : index
    %c0_14 = arith.constant 0 : index
    %c0_15 = arith.constant 0 : index
    %21 = vector.load %arg2[%c4, %c0_14, %c0_15] : memref<9x4x8xf32, #tpu.memory_space<vmem>>, vector<1x4x8xf32>
    %22 = vector.shape_cast %21 : vector<1x4x8xf32> to vector<4x8xf32>
    %23 = vector.extract_strided_slice %1 {offsets = [0, 25], sizes = [8, 626], strides = [1, 1]} : vector<8x676xf32> to vector<8x626xf32>
    %cst_16 = arith.constant dense<0.000000e+00> : vector<4x626xf32>
    %24 = tpu.matmul %22, %23, %cst_16 {dimension_numbers = #tpu.dot_dimension_numbers<[1], [0], [0], [1], [0, 0, 1, 1], [], []>} : vector<4x8xf32>, vector<8x626xf32>, vector<4x626xf32> -> vector<4x626xf32>
    %25 = arith.addf %20, %24 : vector<4x626xf32>
    %c5 = arith.constant 5 : index
    %c0_17 = arith.constant 0 : index
    %c0_18 = arith.constant 0 : index
    %26 = vector.load %arg2[%c5, %c0_17, %c0_18] : memref<9x4x8xf32, #tpu.memory_space<vmem>>, vector<1x4x8xf32>
    %27 = vector.shape_cast %26 : vector<1x4x8xf32> to vector<4x8xf32>
    %28 = vector.extract_strided_slice %1 {offsets = [0, 26], sizes = [8, 626], strides = [1, 1]} : vector<8x676xf32> to vector<8x626xf32>
    %cst_19 = arith.constant dense<0.000000e+00> : vector<4x626xf32>
    %29 = tpu.matmul %27, %28, %cst_19 {dimension_numbers = #tpu.dot_dimension_numbers<[1], [0], [0], [1], [0, 0, 1, 1], [], []>} : vector<4x8xf32>, vector<8x626xf32>, vector<4x626xf32> -> vector<4x626xf32>
    %30 = arith.addf %25, %29 : vector<4x626xf32>
    %c6 = arith.constant 6 : index
    %c0_20 = arith.constant 0 : index
    %c0_21 = arith.constant 0 : index
    %31 = vector.load %arg2[%c6, %c0_20, %c0_21] : memref<9x4x8xf32, #tpu.memory_space<vmem>>, vector<1x4x8xf32>
    %32 = vector.shape_cast %31 : vector<1x4x8xf32> to vector<4x8xf32>
    %33 = vector.extract_strided_slice %1 {offsets = [0, 48], sizes = [8, 626], strides = [1, 1]} : vector<8x676xf32> to vector<8x626xf32>
    %cst_22 = arith.constant dense<0.000000e+00> : vector<4x626xf32>
    %34 = tpu.matmul %32, %33, %cst_22 {dimension_numbers = #tpu.dot_dimension_numbers<[1], [0], [0], [1], [0, 0, 1, 1], [], []>} : vector<4x8xf32>, vector<8x626xf32>, vector<4x626xf32> -> vector<4x626xf32>
    %35 = arith.addf %30, %34 : vector<4x626xf32>
    %c7 = arith.constant 7 : index
    %c0_23 = arith.constant 0 : index
    %c0_24 = arith.constant 0 : index
    %36 = vector.load %arg2[%c7, %c0_23, %c0_24] : memref<9x4x8xf32, #tpu.memory_space<vmem>>, vector<1x4x8xf32>
    %37 = vector.shape_cast %36 : vector<1x4x8xf32> to vector<4x8xf32>
    %38 = vector.extract_strided_slice %1 {offsets = [0, 49], sizes = [8, 626], strides = [1, 1]} : vector<8x676xf32> to vector<8x626xf32>
    %cst_25 = arith.constant dense<0.000000e+00> : vector<4x626xf32>
    %39 = tpu.matmul %37, %38, %cst_25 {dimension_numbers = #tpu.dot_dimension_numbers<[1], [0], [0], [1], [0, 0, 1, 1], [], []>} : vector<4x8xf32>, vector<8x626xf32>, vector<4x626xf32> -> vector<4x626xf32>
    %40 = arith.addf %35, %39 : vector<4x626xf32>
    %c8 = arith.constant 8 : index
    %c0_26 = arith.constant 0 : index
    %c0_27 = arith.constant 0 : index
    %41 = vector.load %arg2[%c8, %c0_26, %c0_27] : memref<9x4x8xf32, #tpu.memory_space<vmem>>, vector<1x4x8xf32>
    %42 = vector.shape_cast %41 : vector<1x4x8xf32> to vector<4x8xf32>
    %43 = vector.extract_strided_slice %1 {offsets = [0, 50], sizes = [8, 626], strides = [1, 1]} : vector<8x676xf32> to vector<8x626xf32>
    %cst_28 = arith.constant dense<0.000000e+00> : vector<4x626xf32>
    %44 = tpu.matmul %42, %43, %cst_28 {dimension_numbers = #tpu.dot_dimension_numbers<[1], [0], [0], [1], [0, 0, 1, 1], [], []>} : vector<4x8xf32>, vector<8x626xf32>, vector<4x626xf32> -> vector<4x626xf32>
    %45 = arith.addf %40, %44 : vector<4x626xf32>
    %c0_29 = arith.constant 0 : index
    %c0_30 = arith.constant 0 : index
    %46 = vector.load %arg3[%c0_29, %c0_30] : memref<4x1xf32, #tpu.memory_space<vmem>>, vector<4x1xf32>
    %47 = vector.broadcast %46 : vector<4x1xf32> to vector<4x626xf32>
    %48 = arith.addf %45, %47 : vector<4x626xf32>
    %cst_31 = arith.constant 0.000000e+00 : f32
    %49 = vector.broadcast %cst_31 : f32 to vector<4x626xf32>
    %50 = arith.maximumf %48, %49 : vector<4x626xf32>
    %c0_32 = arith.constant 0 : index
    %c0_33 = arith.constant 0 : index
    %c0_34 = arith.constant 0 : index
    %51 = vector.load %arg4[%c0_32, %c0_33, %c0_34] : memref<9x4x4xf32, #tpu.memory_space<vmem>>, vector<1x4x4xf32>
    %52 = vector.shape_cast %51 : vector<1x4x4xf32> to vector<4x4xf32>
    %53 = vector.extract_strided_slice %50 {offsets = [0, 0], sizes = [4, 576], strides = [1, 1]} : vector<4x626xf32> to vector<4x576xf32>
    %cst_35 = arith.constant dense<0.000000e+00> : vector<4x576xf32>
    %54 = tpu.matmul %52, %53, %cst_35 {dimension_numbers = #tpu.dot_dimension_numbers<[1], [0], [0], [1], [0, 0, 1, 1], [], []>} : vector<4x4xf32>, vector<4x576xf32>, vector<4x576xf32> -> vector<4x576xf32>
    %c1_36 = arith.constant 1 : index
    %c0_37 = arith.constant 0 : index
    %c0_38 = arith.constant 0 : index
    %55 = vector.load %arg4[%c1_36, %c0_37, %c0_38] : memref<9x4x4xf32, #tpu.memory_space<vmem>>, vector<1x4x4xf32>
    %56 = vector.shape_cast %55 : vector<1x4x4xf32> to vector<4x4xf32>
    %57 = vector.extract_strided_slice %50 {offsets = [0, 1], sizes = [4, 576], strides = [1, 1]} : vector<4x626xf32> to vector<4x576xf32>
    %cst_39 = arith.constant dense<0.000000e+00> : vector<4x576xf32>
    %58 = tpu.matmul %56, %57, %cst_39 {dimension_numbers = #tpu.dot_dimension_numbers<[1], [0], [0], [1], [0, 0, 1, 1], [], []>} : vector<4x4xf32>, vector<4x576xf32>, vector<4x576xf32> -> vector<4x576xf32>
    %59 = arith.addf %54, %58 : vector<4x576xf32>
    %c2_40 = arith.constant 2 : index
    %c0_41 = arith.constant 0 : index
    %c0_42 = arith.constant 0 : index
    %60 = vector.load %arg4[%c2_40, %c0_41, %c0_42] : memref<9x4x4xf32, #tpu.memory_space<vmem>>, vector<1x4x4xf32>
    %61 = vector.shape_cast %60 : vector<1x4x4xf32> to vector<4x4xf32>
    %62 = vector.extract_strided_slice %50 {offsets = [0, 2], sizes = [4, 576], strides = [1, 1]} : vector<4x626xf32> to vector<4x576xf32>
    %cst_43 = arith.constant dense<0.000000e+00> : vector<4x576xf32>
    %63 = tpu.matmul %61, %62, %cst_43 {dimension_numbers = #tpu.dot_dimension_numbers<[1], [0], [0], [1], [0, 0, 1, 1], [], []>} : vector<4x4xf32>, vector<4x576xf32>, vector<4x576xf32> -> vector<4x576xf32>
    %64 = arith.addf %59, %63 : vector<4x576xf32>
    %c3_44 = arith.constant 3 : index
    %c0_45 = arith.constant 0 : index
    %c0_46 = arith.constant 0 : index
    %65 = vector.load %arg4[%c3_44, %c0_45, %c0_46] : memref<9x4x4xf32, #tpu.memory_space<vmem>>, vector<1x4x4xf32>
    %66 = vector.shape_cast %65 : vector<1x4x4xf32> to vector<4x4xf32>
    %67 = vector.extract_strided_slice %50 {offsets = [0, 24], sizes = [4, 576], strides = [1, 1]} : vector<4x626xf32> to vector<4x576xf32>
    %cst_47 = arith.constant dense<0.000000e+00> : vector<4x576xf32>
    %68 = tpu.matmul %66, %67, %cst_47 {dimension_numbers = #tpu.dot_dimension_numbers<[1], [0], [0], [1], [0, 0, 1, 1], [], []>} : vector<4x4xf32>, vector<4x576xf32>, vector<4x576xf32> -> vector<4x576xf32>
    %69 = arith.addf %64, %68 : vector<4x576xf32>
    %c4_48 = arith.constant 4 : index
    %c0_49 = arith.constant 0 : index
    %c0_50 = arith.constant 0 : index
    %70 = vector.load %arg4[%c4_48, %c0_49, %c0_50] : memref<9x4x4xf32, #tpu.memory_space<vmem>>, vector<1x4x4xf32>
    %71 = vector.shape_cast %70 : vector<1x4x4xf32> to vector<4x4xf32>
    %72 = vector.extract_strided_slice %50 {offsets = [0, 25], sizes = [4, 576], strides = [1, 1]} : vector<4x626xf32> to vector<4x576xf32>
    %cst_51 = arith.constant dense<0.000000e+00> : vector<4x576xf32>
    %73 = tpu.matmul %71, %72, %cst_51 {dimension_numbers = #tpu.dot_dimension_numbers<[1], [0], [0], [1], [0, 0, 1, 1], [], []>} : vector<4x4xf32>, vector<4x576xf32>, vector<4x576xf32> -> vector<4x576xf32>
    %74 = arith.addf %69, %73 : vector<4x576xf32>
    %c5_52 = arith.constant 5 : index
    %c0_53 = arith.constant 0 : index
    %c0_54 = arith.constant 0 : index
    %75 = vector.load %arg4[%c5_52, %c0_53, %c0_54] : memref<9x4x4xf32, #tpu.memory_space<vmem>>, vector<1x4x4xf32>
    %76 = vector.shape_cast %75 : vector<1x4x4xf32> to vector<4x4xf32>
    %77 = vector.extract_strided_slice %50 {offsets = [0, 26], sizes = [4, 576], strides = [1, 1]} : vector<4x626xf32> to vector<4x576xf32>
    %cst_55 = arith.constant dense<0.000000e+00> : vector<4x576xf32>
    %78 = tpu.matmul %76, %77, %cst_55 {dimension_numbers = #tpu.dot_dimension_numbers<[1], [0], [0], [1], [0, 0, 1, 1], [], []>} : vector<4x4xf32>, vector<4x576xf32>, vector<4x576xf32> -> vector<4x576xf32>
    %79 = arith.addf %74, %78 : vector<4x576xf32>
    %c6_56 = arith.constant 6 : index
    %c0_57 = arith.constant 0 : index
    %c0_58 = arith.constant 0 : index
    %80 = vector.load %arg4[%c6_56, %c0_57, %c0_58] : memref<9x4x4xf32, #tpu.memory_space<vmem>>, vector<1x4x4xf32>
    %81 = vector.shape_cast %80 : vector<1x4x4xf32> to vector<4x4xf32>
    %82 = vector.extract_strided_slice %50 {offsets = [0, 48], sizes = [4, 576], strides = [1, 1]} : vector<4x626xf32> to vector<4x576xf32>
    %cst_59 = arith.constant dense<0.000000e+00> : vector<4x576xf32>
    %83 = tpu.matmul %81, %82, %cst_59 {dimension_numbers = #tpu.dot_dimension_numbers<[1], [0], [0], [1], [0, 0, 1, 1], [], []>} : vector<4x4xf32>, vector<4x576xf32>, vector<4x576xf32> -> vector<4x576xf32>
    %84 = arith.addf %79, %83 : vector<4x576xf32>
    %c7_60 = arith.constant 7 : index
    %c0_61 = arith.constant 0 : index
    %c0_62 = arith.constant 0 : index
    %85 = vector.load %arg4[%c7_60, %c0_61, %c0_62] : memref<9x4x4xf32, #tpu.memory_space<vmem>>, vector<1x4x4xf32>
    %86 = vector.shape_cast %85 : vector<1x4x4xf32> to vector<4x4xf32>
    %87 = vector.extract_strided_slice %50 {offsets = [0, 49], sizes = [4, 576], strides = [1, 1]} : vector<4x626xf32> to vector<4x576xf32>
    %cst_63 = arith.constant dense<0.000000e+00> : vector<4x576xf32>
    %88 = tpu.matmul %86, %87, %cst_63 {dimension_numbers = #tpu.dot_dimension_numbers<[1], [0], [0], [1], [0, 0, 1, 1], [], []>} : vector<4x4xf32>, vector<4x576xf32>, vector<4x576xf32> -> vector<4x576xf32>
    %89 = arith.addf %84, %88 : vector<4x576xf32>
    %c8_64 = arith.constant 8 : index
    %c0_65 = arith.constant 0 : index
    %c0_66 = arith.constant 0 : index
    %90 = vector.load %arg4[%c8_64, %c0_65, %c0_66] : memref<9x4x4xf32, #tpu.memory_space<vmem>>, vector<1x4x4xf32>
    %91 = vector.shape_cast %90 : vector<1x4x4xf32> to vector<4x4xf32>
    %92 = vector.extract_strided_slice %50 {offsets = [0, 50], sizes = [4, 576], strides = [1, 1]} : vector<4x626xf32> to vector<4x576xf32>
    %cst_67 = arith.constant dense<0.000000e+00> : vector<4x576xf32>
    %93 = tpu.matmul %91, %92, %cst_67 {dimension_numbers = #tpu.dot_dimension_numbers<[1], [0], [0], [1], [0, 0, 1, 1], [], []>} : vector<4x4xf32>, vector<4x576xf32>, vector<4x576xf32> -> vector<4x576xf32>
    %94 = arith.addf %89, %93 : vector<4x576xf32>
    %c0_68 = arith.constant 0 : index
    %c0_69 = arith.constant 0 : index
    %95 = vector.load %arg5[%c0_68, %c0_69] : memref<4x1xf32, #tpu.memory_space<vmem>>, vector<4x1xf32>
    %96 = vector.broadcast %95 : vector<4x1xf32> to vector<4x576xf32>
    %97 = arith.addf %94, %96 : vector<4x576xf32>
    %c0_70 = arith.constant 0 : index
    %c0_71 = arith.constant 0 : index
    %c0_72 = arith.constant 0 : index
    %98 = vector.load %arg6[%c0_70, %c0_71, %c0_72] : memref<1x4x576xf32, #tpu.memory_space<vmem>>, vector<1x4x576xf32>
    %99 = vector.shape_cast %98 : vector<1x4x576xf32> to vector<4x576xf32>
    %100 = vector.shape_cast %97 : vector<4x576xf32> to vector<1x4x576xf32>
    tpu.vector_store %arg6[%c0_70, %c0_71, %c0_72], %100 {strides = array<i32>} : memref<1x4x576xf32, #tpu.memory_space<vmem>>, vector<1x4x576xf32>,
    return
  }
  func.func @transform_0(%arg0: i32) -> (i32, i32, i32) {
    %c0_i32 = arith.constant 0 : i32
    %c0_i32_0 = arith.constant 0 : i32
    %c0_i32_1 = arith.constant 0 : i32
    return %arg0, %c0_i32, %c0_i32_0 : i32, i32, i32
  }
  func.func @transform_1(%arg0: i32) -> (i32, i32, i32) {
    %c0_i32 = arith.constant 0 : i32
    %c0_i32_0 = arith.constant 0 : i32
    %c0_i32_1 = arith.constant 0 : i32
    %c0_i32_2 = arith.constant 0 : i32
    return %c0_i32, %c0_i32_0, %c0_i32_1 : i32, i32, i32
  }
  func.func @transform_2(%arg0: i32) -> (i32, i32) {
    %c0_i32 = arith.constant 0 : i32
    %c0_i32_0 = arith.constant 0 : i32
    %c0_i32_1 = arith.constant 0 : i32
    return %c0_i32, %c0_i32_0 : i32, i32
  }
  func.func @transform_3(%arg0: i32) -> (i32, i32, i32) {
    %c0_i32 = arith.constant 0 : i32
    %c0_i32_0 = arith.constant 0 : i32
    %c0_i32_1 = arith.constant 0 : i32
    %c0_i32_2 = arith.constant 0 : i32
    return %c0_i32, %c0_i32_0, %c0_i32_1 : i32, i32, i32
  }
  func.func @transform_4(%arg0: i32) -> (i32, i32) {
    %c0_i32 = arith.constant 0 : i32
    %c0_i32_0 = arith.constant 0 : i32
    %c0_i32_1 = arith.constant 0 : i32
    return %c0_i32, %c0_i32_0 : i32, i32
  }
  func.func @transform_5(%arg0: i32) -> (i32, i32, i32) {
    %c0_i32 = arith.constant 0 : i32
    %c0_i32_0 = arith.constant 0 : i32
    %c0_i32_1 = arith.constant 0 : i32
    return %arg0, %c0_i32, %c0_i32_0 : i32, i32, i32
  }
}

</mosaic_0001>

<llo_original>
// kernel: tile.13
$region0: #{tile.13}
  #allocation0 [shape = 's32[1]{0}', space=sflag, size = 0x4, scoped, tag = 'scoped memory for tile.13']
  %s0 = inlined_call_operand.vmem [shape: f32[8], index: 0, kind: input, shape index: {}]
  %s1 = inlined_call_operand.vmem [shape: f32[4,8], index: 1, kind: output, shape index: {}]
  // Predicated region
  $region2: #{tile.13} parent=0 // pred_check
    _
  $region3: #{tile.13} parent=0 // pred_check_branch
    %3 = sbr.rel (0) target = $region5
  $region4: #{tile.13} parent=0 // pred_region
    _
  $region5: #{tile.13} parent=0 // pred_fallthru
    _
  %v4 = vld [vmem:[%s0] ss:$0 sm:$0xff]
  %5 = vst [vmem:[%s1] sm:$0xf] %v4

// kernel: tile.0
$region0: #{tile.0}
  %s0 = inlined_call_operand.vmem [shape: f32[4,8], index: 0, kind: input, shape index: {}]
  %s1 = inlined_call_operand.vmem [shape: f32[32,1], index: 1, kind: output, shape index: {}]
  $region1: #{tile.0} parent=0
    #allocation0 [shape = 'u8[4096]{0}', space=vmem, size = 0x1000, scoped, tag = 'scoped mem for input reshape']
    %s3 = sshllo.u32 0, 4
    %v4 = vld [vmem:[%s0] sm:%s3]
    %5 = vst [vmem:[#allocation0] sm:%s3] %v4
    %v6 = vld [vmem:[#allocation0] sm:$0xf]
    %vm7 = vcmask 7168
    %8 = vst.msk [vmem:[%s1] ss:$8 sm:$0xf] %vm7, %v6
    %v9 = vld [vmem:[#allocation0] sm:$0xf]
    %10 = vrot.lane.b32.xlu0 %v9, 127
    %v11 = vpop.permute.xlu0 %10
    %vm12 = vcmask 7168
    %s13 = scalar_lea.vmem %s1, 1
    %14 = vst.msk [vmem:[%s13] ss:$8 sm:$0xf] %vm12, %v11
    %v15 = vld [vmem:[#allocation0] sm:$0xf]
    %16 = vrot.lane.b32.xlu0 %v15, 126
    %v17 = vpop.permute.xlu0 %16
    %vm18 = vcmask 7168
    %s19 = scalar_lea.vmem %s1, 2
    %20 = vst.msk [vmem:[%s19] ss:$8 sm:$0xf] %vm18, %v17
    %v21 = vld [vmem:[#allocation0] sm:$0xf]
    %22 = vrot.lane.b32.xlu0 %v21, 125
    %v23 = vpop.permute.xlu0 %22
    %vm24 = vcmask 7168
    %s25 = scalar_lea.vmem %s1, 3
    %26 = vst.msk [vmem:[%s25] ss:$8 sm:$0xf] %vm24, %v23
    %v27 = vld [vmem:[#allocation0] sm:$0xf]
    %28 = vrot.lane.b32.xlu0 %v27, 124
    %v29 = vpop.permute.xlu0 %28
    %vm30 = vcmask 7168
    %s31 = scalar_lea.vmem %s1, 4
    %32 = vst.msk [vmem:[%s31] ss:$8 sm:$0xf] %vm30, %v29
    %v33 = vld [vmem:[#allocation0] sm:$0xf]
    %34 = vrot.lane.b32.xlu0 %v33, 123
    %v35 = vpop.permute.xlu0 %34
    %vm36 = vcmask 7168
    %s37 = scalar_lea.vmem %s1, 5
    %38 = vst.msk [vmem:[%s37] ss:$8 sm:$0xf] %vm36, %v35
    %v39 = vld [vmem:[#allocation0] sm:$0xf]
    %40 = vrot.lane.b32.xlu0 %v39, 122
    %v41 = vpop.permute.xlu0 %40
    %vm42 = vcmask 7168
    %s43 = scalar_lea.vmem %s1, 6
    %44 = vst.msk [vmem:[%s43] ss:$8 sm:$0xf] %vm42, %v41
    %v45 = vld [vmem:[#allocation0] sm:$0xf]
    %46 = vrot.lane.b32.xlu0 %v45, 121
    %v47 = vpop.permute.xlu0 %46
    %vm48 = vcmask 7168
    %s49 = scalar_lea.vmem %s1, 7
    %50 = vst.msk [vmem:[%s49] ss:$8 sm:$0xf] %vm48, %v47

// kernel: tile.18
$region0: #{tile.18}
  #allocation0 [shape = 's32[1]{0}', space=sflag, size = 0x4, scoped, tag = 'scoped memory for tile.18']
  %s0 = inlined_call_operand.vmem [shape: f32[4], index: 0, kind: input, shape index: {}]
  %s1 = inlined_call_operand.vmem [shape: f32[4,4], index: 1, kind: output, shape index: {}]
  // Predicated region
  $region2: #{tile.18} parent=0 // pred_check
    _
  $region3: #{tile.18} parent=0 // pred_check_branch
    %3 = sbr.rel (0) target = $region5
  $region4: #{tile.18} parent=0 // pred_region
    _
  $region5: #{tile.18} parent=0 // pred_fallthru
    _
  %v4 = vld [vmem:[%s0] ss:$0 sm:$0xff]
  %5 = vst [vmem:[%s1] sm:$0xf] %v4

// kernel: tile.1
$region0: #{tile.1}
  %s0 = inlined_call_operand.vmem [shape: f32[4,4], index: 0, kind: input, shape index: {}]
  %s1 = inlined_call_operand.vmem [shape: f32[16,1], index: 1, kind: output, shape index: {}]
  $region1: #{tile.1} parent=0
    #allocation0 [shape = 'u8[4096]{0}', space=vmem, size = 0x1000, scoped, tag = 'scoped mem for input reshape']
    %s3 = sshllo.u32 0, 4
    %v4 = vld [vmem:[%s0] sm:%s3]
    %5 = vst [vmem:[#allocation0] sm:%s3] %v4
    %v6 = vld [vmem:[#allocation0] sm:$0xf]
    %vm7 = vcmask 7168
    %8 = vst.msk [vmem:[%s1] ss:$4 sm:$0xf] %vm7, %v6
    %v9 = vld [vmem:[#allocation0] sm:$0xf]
    %10 = vrot.lane.b32.xlu0 %v9, 127
    %v11 = vpop.permute.xlu0 %10
    %vm12 = vcmask 7168
    %s13 = scalar_lea.vmem %s1, 1
    %14 = vst.msk [vmem:[%s13] ss:$4 sm:$0xf] %vm12, %v11
    %v15 = vld [vmem:[#allocation0] sm:$0xf]
    %16 = vrot.lane.b32.xlu0 %v15, 126
    %v17 = vpop.permute.xlu0 %16
    %vm18 = vcmask 7168
    %s19 = scalar_lea.vmem %s1, 2
    %20 = vst.msk [vmem:[%s19] ss:$4 sm:$0xf] %vm18, %v17
    %v21 = vld [vmem:[#allocation0] sm:$0xf]
    %22 = vrot.lane.b32.xlu0 %v21, 125
    %v23 = vpop.permute.xlu0 %22
    %vm24 = vcmask 7168
    %s25 = scalar_lea.vmem %s1, 3
    %26 = vst.msk [vmem:[%s25] ss:$4 sm:$0xf] %vm24, %v23

// kernel: unet_decoder_forward.3
$region0: #{unet_decoder_forward.3}
  #allocation0 [shape = 'u32[]', space=smem, size = 0x4, offset = 0x4, fixed_abs, tag = 'smem constant byte address 0x4 - core index']
  #allocation1 [shape = 'u32[144,128]{1,0:T(1,128)}', space=vmem, size = 0x12000, scoped, tag = 'internal scratch']
  %s0 = inlined_call_operand.vmem [shape: f32[2,16,64], index: 0, kind: input, shape index: {}]
  %s1 = inlined_call_operand.vmem [shape: f32[32,16], index: 1, kind: input, shape index: {}]
  %s2 = inlined_call_operand.vmem [shape: f32[32,1], index: 2, kind: input, shape index: {}]
  %s3 = inlined_call_operand.vmem [shape: f32[2,32,64], index: 3, kind: output, shape index: {}]
  %s4 = sld [smem:[#allocation0]]
  $region45: #{unet_decoder_forward.3} parent=0
    _
  %s6 = ssub.s32 1, %s4
  %s7 = scalar_select 0, %s6, %s4
  loop: start=0, step=1, limit=4
  $region2: #{unet_decoder_forward.3} parent=0 // loop_pre_header
    _
  $region3: #{unet_decoder_forward.3} parent=0 // loop_header
    %s9 = sphi 0, %s13
    %p10 = scmp.ge.s32.totalorder %s9, 4
    %s19 = sphi 0, %s21
    %s22 = sphi 0, %s19
    %s23 = sphi 0, %s22
    %s39 = sphi 0, %s23
    %s43 = sphi 0, %s43
    %s45 = sphi 0, %s43
    %s46 = sphi 0, %s45
    %s60 = sphi 0, %s46
    %s64 = sphi 0, %s64
    %s66 = sphi 0, %s64
    %s67 = sphi 0, %s66
    %s81 = sphi 0, %s67
    %s87 = sphi 0, %s89
    %s90 = sphi 0, %s87
    %s91 = sphi 0, %s90
    %s107 = sphi 0, %s91
  $region4: #{unet_decoder_forward.3} parent=0 // loop_header_branch
    %12 = sbr.rel (%p10) target = $region8
  $region5: #{unet_decoder_forward.3} parent=0 // loop_body
    %s14 = ssub.s32 %s9, 1
    %s15 = ssub.s32 %s9, 2
    %s16 = sadd.s32 %s9, 1
    %s17 = ssub.s32 %s9, %s16
    %p18 = scmp.eq.s32.totalorder %s17, 0
    %s20 = sadd.s32 %s19, 1
    %s21 = scalar_select %p18, %s19, %s20
    %p24 = pneg %p18
    %p25 = scmp.eq.s32.totalorder %s9, 1
    %p26 = por %p24, %p25
    %p27 = scmp.ne.s32.totalorder %s19, %s22
    %p28 = scmp.eq.s32.totalorder %s9, 0
    %p29 = por %p27, %p28
    %p30 = scmp.ne.s32.totalorder %s19, %s22
    %p31 = scmp.eq.s32.totalorder %s14, 1
    %p32 = por %p30, %p31
    %p33 = scmp.ne.s32.totalorder %s22, %s23
    %p34 = scmp.eq.s32.totalorder %s14, 0
    %p35 = por %p33, %p34
    %p36 = scmp.ne.s32.totalorder %s22, %s23
    %p37 = scmp.eq.s32.totalorder %s15, 1
    %p38 = por %p36, %p37
    %p40 = scmp.ne.s32.totalorder %s23, %s39
    %p41 = scmp.eq.s32.totalorder %s15, 0
    %p42 = por %p40, %p41
    %s44 = sadd.s32 %s43, 1
    %p47 = scmp.eq.s32.totalorder %s9, 1
    %p48 = scmp.ne.s32.totalorder %s43, %s45
    %p49 = scmp.eq.s32.totalorder %s9, 0
    %p50 = por %p48, %p49
    %p51 = scmp.ne.s32.totalorder %s43, %s45
    %p52 = scmp.eq.s32.totalorder %s14, 1
    %p53 = por %p51, %p52
    %p54 = scmp.ne.s32.totalorder %s45, %s46
    %p55 = scmp.eq.s32.totalorder %s14, 0
    %p56 = por %p54, %p55
    %p57 = scmp.ne.s32.totalorder %s45, %s46
    %p58 = scmp.eq.s32.totalorder %s15, 1
    %p59 = por %p57, %p58
    %p61 = scmp.ne.s32.totalorder %s46, %s60
    %p62 = scmp.eq.s32.totalorder %s15, 0
    %p63 = por %p61, %p62
    %s65 = sadd.s32 %s64, 1
    %p68 = scmp.eq.s32.totalorder %s9, 1
    %p69 = scmp.ne.s32.totalorder %s64, %s66
    %p70 = scmp.eq.s32.totalorder %s9, 0
    %p71 = por %p69, %p70
    %p72 = scmp.ne.s32.totalorder %s64, %s66
    %p73 = scmp.eq.s32.totalorder %s14, 1
    %p74 = por %p72, %p73
    %p75 = scmp.ne.s32.totalorder %s66, %s67
    %p76 = scmp.eq.s32.totalorder %s14, 0
    %p77 = por %p75, %p76
    %p78 = scmp.ne.s32.totalorder %s66, %s67
    %p79 = scmp.eq.s32.totalorder %s15, 1
    %p80 = por %p78, %p79
    %p82 = scmp.ne.s32.totalorder %s67, %s81
    %p83 = scmp.eq.s32.totalorder %s15, 0
    %p84 = por %p82, %p83
    %s85 = ssub.s32 %s9, %s16
    %p86 = scmp.eq.s32.totalorder %s85, 0
    %s88 = sadd.s32 %s87, 1
    %s89 = scalar_select %p86, %s87, %s88
    %p92 = pneg %p86
    %p93 = scmp.eq.s32.totalorder %s9, 1
    %p94 = por %p92, %p93
    %p95 = scmp.ne.s32.totalorder %s87, %s90
    %p96 = scmp.eq.s32.totalorder %s9, 0
    %p97 = por %p95, %p96
    %p98 = scmp.ne.s32.totalorder %s87, %s90
    %p99 = scmp.eq.s32.totalorder %s14, 1
    %p100 = por %p98, %p99
    %p101 = scmp.ne.s32.totalorder %s90, %s91
    %p102 = scmp.eq.s32.totalorder %s14, 0
    %p103 = por %p101, %p102
    %p104 = scmp.ne.s32.totalorder %s90, %s91
    %p105 = scmp.eq.s32.totalorder %s15, 1
    %p106 = por %p104, %p105
    %p108 = scmp.ne.s32.totalorder %s91, %s107
    %p109 = scmp.eq.s32.totalorder %s15, 0
    %p110 = por %p108, %p109
    %p111 = scmp.le.s32.totalorder 1, %s9
    %p112 = scmp.lt.s32.totalorder %s9, 3
    %p113 = pnand %p111, %p112
    %p114 = pneg %p113
    // Predicated region
    $region9: #{unet_decoder_forward.3} parent=5 // pred_check
      _
    $region10: #{unet_decoder_forward.3} parent=5 // pred_check_branch
      %116 = sbr.rel (%p113) target = $region12
    $region11: #{unet_decoder_forward.3} parent=5 // pred_region
      %s117 = ssub.s32 %s9, 1
      // Predicated region
      $region13: #{unet_decoder_forward.3} parent=11 // pred_check
        %p118 = pneg %p56
      $region14: #{unet_decoder_forward.3} parent=11 // pred_check_branch
        %120 = sbr.rel (%p118) target = $region16
      $region15: #{unet_decoder_forward.3} parent=11 // pred_region
        _
      $region16: #{unet_decoder_forward.3} parent=11 // pred_fallthru
        _
      // Predicated region
      $region17: #{unet_decoder_forward.3} parent=11 // pred_check
        %p121 = pneg %p77
      $region18: #{unet_decoder_forward.3} parent=11 // pred_check_branch
        %123 = sbr.rel (%p121) target = $region20
      $region19: #{unet_decoder_forward.3} parent=11 // pred_region
        _
      $region20: #{unet_decoder_forward.3} parent=11 // pred_fallthru
        _
    $region12: #{unet_decoder_forward.3} parent=5 // pred_fallthru
      _
    %p124 = scmp.lt.s32.totalorder %s9, 2
    // Predicated region
    $region21: #{unet_decoder_forward.3} parent=5 // pred_check
      %p125 = pneg %p124
    $region22: #{unet_decoder_forward.3} parent=5 // pred_check_branch
      %127 = sbr.rel (%p125) target = $region24
    $region23: #{unet_decoder_forward.3} parent=5 // pred_region
      // Predicated region
      $region25: #{unet_decoder_forward.3} parent=23 // pred_check
        %p128 = pneg %p29
      $region26: #{unet_decoder_forward.3} parent=23 // pred_check_branch
        %130 = sbr.rel (%p128) target = $region28
      $region27: #{unet_decoder_forward.3} parent=23 // pred_region
        %p131 = scmp.lt.s32.totalorder %s9, 1
        %s132 = scalar_select %p131, %s9, 1
        %s133 = smul.addr %s132, 2
        %s134 = smul.addr %s133, 8
        %s135 = scalar_lea.vmem %s0, %s134
      $region28: #{unet_decoder_forward.3} parent=23 // pred_fallthru
        _
    $region24: #{unet_decoder_forward.3} parent=5 // pred_fallthru
      _
    %p136 = scmp.le.s32.totalorder 1, %s9
    %p137 = scmp.lt.s32.totalorder %s9, 3
    %p138 = pnand %p136, %p137
    %p139 = pneg %p138
    // Predicated region
    $region29: #{unet_decoder_forward.3} parent=5 // pred_check
      _
    $region30: #{unet_decoder_forward.3} parent=5 // pred_check_branch
      %141 = sbr.rel (%p138) target = $region32
    $region31: #{unet_decoder_forward.3} parent=5 // pred_region
      %s142 = ssub.s32 %s9, 1
      %p143 = scmp.lt.s32.totalorder %s14, 1
      %s144 = scalar_select %p143, %s14, 1
      %s145 = smul.addr %s144, 2
      %s146 = smul.addr %s145, 8
      %s147 = scalar_lea.vmem %s0, %s146
      %p148 = pneg %p35
      %p149 = pneg %p32
      %p150 = pneg %p56
      %p151 = pneg %p53
      %p152 = pneg %p77
      %p153 = pneg %p74
      %p154 = pneg %p103
      %p155 = pneg %p100
      %p156 = scmp.lt.s32.totalorder %s14, 1
      %s157 = scalar_select %p156, %s14, 1
      %s158 = smul.addr %s157, 4
      %s159 = smul.addr %s158, 8
      %s160 = scalar_lea.vmem %s3, %s159
      %p161 = scmp.lt.s32.totalorder %s14, 1
      %s162 = scalar_select %p161, %s14, 1
      %s163 = smul.addr %s162, 2
      %s164 = smul.addr %s163, 8
      %s165 = scalar_lea.vmem %s0, %s164
      %p166 = scmp.lt.s32.totalorder %s14, 1
      %s167 = scalar_select %p166, %s14, 1
      %s168 = smul.addr %s167, 4
      %s169 = smul.addr %s168, 8
      %s170 = scalar_lea.vmem %s3, %s169
      %v171 = vld [vmem:[%s1] sm:$0xff]
      %v172 = vld [vmem:[%s1 + $0x8] sm:$0xff]
      %v173 = vld [vmem:[%s1 + $0x10] sm:$0xff]
      %v174 = vld [vmem:[%s1 + $0x18] sm:$0xff]
      %v175 = vld [vmem:[%s165] sm:$0xff]
      %v176 = vld [vmem:[%s165 + $0x8] sm:$0xff]
      %v177 = vld [vmem:[%s2] sm:$0xff]
      %v178 = vld [vmem:[%s2 + $0x8] sm:$0xff]
      %v179 = vld [vmem:[%s2 + $0x10] sm:$0xff]
      %v180 = vld [vmem:[%s2 + $0x18] sm:$0xff]
      %182 = vset.pattern.permute.xlu0 0
      %183 = vperm.xlu0 %182, %v177
      %v184 = vpop.permute.xlu0 %183
      %187 = vset.pattern.permute.xlu0 0
      %188 = vperm.xlu0 %187, %v178
      %v189 = vpop.permute.xlu0 %188
      %192 = vset.pattern.permute.xlu0 0
      %193 = vperm.xlu0 %192, %v179
      %v194 = vpop.permute.xlu0 %193
      %197 = vset.pattern.permute.xlu0 0
      %198 = vperm.xlu0 %197, %v180
      %v199 = vpop.permute.xlu0 %198
      %vm201 = vcmask 130048
      %v203 = vsel %vm201, %v171, 0
      %v206 = vsel %vm201, %v172, 0
      %v209 = vsel %vm201, %v173, 0
      %v212 = vsel %vm201, %v174, 0
      %214 = vmatprep.subr.mxu0 0.0
      %215 = vmatpush1.msra.mxu0 %v175
      %216 = vmatprep.subr.mxu0 0.0
      %217 = vmatpush1.msra.mxu0 %v176
      %218 = vmatprep.subr.mxu0 0.0
      %219 = vmatpush1.msra.mxu0 0.0
      %220 = vmatprep.subr.mxu0 0.0
      %221 = vmatpush1.msra.mxu0 0.0
      %222 = vmatprep.subr.mxu0 0.0
      %223 = vmatpush1.msra.mxu0 0.0
      %224 = vmatprep.subr.mxu0 0.0
      %225 = vmatpush1.msra.mxu0 0.0
      %226 = vmatprep.subr.mxu0 0.0
      %227 = vmatpush1.msra.mxu0 0.0
      %228 = vmatprep.subr.mxu0 0.0
      %229 = vmatpush1.msra.mxu0 0.0
      %230 = vmatprep.subr.mxu0 0.0
      %231 = vmatpush1.msra.mxu0 0.0
      %232 = vmatprep.subr.mxu0 0.0
      %233 = vmatpush1.msra.mxu0 0.0
      %234 = vmatprep.subr.mxu0 0.0
      %235 = vmatpush1.msra.mxu0 0.0
      %236 = vmatprep.subr.mxu0 0.0
      %237 = vmatpush1.msra.mxu0 0.0
      %238 = vmatprep.subr.mxu0 0.0
      %239 = vmatpush1.msra.mxu0 0.0
      %240 = vmatprep.subr.mxu0 0.0
      %241 = vmatpush1.msra.mxu0 0.0
      %242 = vmatprep.subr.mxu0 0.0
      %243 = vmatpush1.msra.mxu0 0.0
      %244 = vmatprep.subr.mxu0 0.0
      %245 = vmatpush1.msra.mxu0 0.0
      %246 = vmatprep.subr.mxu0 0.0
      %247 = vmatpush1.msra.mxu0 0.0
      %248 = vmatprep.subr.mxu0 0.0
      %249 = vmatpush1.msra.mxu0 0.0
      %250 = vmatprep.subr.mxu0 0.0
      %251 = vmatpush1.msra.mxu0 0.0
      %252 = vmatprep.subr.mxu0 0.0
      %253 = vmatpush1.msra.mxu0 0.0
      %254 = vmatprep.subr.mxu0 0.0
      %255 = vmatpush1.msra.mxu0 0.0
      %256 = vmatprep.subr.mxu0 0.0
      %257 = vmatpush1.msra.mxu0 0.0
      %258 = vmatprep.subr.mxu0 0.0
      %259 = vmatpush1.msra.mxu0 0.0
      %260 = vmatprep.subr.mxu0 0.0
      %261 = vmatpush1.msra.mxu0 0.0
      %262 = vmatprep.subr.mxu0 0.0
      %263 = vmatpush1.msra.mxu0 0.0
      %264 = vmatprep.subr.mxu0 0.0
      %265 = vmatpush1.msra.mxu0 0.0
      %266 = vmatprep.subr.mxu0 0.0
      %267 = vmatpush1.msra.mxu0 0.0
      %268 = vmatprep.subr.mxu0 0.0
      %269 = vmatpush1.msra.mxu0 0.0
      %270 = vmatprep.subr.mxu0 0.0
      %271 = vmatpush1.msra.mxu0 0.0
      %272 = vmatprep.subr.mxu0 0.0
      %273 = vmatpush1.msra.mxu0 0.0
      %274 = vmatprep.subr.mxu0 0.0
      %275 = vmatpush1.msra.mxu0 0.0
      %276 = vmatprep.subr.mxu0 0.0
      %277 = vmatpush1.msra.mxu0 0.0
      %278 = vmatprep.mubr.f32.mxu0 0.0
      %279 = vmatmul.mubr.f32.gmra.mrb[0].mxu0 %v203
      %v280 = vpop.f32.mrb[0].mxu0
      %v281 = vadd.f32 %v184, %v280
      %v282 = vpop.f32.mrb[0].mxu0
      %283 = vmatprep.mubr.f32.mxu0 0.0
      %284 = vmatmul.mubr.f32.gmra.mrb[0].mxu0 %v206
      %v285 = vpop.f32.mrb[0].mxu0
      %v286 = vadd.f32 %v189, %v285
      %v287 = vpop.f32.mrb[0].mxu0
      %288 = vmatprep.mubr.f32.mxu0 0.0
      %289 = vmatmul.mubr.f32.gmra.mrb[0].mxu0 %v209
      %v290 = vpop.f32.mrb[0].mxu0
      %v291 = vadd.f32 %v194, %v290
      %v292 = vpop.f32.mrb[0].mxu0
      %293 = vmatprep.mubr.f32.mxu0 0.0
      %294 = vmatmul.mubr.f32.gmra.mrb[0].mxu0 %v212
      %v295 = vpop.f32.mrb[0].mxu0
      %v296 = vadd.f32 %v199, %v295
      %v297 = vpop.f32.mrb[0].mxu0
      %298 = vdwg.mxu0
      %vm299 = vcmask 523264
      %300 = vst.msk [vmem:[%s170] sm:$0xff] %vm299, %v281
      %301 = vst.msk [vmem:[%s170 + $0x8] sm:$0xff] %vm299, %v286
      %302 = vst.msk [vmem:[%s170 + $0x10] sm:$0xff] %vm299, %v291
      %303 = vst.msk [vmem:[%s170 + $0x18] sm:$0xff] %vm299, %v296
      %p304 = scmp.lt.s32.totalorder %s14, 1
      %s305 = scalar_select %p304, %s14, 1
      %s306 = smul.addr %s305, 4
      %s307 = smul.addr %s306, 8
      %s308 = scalar_lea.vmem %s3, %s307
      // Predicated region
      $region33: #{unet_decoder_forward.3} parent=31 // pred_check
        %p309 = pneg %p100
      $region34: #{unet_decoder_forward.3} parent=31 // pred_check_branch
        %311 = sbr.rel (%p309) target = $region36
      $region35: #{unet_decoder_forward.3} parent=31 // pred_region
        _
      $region36: #{unet_decoder_forward.3} parent=31 // pred_fallthru
        _
    $region32: #{unet_decoder_forward.3} parent=5 // pred_fallthru
      _
    %p312 = scmp.le.s32.totalorder 2, %s9
    // Predicated region
    $region37: #{unet_decoder_forward.3} parent=5 // pred_check
      %p313 = pneg %p312
    $region38: #{unet_decoder_forward.3} parent=5 // pred_check_branch
      %315 = sbr.rel (%p313) target = $region40
    $region39: #{unet_decoder_forward.3} parent=5 // pred_region
      %s316 = ssub.s32 %s9, 2
      // Predicated region
      $region41: #{unet_decoder_forward.3} parent=39 // pred_check
        %p317 = pneg %p106
      $region42: #{unet_decoder_forward.3} parent=39 // pred_check_branch
        %319 = sbr.rel (%p317) target = $region44
      $region43: #{unet_decoder_forward.3} parent=39 // pred_region
        %p320 = scmp.lt.s32.totalorder %s15, 1
        %s321 = scalar_select %p320, %s15, 1
        %s322 = smul.addr %s321, 4
        %s323 = smul.addr %s322, 8
        %s324 = scalar_lea.vmem %s3, %s323
      $region44: #{unet_decoder_forward.3} parent=39 // pred_fallthru
        _
    $region40: #{unet_decoder_forward.3} parent=5 // pred_fallthru
      _
  $region6: #{unet_decoder_forward.3} parent=0 // loop_footer
    %s13 = sadd.s32 1, %s9
  $region7: #{unet_decoder_forward.3} parent=0 // loop_footer_branch
    %8 = sbr.rel target = $region3
  $region8: #{unet_decoder_forward.3} parent=0 // loop_exit
    _

// kernel: unet_decoder_forward.4
$region0: #{unet_decoder_forward.4}
  #allocation0 [shape = 'u32[]', space=smem, size = 0x4, offset = 0x4, fixed_abs, tag = 'smem constant byte address 0x4 - core index']
  #allocation1 [shape = 'u32[144,128]{1,0:T(1,128)}', space=vmem, size = 0x12000, scoped, tag = 'internal scratch']
  %s0 = inlined_call_operand.vmem [shape: f32[2,16,324], index: 0, kind: input, shape index: {}]
  %s1 = inlined_call_operand.vmem [shape: f32[9,8,16], index: 1, kind: input, shape index: {}]
  %s2 = inlined_call_operand.vmem [shape: f32[8,1], index: 2, kind: input, shape index: {}]
  %s3 = inlined_call_operand.vmem [shape: f32[9,8,8], index: 3, kind: input, shape index: {}]
  %s4 = inlined_call_operand.vmem [shape: f32[8,1], index: 4, kind: input, shape index: {}]
  %s5 = inlined_call_operand.vmem [shape: f32[16,8], index: 5, kind: input, shape index: {}]
  %s6 = inlined_call_operand.vmem [shape: f32[16,1], index: 6, kind: input, shape index: {}]
  %s7 = inlined_call_operand.vmem [shape: f32[2,16,256], index: 7, kind: output, shape index: {}]
  %s8 = sld [smem:[#allocation0]]
  $region61: #{unet_decoder_forward.4} parent=0
    _
  %s10 = ssub.s32 1, %s8
  %s11 = scalar_select 0, %s10, %s8
  loop: start=0, step=1, limit=4
  $region2: #{unet_decoder_forward.4} parent=0 // loop_pre_header
    _
  $region3: #{unet_decoder_forward.4} parent=0 // loop_header
    %s13 = sphi 0, %s17
    %p14 = scmp.ge.s32.totalorder %s13, 4
    %s23 = sphi 0, %s25
    %s26 = sphi 0, %s23
    %s27 = sphi 0, %s26
    %s43 = sphi 0, %s27
    %s47 = sphi 0, %s47
    %s49 = sphi 0, %s47
    %s50 = sphi 0, %s49
    %s64 = sphi 0, %s50
    %s68 = sphi 0, %s68
    %s70 = sphi 0, %s68
    %s71 = sphi 0, %s70
    %s85 = sphi 0, %s71
    %s89 = sphi 0, %s89
    %s91 = sphi 0, %s89
    %s92 = sphi 0, %s91
    %s106 = sphi 0, %s92
    %s110 = sphi 0, %s110
    %s112 = sphi 0, %s110
    %s113 = sphi 0, %s112
    %s127 = sphi 0, %s113
    %s131 = sphi 0, %s131
    %s133 = sphi 0, %s131
    %s134 = sphi 0, %s133
    %s148 = sphi 0, %s134
    %s152 = sphi 0, %s152
    %s154 = sphi 0, %s152
    %s155 = sphi 0, %s154
    %s169 = sphi 0, %s155
    %s175 = sphi 0, %s177
    %s178 = sphi 0, %s175
    %s179 = sphi 0, %s178
    %s195 = sphi 0, %s179
  $region4: #{unet_decoder_forward.4} parent=0 // loop_header_branch
    %16 = sbr.rel (%p14) target = $region8
  $region5: #{unet_decoder_forward.4} parent=0 // loop_body
    %s18 = ssub.s32 %s13, 1
    %s19 = ssub.s32 %s13, 2
    %s20 = sadd.s32 %s13, 1
    %s21 = ssub.s32 %s13, %s20
    %p22 = scmp.eq.s32.totalorder %s21, 0
    %s24 = sadd.s32 %s23, 1
    %s25 = scalar_select %p22, %s23, %s24
    %p28 = pneg %p22
    %p29 = scmp.eq.s32.totalorder %s13, 1
    %p30 = por %p28, %p29
    %p31 = scmp.ne.s32.totalorder %s23, %s26
    %p32 = scmp.eq.s32.totalorder %s13, 0
    %p33 = por %p31, %p32
    %p34 = scmp.ne.s32.totalorder %s23, %s26
    %p35 = scmp.eq.s32.totalorder %s18, 1
    %p36 = por %p34, %p35
    %p37 = scmp.ne.s32.totalorder %s26, %s27
    %p38 = scmp.eq.s32.totalorder %s18, 0
    %p39 = por %p37, %p38
    %p40 = scmp.ne.s32.totalorder %s26, %s27
    %p41 = scmp.eq.s32.totalorder %s19, 1
    %p42 = por %p40, %p41
    %p44 = scmp.ne.s32.totalorder %s27, %s43
    %p45 = scmp.eq.s32.totalorder %s19, 0
    %p46 = por %p44, %p45
    %s48 = sadd.s32 %s47, 1
    %p51 = scmp.eq.s32.totalorder %s13, 1
    %p52 = scmp.ne.s32.totalorder %s47, %s49
    %p53 = scmp.eq.s32.totalorder %s13, 0
    %p54 = por %p52, %p53
    %p55 = scmp.ne.s32.totalorder %s47, %s49
    %p56 = scmp.eq.s32.totalorder %s18, 1
    %p57 = por %p55, %p56
    %p58 = scmp.ne.s32.totalorder %s49, %s50
    %p59 = scmp.eq.s32.totalorder %s18, 0
    %p60 = por %p58, %p59
    %p61 = scmp.ne.s32.totalorder %s49, %s50
    %p62 = scmp.eq.s32.totalorder %s19, 1
    %p63 = por %p61, %p62
    %p65 = scmp.ne.s32.totalorder %s50, %s64
    %p66 = scmp.eq.s32.totalorder %s19, 0
    %p67 = por %p65, %p66
    %s69 = sadd.s32 %s68, 1
    %p72 = scmp.eq.s32.totalorder %s13, 1
    %p73 = scmp.ne.s32.totalorder %s68, %s70
    %p74 = scmp.eq.s32.totalorder %s13, 0
    %p75 = por %p73, %p74
    %p76 = scmp.ne.s32.totalorder %s68, %s70
    %p77 = scmp.eq.s32.totalorder %s18, 1
    %p78 = por %p76, %p77
    %p79 = scmp.ne.s32.totalorder %s70, %s71
    %p80 = scmp.eq.s32.totalorder %s18, 0
    %p81 = por %p79, %p80
    %p82 = scmp.ne.s32.totalorder %s70, %s71
    %p83 = scmp.eq.s32.totalorder %s19, 1
    %p84 = por %p82, %p83
    %p86 = scmp.ne.s32.totalorder %s71, %s85
    %p87 = scmp.eq.s32.totalorder %s19, 0
    %p88 = por %p86, %p87
    %s90 = sadd.s32 %s89, 1
    %p93 = scmp.eq.s32.totalorder %s13, 1
    %p94 = scmp.ne.s32.totalorder %s89, %s91
    %p95 = scmp.eq.s32.totalorder %s13, 0
    %p96 = por %p94, %p95
    %p97 = scmp.ne.s32.totalorder %s89, %s91
    %p98 = scmp.eq.s32.totalorder %s18, 1
    %p99 = por %p97, %p98
    %p100 = scmp.ne.s32.totalorder %s91, %s92
    %p101 = scmp.eq.s32.totalorder %s18, 0
    %p102 = por %p100, %p101
    %p103 = scmp.ne.s32.totalorder %s91, %s92
    %p104 = scmp.eq.s32.totalorder %s19, 1
    %p105 = por %p103, %p104
    %p107 = scmp.ne.s32.totalorder %s92, %s106
    %p108 = scmp.eq.s32.totalorder %s19, 0
    %p109 = por %p107, %p108
    %s111 = sadd.s32 %s110, 1
    %p114 = scmp.eq.s32.totalorder %s13, 1
    %p115 = scmp.ne.s32.totalorder %s110, %s112
    %p116 = scmp.eq.s32.totalorder %s13, 0
    %p117 = por %p115, %p116
    %p118 = scmp.ne.s32.totalorder %s110, %s112
    %p119 = scmp.eq.s32.totalorder %s18, 1
    %p120 = por %p118, %p119
    %p121 = scmp.ne.s32.totalorder %s112, %s113
    %p122 = scmp.eq.s32.totalorder %s18, 0
    %p123 = por %p121, %p122
    %p124 = scmp.ne.s32.totalorder %s112, %s113
    %p125 = scmp.eq.s32.totalorder %s19, 1
    %p126 = por %p124, %p125
    %p128 = scmp.ne.s32.totalorder %s113, %s127
    %p129 = scmp.eq.s32.totalorder %s19, 0
    %p130 = por %p128, %p129
    %s132 = sadd.s32 %s131, 1
    %p135 = scmp.eq.s32.totalorder %s13, 1
    %p136 = scmp.ne.s32.totalorder %s131, %s133
    %p137 = scmp.eq.s32.totalorder %s13, 0
    %p138 = por %p136, %p137
    %p139 = scmp.ne.s32.totalorder %s131, %s133
    %p140 = scmp.eq.s32.totalorder %s18, 1
    %p141 = por %p139, %p140
    %p142 = scmp.ne.s32.totalorder %s133, %s134
    %p143 = scmp.eq.s32.totalorder %s18, 0
    %p144 = por %p142, %p143
    %p145 = scmp.ne.s32.totalorder %s133, %s134
    %p146 = scmp.eq.s32.totalorder %s19, 1
    %p147 = por %p145, %p146
    %p149 = scmp.ne.s32.totalorder %s134, %s148
    %p150 = scmp.eq.s32.totalorder %s19, 0
    %p151 = por %p149, %p150
    %s153 = sadd.s32 %s152, 1
    %p156 = scmp.eq.s32.totalorder %s13, 1
    %p157 = scmp.ne.s32.totalorder %s152, %s154
    %p158 = scmp.eq.s32.totalorder %s13, 0
    %p159 = por %p157, %p158
    %p160 = scmp.ne.s32.totalorder %s152, %s154
    %p161 = scmp.eq.s32.totalorder %s18, 1
    %p162 = por %p160, %p161
    %p163 = scmp.ne.s32.totalorder %s154, %s155
    %p164 = scmp.eq.s32.totalorder %s18, 0
    %p165 = por %p163, %p164
    %p166 = scmp.ne.s32.totalorder %s154, %s155
    %p167 = scmp.eq.s32.totalorder %s19, 1
    %p168 = por %p166, %p167
    %p170 = scmp.ne.s32.totalorder %s155, %s169
    %p171 = scmp.eq.s32.totalorder %s19, 0
    %p172 = por %p170, %p171
    %s173 = ssub.s32 %s13, %s20
    %p174 = scmp.eq.s32.totalorder %s173, 0
    %s176 = sadd.s32 %s175, 1
    %s177 = scalar_select %p174, %s175, %s176
    %p180 = pneg %p174
    %p181 = scmp.eq.s32.totalorder %s13, 1
    %p182 = por %p180, %p181
    %p183 = scmp.ne.s32.totalorder %s175, %s178
    %p184 = scmp.eq.s32.totalorder %s13, 0
    %p185 = por %p183, %p184
    %p186 = scmp.ne.s32.totalorder %s175, %s178
    %p187 = scmp.eq.s32.totalorder %s18, 1
    %p188 = por %p186, %p187
    %p189 = scmp.ne.s32.totalorder %s178, %s179
    %p190 = scmp.eq.s32.totalorder %s18, 0
    %p191 = por %p189, %p190
    %p192 = scmp.ne.s32.totalorder %s178, %s179
    %p193 = scmp.eq.s32.totalorder %s19, 1
    %p194 = por %p192, %p193
    %p196 = scmp.ne.s32.totalorder %s179, %s195
    %p197 = scmp.eq.s32.totalorder %s19, 0
    %p198 = por %p196, %p197
    %p199 = scmp.le.s32.totalorder 1, %s13
    %p200 = scmp.lt.s32.totalorder %s13, 3
    %p201 = pnand %p199, %p200
    %p202 = pneg %p201
    // Predicated region
    $region9: #{unet_decoder_forward.4} parent=5 // pred_check
      _
    $region10: #{unet_decoder_forward.4} parent=5 // pred_check_branch
      %204 = sbr.rel (%p201) target = $region12
    $region11: #{unet_decoder_forward.4} parent=5 // pred_region
      %s205 = ssub.s32 %s13, 1
      // Predicated region
      $region13: #{unet_decoder_forward.4} parent=11 // pred_check
        %p206 = pneg %p60
      $region14: #{unet_decoder_forward.4} parent=11 // pred_check_branch
        %208 = sbr.rel (%p206) target = $region16
      $region15: #{unet_decoder_forward.4} parent=11 // pred_region
        _
      $region16: #{unet_decoder_forward.4} parent=11 // pred_fallthru
        _
      // Predicated region
      $region17: #{unet_decoder_forward.4} parent=11 // pred_check
        %p209 = pneg %p81
      $region18: #{unet_decoder_forward.4} parent=11 // pred_check_branch
        %211 = sbr.rel (%p209) target = $region20
      $region19: #{unet_decoder_forward.4} parent=11 // pred_region
        _
      $region20: #{unet_decoder_forward.4} parent=11 // pred_fallthru
        _
      // Predicated region
      $region21: #{unet_decoder_forward.4} parent=11 // pred_check
        %p212 = pneg %p102
      $region22: #{unet_decoder_forward.4} parent=11 // pred_check_branch
        %214 = sbr.rel (%p212) target = $region24
      $region23: #{unet_decoder_forward.4} parent=11 // pred_region
        _
      $region24: #{unet_decoder_forward.4} parent=11 // pred_fallthru
        _
      // Predicated region
      $region25: #{unet_decoder_forward.4} parent=11 // pred_check
        %p215 = pneg %p123
      $region26: #{unet_decoder_forward.4} parent=11 // pred_check_branch
        %217 = sbr.rel (%p215) target = $region28
      $region27: #{unet_decoder_forward.4} parent=11 // pred_region
        _
      $region28: #{unet_decoder_forward.4} parent=11 // pred_fallthru
        _
      // Predicated region
      $region29: #{unet_decoder_forward.4} parent=11 // pred_check
        %p218 = pneg %p144
      $region30: #{unet_decoder_forward.4} parent=11 // pred_check_branch
        %220 = sbr.rel (%p218) target = $region32
      $region31: #{unet_decoder_forward.4} parent=11 // pred_region
        _
      $region32: #{unet_decoder_forward.4} parent=11 // pred_fallthru
        _
      // Predicated region
      $region33: #{unet_decoder_forward.4} parent=11 // pred_check
        %p221 = pneg %p165
      $region34: #{unet_decoder_forward.4} parent=11 // pred_check_branch
        %223 = sbr.rel (%p221) target = $region36
      $region35: #{unet_decoder_forward.4} parent=11 // pred_region
        _
      $region36: #{unet_decoder_forward.4} parent=11 // pred_fallthru
        _
    $region12: #{unet_decoder_forward.4} parent=5 // pred_fallthru
      _
    %p224 = scmp.lt.s32.totalorder %s13, 2
    // Predicated region
    $region37: #{unet_decoder_forward.4} parent=5 // pred_check
      %p225 = pneg %p224
    $region38: #{unet_decoder_forward.4} parent=5 // pred_check_branch
      %227 = sbr.rel (%p225) target = $region40
    $region39: #{unet_decoder_forward.4} parent=5 // pred_region
      // Predicated region
      $region41: #{unet_decoder_forward.4} parent=39 // pred_check
        %p228 = pneg %p33
      $region42: #{unet_decoder_forward.4} parent=39 // pred_check_branch
        %230 = sbr.rel (%p228) target = $region44
      $region43: #{unet_decoder_forward.4} parent=39 // pred_region
        %p231 = scmp.lt.s32.totalorder %s13, 1
        %s232 = scalar_select %p231, %s13, 1
        %s233 = smul.addr %s232, 6
        %s234 = smul.addr %s233, 8
        %s235 = scalar_lea.vmem %s0, %s234
      $region44: #{unet_decoder_forward.4} parent=39 // pred_fallthru
        _
    $region40: #{unet_decoder_forward.4} parent=5 // pred_fallthru
      _
    %p236 = scmp.le.s32.totalorder 1, %s13
    %p237 = scmp.lt.s32.totalorder %s13, 3
    %p238 = pnand %p236, %p237
    %p239 = pneg %p238
    // Predicated region
    $region45: #{unet_decoder_forward.4} parent=5 // pred_check
      _
    $region46: #{unet_decoder_forward.4} parent=5 // pred_check_branch
      %241 = sbr.rel (%p238) target = $region48
    $region47: #{unet_decoder_forward.4} parent=5 // pred_region
      %s242 = ssub.s32 %s13, 1
      %p243 = scmp.lt.s32.totalorder %s18, 1
      %s244 = scalar_select %p243, %s18, 1
      %s245 = smul.addr %s244, 6
      %s246 = smul.addr %s245, 8
      %s247 = scalar_lea.vmem %s0, %s246
      %p248 = pneg %p39
      %p249 = pneg %p36
      %p250 = pneg %p60
      %p251 = pneg %p57
      %p252 = pneg %p81
      %p253 = pneg %p78
      %p254 = pneg %p102
      %p255 = pneg %p99
      %p256 = pneg %p123
      %p257 = pneg %p120
      %p258 = pneg %p144
      %p259 = pneg %p141
      %p260 = pneg %p165
      %p261 = pneg %p162
      %p262 = pneg %p191
      %p263 = pneg %p188
      %p264 = scmp.lt.s32.totalorder %s18, 1
      %s265 = scalar_select %p264, %s18, 1
      %s266 = smul.addr %s265, 4
      %s267 = smul.addr %s266, 8
      %s268 = scalar_lea.vmem %s7, %s267
      %p269 = scmp.lt.s32.totalorder %s18, 1
      %s270 = scalar_select %p269, %s18, 1
      %s271 = smul.addr %s270, 6
      %s272 = smul.addr %s271, 8
      %s273 = scalar_lea.vmem %s0, %s272
      %p274 = scmp.lt.s32.totalorder %s18, 1
      %s275 = scalar_select %p274, %s18, 1
      %s276 = smul.addr %s275, 4
      %s277 = smul.addr %s276, 8
      %s278 = scalar_lea.vmem %s7, %s277
      %v279 = vld [vmem:[%s273] sm:$0xff]
      %v280 = vld [vmem:[%s273 + $0x8] sm:$0xff]
      %v281 = vld [vmem:[%s273 + $0x10] sm:$0xff]
      %v282 = vld [vmem:[%s273 + $0x18] sm:$0xff]
      %v283 = vld [vmem:[%s273 + $0x20] sm:$0xff]
      %v284 = vld [vmem:[%s273 + $0x28] sm:$0xff]
      %v285 = vld [vmem:[%s1] sm:$0xff]
      %s286 = scalar_lea.vmem %s1, 8
      %v287 = vld [vmem:[%s286] sm:$0xff]
      %294 = vrot.lane.b32.xlu0 %v279, 127
      %v295 = vpop.permute.xlu0 %294
      %296 = vrot.lane.b32.xlu0 %v280, 127
      %v297 = vpop.permute.xlu0 %296
      %298 = vrot.lane.b32.xlu0 %v281, 127
      %v299 = vpop.permute.xlu0 %298
      %300 = vrot.lane.b32.xlu0 %v282, 127
      %v301 = vpop.permute.xlu0 %300
      %302 = vrot.lane.b32.xlu0 %v283, 127
      %v303 = vpop.permute.xlu0 %302
      %304 = vrot.lane.b32.xlu0 %v284, 127
      %v305 = vpop.permute.xlu0 %304
      %vm306 = vcmask 1039360
      %v307 = vsel %vm306, %v295, %v297
      %v308 = vsel %vm306, %v297, %v299
      %v309 = vsel %vm306, %v301, %v303
      %v310 = vsel %vm306, %v303, %v305
      %vm317 = vcmask 130048
      %v319 = vsel %vm317, %v287, 0
      %321 = vmatprep.subr.mxu0 %v308
      %322 = vmatpush1.msra.mxu0 %v307
      %323 = vmatprep.subr.mxu0 %v310
      %324 = vmatpush1.msra.mxu0 %v309
      %325 = vmatprep.subr.mxu0 0.0
      %326 = vmatpush1.msra.mxu0 0.0
      %327 = vmatprep.subr.mxu0 0.0
      %328 = vmatpush1.msra.mxu0 0.0
      %329 = vmatprep.subr.mxu0 0.0
      %330 = vmatpush1.msra.mxu0 0.0
      %331 = vmatprep.subr.mxu0 0.0
      %332 = vmatpush1.msra.mxu0 0.0
      %333 = vmatprep.subr.mxu0 0.0
      %334 = vmatpush1.msra.mxu0 0.0
      %335 = vmatprep.subr.mxu0 0.0
      %336 = vmatpush1.msra.mxu0 0.0
      %337 = vmatprep.subr.mxu0 0.0
      %338 = vmatpush1.msra.mxu0 0.0
      %339 = vmatprep.subr.mxu0 0.0
      %340 = vmatpush1.msra.mxu0 0.0
      %341 = vmatprep.subr.mxu0 0.0
      %342 = vmatpush1.msra.mxu0 0.0
      %343 = vmatprep.subr.mxu0 0.0
      %344 = vmatpush1.msra.mxu0 0.0
      %345 = vmatprep.subr.mxu0 0.0
      %346 = vmatpush1.msra.mxu0 0.0
      %347 = vmatprep.subr.mxu0 0.0
      %348 = vmatpush1.msra.mxu0 0.0
      %349 = vmatprep.subr.mxu0 0.0
      %350 = vmatpush1.msra.mxu0 0.0
      %351 = vmatprep.subr.mxu0 0.0
      %352 = vmatpush1.msra.mxu0 0.0
      %353 = vmatprep.subr.mxu0 0.0
      %354 = vmatpush1.msra.mxu0 0.0
      %355 = vmatprep.subr.mxu0 0.0
      %356 = vmatpush1.msra.mxu0 0.0
      %357 = vmatprep.subr.mxu0 0.0
      %358 = vmatpush1.msra.mxu0 0.0
      %359 = vmatprep.subr.mxu0 0.0
      %360 = vmatpush1.msra.mxu0 0.0
      %361 = vmatprep.subr.mxu0 0.0
      %362 = vmatpush1.msra.mxu0 0.0
      %363 = vmatprep.subr.mxu0 0.0
      %364 = vmatpush1.msra.mxu0 0.0
      %365 = vmatprep.subr.mxu0 0.0
      %366 = vmatpush1.msra.mxu0 0.0
      %367 = vmatprep.subr.mxu0 0.0
      %368 = vmatpush1.msra.mxu0 0.0
      %369 = vmatprep.subr.mxu0 0.0
      %370 = vmatpush1.msra.mxu0 0.0
      %371 = vmatprep.subr.mxu0 0.0
      %372 = vmatpush1.msra.mxu0 0.0
      %373 = vmatprep.subr.mxu0 0.0
      %374 = vmatpush1.msra.mxu0 0.0
      %375 = vmatprep.subr.mxu0 0.0
      %376 = vmatpush1.msra.mxu0 0.0
      %377 = vmatprep.subr.mxu0 0.0
      %378 = vmatpush1.msra.mxu0 0.0
      %379 = vmatprep.subr.mxu0 0.0
      %380 = vmatpush1.msra.mxu0 0.0
      %381 = vmatprep.subr.mxu0 0.0
      %382 = vmatpush1.msra.mxu0 0.0
      %383 = vmatprep.subr.mxu0 0.0
      %384 = vmatpush1.msra.mxu0 0.0
      %385 = vmatprep.mubr.f32.mxu0 0.0
      %386 = vmatmul.mubr.f32.gmra.mrb[0].mxu0 %v319
      %v387 = vpop.f32.mrb[0].mxu0
      %v388 = vadd.f32 0.0, %v387
      %v389 = vpop.f32.mrb[0].mxu0
      %v390 = vadd.f32 0.0, %v389
      %391 = vdwg.mxu0
      %392 = vmatprep.subr.mxu0 0.0
      %393 = vmatpush1.msra.mxu0 %v299
      %394 = vmatprep.subr.mxu0 0.0
      %395 = vmatpush1.msra.mxu0 %v305
      %396 = vmatprep.subr.mxu0 0.0
      %397 = vmatpush1.msra.mxu0 0.0
      %398 = vmatprep.subr.mxu0 0.0
      %399 = vmatpush1.msra.mxu0 0.0
      %400 = vmatprep.subr.mxu0 0.0
      %401 = vmatpush1.msra.mxu0 0.0
      %402 = vmatprep.subr.mxu0 0.0
      %403 = vmatpush1.msra.mxu0 0.0
      %404 = vmatprep.subr.mxu0 0.0
      %405 = vmatpush1.msra.mxu0 0.0
      %406 = vmatprep.subr.mxu0 0.0
      %407 = vmatpush1.msra.mxu0 0.0
      %408 = vmatprep.subr.mxu0 0.0
      %409 = vmatpush1.msra.mxu0 0.0
      %410 = vmatprep.subr.mxu0 0.0
      %411 = vmatpush1.msra.mxu0 0.0
      %412 = vmatprep.subr.mxu0 0.0
      %413 = vmatpush1.msra.mxu0 0.0
      %414 = vmatprep.subr.mxu0 0.0
      %415 = vmatpush1.msra.mxu0 0.0
      %416 = vmatprep.subr.mxu0 0.0
      %417 = vmatpush1.msra.mxu0 0.0
      %418 = vmatprep.subr.mxu0 0.0
      %419 = vmatpush1.msra.mxu0 0.0
      %420 = vmatprep.subr.mxu0 0.0
      %421 = vmatpush1.msra.mxu0 0.0
      %422 = vmatprep.subr.mxu0 0.0
      %423 = vmatpush1.msra.mxu0 0.0
      %424 = vmatprep.subr.mxu0 0.0
      %425 = vmatpush1.msra.mxu0 0.0
      %426 = vmatprep.subr.mxu0 0.0
      %427 = vmatpush1.msra.mxu0 0.0
      %428 = vmatprep.subr.mxu0 0.0
      %429 = vmatpush1.msra.mxu0 0.0
      %430 = vmatprep.subr.mxu0 0.0
      %431 = vmatpush1.msra.mxu0 0.0
      %432 = vmatprep.subr.mxu0 0.0
      %433 = vmatpush1.msra.mxu0 0.0
      %434 = vmatprep.subr.mxu0 0.0
      %435 = vmatpush1.msra.mxu0 0.0
      %436 = vmatprep.subr.mxu0 0.0
      %437 = vmatpush1.msra.mxu0 0.0
      %438 = vmatprep.subr.mxu0 0.0
      %439 = vmatpush1.msra.mxu0 0.0
      %440 = vmatprep.subr.mxu0 0.0
      %441 = vmatpush1.msra.mxu0 0.0
      %442 = vmatprep.subr.mxu0 0.0
      %443 = vmatpush1.msra.mxu0 0.0
      %444 = vmatprep.subr.mxu0 0.0
      %445 = vmatpush1.msra.mxu0 0.0
      %446 = vmatprep.subr.mxu0 0.0
      %447 = vmatpush1.msra.mxu0 0.0
      %448 = vmatprep.subr.mxu0 0.0
      %449 = vmatpush1.msra.mxu0 0.0
      %450 = vmatprep.subr.mxu0 0.0
      %451 = vmatpush1.msra.mxu0 0.0
      %452 = vmatprep.subr.mxu0 0.0
      %453 = vmatpush1.msra.mxu0 0.0
      %454 = vmatprep.subr.mxu0 0.0
      %455 = vmatpush1.msra.mxu0 0.0
      %456 = vmatprep.mubr.f32.mxu0 0.0
      %457 = vmatmul.mubr.f32.gmra.mrb[0].mxu0 %v319
      %v458 = vpop.f32.mrb[0].mxu0
      %v459 = vadd.f32 0.0, %v458
      %v460 = vpop.f32.mrb[0].mxu0
      %461 = vdwg.mxu0
      %v463 = vsel %vm317, %v285, 0
      %465 = vmatprep.subr.mxu0 %v280
      %466 = vmatpush1.msra.mxu0 %v279
      %467 = vmatprep.subr.mxu0 %v283
      %468 = vmatpush1.msra.mxu0 %v282
      %469 = vmatprep.subr.mxu0 0.0
      %470 = vmatpush1.msra.mxu0 0.0
      %471 = vmatprep.subr.mxu0 0.0
      %472 = vmatpush1.msra.mxu0 0.0
      %473 = vmatprep.subr.mxu0 0.0
      %474 = vmatpush1.msra.mxu0 0.0
      %475 = vmatprep.subr.mxu0 0.0
      %476 = vmatpush1.msra.mxu0 0.0
      %477 = vmatprep.subr.mxu0 0.0
      %478 = vmatpush1.msra.mxu0 0.0
      %479 = vmatprep.subr.mxu0 0.0
      %480 = vmatpush1.msra.mxu0 0.0
      %481 = vmatprep.subr.mxu0 0.0
      %482 = vmatpush1.msra.mxu0 0.0
      %483 = vmatprep.subr.mxu0 0.0
      %484 = vmatpush1.msra.mxu0 0.0
      %485 = vmatprep.subr.mxu0 0.0
      %486 = vmatpush1.msra.mxu0 0.0
      %487 = vmatprep.subr.mxu0 0.0
      %488 = vmatpush1.msra.mxu0 0.0
      %489 = vmatprep.subr.mxu0 0.0
      %490 = vmatpush1.msra.mxu0 0.0
      %491 = vmatprep.subr.mxu0 0.0
      %492 = vmatpush1.msra.mxu0 0.0
      %493 = vmatprep.subr.mxu0 0.0
      %494 = vmatpush1.msra.mxu0 0.0
      %495 = vmatprep.subr.mxu0 0.0
      %496 = vmatpush1.msra.mxu0 0.0
      %497 = vmatprep.subr.mxu0 0.0
      %498 = vmatpush1.msra.mxu0 0.0
      %499 = vmatprep.subr.mxu0 0.0
      %500 = vmatpush1.msra.mxu0 0.0
      %501 = vmatprep.subr.mxu0 0.0
      %502 = vmatpush1.msra.mxu0 0.0
      %503 = vmatprep.subr.mxu0 0.0
      %504 = vmatpush1.msra.mxu0 0.0
      %505 = vmatprep.subr.mxu0 0.0
      %506 = vmatpush1.msra.mxu0 0.0
      %507 = vmatprep.subr.mxu0 0.0
      %508 = vmatpush1.msra.mxu0 0.0
      %509 = vmatprep.subr.mxu0 0.0
      %510 = vmatpush1.msra.mxu0 0.0
      %511 = vmatprep.subr.mxu0 0.0
      %512 = vmatpush1.msra.mxu0 0.0
      %513 = vmatprep.subr.mxu0 0.0
      %514 = vmatpush1.msra.mxu0 0.0
      %515 = vmatprep.subr.mxu0 0.0
      %516 = vmatpush1.msra.mxu0 0.0
      %517 = vmatprep.subr.mxu0 0.0
      %518 = vmatpush1.msra.mxu0 0.0
      %519 = vmatprep.subr.mxu0 0.0
      %520 = vmatpush1.msra.mxu0 0.0
      %521 = vmatprep.subr.mxu0 0.0
      %522 = vmatpush1.msra.mxu0 0.0
      %523 = vmatprep.subr.mxu0 0.0
      %524 = vmatpush1.msra.mxu0 0.0
      %525 = vmatprep.subr.mxu0 0.0
      %526 = vmatpush1.msra.mxu0 0.0
      %527 = vmatprep.subr.mxu0 0.0
      %528 = vmatpush1.msra.mxu0 0.0
      %529 = vmatprep.mubr.f32.mxu0 0.0
      %530 = vmatmul.mubr.f32.gmra.mrb[0].mxu0 %v463
      %v531 = vpop.f32.mrb[0].mxu0
      %v532 = vadd.f32 %v388, %v531
      %v533 = vpop.f32.mrb[0].mxu0
      %v534 = vadd.f32 %v390, %v533
      %535 = vdwg.mxu0
      %536 = vmatprep.subr.mxu0 0.0
      %537 = vmatpush1.msra.mxu0 %v281
      %538 = vmatprep.subr.mxu0 0.0
      %539 = vmatpush1.msra.mxu0 %v284
      %540 = vmatprep.subr.mxu0 0.0
      %541 = vmatpush1.msra.mxu0 0.0
      %542 = vmatprep.subr.mxu0 0.0
      %543 = vmatpush1.msra.mxu0 0.0
      %544 = vmatprep.subr.mxu0 0.0
      %545 = vmatpush1.msra.mxu0 0.0
      %546 = vmatprep.subr.mxu0 0.0
      %547 = vmatpush1.msra.mxu0 0.0
      %548 = vmatprep.subr.mxu0 0.0
      %549 = vmatpush1.msra.mxu0 0.0
      %550 = vmatprep.subr.mxu0 0.0
      %551 = vmatpush1.msra.mxu0 0.0
      %552 = vmatprep.subr.mxu0 0.0
      %553 = vmatpush1.msra.mxu0 0.0
      %554 = vmatprep.subr.mxu0 0.0
      %555 = vmatpush1.msra.mxu0 0.0
      %556 = vmatprep.subr.mxu0 0.0
      %557 = vmatpush1.msra.mxu0 0.0
      %558 = vmatprep.subr.mxu0 0.0
      %559 = vmatpush1.msra.mxu0 0.0
      %560 = vmatprep.subr.mxu0 0.0
      %561 = vmatpush1.msra.mxu0 0.0
      %562 = vmatprep.subr.mxu0 0.0
      %563 = vmatpush1.msra.mxu0 0.0
      %564 = vmatprep.subr.mxu0 0.0
      %565 = vmatpush1.msra.mxu0 0.0
      %566 = vmatprep.subr.mxu0 0.0
      %567 = vmatpush1.msra.mxu0 0.0
      %568 = vmatprep.subr.mxu0 0.0
      %569 = vmatpush1.msra.mxu0 0.0
      %570 = vmatprep.subr.mxu0 0.0
      %571 = vmatpush1.msra.mxu0 0.0
      %572 = vmatprep.subr.mxu0 0.0
      %573 = vmatpush1.msra.mxu0 0.0
      %574 = vmatprep.subr.mxu0 0.0
      %575 = vmatpush1.msra.mxu0 0.0
      %576 = vmatprep.subr.mxu0 0.0
      %577 = vmatpush1.msra.mxu0 0.0
      %578 = vmatprep.subr.mxu0 0.0
      %579 = vmatpush1.msra.mxu0 0.0
      %580 = vmatprep.subr.mxu0 0.0
      %581 = vmatpush1.msra.mxu0 0.0
      %582 = vmatprep.subr.mxu0 0.0
      %583 = vmatpush1.msra.mxu0 0.0
      %584 = vmatprep.subr.mxu0 0.0
      %585 = vmatpush1.msra.mxu0 0.0
      %586 = vmatprep.subr.mxu0 0.0
      %587 = vmatpush1.msra.mxu0 0.0
      %588 = vmatprep.subr.mxu0 0.0
      %589 = vmatpush1.msra.mxu0 0.0
      %590 = vmatprep.subr.mxu0 0.0
      %591 = vmatpush1.msra.mxu0 0.0
      %592 = vmatprep.subr.mxu0 0.0
      %593 = vmatpush1.msra.mxu0 0.0
      %594 = vmatprep.subr.mxu0 0.0
      %595 = vmatpush1.msra.mxu0 0.0
      %596 = vmatprep.subr.mxu0 0.0
      %597 = vmatpush1.msra.mxu0 0.0
      %598 = vmatprep.subr.mxu0 0.0
      %599 = vmatpush1.msra.mxu0 0.0
      %600 = vmatprep.mubr.f32.mxu0 0.0
      %601 = vmatmul.mubr.f32.gmra.mrb[0].mxu0 %v463
      %v602 = vpop.f32.mrb[0].mxu0
      %v603 = vadd.f32 %v459, %v602
      %v604 = vpop.f32.mrb[0].mxu0
      %605 = vdwg.mxu0
      %s606 = scalar_lea.vmem %s1, 16
      %v607 = vld [vmem:[%s606] sm:$0xff]
      %608 = vrot.lane.b32.xlu0 %v279, 126
      %v609 = vpop.permute.xlu0 %608
      %610 = vrot.lane.b32.xlu0 %v280, 126
      %v611 = vpop.permute.xlu0 %610
      %612 = vrot.lane.b32.xlu0 %v281, 126
      %v613 = vpop.permute.xlu0 %612
      %614 = vrot.lane.b32.xlu0 %v282, 126
      %v615 = vpop.permute.xlu0 %614
      %616 = vrot.lane.b32.xlu0 %v283, 126
      %v617 = vpop.permute.xlu0 %616
      %618 = vrot.lane.b32.xlu0 %v284, 126
      %v619 = vpop.permute.xlu0 %618
      %vm620 = vcmask 1031168
      %v621 = vsel %vm620, %v609, %v611
      %v622 = vsel %vm620, %v611, %v613
      %v623 = vsel %vm620, %v615, %v617
      %v624 = vsel %vm620, %v617, %v619
      %v632 = vsel %vm317, %v607, 0
      %634 = vmatprep.subr.mxu0 %v622
      %635 = vmatpush1.msra.mxu0 %v621
      %636 = vmatprep.subr.mxu0 %v624
      %637 = vmatpush1.msra.mxu0 %v623
      %638 = vmatprep.subr.mxu0 0.0
      %639 = vmatpush1.msra.mxu0 0.0
      %640 = vmatprep.subr.mxu0 0.0
      %641 = vmatpush1.msra.mxu0 0.0
      %642 = vmatprep.subr.mxu0 0.0
      %643 = vmatpush1.msra.mxu0 0.0
      %644 = vmatprep.subr.mxu0 0.0
      %645 = vmatpush1.msra.mxu0 0.0
      %646 = vmatprep.subr.mxu0 0.0
      %647 = vmatpush1.msra.mxu0 0.0
      %648 = vmatprep.subr.mxu0 0.0
      %649 = vmatpush1.msra.mxu0 0.0
      %650 = vmatprep.subr.mxu0 0.0
      %651 = vmatpush1.msra.mxu0 0.0
      %652 = vmatprep.subr.mxu0 0.0
      %653 = vmatpush1.msra.mxu0 0.0
      %654 = vmatprep.subr.mxu0 0.0
      %655 = vmatpush1.msra.mxu0 0.0
      %656 = vmatprep.subr.mxu0 0.0
      %657 = vmatpush1.msra.mxu0 0.0
      %658 = vmatprep.subr.mxu0 0.0
      %659 = vmatpush1.msra.mxu0 0.0
      %660 = vmatprep.subr.mxu0 0.0
      %661 = vmatpush1.msra.mxu0 0.0
      %662 = vmatprep.subr.mxu0 0.0
      %663 = vmatpush1.msra.mxu0 0.0
      %664 = vmatprep.subr.mxu0 0.0
      %665 = vmatpush1.msra.mxu0 0.0
      %666 = vmatprep.subr.mxu0 0.0
      %667 = vmatpush1.msra.mxu0 0.0
      %668 = vmatprep.subr.mxu0 0.0
      %669 = vmatpush1.msra.mxu0 0.0
      %670 = vmatprep.subr.mxu0 0.0
      %671 = vmatpush1.msra.mxu0 0.0
      %672 = vmatprep.subr.mxu0 0.0
      %673 = vmatpush1.msra.mxu0 0.0
      %674 = vmatprep.subr.mxu0 0.0
      %675 = vmatpush1.msra.mxu0 0.0
      %676 = vmatprep.subr.mxu0 0.0
      %677 = vmatpush1.msra.mxu0 0.0
      %678 = vmatprep.subr.mxu0 0.0
      %679 = vmatpush1.msra.mxu0 0.0
      %680 = vmatprep.subr.mxu0 0.0
      %681 = vmatpush1.msra.mxu0 0.0
      %682 = vmatprep.subr.mxu0 0.0
      %683 = vmatpush1.msra.mxu0 0.0
      %684 = vmatprep.subr.mxu0 0.0
      %685 = vmatpush1.msra.mxu0 0.0
      %686 = vmatprep.subr.mxu0 0.0
      %687 = vmatpush1.msra.mxu0 0.0
      %688 = vmatprep.subr.mxu0 0.0
      %689 = vmatpush1.msra.mxu0 0.0
      %690 = vmatprep.subr.mxu0 0.0
      %691 = vmatpush1.msra.mxu0 0.0
      %692 = vmatprep.subr.mxu0 0.0
      %693 = vmatpush1.msra.mxu0 0.0
      %694 = vmatprep.subr.mxu0 0.0
      %695 = vmatpush1.msra.mxu0 0.0
      %696 = vmatprep.subr.mxu0 0.0
      %697 = vmatpush1.msra.mxu0 0.0
      %698 = vmatprep.mubr.f32.mxu0 0.0
      %699 = vmatmul.mubr.f32.gmra.mrb[0].mxu0 %v632
      %v700 = vpop.f32.mrb[0].mxu0
      %v701 = vadd.f32 0.0, %v700
      %v702 = vpop.f32.mrb[0].mxu0
      %v703 = vadd.f32 0.0, %v702
      %704 = vdwg.mxu0
      %705 = vmatprep.subr.mxu0 0.0
      %706 = vmatpush1.msra.mxu0 %v613
      %707 = vmatprep.subr.mxu0 0.0
      %708 = vmatpush1.msra.mxu0 %v619
      %709 = vmatprep.subr.mxu0 0.0
      %710 = vmatpush1.msra.mxu0 0.0
      %711 = vmatprep.subr.mxu0 0.0
      %712 = vmatpush1.msra.mxu0 0.0
      %713 = vmatprep.subr.mxu0 0.0
      %714 = vmatpush1.msra.mxu0 0.0
      %715 = vmatprep.subr.mxu0 0.0
      %716 = vmatpush1.msra.mxu0 0.0
      %717 = vmatprep.subr.mxu0 0.0
      %718 = vmatpush1.msra.mxu0 0.0
      %719 = vmatprep.subr.mxu0 0.0
      %720 = vmatpush1.msra.mxu0 0.0
      %721 = vmatprep.subr.mxu0 0.0
      %722 = vmatpush1.msra.mxu0 0.0
      %723 = vmatprep.subr.mxu0 0.0
      %724 = vmatpush1.msra.mxu0 0.0
      %725 = vmatprep.subr.mxu0 0.0
      %726 = vmatpush1.msra.mxu0 0.0
      %727 = vmatprep.subr.mxu0 0.0
      %728 = vmatpush1.msra.mxu0 0.0
      %729 = vmatprep.subr.mxu0 0.0
      %730 = vmatpush1.msra.mxu0 0.0
      %731 = vmatprep.subr.mxu0 0.0
      %732 = vmatpush1.msra.mxu0 0.0
      %733 = vmatprep.subr.mxu0 0.0
      %734 = vmatpush1.msra.mxu0 0.0
      %735 = vmatprep.subr.mxu0 0.0
      %736 = vmatpush1.msra.mxu0 0.0
      %737 = vmatprep.subr.mxu0 0.0
      %738 = vmatpush1.msra.mxu0 0.0
      %739 = vmatprep.subr.mxu0 0.0
      %740 = vmatpush1.msra.mxu0 0.0
      %741 = vmatprep.subr.mxu0 0.0
      %742 = vmatpush1.msra.mxu0 0.0
      %743 = vmatprep.subr.mxu0 0.0
      %744 = vmatpush1.msra.mxu0 0.0
      %745 = vmatprep.subr.mxu0 0.0
      %746 = vmatpush1.msra.mxu0 0.0
      %747 = vmatprep.subr.mxu0 0.0
      %748 = vmatpush1.msra.mxu0 0.0
      %749 = vmatprep.subr.mxu0 0.0
      %750 = vmatpush1.msra.mxu0 0.0
      %751 = vmatprep.subr.mxu0 0.0
      %752 = vmatpush1.msra.mxu0 0.0
      %753 = vmatprep.subr.mxu0 0.0
      %754 = vmatpush1.msra.mxu0 0.0
      %755 = vmatprep.subr.mxu0 0.0
      %756 = vmatpush1.msra.mxu0 0.0
      %757 = vmatprep.subr.mxu0 0.0
      %758 = vmatpush1.msra.mxu0 0.0
      %759 = vmatprep.subr.mxu0 0.0
      %760 = vmatpush1.msra.mxu0 0.0
      %761 = vmatprep.subr.mxu0 0.0
      %762 = vmatpush1.msra.mxu0 0.0
      %763 = vmatprep.subr.mxu0 0.0
      %764 = vmatpush1.msra.mxu0 0.0
      %765 = vmatprep.subr.mxu0 0.0
      %766 = vmatpush1.msra.mxu0 0.0
      %767 = vmatprep.subr.mxu0 0.0
      %768 = vmatpush1.msra.mxu0 0.0
      %769 = vmatprep.mubr.f32.mxu0 0.0
      %770 = vmatmul.mubr.f32.gmra.mrb[0].mxu0 %v632
      %v771 = vpop.f32.mrb[0].mxu0
      %v772 = vadd.f32 0.0, %v771
      %v773 = vpop.f32.mrb[0].mxu0
      %774 = vdwg.mxu0
      %v775 = vadd.f32 %v532, %v701
      %v776 = vadd.f32 %v534, %v703
      %v777 = vadd.f32 %v603, %v772
      %s778 = scalar_lea.vmem %s1, 24
      %v779 = vld [vmem:[%s778] sm:$0xff]
      %780 = vrot.lane.b32.xlu0 %v279, 112
      %v781 = vpop.permute.xlu0 %780
      %782 = vrot.lane.b32.xlu0 %v280, 112
      %v783 = vpop.permute.xlu0 %782
      %784 = vrot.lane.b32.xlu0 %v281, 112
      %v785 = vpop.permute.xlu0 %784
      %786 = vrot.lane.b32.xlu0 %v282, 112
      %v787 = vpop.permute.xlu0 %786
      %788 = vrot.lane.b32.xlu0 %v283, 112
      %v789 = vpop.permute.xlu0 %788
      %790 = vrot.lane.b32.xlu0 %v284, 112
      %v791 = vpop.permute.xlu0 %790
      %vm792 = vcmask 916480
      %v793 = vsel %vm792, %v781, %v783
      %v794 = vsel %vm792, %v783, %v785
      %v795 = vsel %vm792, %v787, %v789
      %v796 = vsel %vm792, %v789, %v791
      %v804 = vsel %vm317, %v779, 0
      %806 = vmatprep.subr.mxu0 %v794
      %807 = vmatpush1.msra.mxu0 %v793
      %808 = vmatprep.subr.mxu0 %v796
      %809 = vmatpush1.msra.mxu0 %v795
      %810 = vmatprep.subr.mxu0 0.0
      %811 = vmatpush1.msra.mxu0 0.0
      %812 = vmatprep.subr.mxu0 0.0
      %813 = vmatpush1.msra.mxu0 0.0
      %814 = vmatprep.subr.mxu0 0.0
      %815 = vmatpush1.msra.mxu0 0.0
      %816 = vmatprep.subr.mxu0 0.0
      %817 = vmatpush1.msra.mxu0 0.0
      %818 = vmatprep.subr.mxu0 0.0
      %819 = vmatpush1.msra.mxu0 0.0
      %820 = vmatprep.subr.mxu0 0.0
      %821 = vmatpush1.msra.mxu0 0.0
      %822 = vmatprep.subr.mxu0 0.0
      %823 = vmatpush1.msra.mxu0 0.0
      %824 = vmatprep.subr.mxu0 0.0
      %825 = vmatpush1.msra.mxu0 0.0
      %826 = vmatprep.subr.mxu0 0.0
      %827 = vmatpush1.msra.mxu0 0.0
      %828 = vmatprep.subr.mxu0 0.0
      %829 = vmatpush1.msra.mxu0 0.0
      %830 = vmatprep.subr.mxu0 0.0
      %831 = vmatpush1.msra.mxu0 0.0
      %832 = vmatprep.subr.mxu0 0.0
      %833 = vmatpush1.msra.mxu0 0.0
      %834 = vmatprep.subr.mxu0 0.0
      %835 = vmatpush1.msra.mxu0 0.0
      %836 = vmatprep.subr.mxu0 0.0
      %837 = vmatpush1.msra.mxu0 0.0
      %838 = vmatprep.subr.mxu0 0.0
      %839 = vmatpush1.msra.mxu0 0.0
      %840 = vmatprep.subr.mxu0 0.0
      %841 = vmatpush1.msra.mxu0 0.0
      %842 = vmatprep.subr.mxu0 0.0
      %843 = vmatpush1.msra.mxu0 0.0
      %844 = vmatprep.subr.mxu0 0.0
      %845 = vmatpush1.msra.mxu0 0.0
      %846 = vmatprep.subr.mxu0 0.0
      %847 = vmatpush1.msra.mxu0 0.0
      %848 = vmatprep.subr.mxu0 0.0
      %849 = vmatpush1.msra.mxu0 0.0
      %850 = vmatprep.subr.mxu0 0.0
      %851 = vmatpush1.msra.mxu0 0.0
      %852 = vmatprep.subr.mxu0 0.0
      %853 = vmatpush1.msra.mxu0 0.0
      %854 = vmatprep.subr.mxu0 0.0
      %855 = vmatpush1.msra.mxu0 0.0
      %856 = vmatprep.subr.mxu0 0.0
      %857 = vmatpush1.msra.mxu0 0.0
      %858 = vmatprep.subr.mxu0 0.0
      %859 = vmatpush1.msra.mxu0 0.0
      %860 = vmatprep.subr.mxu0 0.0
      %861 = vmatpush1.msra.mxu0 0.0
      %862 = vmatprep.subr.mxu0 0.0
      %863 = vmatpush1.msra.mxu0 0.0
      %864 = vmatprep.subr.mxu0 0.0
      %865 = vmatpush1.msra.mxu0 0.0
      %866 = vmatprep.subr.mxu0 0.0
      %867 = vmatpush1.msra.mxu0 0.0
      %868 = vmatprep.subr.mxu0 0.0
      %869 = vmatpush1.msra.mxu0 0.0
      %870 = vmatprep.mubr.f32.mxu0 0.0
      %871 = vmatmul.mubr.f32.gmra.mrb[0].mxu0 %v804
      %v872 = vpop.f32.mrb[0].mxu0
      %v873 = vadd.f32 0.0, %v872
      %v874 = vpop.f32.mrb[0].mxu0
      %v875 = vadd.f32 0.0, %v874
      %876 = vdwg.mxu0
      %877 = vmatprep.subr.mxu0 0.0
      %878 = vmatpush1.msra.mxu0 %v785
      %879 = vmatprep.subr.mxu0 0.0
      %880 = vmatpush1.msra.mxu0 %v791
      %881 = vmatprep.subr.mxu0 0.0
      %882 = vmatpush1.msra.mxu0 0.0
      %883 = vmatprep.subr.mxu0 0.0
      %884 = vmatpush1.msra.mxu0 0.0
      %885 = vmatprep.subr.mxu0 0.0
      %886 = vmatpush1.msra.mxu0 0.0
      %887 = vmatprep.subr.mxu0 0.0
      %888 = vmatpush1.msra.mxu0 0.0
      %889 = vmatprep.subr.mxu0 0.0
      %890 = vmatpush1.msra.mxu0 0.0
      %891 = vmatprep.subr.mxu0 0.0
      %892 = vmatpush1.msra.mxu0 0.0
      %893 = vmatprep.subr.mxu0 0.0
      %894 = vmatpush1.msra.mxu0 0.0
      %895 = vmatprep.subr.mxu0 0.0
      %896 = vmatpush1.msra.mxu0 0.0
      %897 = vmatprep.subr.mxu0 0.0
      %898 = vmatpush1.msra.mxu0 0.0
      %899 = vmatprep.subr.mxu0 0.0
      %900 = vmatpush1.msra.mxu0 0.0
      %901 = vmatprep.subr.mxu0 0.0
      %902 = vmatpush1.msra.mxu0 0.0
      %903 = vmatprep.subr.mxu0 0.0
      %904 = vmatpush1.msra.mxu0 0.0
      %905 = vmatprep.subr.mxu0 0.0
      %906 = vmatpush1.msra.mxu0 0.0
      %907 = vmatprep.subr.mxu0 0.0
      %908 = vmatpush1.msra.mxu0 0.0
      %909 = vmatprep.subr.mxu0 0.0
      %910 = vmatpush1.msra.mxu0 0.0
      %911 = vmatprep.subr.mxu0 0.0
      %912 = vmatpush1.msra.mxu0 0.0
      %913 = vmatprep.subr.mxu0 0.0
      %914 = vmatpush1.msra.mxu0 0.0
      %915 = vmatprep.subr.mxu0 0.0
      %916 = vmatpush1.msra.mxu0 0.0
      %917 = vmatprep.subr.mxu0 0.0
      %918 = vmatpush1.msra.mxu0 0.0
      %919 = vmatprep.subr.mxu0 0.0
      %920 = vmatpush1.msra.mxu0 0.0
      %921 = vmatprep.subr.mxu0 0.0
      %922 = vmatpush1.msra.mxu0 0.0
      %923 = vmatprep.subr.mxu0 0.0
      %924 = vmatpush1.msra.mxu0 0.0
      %925 = vmatprep.subr.mxu0 0.0
      %926 = vmatpush1.msra.mxu0 0.0
      %927 = vmatprep.subr.mxu0 0.0
      %928 = vmatpush1.msra.mxu0 0.0
      %929 = vmatprep.subr.mxu0 0.0
      %930 = vmatpush1.msra.mxu0 0.0
      %931 = vmatprep.subr.mxu0 0.0
      %932 = vmatpush1.msra.mxu0 0.0
      %933 = vmatprep.subr.mxu0 0.0
      %934 = vmatpush1.msra.mxu0 0.0
      %935 = vmatprep.subr.mxu0 0.0
      %936 = vmatpush1.msra.mxu0 0.0
      %937 = vmatprep.subr.mxu0 0.0
      %938 = vmatpush1.msra.mxu0 0.0
      %939 = vmatprep.subr.mxu0 0.0
      %940 = vmatpush1.msra.mxu0 0.0
      %941 = vmatprep.mubr.f32.mxu0 0.0
      %942 = vmatmul.mubr.f32.gmra.mrb[0].mxu0 %v804
      %v943 = vpop.f32.mrb[0].mxu0
      %v944 = vadd.f32 0.0, %v943
      %v945 = vpop.f32.mrb[0].mxu0
      %946 = vdwg.mxu0
      %v947 = vadd.f32 %v775, %v873
      %v948 = vadd.f32 %v776, %v875
      %v949 = vadd.f32 %v777, %v944
      %s950 = scalar_lea.vmem %s1, 32
      %v951 = vld [vmem:[%s950] sm:$0xff]
      %952 = vrot.lane.b32.xlu0 %v279, 111
      %v953 = vpop.permute.xlu0 %952
      %954 = vrot.lane.b32.xlu0 %v280, 111
      %v955 = vpop.permute.xlu0 %954
      %956 = vrot.lane.b32.xlu0 %v281, 111
      %v957 = vpop.permute.xlu0 %956
      %958 = vrot.lane.b32.xlu0 %v282, 111
      %v959 = vpop.permute.xlu0 %958
      %960 = vrot.lane.b32.xlu0 %v283, 111
      %v961 = vpop.permute.xlu0 %960
      %962 = vrot.lane.b32.xlu0 %v284, 111
      %v963 = vpop.permute.xlu0 %962
      %vm964 = vcmask 908288
      %v965 = vsel %vm964, %v953, %v955
      %v966 = vsel %vm964, %v955, %v957
      %v967 = vsel %vm964, %v959, %v961
      %v968 = vsel %vm964, %v961, %v963
      %v976 = vsel %vm317, %v951, 0
      %978 = vmatprep.subr.mxu0 %v966
      %979 = vmatpush1.msra.mxu0 %v965
      %980 = vmatprep.subr.mxu0 %v968
      %981 = vmatpush1.msra.mxu0 %v967
      %982 = vmatprep.subr.mxu0 0.0
      %983 = vmatpush1.msra.mxu0 0.0
      %984 = vmatprep.subr.mxu0 0.0
      %985 = vmatpush1.msra.mxu0 0.0
      %986 = vmatprep.subr.mxu0 0.0
      %987 = vmatpush1.msra.mxu0 0.0
      %988 = vmatprep.subr.mxu0 0.0
      %989 = vmatpush1.msra.mxu0 0.0
      %990 = vmatprep.subr.mxu0 0.0
      %991 = vmatpush1.msra.mxu0 0.0
      %992 = vmatprep.subr.mxu0 0.0
      %993 = vmatpush1.msra.mxu0 0.0
      %994 = vmatprep.subr.mxu0 0.0
      %995 = vmatpush1.msra.mxu0 0.0
      %996 = vmatprep.subr.mxu0 0.0
      %997 = vmatpush1.msra.mxu0 0.0
      %998 = vmatprep.subr.mxu0 0.0
      %999 = vmatpush1.msra.mxu0 0.0
      %1000 = vmatprep.subr.mxu0 0.0
      %1001 = vmatpush1.msra.mxu0 0.0
      %1002 = vmatprep.subr.mxu0 0.0
      %1003 = vmatpush1.msra.mxu0 0.0
      %1004 = vmatprep.subr.mxu0 0.0
      %1005 = vmatpush1.msra.mxu0 0.0
      %1006 = vmatprep.subr.mxu0 0.0
      %1007 = vmatpush1.msra.mxu0 0.0
      %1008 = vmatprep.subr.mxu0 0.0
      %1009 = vmatpush1.msra.mxu0 0.0
      %1010 = vmatprep.subr.mxu0 0.0
      %1011 = vmatpush1.msra.mxu0 0.0
      %1012 = vmatprep.subr.mxu0 0.0
      %1013 = vmatpush1.msra.mxu0 0.0
      %1014 = vmatprep.subr.mxu0 0.0
      %1015 = vmatpush1.msra.mxu0 0.0
      %1016 = vmatprep.subr.mxu0 0.0
      %1017 = vmatpush1.msra.mxu0 0.0
      %1018 = vmatprep.subr.mxu0 0.0
      %1019 = vmatpush1.msra.mxu0 0.0
      %1020 = vmatprep.subr.mxu0 0.0
      %1021 = vmatpush1.msra.mxu0 0.0
      %1022 = vmatprep.subr.mxu0 0.0
      %1023 = vmatpush1.msra.mxu0 0.0
      %1024 = vmatprep.subr.mxu0 0.0
      %1025 = vmatpush1.msra.mxu0 0.0
      %1026 = vmatprep.subr.mxu0 0.0
      %1027 = vmatpush1.msra.mxu0 0.0
      %1028 = vmatprep.subr.mxu0 0.0
      %1029 = vmatpush1.msra.mxu0 0.0
      %1030 = vmatprep.subr.mxu0 0.0
      %1031 = vmatpush1.msra.mxu0 0.0
      %1032 = vmatprep.subr.mxu0 0.0
      %1033 = vmatpush1.msra.mxu0 0.0
      %1034 = vmatprep.subr.mxu0 0.0
      %1035 = vmatpush1.msra.mxu0 0.0
      %1036 = vmatprep.subr.mxu0 0.0
      %1037 = vmatpush1.msra.mxu0 0.0
      %1038 = vmatprep.subr.mxu0 0.0
      %1039 = vmatpush1.msra.mxu0 0.0
      %1040 = vmatprep.subr.mxu0 0.0
      %1041 = vmatpush1.msra.mxu0 0.0
      %1042 = vmatprep.mubr.f32.mxu0 0.0
      %1043 = vmatmul.mubr.f32.gmra.mrb[0].mxu0 %v976
      %v1044 = vpop.f32.mrb[0].mxu0
      %v1045 = vadd.f32 0.0, %v1044
      %v1046 = vpop.f32.mrb[0].mxu0
      %v1047 = vadd.f32 0.0, %v1046
      %1048 = vdwg.mxu0
      %1049 = vmatprep.subr.mxu0 0.0
      %1050 = vmatpush1.msra.mxu0 %v957
      %1051 = vmatprep.subr.mxu0 0.0
      %1052 = vmatpush1.msra.mxu0 %v963
      %1053 = vmatprep.subr.mxu0 0.0
      %1054 = vmatpush1.msra.mxu0 0.0
      %1055 = vmatprep.subr.mxu0 0.0
      %1056 = vmatpush1.msra.mxu0 0.0
      %1057 = vmatprep.subr.mxu0 0.0
      %1058 = vmatpush1.msra.mxu0 0.0
      %1059 = vmatprep.subr.mxu0 0.0
      %1060 = vmatpush1.msra.mxu0 0.0
      %1061 = vmatprep.subr.mxu0 0.0
      %1062 = vmatpush1.msra.mxu0 0.0
      %1063 = vmatprep.subr.mxu0 0.0
      %1064 = vmatpush1.msra.mxu0 0.0
      %1065 = vmatprep.subr.mxu0 0.0
      %1066 = vmatpush1.msra.mxu0 0.0
      %1067 = vmatprep.subr.mxu0 0.0
      %1068 = vmatpush1.msra.mxu0 0.0
      %1069 = vmatprep.subr.mxu0 0.0
      %1070 = vmatpush1.msra.mxu0 0.0
      %1071 = vmatprep.subr.mxu0 0.0
      %1072 = vmatpush1.msra.mxu0 0.0
      %1073 = vmatprep.subr.mxu0 0.0
      %1074 = vmatpush1.msra.mxu0 0.0
      %1075 = vmatprep.subr.mxu0 0.0
      %1076 = vmatpush1.msra.mxu0 0.0
      %1077 = vmatprep.subr.mxu0 0.0
      %1078 = vmatpush1.msra.mxu0 0.0
      %1079 = vmatprep.subr.mxu0 0.0
      %1080 = vmatpush1.msra.mxu0 0.0
      %1081 = vmatprep.subr.mxu0 0.0
      %1082 = vmatpush1.msra.mxu0 0.0
      %1083 = vmatprep.subr.mxu0 0.0
      %1084 = vmatpush1.msra.mxu0 0.0
      %1085 = vmatprep.subr.mxu0 0.0
      %1086 = vmatpush1.msra.mxu0 0.0
      %1087 = vmatprep.subr.mxu0 0.0
      %1088 = vmatpush1.msra.mxu0 0.0
      %1089 = vmatprep.subr.mxu0 0.0
      %1090 = vmatpush1.msra.mxu0 0.0
      %1091 = vmatprep.subr.mxu0 0.0
      %1092 = vmatpush1.msra.mxu0 0.0
      %1093 = vmatprep.subr.mxu0 0.0
      %1094 = vmatpush1.msra.mxu0 0.0
      %1095 = vmatprep.subr.mxu0 0.0
      %1096 = vmatpush1.msra.mxu0 0.0
      %1097 = vmatprep.subr.mxu0 0.0
      %1098 = vmatpush1.msra.mxu0 0.0
      %1099 = vmatprep.subr.mxu0 0.0
      %1100 = vmatpush1.msra.mxu0 0.0
      %1101 = vmatprep.subr.mxu0 0.0
      %1102 = vmatpush1.msra.mxu0 0.0
      %1103 = vmatprep.subr.mxu0 0.0
      %1104 = vmatpush1.msra.mxu0 0.0
      %1105 = vmatprep.subr.mxu0 0.0
      %1106 = vmatpush1.msra.mxu0 0.0
      %1107 = vmatprep.subr.mxu0 0.0
      %1108 = vmatpush1.msra.mxu0 0.0
      %1109 = vmatprep.subr.mxu0 0.0
      %1110 = vmatpush1.msra.mxu0 0.0
      %1111 = vmatprep.subr.mxu0 0.0
      %1112 = vmatpush1.msra.mxu0 0.0
      %1113 = vmatprep.mubr.f32.mxu0 0.0
      %1114 = vmatmul.mubr.f32.gmra.mrb[0].mxu0 %v976
      %v1115 = vpop.f32.mrb[0].mxu0
      %v1116 = vadd.f32 0.0, %v1115
      %v1117 = vpop.f32.mrb[0].mxu0
      %1118 = vdwg.mxu0
      %v1119 = vadd.f32 %v947, %v1045
      %v1120 = vadd.f32 %v948, %v1047
      %v1121 = vadd.f32 %v949, %v1116
      %s1122 = scalar_lea.vmem %s1, 40
      %v1123 = vld [vmem:[%s1122] sm:$0xff]
      %1124 = vrot.lane.b32.xlu0 %v279, 110
      %v1125 = vpop.permute.xlu0 %1124
      %1126 = vrot.lane.b32.xlu0 %v280, 110
      %v1127 = vpop.permute.xlu0 %1126
      %1128 = vrot.lane.b32.xlu0 %v281, 110
      %v1129 = vpop.permute.xlu0 %1128
      %1130 = vrot.lane.b32.xlu0 %v282, 110
      %v1131 = vpop.permute.xlu0 %1130
      %1132 = vrot.lane.b32.xlu0 %v283, 110
      %v1133 = vpop.permute.xlu0 %1132
      %1134 = vrot.lane.b32.xlu0 %v284, 110
      %v1135 = vpop.permute.xlu0 %1134
      %vm1136 = vcmask 900096
      %v1137 = vsel %vm1136, %v1125, %v1127
      %v1138 = vsel %vm1136, %v1127, %v1129
      %v1139 = vsel %vm1136, %v1131, %v1133
      %v1140 = vsel %vm1136, %v1133, %v1135
      %v1148 = vsel %vm317, %v1123, 0
      %1150 = vmatprep.subr.mxu0 %v1138
      %1151 = vmatpush1.msra.mxu0 %v1137
      %1152 = vmatprep.subr.mxu0 %v1140
      %1153 = vmatpush1.msra.mxu0 %v1139
      %1154 = vmatprep.subr.mxu0 0.0
      %1155 = vmatpush1.msra.mxu0 0.0
      %1156 = vmatprep.subr.mxu0 0.0
      %1157 = vmatpush1.msra.mxu0 0.0
      %1158 = vmatprep.subr.mxu0 0.0
      %1159 = vmatpush1.msra.mxu0 0.0
      %1160 = vmatprep.subr.mxu0 0.0
      %1161 = vmatpush1.msra.mxu0 0.0
      %1162 = vmatprep.subr.mxu0 0.0
      %1163 = vmatpush1.msra.mxu0 0.0
      %1164 = vmatprep.subr.mxu0 0.0
      %1165 = vmatpush1.msra.mxu0 0.0
      %1166 = vmatprep.subr.mxu0 0.0
      %1167 = vmatpush1.msra.mxu0 0.0
      %1168 = vmatprep.subr.mxu0 0.0
      %1169 = vmatpush1.msra.mxu0 0.0
      %1170 = vmatprep.subr.mxu0 0.0
      %1171 = vmatpush1.msra.mxu0 0.0
      %1172 = vmatprep.subr.mxu0 0.0
      %1173 = vmatpush1.msra.mxu0 0.0
      %1174 = vmatprep.subr.mxu0 0.0
      %1175 = vmatpush1.msra.mxu0 0.0
      %1176 = vmatprep.subr.mxu0 0.0
      %1177 = vmatpush1.msra.mxu0 0.0
      %1178 = vmatprep.subr.mxu0 0.0
      %1179 = vmatpush1.msra.mxu0 0.0
      %1180 = vmatprep.subr.mxu0 0.0
      %1181 = vmatpush1.msra.mxu0 0.0
      %1182 = vmatprep.subr.mxu0 0.0
      %1183 = vmatpush1.msra.mxu0 0.0
      %1184 = vmatprep.subr.mxu0 0.0
      %1185 = vmatpush1.msra.mxu0 0.0
      %1186 = vmatprep.subr.mxu0 0.0
      %1187 = vmatpush1.msra.mxu0 0.0
      %1188 = vmatprep.subr.mxu0 0.0
      %1189 = vmatpush1.msra.mxu0 0.0
      %1190 = vmatprep.subr.mxu0 0.0
      %1191 = vmatpush1.msra.mxu0 0.0
      %1192 = vmatprep.subr.mxu0 0.0
      %1193 = vmatpush1.msra.mxu0 0.0
      %1194 = vmatprep.subr.mxu0 0.0
      %1195 = vmatpush1.msra.mxu0 0.0
      %1196 = vmatprep.subr.mxu0 0.0
      %1197 = vmatpush1.msra.mxu0 0.0
      %1198 = vmatprep.subr.mxu0 0.0
      %1199 = vmatpush1.msra.mxu0 0.0
      %1200 = vmatprep.subr.mxu0 0.0
      %1201 = vmatpush1.msra.mxu0 0.0
      %1202 = vmatprep.subr.mxu0 0.0
      %1203 = vmatpush1.msra.mxu0 0.0
      %1204 = vmatprep.subr.mxu0 0.0
      %1205 = vmatpush1.msra.mxu0 0.0
      %1206 = vmatprep.subr.mxu0 0.0
      %1207 = vmatpush1.msra.mxu0 0.0
      %1208 = vmatprep.subr.mxu0 0.0
      %1209 = vmatpush1.msra.mxu0 0.0
      %1210 = vmatprep.subr.mxu0 0.0
      %1211 = vmatpush1.msra.mxu0 0.0
      %1212 = vmatprep.subr.mxu0 0.0
      %1213 = vmatpush1.msra.mxu0 0.0
      %1214 = vmatprep.mubr.f32.mxu0 0.0
      %1215 = vmatmul.mubr.f32.gmra.mrb[0].mxu0 %v1148
      %v1216 = vpop.f32.mrb[0].mxu0
      %v1217 = vadd.f32 0.0, %v1216
      %v1218 = vpop.f32.mrb[0].mxu0
      %v1219 = vadd.f32 0.0, %v1218
      %1220 = vdwg.mxu0
      %1221 = vmatprep.subr.mxu0 0.0
      %1222 = vmatpush1.msra.mxu0 %v1129
      %1223 = vmatprep.subr.mxu0 0.0
      %1224 = vmatpush1.msra.mxu0 %v1135
      %1225 = vmatprep.subr.mxu0 0.0
      %1226 = vmatpush1.msra.mxu0 0.0
      %1227 = vmatprep.subr.mxu0 0.0
      %1228 = vmatpush1.msra.mxu0 0.0
      %1229 = vmatprep.subr.mxu0 0.0
      %1230 = vmatpush1.msra.mxu0 0.0
      %1231 = vmatprep.subr.mxu0 0.0
      %1232 = vmatpush1.msra.mxu0 0.0
      %1233 = vmatprep.subr.mxu0 0.0
      %1234 = vmatpush1.msra.mxu0 0.0
      %1235 = vmatprep.subr.mxu0 0.0
      %1236 = vmatpush1.msra.mxu0 0.0
      %1237 = vmatprep.subr.mxu0 0.0
      %1238 = vmatpush1.msra.mxu0 0.0
      %1239 = vmatprep.subr.mxu0 0.0
      %1240 = vmatpush1.msra.mxu0 0.0
      %1241 = vmatprep.subr.mxu0 0.0
      %1242 = vmatpush1.msra.mxu0 0.0
      %1243 = vmatprep.subr.mxu0 0.0
      %1244 = vmatpush1.msra.mxu0 0.0
      %1245 = vmatprep.subr.mxu0 0.0
      %1246 = vmatpush1.msra.mxu0 0.0
      %1247 = vmatprep.subr.mxu0 0.0
      %1248 = vmatpush1.msra.mxu0 0.0
      %1249 = vmatprep.subr.mxu0 0.0
      %1250 = vmatpush1.msra.mxu0 0.0
      %1251 = vmatprep.subr.mxu0 0.0
      %1252 = vmatpush1.msra.mxu0 0.0
      %1253 = vmatprep.subr.mxu0 0.0
      %1254 = vmatpush1.msra.mxu0 0.0
      %1255 = vmatprep.subr.mxu0 0.0
      %1256 = vmatpush1.msra.mxu0 0.0
      %1257 = vmatprep.subr.mxu0 0.0
      %1258 = vmatpush1.msra.mxu0 0.0
      %1259 = vmatprep.subr.mxu0 0.0
      %1260 = vmatpush1.msra.mxu0 0.0
      %1261 = vmatprep.subr.mxu0 0.0
      %1262 = vmatpush1.msra.mxu0 0.0
      %1263 = vmatprep.subr.mxu0 0.0
      %1264 = vmatpush1.msra.mxu0 0.0
      %1265 = vmatprep.subr.mxu0 0.0
      %1266 = vmatpush1.msra.mxu0 0.0
      %1267 = vmatprep.subr.mxu0 0.0
      %1268 = vmatpush1.msra.mxu0 0.0
      %1269 = vmatprep.subr.mxu0 0.0
      %1270 = vmatpush1.msra.mxu0 0.0
      %1271 = vmatprep.subr.mxu0 0.0
      %1272 = vmatpush1.msra.mxu0 0.0
      %1273 = vmatprep.subr.mxu0 0.0
      %1274 = vmatpush1.msra.mxu0 0.0
      %1275 = vmatprep.subr.mxu0 0.0
      %1276 = vmatpush1.msra.mxu0 0.0
      %1277 = vmatprep.subr.mxu0 0.0
      %1278 = vmatpush1.msra.mxu0 0.0
      %1279 = vmatprep.subr.mxu0 0.0
      %1280 = vmatpush1.msra.mxu0 0.0
      %1281 = vmatprep.subr.mxu0 0.0
      %1282 = vmatpush1.msra.mxu0 0.0
      %1283 = vmatprep.subr.mxu0 0.0
      %1284 = vmatpush1.msra.mxu0 0.0
      %1285 = vmatprep.mubr.f32.mxu0 0.0
      %1286 = vmatmul.mubr.f32.gmra.mrb[0].mxu0 %v1148
      %v1287 = vpop.f32.mrb[0].mxu0
      %v1288 = vadd.f32 0.0, %v1287
      %v1289 = vpop.f32.mrb[0].mxu0
      %1290 = vdwg.mxu0
      %v1291 = vadd.f32 %v1119, %v1217
      %v1292 = vadd.f32 %v1120, %v1219
      %v1293 = vadd.f32 %v1121, %v1288
      %s1294 = scalar_lea.vmem %s1, 48
      %v1295 = vld [vmem:[%s1294] sm:$0xff]
      %1296 = vrot.lane.b32.xlu0 %v279, 96
      %v1297 = vpop.permute.xlu0 %1296
      %1298 = vrot.lane.b32.xlu0 %v280, 96
      %v1299 = vpop.permute.xlu0 %1298
      %1300 = vrot.lane.b32.xlu0 %v281, 96
      %v1301 = vpop.permute.xlu0 %1300
      %1302 = vrot.lane.b32.xlu0 %v282, 96
      %v1303 = vpop.permute.xlu0 %1302
      %1304 = vrot.lane.b32.xlu0 %v283, 96
      %v1305 = vpop.permute.xlu0 %1304
      %1306 = vrot.lane.b32.xlu0 %v284, 96
      %v1307 = vpop.permute.xlu0 %1306
      %vm1308 = vcmask 785408
      %v1309 = vsel %vm1308, %v1297, %v1299
      %v1310 = vsel %vm1308, %v1299, %v1301
      %v1311 = vsel %vm1308, %v1303, %v1305
      %v1312 = vsel %vm1308, %v1305, %v1307
      %v1320 = vsel %vm317, %v1295, 0
      %1322 = vmatprep.subr.mxu0 %v1310
      %1323 = vmatpush1.msra.mxu0 %v1309
      %1324 = vmatprep.subr.mxu0 %v1312
      %1325 = vmatpush1.msra.mxu0 %v1311
      %1326 = vmatprep.subr.mxu0 0.0
      %1327 = vmatpush1.msra.mxu0 0.0
      %1328 = vmatprep.subr.mxu0 0.0
      %1329 = vmatpush1.msra.mxu0 0.0
      %1330 = vmatprep.subr.mxu0 0.0
      %1331 = vmatpush1.msra.mxu0 0.0
      %1332 = vmatprep.subr.mxu0 0.0
      %1333 = vmatpush1.msra.mxu0 0.0
      %1334 = vmatprep.subr.mxu0 0.0
      %1335 = vmatpush1.msra.mxu0 0.0
      %1336 = vmatprep.subr.mxu0 0.0
      %1337 = vmatpush1.msra.mxu0 0.0
      %1338 = vmatprep.subr.mxu0 0.0
      %1339 = vmatpush1.msra.mxu0 0.0
      %1340 = vmatprep.subr.mxu0 0.0
      %1341 = vmatpush1.msra.mxu0 0.0
      %1342 = vmatprep.subr.mxu0 0.0
      %1343 = vmatpush1.msra.mxu0 0.0
      %1344 = vmatprep.subr.mxu0 0.0
      %1345 = vmatpush1.msra.mxu0 0.0
      %1346 = vmatprep.subr.mxu0 0.0
      %1347 = vmatpush1.msra.mxu0 0.0
      %1348 = vmatprep.subr.mxu0 0.0
      %1349 = vmatpush1.msra.mxu0 0.0
      %1350 = vmatprep.subr.mxu0 0.0
      %1351 = vmatpush1.msra.mxu0 0.0
      %1352 = vmatprep.subr.mxu0 0.0
      %1353 = vmatpush1.msra.mxu0 0.0
      %1354 = vmatprep.subr.mxu0 0.0
      %1355 = vmatpush1.msra.mxu0 0.0
      %1356 = vmatprep.subr.mxu0 0.0
      %1357 = vmatpush1.msra.mxu0 0.0
      %1358 = vmatprep.subr.mxu0 0.0
      %1359 = vmatpush1.msra.mxu0 0.0
      %1360 = vmatprep.subr.mxu0 0.0
      %1361 = vmatpush1.msra.mxu0 0.0
      %1362 = vmatprep.subr.mxu0 0.0
      %1363 = vmatpush1.msra.mxu0 0.0
      %1364 = vmatprep.subr.mxu0 0.0
      %1365 = vmatpush1.msra.mxu0 0.0
      %1366 = vmatprep.subr.mxu0 0.0
      %1367 = vmatpush1.msra.mxu0 0.0
      %1368 = vmatprep.subr.mxu0 0.0
      %1369 = vmatpush1.msra.mxu0 0.0
      %1370 = vmatprep.subr.mxu0 0.0
      %1371 = vmatpush1.msra.mxu0 0.0
      %1372 = vmatprep.subr.mxu0 0.0
      %1373 = vmatpush1.msra.mxu0 0.0
      %1374 = vmatprep.subr.mxu0 0.0
      %1375 = vmatpush1.msra.mxu0 0.0
      %1376 = vmatprep.subr.mxu0 0.0
      %1377 = vmatpush1.msra.mxu0 0.0
      %1378 = vmatprep.subr.mxu0 0.0
      %1379 = vmatpush1.msra.mxu0 0.0
      %1380 = vmatprep.subr.mxu0 0.0
      %1381 = vmatpush1.msra.mxu0 0.0
      %1382 = vmatprep.subr.mxu0 0.0
      %1383 = vmatpush1.msra.mxu0 0.0
      %1384 = vmatprep.subr.mxu0 0.0
      %1385 = vmatpush1.msra.mxu0 0.0
      %1386 = vmatprep.mubr.f32.mxu0 0.0
      %1387 = vmatmul.mubr.f32.gmra.mrb[0].mxu0 %v1320
      %v1388 = vpop.f32.mrb[0].mxu0
      %v1389 = vadd.f32 0.0, %v1388
      %v1390 = vpop.f32.mrb[0].mxu0
      %v1391 = vadd.f32 0.0, %v1390
      %1392 = vdwg.mxu0
      %1393 = vmatprep.subr.mxu0 0.0
      %1394 = vmatpush1.msra.mxu0 %v1301
      %1395 = vmatprep.subr.mxu0 0.0
      %1396 = vmatpush1.msra.mxu0 %v1307
      %1397 = vmatprep.subr.mxu0 0.0
      %1398 = vmatpush1.msra.mxu0 0.0
      %1399 = vmatprep.subr.mxu0 0.0
      %1400 = vmatpush1.msra.mxu0 0.0
      %1401 = vmatprep.subr.mxu0 0.0
      %1402 = vmatpush1.msra.mxu0 0.0
      %1403 = vmatprep.subr.mxu0 0.0
      %1404 = vmatpush1.msra.mxu0 0.0
      %1405 = vmatprep.subr.mxu0 0.0
      %1406 = vmatpush1.msra.mxu0 0.0
      %1407 = vmatprep.subr.mxu0 0.0
      %1408 = vmatpush1.msra.mxu0 0.0
      %1409 = vmatprep.subr.mxu0 0.0
      %1410 = vmatpush1.msra.mxu0 0.0
      %1411 = vmatprep.subr.mxu0 0.0
      %1412 = vmatpush1.msra.mxu0 0.0
      %1413 = vmatprep.subr.mxu0 0.0
      %1414 = vmatpush1.msra.mxu0 0.0
      %1415 = vmatprep.subr.mxu0 0.0
      %1416 = vmatpush1.msra.mxu0 0.0
      %1417 = vmatprep.subr.mxu0 0.0
      %1418 = vmatpush1.msra.mxu0 0.0
      %1419 = vmatprep.subr.mxu0 0.0
      %1420 = vmatpush1.msra.mxu0 0.0
      %1421 = vmatprep.subr.mxu0 0.0
      %1422 = vmatpush1.msra.mxu0 0.0
      %1423 = vmatprep.subr.mxu0 0.0
      %1424 = vmatpush1.msra.mxu0 0.0
      %1425 = vmatprep.subr.mxu0 0.0
      %1426 = vmatpush1.msra.mxu0 0.0
      %1427 = vmatprep.subr.mxu0 0.0
      %1428 = vmatpush1.msra.mxu0 0.0
      %1429 = vmatprep.subr.mxu0 0.0
      %1430 = vmatpush1.msra.mxu0 0.0
      %1431 = vmatprep.subr.mxu0 0.0
      %1432 = vmatpush1.msra.mxu0 0.0
      %1433 = vmatprep.subr.mxu0 0.0
      %1434 = vmatpush1.msra.mxu0 0.0
      %1435 = vmatprep.subr.mxu0 0.0
      %1436 = vmatpush1.msra.mxu0 0.0
      %1437 = vmatprep.subr.mxu0 0.0
      %1438 = vmatpush1.msra.mxu0 0.0
      %1439 = vmatprep.subr.mxu0 0.0
      %1440 = vmatpush1.msra.mxu0 0.0
      %1441 = vmatprep.subr.mxu0 0.0
      %1442 = vmatpush1.msra.mxu0 0.0
      %1443 = vmatprep.subr.mxu0 0.0
      %1444 = vmatpush1.msra.mxu0 0.0
      %1445 = vmatprep.subr.mxu0 0.0
      %1446 = vmatpush1.msra.mxu0 0.0
      %1447 = vmatprep.subr.mxu0 0.0
      %1448 = vmatpush1.msra.mxu0 0.0
      %1449 = vmatprep.subr.mxu0 0.0
      %1450 = vmatpush1.msra.mxu0 0.0
      %1451 = vmatprep.subr.mxu0 0.0
      %1452 = vmatpush1.msra.mxu0 0.0
      %1453 = vmatprep.subr.mxu0 0.0
      %1454 = vmatpush1.msra.mxu0 0.0
      %1455 = vmatprep.subr.mxu0 0.0
      %1456 = vmatpush1.msra.mxu0 0.0
      %1457 = vmatprep.mubr.f32.mxu0 0.0
      %1458 = vmatmul.mubr.f32.gmra.mrb[0].mxu0 %v1320
      %v1459 = vpop.f32.mrb[0].mxu0
      %v1460 = vadd.f32 0.0, %v1459
      %v1461 = vpop.f32.mrb[0].mxu0
      %1462 = vdwg.mxu0
      %v1463 = vadd.f32 %v1291, %v1389
      %v1464 = vadd.f32 %v1292, %v1391
      %v1465 = vadd.f32 %v1293, %v1460
      %s1466 = scalar_lea.vmem %s1, 56
      %v1467 = vld [vmem:[%s1466] sm:$0xff]
      %1468 = vrot.lane.b32.xlu0 %v279, 95
      %v1469 = vpop.permute.xlu0 %1468
      %1470 = vrot.lane.b32.xlu0 %v280, 95
      %v1471 = vpop.permute.xlu0 %1470
      %1472 = vrot.lane.b32.xlu0 %v281, 95
      %v1473 = vpop.permute.xlu0 %1472
      %1474 = vrot.lane.b32.xlu0 %v282, 95
      %v1475 = vpop.permute.xlu0 %1474
      %1476 = vrot.lane.b32.xlu0 %v283, 95
      %v1477 = vpop.permute.xlu0 %1476
      %1478 = vrot.lane.b32.xlu0 %v284, 95
      %v1479 = vpop.permute.xlu0 %1478
      %vm1480 = vcmask 777216
      %v1481 = vsel %vm1480, %v1469, %v1471
      %v1482 = vsel %vm1480, %v1471, %v1473
      %v1483 = vsel %vm1480, %v1475, %v1477
      %v1484 = vsel %vm1480, %v1477, %v1479
      %v1492 = vsel %vm317, %v1467, 0
      %1494 = vmatprep.subr.mxu0 %v1482
      %1495 = vmatpush1.msra.mxu0 %v1481
      %1496 = vmatprep.subr.mxu0 %v1484
      %1497 = vmatpush1.msra.mxu0 %v1483
      %1498 = vmatprep.subr.mxu0 0.0
      %1499 = vmatpush1.msra.mxu0 0.0
      %1500 = vmatprep.subr.mxu0 0.0
      %1501 = vmatpush1.msra.mxu0 0.0
      %1502 = vmatprep.subr.mxu0 0.0
      %1503 = vmatpush1.msra.mxu0 0.0
      %1504 = vmatprep.subr.mxu0 0.0
      %1505 = vmatpush1.msra.mxu0 0.0
      %1506 = vmatprep.subr.mxu0 0.0
      %1507 = vmatpush1.msra.mxu0 0.0
      %1508 = vmatprep.subr.mxu0 0.0
      %1509 = vmatpush1.msra.mxu0 0.0
      %1510 = vmatprep.subr.mxu0 0.0
      %1511 = vmatpush1.msra.mxu0 0.0
      %1512 = vmatprep.subr.mxu0 0.0
      %1513 = vmatpush1.msra.mxu0 0.0
      %1514 = vmatprep.subr.mxu0 0.0
      %1515 = vmatpush1.msra.mxu0 0.0
      %1516 = vmatprep.subr.mxu0 0.0
      %1517 = vmatpush1.msra.mxu0 0.0
      %1518 = vmatprep.subr.mxu0 0.0
      %1519 = vmatpush1.msra.mxu0 0.0
      %1520 = vmatprep.subr.mxu0 0.0
      %1521 = vmatpush1.msra.mxu0 0.0
      %1522 = vmatprep.subr.mxu0 0.0
      %1523 = vmatpush1.msra.mxu0 0.0
      %1524 = vmatprep.subr.mxu0 0.0
      %1525 = vmatpush1.msra.mxu0 0.0
      %1526 = vmatprep.subr.mxu0 0.0
      %1527 = vmatpush1.msra.mxu0 0.0
      %1528 = vmatprep.subr.mxu0 0.0
      %1529 = vmatpush1.msra.mxu0 0.0
      %1530 = vmatprep.subr.mxu0 0.0
      %1531 = vmatpush1.msra.mxu0 0.0
      %1532 = vmatprep.subr.mxu0 0.0
      %1533 = vmatpush1.msra.mxu0 0.0
      %1534 = vmatprep.subr.mxu0 0.0
      %1535 = vmatpush1.msra.mxu0 0.0
      %1536 = vmatprep.subr.mxu0 0.0
      %1537 = vmatpush1.msra.mxu0 0.0
      %1538 = vmatprep.subr.mxu0 0.0
      %1539 = vmatpush1.msra.mxu0 0.0
      %1540 = vmatprep.subr.mxu0 0.0
      %1541 = vmatpush1.msra.mxu0 0.0
      %1542 = vmatprep.subr.mxu0 0.0
      %1543 = vmatpush1.msra.mxu0 0.0
      %1544 = vmatprep.subr.mxu0 0.0
      %1545 = vmatpush1.msra.mxu0 0.0
      %1546 = vmatprep.subr.mxu0 0.0
      %1547 = vmatpush1.msra.mxu0 0.0
      %1548 = vmatprep.subr.mxu0 0.0
      %1549 = vmatpush1.msra.mxu0 0.0
      %1550 = vmatprep.subr.mxu0 0.0
      %1551 = vmatpush1.msra.mxu0 0.0
      %1552 = vmatprep.subr.mxu0 0.0
      %1553 = vmatpush1.msra.mxu0 0.0
      %1554 = vmatprep.subr.mxu0 0.0
      %1555 = vmatpush1.msra.mxu0 0.0
      %1556 = vmatprep.subr.mxu0 0.0
      %1557 = vmatpush1.msra.mxu0 0.0
      %1558 = vmatprep.mubr.f32.mxu0 0.0
      %1559 = vmatmul.mubr.f32.gmra.mrb[0].mxu0 %v1492
      %v1560 = vpop.f32.mrb[0].mxu0
      %v1561 = vadd.f32 0.0, %v1560
      %v1562 = vpop.f32.mrb[0].mxu0
      %v1563 = vadd.f32 0.0, %v1562
      %1564 = vdwg.mxu0
      %1565 = vmatprep.subr.mxu0 0.0
      %1566 = vmatpush1.msra.mxu0 %v1473
      %1567 = vmatprep.subr.mxu0 0.0
      %1568 = vmatpush1.msra.mxu0 %v1479
      %1569 = vmatprep.subr.mxu0 0.0
      %1570 = vmatpush1.msra.mxu0 0.0
      %1571 = vmatprep.subr.mxu0 0.0
      %1572 = vmatpush1.msra.mxu0 0.0
      %1573 = vmatprep.subr.mxu0 0.0
      %1574 = vmatpush1.msra.mxu0 0.0
      %1575 = vmatprep.subr.mxu0 0.0
      %1576 = vmatpush1.msra.mxu0 0.0
      %1577 = vmatprep.subr.mxu0 0.0
      %1578 = vmatpush1.msra.mxu0 0.0
      %1579 = vmatprep.subr.mxu0 0.0
      %1580 = vmatpush1.msra.mxu0 0.0
      %1581 = vmatprep.subr.mxu0 0.0
      %1582 = vmatpush1.msra.mxu0 0.0
      %1583 = vmatprep.subr.mxu0 0.0
      %1584 = vmatpush1.msra.mxu0 0.0
      %1585 = vmatprep.subr.mxu0 0.0
      %1586 = vmatpush1.msra.mxu0 0.0
      %1587 = vmatprep.subr.mxu0 0.0
      %1588 = vmatpush1.msra.mxu0 0.0
      %1589 = vmatprep.subr.mxu0 0.0
      %1590 = vmatpush1.msra.mxu0 0.0
      %1591 = vmatprep.subr.mxu0 0.0
      %1592 = vmatpush1.msra.mxu0 0.0
      %1593 = vmatprep.subr.mxu0 0.0
      %1594 = vmatpush1.msra.mxu0 0.0
      %1595 = vmatprep.subr.mxu0 0.0
      %1596 = vmatpush1.msra.mxu0 0.0
      %1597 = vmatprep.subr.mxu0 0.0
      %1598 = vmatpush1.msra.mxu0 0.0
      %1599 = vmatprep.subr.mxu0 0.0
      %1600 = vmatpush1.msra.mxu0 0.0
      %1601 = vmatprep.subr.mxu0 0.0
      %1602 = vmatpush1.msra.mxu0 0.0
      %1603 = vmatprep.subr.mxu0 0.0
      %1604 = vmatpush1.msra.mxu0 0.0
      %1605 = vmatprep.subr.mxu0 0.0
      %1606 = vmatpush1.msra.mxu0 0.0
      %1607 = vmatprep.subr.mxu0 0.0
      %1608 = vmatpush1.msra.mxu0 0.0
      %1609 = vmatprep.subr.mxu0 0.0
      %1610 = vmatpush1.msra.mxu0 0.0
      %1611 = vmatprep.subr.mxu0 0.0
      %1612 = vmatpush1.msra.mxu0 0.0
      %1613 = vmatprep.subr.mxu0 0.0
      %1614 = vmatpush1.msra.mxu0 0.0
      %1615 = vmatprep.subr.mxu0 0.0
      %1616 = vmatpush1.msra.mxu0 0.0
      %1617 = vmatprep.subr.mxu0 0.0
      %1618 = vmatpush1.msra.mxu0 0.0
      %1619 = vmatprep.subr.mxu0 0.0
      %1620 = vmatpush1.msra.mxu0 0.0
      %1621 = vmatprep.subr.mxu0 0.0
      %1622 = vmatpush1.msra.mxu0 0.0
      %1623 = vmatprep.subr.mxu0 0.0
      %1624 = vmatpush1.msra.mxu0 0.0
      %1625 = vmatprep.subr.mxu0 0.0
      %1626 = vmatpush1.msra.mxu0 0.0
      %1627 = vmatprep.subr.mxu0 0.0
      %1628 = vmatpush1.msra.mxu0 0.0
      %1629 = vmatprep.mubr.f32.mxu0 0.0
      %1630 = vmatmul.mubr.f32.gmra.mrb[0].mxu0 %v1492
      %v1631 = vpop.f32.mrb[0].mxu0
      %v1632 = vadd.f32 0.0, %v1631
      %v1633 = vpop.f32.mrb[0].mxu0
      %1634 = vdwg.mxu0
      %v1635 = vadd.f32 %v1463, %v1561
      %v1636 = vadd.f32 %v1464, %v1563
      %v1637 = vadd.f32 %v1465, %v1632
      %s1638 = scalar_lea.vmem %s1, 64
      %v1639 = vld [vmem:[%s1638] sm:$0xff]
      %1640 = vrot.lane.b32.xlu0 %v279, 94
      %v1641 = vpop.permute.xlu0 %1640
      %1642 = vrot.lane.b32.xlu0 %v280, 94
      %v1643 = vpop.permute.xlu0 %1642
      %1644 = vrot.lane.b32.xlu0 %v281, 94
      %v1645 = vpop.permute.xlu0 %1644
      %1646 = vrot.lane.b32.xlu0 %v282, 94
      %v1647 = vpop.permute.xlu0 %1646
      %1648 = vrot.lane.b32.xlu0 %v283, 94
      %v1649 = vpop.permute.xlu0 %1648
      %1650 = vrot.lane.b32.xlu0 %v284, 94
      %v1651 = vpop.permute.xlu0 %1650
      %vm1652 = vcmask 769024
      %v1653 = vsel %vm1652, %v1641, %v1643
      %v1654 = vsel %vm1652, %v1643, %v1645
      %v1655 = vsel %vm1652, %v1647, %v1649
      %v1656 = vsel %vm1652, %v1649, %v1651
      %v1664 = vsel %vm317, %v1639, 0
      %1666 = vmatprep.subr.mxu0 %v1654
      %1667 = vmatpush1.msra.mxu0 %v1653
      %1668 = vmatprep.subr.mxu0 %v1656
      %1669 = vmatpush1.msra.mxu0 %v1655
      %1670 = vmatprep.subr.mxu0 0.0
      %1671 = vmatpush1.msra.mxu0 0.0
      %1672 = vmatprep.subr.mxu0 0.0
      %1673 = vmatpush1.msra.mxu0 0.0
      %1674 = vmatprep.subr.mxu0 0.0
      %1675 = vmatpush1.msra.mxu0 0.0
      %1676 = vmatprep.subr.mxu0 0.0
      %1677 = vmatpush1.msra.mxu0 0.0
      %1678 = vmatprep.subr.mxu0 0.0
      %1679 = vmatpush1.msra.mxu0 0.0
      %1680 = vmatprep.subr.mxu0 0.0
      %1681 = vmatpush1.msra.mxu0 0.0
      %1682 = vmatprep.subr.mxu0 0.0
      %1683 = vmatpush1.msra.mxu0 0.0
      %1684 = vmatprep.subr.mxu0 0.0
      %1685 = vmatpush1.msra.mxu0 0.0
      %1686 = vmatprep.subr.mxu0 0.0
      %1687 = vmatpush1.msra.mxu0 0.0
      %1688 = vmatprep.subr.mxu0 0.0
      %1689 = vmatpush1.msra.mxu0 0.0
      %1690 = vmatprep.subr.mxu0 0.0
      %1691 = vmatpush1.msra.mxu0 0.0
      %1692 = vmatprep.subr.mxu0 0.0
      %1693 = vmatpush1.msra.mxu0 0.0
      %1694 = vmatprep.subr.mxu0 0.0
      %1695 = vmatpush1.msra.mxu0 0.0
      %1696 = vmatprep.subr.mxu0 0.0
      %1697 = vmatpush1.msra.mxu0 0.0
      %1698 = vmatprep.subr.mxu0 0.0
      %1699 = vmatpush1.msra.mxu0 0.0
      %1700 = vmatprep.subr.mxu0 0.0
      %1701 = vmatpush1.msra.mxu0 0.0
      %1702 = vmatprep.subr.mxu0 0.0
      %1703 = vmatpush1.msra.mxu0 0.0
      %1704 = vmatprep.subr.mxu0 0.0
      %1705 = vmatpush1.msra.mxu0 0.0
      %1706 = vmatprep.subr.mxu0 0.0
      %1707 = vmatpush1.msra.mxu0 0.0
      %1708 = vmatprep.subr.mxu0 0.0
      %1709 = vmatpush1.msra.mxu0 0.0
      %1710 = vmatprep.subr.mxu0 0.0
      %1711 = vmatpush1.msra.mxu0 0.0
      %1712 = vmatprep.subr.mxu0 0.0
      %1713 = vmatpush1.msra.mxu0 0.0
      %1714 = vmatprep.subr.mxu0 0.0
      %1715 = vmatpush1.msra.mxu0 0.0
      %1716 = vmatprep.subr.mxu0 0.0
      %1717 = vmatpush1.msra.mxu0 0.0
      %1718 = vmatprep.subr.mxu0 0.0
      %1719 = vmatpush1.msra.mxu0 0.0
      %1720 = vmatprep.subr.mxu0 0.0
      %1721 = vmatpush1.msra.mxu0 0.0
      %1722 = vmatprep.subr.mxu0 0.0
      %1723 = vmatpush1.msra.mxu0 0.0
      %1724 = vmatprep.subr.mxu0 0.0
      %1725 = vmatpush1.msra.mxu0 0.0
      %1726 = vmatprep.subr.mxu0 0.0
      %1727 = vmatpush1.msra.mxu0 0.0
      %1728 = vmatprep.subr.mxu0 0.0
      %1729 = vmatpush1.msra.mxu0 0.0
      %1730 = vmatprep.mubr.f32.mxu0 0.0
      %1731 = vmatmul.mubr.f32.gmra.mrb[0].mxu0 %v1664
      %v1732 = vpop.f32.mrb[0].mxu0
      %v1733 = vadd.f32 0.0, %v1732
      %v1734 = vpop.f32.mrb[0].mxu0
      %v1735 = vadd.f32 0.0, %v1734
      %1736 = vdwg.mxu0
      %1737 = vmatprep.subr.mxu0 0.0
      %1738 = vmatpush1.msra.mxu0 %v1645
      %1739 = vmatprep.subr.mxu0 0.0
      %1740 = vmatpush1.msra.mxu0 %v1651
      %1741 = vmatprep.subr.mxu0 0.0
      %1742 = vmatpush1.msra.mxu0 0.0
      %1743 = vmatprep.subr.mxu0 0.0
      %1744 = vmatpush1.msra.mxu0 0.0
      %1745 = vmatprep.subr.mxu0 0.0
      %1746 = vmatpush1.msra.mxu0 0.0
      %1747 = vmatprep.subr.mxu0 0.0
      %1748 = vmatpush1.msra.mxu0 0.0
      %1749 = vmatprep.subr.mxu0 0.0
      %1750 = vmatpush1.msra.mxu0 0.0
      %1751 = vmatprep.subr.mxu0 0.0
      %1752 = vmatpush1.msra.mxu0 0.0
      %1753 = vmatprep.subr.mxu0 0.0
      %1754 = vmatpush1.msra.mxu0 0.0
      %1755 = vmatprep.subr.mxu0 0.0
      %1756 = vmatpush1.msra.mxu0 0.0
      %1757 = vmatprep.subr.mxu0 0.0
      %1758 = vmatpush1.msra.mxu0 0.0
      %1759 = vmatprep.subr.mxu0 0.0
      %1760 = vmatpush1.msra.mxu0 0.0
      %1761 = vmatprep.subr.mxu0 0.0
      %1762 = vmatpush1.msra.mxu0 0.0
      %1763 = vmatprep.subr.mxu0 0.0
      %1764 = vmatpush1.msra.mxu0 0.0
      %1765 = vmatprep.subr.mxu0 0.0
      %1766 = vmatpush1.msra.mxu0 0.0
      %1767 = vmatprep.subr.mxu0 0.0
      %1768 = vmatpush1.msra.mxu0 0.0
      %1769 = vmatprep.subr.mxu0 0.0
      %1770 = vmatpush1.msra.mxu0 0.0
      %1771 = vmatprep.subr.mxu0 0.0
      %1772 = vmatpush1.msra.mxu0 0.0
      %1773 = vmatprep.subr.mxu0 0.0
      %1774 = vmatpush1.msra.mxu0 0.0
      %1775 = vmatprep.subr.mxu0 0.0
      %1776 = vmatpush1.msra.mxu0 0.0
      %1777 = vmatprep.subr.mxu0 0.0
      %1778 = vmatpush1.msra.mxu0 0.0
      %1779 = vmatprep.subr.mxu0 0.0
      %1780 = vmatpush1.msra.mxu0 0.0
      %1781 = vmatprep.subr.mxu0 0.0
      %1782 = vmatpush1.msra.mxu0 0.0
      %1783 = vmatprep.subr.mxu0 0.0
      %1784 = vmatpush1.msra.mxu0 0.0
      %1785 = vmatprep.subr.mxu0 0.0
      %1786 = vmatpush1.msra.mxu0 0.0
      %1787 = vmatprep.subr.mxu0 0.0
      %1788 = vmatpush1.msra.mxu0 0.0
      %1789 = vmatprep.subr.mxu0 0.0
      %1790 = vmatpush1.msra.mxu0 0.0
      %1791 = vmatprep.subr.mxu0 0.0
      %1792 = vmatpush1.msra.mxu0 0.0
      %1793 = vmatprep.subr.mxu0 0.0
      %1794 = vmatpush1.msra.mxu0 0.0
      %1795 = vmatprep.subr.mxu0 0.0
      %1796 = vmatpush1.msra.mxu0 0.0
      %1797 = vmatprep.subr.mxu0 0.0
      %1798 = vmatpush1.msra.mxu0 0.0
      %1799 = vmatprep.subr.mxu0 0.0
      %1800 = vmatpush1.msra.mxu0 0.0
      %1801 = vmatprep.mubr.f32.mxu0 0.0
      %1802 = vmatmul.mubr.f32.gmra.mrb[0].mxu0 %v1664
      %v1803 = vpop.f32.mrb[0].mxu0
      %v1804 = vadd.f32 0.0, %v1803
      %v1805 = vpop.f32.mrb[0].mxu0
      %1806 = vdwg.mxu0
      %v1807 = vadd.f32 %v1635, %v1733
      %v1808 = vadd.f32 %v1636, %v1735
      %v1809 = vadd.f32 %v1637, %v1804
      %v1810 = vld [vmem:[%s2] sm:$0xff]
      %1812 = vset.pattern.permute.xlu0 0
      %1813 = vperm.xlu0 %1812, %v1810
      %v1814 = vpop.permute.xlu0 %1813
      %v1816 = vadd.f32 %v1807, %v1814
      %v1817 = vadd.f32 %v1808, %v1814
      %v1818 = vadd.f32 %v1809, %v1814
      %v1819 = vmax.f32 %v1816, 0.0
      %v1820 = vmax.f32 %v1817, 0.0
      %v1821 = vmax.f32 %v1818, 0.0
      %v1822 = vld [vmem:[%s3] sm:$0xff]
      %s1823 = scalar_lea.vmem %s3, 8
      %v1824 = vld [vmem:[%s1823] sm:$0xff]
      %1828 = vrot.lane.b32.xlu0 %v1819, 127
      %v1829 = vpop.permute.xlu0 %1828
      %1830 = vrot.lane.b32.xlu0 %v1820, 127
      %v1831 = vpop.permute.xlu0 %1830
      %1832 = vrot.lane.b32.xlu0 %v1821, 127
      %v1833 = vpop.permute.xlu0 %1832
      %v1834 = vsel %vm306, %v1829, %v1831
      %v1835 = vsel %vm306, %v1831, %v1833
      %vm1838 = vcmask 64512
      %v1840 = vsel %vm1838, %v1824, 0
      %1842 = vmatprep.subr.mxu0 %v1835
      %1843 = vmatpush1.msra.mxu0 %v1834
      %1844 = vmatprep.subr.mxu0 0.0
      %1845 = vmatpush1.msra.mxu0 0.0
      %1846 = vmatprep.subr.mxu0 0.0
      %1847 = vmatpush1.msra.mxu0 0.0
      %1848 = vmatprep.subr.mxu0 0.0
      %1849 = vmatpush1.msra.mxu0 0.0
      %1850 = vmatprep.subr.mxu0 0.0
      %1851 = vmatpush1.msra.mxu0 0.0
      %1852 = vmatprep.subr.mxu0 0.0
      %1853 = vmatpush1.msra.mxu0 0.0
      %1854 = vmatprep.subr.mxu0 0.0
      %1855 = vmatpush1.msra.mxu0 0.0
      %1856 = vmatprep.subr.mxu0 0.0
      %1857 = vmatpush1.msra.mxu0 0.0
      %1858 = vmatprep.subr.mxu0 0.0
      %1859 = vmatpush1.msra.mxu0 0.0
      %1860 = vmatprep.subr.mxu0 0.0
      %1861 = vmatpush1.msra.mxu0 0.0
      %1862 = vmatprep.subr.mxu0 0.0
      %1863 = vmatpush1.msra.mxu0 0.0
      %1864 = vmatprep.subr.mxu0 0.0
      %1865 = vmatpush1.msra.mxu0 0.0
      %1866 = vmatprep.subr.mxu0 0.0
      %1867 = vmatpush1.msra.mxu0 0.0
      %1868 = vmatprep.subr.mxu0 0.0
      %1869 = vmatpush1.msra.mxu0 0.0
      %1870 = vmatprep.subr.mxu0 0.0
      %1871 = vmatpush1.msra.mxu0 0.0
      %1872 = vmatprep.subr.mxu0 0.0
      %1873 = vmatpush1.msra.mxu0 0.0
      %1874 = vmatprep.subr.mxu0 0.0
      %1875 = vmatpush1.msra.mxu0 0.0
      %1876 = vmatprep.subr.mxu0 0.0
      %1877 = vmatpush1.msra.mxu0 0.0
      %1878 = vmatprep.subr.mxu0 0.0
      %1879 = vmatpush1.msra.mxu0 0.0
      %1880 = vmatprep.subr.mxu0 0.0
      %1881 = vmatpush1.msra.mxu0 0.0
      %1882 = vmatprep.subr.mxu0 0.0
      %1883 = vmatpush1.msra.mxu0 0.0
      %1884 = vmatprep.subr.mxu0 0.0
      %1885 = vmatpush1.msra.mxu0 0.0
      %1886 = vmatprep.subr.mxu0 0.0
      %1887 = vmatpush1.msra.mxu0 0.0
      %1888 = vmatprep.subr.mxu0 0.0
      %1889 = vmatpush1.msra.mxu0 0.0
      %1890 = vmatprep.subr.mxu0 0.0
      %1891 = vmatpush1.msra.mxu0 0.0
      %1892 = vmatprep.subr.mxu0 0.0
      %1893 = vmatpush1.msra.mxu0 0.0
      %1894 = vmatprep.subr.mxu0 0.0
      %1895 = vmatpush1.msra.mxu0 0.0
      %1896 = vmatprep.subr.mxu0 0.0
      %1897 = vmatpush1.msra.mxu0 0.0
      %1898 = vmatprep.subr.mxu0 0.0
      %1899 = vmatpush1.msra.mxu0 0.0
      %1900 = vmatprep.subr.mxu0 0.0
      %1901 = vmatpush1.msra.mxu0 0.0
      %1902 = vmatprep.subr.mxu0 0.0
      %1903 = vmatpush1.msra.mxu0 0.0
      %1904 = vmatprep.subr.mxu0 0.0
      %1905 = vmatpush1.msra.mxu0 0.0
      %1906 = vmatprep.mubr.f32.mxu0 0.0
      %1907 = vmatmul.mubr.f32.gmra.mrb[0].mxu0 %v1840
      %v1908 = vpop.f32.mrb[0].mxu0
      %v1909 = vadd.f32 0.0, %v1908
      %v1910 = vpop.f32.mrb[0].mxu0
      %v1911 = vadd.f32 0.0, %v1910
      %1912 = vdwg.mxu0
      %v1914 = vsel %vm1838, %v1822, 0
      %1916 = vmatprep.subr.mxu0 %v1820
      %1917 = vmatpush1.msra.mxu0 %v1819
      %1918 = vmatprep.subr.mxu0 0.0
      %1919 = vmatpush1.msra.mxu0 0.0
      %1920 = vmatprep.subr.mxu0 0.0
      %1921 = vmatpush1.msra.mxu0 0.0
      %1922 = vmatprep.subr.mxu0 0.0
      %1923 = vmatpush1.msra.mxu0 0.0
      %1924 = vmatprep.subr.mxu0 0.0
      %1925 = vmatpush1.msra.mxu0 0.0
      %1926 = vmatprep.subr.mxu0 0.0
      %1927 = vmatpush1.msra.mxu0 0.0
      %1928 = vmatprep.subr.mxu0 0.0
      %1929 = vmatpush1.msra.mxu0 0.0
      %1930 = vmatprep.subr.mxu0 0.0
      %1931 = vmatpush1.msra.mxu0 0.0
      %1932 = vmatprep.subr.mxu0 0.0
      %1933 = vmatpush1.msra.mxu0 0.0
      %1934 = vmatprep.subr.mxu0 0.0
      %1935 = vmatpush1.msra.mxu0 0.0
      %1936 = vmatprep.subr.mxu0 0.0
      %1937 = vmatpush1.msra.mxu0 0.0
      %1938 = vmatprep.subr.mxu0 0.0
      %1939 = vmatpush1.msra.mxu0 0.0
      %1940 = vmatprep.subr.mxu0 0.0
      %1941 = vmatpush1.msra.mxu0 0.0
      %1942 = vmatprep.subr.mxu0 0.0
      %1943 = vmatpush1.msra.mxu0 0.0
      %1944 = vmatprep.subr.mxu0 0.0
      %1945 = vmatpush1.msra.mxu0 0.0
      %1946 = vmatprep.subr.mxu0 0.0
      %1947 = vmatpush1.msra.mxu0 0.0
      %1948 = vmatprep.subr.mxu0 0.0
      %1949 = vmatpush1.msra.mxu0 0.0
      %1950 = vmatprep.subr.mxu0 0.0
      %1951 = vmatpush1.msra.mxu0 0.0
      %1952 = vmatprep.subr.mxu0 0.0
      %1953 = vmatpush1.msra.mxu0 0.0
      %1954 = vmatprep.subr.mxu0 0.0
      %1955 = vmatpush1.msra.mxu0 0.0
      %1956 = vmatprep.subr.mxu0 0.0
      %1957 = vmatpush1.msra.mxu0 0.0
      %1958 = vmatprep.subr.mxu0 0.0
      %1959 = vmatpush1.msra.mxu0 0.0
      %1960 = vmatprep.subr.mxu0 0.0
      %1961 = vmatpush1.msra.mxu0 0.0
      %1962 = vmatprep.subr.mxu0 0.0
      %1963 = vmatpush1.msra.mxu0 0.0
      %1964 = vmatprep.subr.mxu0 0.0
      %1965 = vmatpush1.msra.mxu0 0.0
      %1966 = vmatprep.subr.mxu0 0.0
      %1967 = vmatpush1.msra.mxu0 0.0
      %1968 = vmatprep.subr.mxu0 0.0
      %1969 = vmatpush1.msra.mxu0 0.0
      %1970 = vmatprep.subr.mxu0 0.0
      %1971 = vmatpush1.msra.mxu0 0.0
      %1972 = vmatprep.subr.mxu0 0.0
      %1973 = vmatpush1.msra.mxu0 0.0
      %1974 = vmatprep.subr.mxu0 0.0
      %1975 = vmatpush1.msra.mxu0 0.0
      %1976 = vmatprep.subr.mxu0 0.0
      %1977 = vmatpush1.msra.mxu0 0.0
      %1978 = vmatprep.subr.mxu0 0.0
      %1979 = vmatpush1.msra.mxu0 0.0
      %1980 = vmatprep.mubr.f32.mxu0 0.0
      %1981 = vmatmul.mubr.f32.gmra.mrb[0].mxu0 %v1914
      %v1982 = vpop.f32.mrb[0].mxu0
      %v1983 = vadd.f32 %v1909, %v1982
      %v1984 = vpop.f32.mrb[0].mxu0
      %v1985 = vadd.f32 %v1911, %v1984
      %1986 = vdwg.mxu0
      %s1987 = scalar_lea.vmem %s3, 16
      %v1988 = vld [vmem:[%s1987] sm:$0xff]
      %1989 = vrot.lane.b32.xlu0 %v1819, 126
      %v1990 = vpop.permute.xlu0 %1989
      %1991 = vrot.lane.b32.xlu0 %v1820, 126
      %v1992 = vpop.permute.xlu0 %1991
      %1993 = vrot.lane.b32.xlu0 %v1821, 126
      %v1994 = vpop.permute.xlu0 %1993
      %v1995 = vsel %vm620, %v1990, %v1992
      %v1996 = vsel %vm620, %v1992, %v1994
      %v2000 = vsel %vm1838, %v1988, 0
      %2002 = vmatprep.subr.mxu0 %v1996
      %2003 = vmatpush1.msra.mxu0 %v1995
      %2004 = vmatprep.subr.mxu0 0.0
      %2005 = vmatpush1.msra.mxu0 0.0
      %2006 = vmatprep.subr.mxu0 0.0
      %2007 = vmatpush1.msra.mxu0 0.0
      %2008 = vmatprep.subr.mxu0 0.0
      %2009 = vmatpush1.msra.mxu0 0.0
      %2010 = vmatprep.subr.mxu0 0.0
      %2011 = vmatpush1.msra.mxu0 0.0
      %2012 = vmatprep.subr.mxu0 0.0
      %2013 = vmatpush1.msra.mxu0 0.0
      %2014 = vmatprep.subr.mxu0 0.0
      %2015 = vmatpush1.msra.mxu0 0.0
      %2016 = vmatprep.subr.mxu0 0.0
      %2017 = vmatpush1.msra.mxu0 0.0
      %2018 = vmatprep.subr.mxu0 0.0
      %2019 = vmatpush1.msra.mxu0 0.0
      %2020 = vmatprep.subr.mxu0 0.0
      %2021 = vmatpush1.msra.mxu0 0.0
      %2022 = vmatprep.subr.mxu0 0.0
      %2023 = vmatpush1.msra.mxu0 0.0
      %2024 = vmatprep.subr.mxu0 0.0
      %2025 = vmatpush1.msra.mxu0 0.0
      %2026 = vmatprep.subr.mxu0 0.0
      %2027 = vmatpush1.msra.mxu0 0.0
      %2028 = vmatprep.subr.mxu0 0.0
      %2029 = vmatpush1.msra.mxu0 0.0
      %2030 = vmatprep.subr.mxu0 0.0
      %2031 = vmatpush1.msra.mxu0 0.0
      %2032 = vmatprep.subr.mxu0 0.0
      %2033 = vmatpush1.msra.mxu0 0.0
      %2034 = vmatprep.subr.mxu0 0.0
      %2035 = vmatpush1.msra.mxu0 0.0
      %2036 = vmatprep.subr.mxu0 0.0
      %2037 = vmatpush1.msra.mxu0 0.0
      %2038 = vmatprep.subr.mxu0 0.0
      %2039 = vmatpush1.msra.mxu0 0.0
      %2040 = vmatprep.subr.mxu0 0.0
      %2041 = vmatpush1.msra.mxu0 0.0
      %2042 = vmatprep.subr.mxu0 0.0
      %2043 = vmatpush1.msra.mxu0 0.0
      %2044 = vmatprep.subr.mxu0 0.0
      %2045 = vmatpush1.msra.mxu0 0.0
      %2046 = vmatprep.subr.mxu0 0.0
      %2047 = vmatpush1.msra.mxu0 0.0
      %2048 = vmatprep.subr.mxu0 0.0
      %2049 = vmatpush1.msra.mxu0 0.0
      %2050 = vmatprep.subr.mxu0 0.0
      %2051 = vmatpush1.msra.mxu0 0.0
      %2052 = vmatprep.subr.mxu0 0.0
      %2053 = vmatpush1.msra.mxu0 0.0
      %2054 = vmatprep.subr.mxu0 0.0
      %2055 = vmatpush1.msra.mxu0 0.0
      %2056 = vmatprep.subr.mxu0 0.0
      %2057 = vmatpush1.msra.mxu0 0.0
      %2058 = vmatprep.subr.mxu0 0.0
      %2059 = vmatpush1.msra.mxu0 0.0
      %2060 = vmatprep.subr.mxu0 0.0
      %2061 = vmatpush1.msra.mxu0 0.0
      %2062 = vmatprep.subr.mxu0 0.0
      %2063 = vmatpush1.msra.mxu0 0.0
      %2064 = vmatprep.subr.mxu0 0.0
      %2065 = vmatpush1.msra.mxu0 0.0
      %2066 = vmatprep.mubr.f32.mxu0 0.0
      %2067 = vmatmul.mubr.f32.gmra.mrb[0].mxu0 %v2000
      %v2068 = vpop.f32.mrb[0].mxu0
      %v2069 = vadd.f32 0.0, %v2068
      %v2070 = vpop.f32.mrb[0].mxu0
      %v2071 = vadd.f32 0.0, %v2070
      %2072 = vdwg.mxu0
      %v2073 = vadd.f32 %v1983, %v2069
      %v2074 = vadd.f32 %v1985, %v2071
      %s2075 = scalar_lea.vmem %s3, 24
      %v2076 = vld [vmem:[%s2075] sm:$0xff]
      %2077 = vrot.lane.b32.xlu0 %v1819, 112
      %v2078 = vpop.permute.xlu0 %2077
      %2079 = vrot.lane.b32.xlu0 %v1820, 112
      %v2080 = vpop.permute.xlu0 %2079
      %2081 = vrot.lane.b32.xlu0 %v1821, 112
      %v2082 = vpop.permute.xlu0 %2081
      %v2083 = vsel %vm792, %v2078, %v2080
      %v2084 = vsel %vm792, %v2080, %v2082
      %v2088 = vsel %vm1838, %v2076, 0
      %2090 = vmatprep.subr.mxu0 %v2084
      %2091 = vmatpush1.msra.mxu0 %v2083
      %2092 = vmatprep.subr.mxu0 0.0
      %2093 = vmatpush1.msra.mxu0 0.0
      %2094 = vmatprep.subr.mxu0 0.0
      %2095 = vmatpush1.msra.mxu0 0.0
      %2096 = vmatprep.subr.mxu0 0.0
      %2097 = vmatpush1.msra.mxu0 0.0
      %2098 = vmatprep.subr.mxu0 0.0
      %2099 = vmatpush1.msra.mxu0 0.0
      %2100 = vmatprep.subr.mxu0 0.0
      %2101 = vmatpush1.msra.mxu0 0.0
      %2102 = vmatprep.subr.mxu0 0.0
      %2103 = vmatpush1.msra.mxu0 0.0
      %2104 = vmatprep.subr.mxu0 0.0
      %2105 = vmatpush1.msra.mxu0 0.0
      %2106 = vmatprep.subr.mxu0 0.0
      %2107 = vmatpush1.msra.mxu0 0.0
      %2108 = vmatprep.subr.mxu0 0.0
      %2109 = vmatpush1.msra.mxu0 0.0
      %2110 = vmatprep.subr.mxu0 0.0
      %2111 = vmatpush1.msra.mxu0 0.0
      %2112 = vmatprep.subr.mxu0 0.0
      %2113 = vmatpush1.msra.mxu0 0.0
      %2114 = vmatprep.subr.mxu0 0.0
      %2115 = vmatpush1.msra.mxu0 0.0
      %2116 = vmatprep.subr.mxu0 0.0
      %2117 = vmatpush1.msra.mxu0 0.0
      %2118 = vmatprep.subr.mxu0 0.0
      %2119 = vmatpush1.msra.mxu0 0.0
      %2120 = vmatprep.subr.mxu0 0.0
      %2121 = vmatpush1.msra.mxu0 0.0
      %2122 = vmatprep.subr.mxu0 0.0
      %2123 = vmatpush1.msra.mxu0 0.0
      %2124 = vmatprep.subr.mxu0 0.0
      %2125 = vmatpush1.msra.mxu0 0.0
      %2126 = vmatprep.subr.mxu0 0.0
      %2127 = vmatpush1.msra.mxu0 0.0
      %2128 = vmatprep.subr.mxu0 0.0
      %2129 = vmatpush1.msra.mxu0 0.0
      %2130 = vmatprep.subr.mxu0 0.0
      %2131 = vmatpush1.msra.mxu0 0.0
      %2132 = vmatprep.subr.mxu0 0.0
      %2133 = vmatpush1.msra.mxu0 0.0
      %2134 = vmatprep.subr.mxu0 0.0
      %2135 = vmatpush1.msra.mxu0 0.0
      %2136 = vmatprep.subr.mxu0 0.0
      %2137 = vmatpush1.msra.mxu0 0.0
      %2138 = vmatprep.subr.mxu0 0.0
      %2139 = vmatpush1.msra.mxu0 0.0
      %2140 = vmatprep.subr.mxu0 0.0
      %2141 = vmatpush1.msra.mxu0 0.0
      %2142 = vmatprep.subr.mxu0 0.0
      %2143 = vmatpush1.msra.mxu0 0.0
      %2144 = vmatprep.subr.mxu0 0.0
      %2145 = vmatpush1.msra.mxu0 0.0
      %2146 = vmatprep.subr.mxu0 0.0
      %2147 = vmatpush1.msra.mxu0 0.0
      %2148 = vmatprep.subr.mxu0 0.0
      %2149 = vmatpush1.msra.mxu0 0.0
      %2150 = vmatprep.subr.mxu0 0.0
      %2151 = vmatpush1.msra.mxu0 0.0
      %2152 = vmatprep.subr.mxu0 0.0
      %2153 = vmatpush1.msra.mxu0 0.0
      %2154 = vmatprep.mubr.f32.mxu0 0.0
      %2155 = vmatmul.mubr.f32.gmra.mrb[0].mxu0 %v2088
      %v2156 = vpop.f32.mrb[0].mxu0
      %v2157 = vadd.f32 0.0, %v2156
      %v2158 = vpop.f32.mrb[0].mxu0
      %v2159 = vadd.f32 0.0, %v2158
      %2160 = vdwg.mxu0
      %v2161 = vadd.f32 %v2073, %v2157
      %v2162 = vadd.f32 %v2074, %v2159
      %s2163 = scalar_lea.vmem %s3, 32
      %v2164 = vld [vmem:[%s2163] sm:$0xff]
      %2165 = vrot.lane.b32.xlu0 %v1819, 111
      %v2166 = vpop.permute.xlu0 %2165
      %2167 = vrot.lane.b32.xlu0 %v1820, 111
      %v2168 = vpop.permute.xlu0 %2167
      %2169 = vrot.lane.b32.xlu0 %v1821, 111
      %v2170 = vpop.permute.xlu0 %2169
      %v2171 = vsel %vm964, %v2166, %v2168
      %v2172 = vsel %vm964, %v2168, %v2170
      %v2176 = vsel %vm1838, %v2164, 0
      %2178 = vmatprep.subr.mxu0 %v2172
      %2179 = vmatpush1.msra.mxu0 %v2171
      %2180 = vmatprep.subr.mxu0 0.0
      %2181 = vmatpush1.msra.mxu0 0.0
      %2182 = vmatprep.subr.mxu0 0.0
      %2183 = vmatpush1.msra.mxu0 0.0
      %2184 = vmatprep.subr.mxu0 0.0
      %2185 = vmatpush1.msra.mxu0 0.0
      %2186 = vmatprep.subr.mxu0 0.0
      %2187 = vmatpush1.msra.mxu0 0.0
      %2188 = vmatprep.subr.mxu0 0.0
      %2189 = vmatpush1.msra.mxu0 0.0
      %2190 = vmatprep.subr.mxu0 0.0
      %2191 = vmatpush1.msra.mxu0 0.0
      %2192 = vmatprep.subr.mxu0 0.0
      %2193 = vmatpush1.msra.mxu0 0.0
      %2194 = vmatprep.subr.mxu0 0.0
      %2195 = vmatpush1.msra.mxu0 0.0
      %2196 = vmatprep.subr.mxu0 0.0
      %2197 = vmatpush1.msra.mxu0 0.0
      %2198 = vmatprep.subr.mxu0 0.0
      %2199 = vmatpush1.msra.mxu0 0.0
      %2200 = vmatprep.subr.mxu0 0.0
      %2201 = vmatpush1.msra.mxu0 0.0
      %2202 = vmatprep.subr.mxu0 0.0
      %2203 = vmatpush1.msra.mxu0 0.0
      %2204 = vmatprep.subr.mxu0 0.0
      %2205 = vmatpush1.msra.mxu0 0.0
      %2206 = vmatprep.subr.mxu0 0.0
      %2207 = vmatpush1.msra.mxu0 0.0
      %2208 = vmatprep.subr.mxu0 0.0
      %2209 = vmatpush1.msra.mxu0 0.0
      %2210 = vmatprep.subr.mxu0 0.0
      %2211 = vmatpush1.msra.mxu0 0.0
      %2212 = vmatprep.subr.mxu0 0.0
      %2213 = vmatpush1.msra.mxu0 0.0
      %2214 = vmatprep.subr.mxu0 0.0
      %2215 = vmatpush1.msra.mxu0 0.0
      %2216 = vmatprep.subr.mxu0 0.0
      %2217 = vmatpush1.msra.mxu0 0.0
      %2218 = vmatprep.subr.mxu0 0.0
      %2219 = vmatpush1.msra.mxu0 0.0
      %2220 = vmatprep.subr.mxu0 0.0
      %2221 = vmatpush1.msra.mxu0 0.0
      %2222 = vmatprep.subr.mxu0 0.0
      %2223 = vmatpush1.msra.mxu0 0.0
      %2224 = vmatprep.subr.mxu0 0.0
      %2225 = vmatpush1.msra.mxu0 0.0
      %2226 = vmatprep.subr.mxu0 0.0
      %2227 = vmatpush1.msra.mxu0 0.0
      %2228 = vmatprep.subr.mxu0 0.0
      %2229 = vmatpush1.msra.mxu0 0.0
      %2230 = vmatprep.subr.mxu0 0.0
      %2231 = vmatpush1.msra.mxu0 0.0
      %2232 = vmatprep.subr.mxu0 0.0
      %2233 = vmatpush1.msra.mxu0 0.0
      %2234 = vmatprep.subr.mxu0 0.0
      %2235 = vmatpush1.msra.mxu0 0.0
      %2236 = vmatprep.subr.mxu0 0.0
      %2237 = vmatpush1.msra.mxu0 0.0
      %2238 = vmatprep.subr.mxu0 0.0
      %2239 = vmatpush1.msra.mxu0 0.0
      %2240 = vmatprep.subr.mxu0 0.0
      %2241 = vmatpush1.msra.mxu0 0.0
      %2242 = vmatprep.mubr.f32.mxu0 0.0
      %2243 = vmatmul.mubr.f32.gmra.mrb[0].mxu0 %v2176
      %v2244 = vpop.f32.mrb[0].mxu0
      %v2245 = vadd.f32 0.0, %v2244
      %v2246 = vpop.f32.mrb[0].mxu0
      %v2247 = vadd.f32 0.0, %v2246
      %2248 = vdwg.mxu0
      %v2249 = vadd.f32 %v2161, %v2245
      %v2250 = vadd.f32 %v2162, %v2247
      %s2251 = scalar_lea.vmem %s3, 40
      %v2252 = vld [vmem:[%s2251] sm:$0xff]
      %2253 = vrot.lane.b32.xlu0 %v1819, 110
      %v2254 = vpop.permute.xlu0 %2253
      %2255 = vrot.lane.b32.xlu0 %v1820, 110
      %v2256 = vpop.permute.xlu0 %2255
      %2257 = vrot.lane.b32.xlu0 %v1821, 110
      %v2258 = vpop.permute.xlu0 %2257
      %v2259 = vsel %vm1136, %v2254, %v2256
      %v2260 = vsel %vm1136, %v2256, %v2258
      %v2264 = vsel %vm1838, %v2252, 0
      %2266 = vmatprep.subr.mxu0 %v2260
      %2267 = vmatpush1.msra.mxu0 %v2259
      %2268 = vmatprep.subr.mxu0 0.0
      %2269 = vmatpush1.msra.mxu0 0.0
      %2270 = vmatprep.subr.mxu0 0.0
      %2271 = vmatpush1.msra.mxu0 0.0
      %2272 = vmatprep.subr.mxu0 0.0
      %2273 = vmatpush1.msra.mxu0 0.0
      %2274 = vmatprep.subr.mxu0 0.0
      %2275 = vmatpush1.msra.mxu0 0.0
      %2276 = vmatprep.subr.mxu0 0.0
      %2277 = vmatpush1.msra.mxu0 0.0
      %2278 = vmatprep.subr.mxu0 0.0
      %2279 = vmatpush1.msra.mxu0 0.0
      %2280 = vmatprep.subr.mxu0 0.0
      %2281 = vmatpush1.msra.mxu0 0.0
      %2282 = vmatprep.subr.mxu0 0.0
      %2283 = vmatpush1.msra.mxu0 0.0
      %2284 = vmatprep.subr.mxu0 0.0
      %2285 = vmatpush1.msra.mxu0 0.0
      %2286 = vmatprep.subr.mxu0 0.0
      %2287 = vmatpush1.msra.mxu0 0.0
      %2288 = vmatprep.subr.mxu0 0.0
      %2289 = vmatpush1.msra.mxu0 0.0
      %2290 = vmatprep.subr.mxu0 0.0
      %2291 = vmatpush1.msra.mxu0 0.0
      %2292 = vmatprep.subr.mxu0 0.0
      %2293 = vmatpush1.msra.mxu0 0.0
      %2294 = vmatprep.subr.mxu0 0.0
      %2295 = vmatpush1.msra.mxu0 0.0
      %2296 = vmatprep.subr.mxu0 0.0
      %2297 = vmatpush1.msra.mxu0 0.0
      %2298 = vmatprep.subr.mxu0 0.0
      %2299 = vmatpush1.msra.mxu0 0.0
      %2300 = vmatprep.subr.mxu0 0.0
      %2301 = vmatpush1.msra.mxu0 0.0
      %2302 = vmatprep.subr.mxu0 0.0
      %2303 = vmatpush1.msra.mxu0 0.0
      %2304 = vmatprep.subr.mxu0 0.0
      %2305 = vmatpush1.msra.mxu0 0.0
      %2306 = vmatprep.subr.mxu0 0.0
      %2307 = vmatpush1.msra.mxu0 0.0
      %2308 = vmatprep.subr.mxu0 0.0
      %2309 = vmatpush1.msra.mxu0 0.0
      %2310 = vmatprep.subr.mxu0 0.0
      %2311 = vmatpush1.msra.mxu0 0.0
      %2312 = vmatprep.subr.mxu0 0.0
      %2313 = vmatpush1.msra.mxu0 0.0
      %2314 = vmatprep.subr.mxu0 0.0
      %2315 = vmatpush1.msra.mxu0 0.0
      %2316 = vmatprep.subr.mxu0 0.0
      %2317 = vmatpush1.msra.mxu0 0.0
      %2318 = vmatprep.subr.mxu0 0.0
      %2319 = vmatpush1.msra.mxu0 0.0
      %2320 = vmatprep.subr.mxu0 0.0
      %2321 = vmatpush1.msra.mxu0 0.0
      %2322 = vmatprep.subr.mxu0 0.0
      %2323 = vmatpush1.msra.mxu0 0.0
      %2324 = vmatprep.subr.mxu0 0.0
      %2325 = vmatpush1.msra.mxu0 0.0
      %2326 = vmatprep.subr.mxu0 0.0
      %2327 = vmatpush1.msra.mxu0 0.0
      %2328 = vmatprep.subr.mxu0 0.0
      %2329 = vmatpush1.msra.mxu0 0.0
      %2330 = vmatprep.mubr.f32.mxu0 0.0
      %2331 = vmatmul.mubr.f32.gmra.mrb[0].mxu0 %v2264
      %v2332 = vpop.f32.mrb[0].mxu0
      %v2333 = vadd.f32 0.0, %v2332
      %v2334 = vpop.f32.mrb[0].mxu0
      %v2335 = vadd.f32 0.0, %v2334
      %2336 = vdwg.mxu0
      %v2337 = vadd.f32 %v2249, %v2333
      %v2338 = vadd.f32 %v2250, %v2335
      %s2339 = scalar_lea.vmem %s3, 48
      %v2340 = vld [vmem:[%s2339] sm:$0xff]
      %2341 = vrot.lane.b32.xlu0 %v1819, 96
      %v2342 = vpop.permute.xlu0 %2341
      %2343 = vrot.lane.b32.xlu0 %v1820, 96
      %v2344 = vpop.permute.xlu0 %2343
      %2345 = vrot.lane.b32.xlu0 %v1821, 96
      %v2346 = vpop.permute.xlu0 %2345
      %v2347 = vsel %vm1308, %v2342, %v2344
      %v2348 = vsel %vm1308, %v2344, %v2346
      %v2352 = vsel %vm1838, %v2340, 0
      %2354 = vmatprep.subr.mxu0 %v2348
      %2355 = vmatpush1.msra.mxu0 %v2347
      %2356 = vmatprep.subr.mxu0 0.0
      %2357 = vmatpush1.msra.mxu0 0.0
      %2358 = vmatprep.subr.mxu0 0.0
      %2359 = vmatpush1.msra.mxu0 0.0
      %2360 = vmatprep.subr.mxu0 0.0
      %2361 = vmatpush1.msra.mxu0 0.0
      %2362 = vmatprep.subr.mxu0 0.0
      %2363 = vmatpush1.msra.mxu0 0.0
      %2364 = vmatprep.subr.mxu0 0.0
      %2365 = vmatpush1.msra.mxu0 0.0
      %2366 = vmatprep.subr.mxu0 0.0
      %2367 = vmatpush1.msra.mxu0 0.0
      %2368 = vmatprep.subr.mxu0 0.0
      %2369 = vmatpush1.msra.mxu0 0.0
      %2370 = vmatprep.subr.mxu0 0.0
      %2371 = vmatpush1.msra.mxu0 0.0
      %2372 = vmatprep.subr.mxu0 0.0
      %2373 = vmatpush1.msra.mxu0 0.0
      %2374 = vmatprep.subr.mxu0 0.0
      %2375 = vmatpush1.msra.mxu0 0.0
      %2376 = vmatprep.subr.mxu0 0.0
      %2377 = vmatpush1.msra.mxu0 0.0
      %2378 = vmatprep.subr.mxu0 0.0
      %2379 = vmatpush1.msra.mxu0 0.0
      %2380 = vmatprep.subr.mxu0 0.0
      %2381 = vmatpush1.msra.mxu0 0.0
      %2382 = vmatprep.subr.mxu0 0.0
      %2383 = vmatpush1.msra.mxu0 0.0
      %2384 = vmatprep.subr.mxu0 0.0
      %2385 = vmatpush1.msra.mxu0 0.0
      %2386 = vmatprep.subr.mxu0 0.0
      %2387 = vmatpush1.msra.mxu0 0.0
      %2388 = vmatprep.subr.mxu0 0.0
      %2389 = vmatpush1.msra.mxu0 0.0
      %2390 = vmatprep.subr.mxu0 0.0
      %2391 = vmatpush1.msra.mxu0 0.0
      %2392 = vmatprep.subr.mxu0 0.0
      %2393 = vmatpush1.msra.mxu0 0.0
      %2394 = vmatprep.subr.mxu0 0.0
      %2395 = vmatpush1.msra.mxu0 0.0
      %2396 = vmatprep.subr.mxu0 0.0
      %2397 = vmatpush1.msra.mxu0 0.0
      %2398 = vmatprep.subr.mxu0 0.0
      %2399 = vmatpush1.msra.mxu0 0.0
      %2400 = vmatprep.subr.mxu0 0.0
      %2401 = vmatpush1.msra.mxu0 0.0
      %2402 = vmatprep.subr.mxu0 0.0
      %2403 = vmatpush1.msra.mxu0 0.0
      %2404 = vmatprep.subr.mxu0 0.0
      %2405 = vmatpush1.msra.mxu0 0.0
      %2406 = vmatprep.subr.mxu0 0.0
      %2407 = vmatpush1.msra.mxu0 0.0
      %2408 = vmatprep.subr.mxu0 0.0
      %2409 = vmatpush1.msra.mxu0 0.0
      %2410 = vmatprep.subr.mxu0 0.0
      %2411 = vmatpush1.msra.mxu0 0.0
      %2412 = vmatprep.subr.mxu0 0.0
      %2413 = vmatpush1.msra.mxu0 0.0
      %2414 = vmatprep.subr.mxu0 0.0
      %2415 = vmatpush1.msra.mxu0 0.0
      %2416 = vmatprep.subr.mxu0 0.0
      %2417 = vmatpush1.msra.mxu0 0.0
      %2418 = vmatprep.mubr.f32.mxu0 0.0
      %2419 = vmatmul.mubr.f32.gmra.mrb[0].mxu0 %v2352
      %v2420 = vpop.f32.mrb[0].mxu0
      %v2421 = vadd.f32 0.0, %v2420
      %v2422 = vpop.f32.mrb[0].mxu0
      %v2423 = vadd.f32 0.0, %v2422
      %2424 = vdwg.mxu0
      %v2425 = vadd.f32 %v2337, %v2421
      %v2426 = vadd.f32 %v2338, %v2423
      %s2427 = scalar_lea.vmem %s3, 56
      %v2428 = vld [vmem:[%s2427] sm:$0xff]
      %2429 = vrot.lane.b32.xlu0 %v1819, 95
      %v2430 = vpop.permute.xlu0 %2429
      %2431 = vrot.lane.b32.xlu0 %v1820, 95
      %v2432 = vpop.permute.xlu0 %2431
      %2433 = vrot.lane.b32.xlu0 %v1821, 95
      %v2434 = vpop.permute.xlu0 %2433
      %v2435 = vsel %vm1480, %v2430, %v2432
      %v2436 = vsel %vm1480, %v2432, %v2434
      %v2440 = vsel %vm1838, %v2428, 0
      %2442 = vmatprep.subr.mxu0 %v2436
      %2443 = vmatpush1.msra.mxu0 %v2435
      %2444 = vmatprep.subr.mxu0 0.0
      %2445 = vmatpush1.msra.mxu0 0.0
      %2446 = vmatprep.subr.mxu0 0.0
      %2447 = vmatpush1.msra.mxu0 0.0
      %2448 = vmatprep.subr.mxu0 0.0
      %2449 = vmatpush1.msra.mxu0 0.0
      %2450 = vmatprep.subr.mxu0 0.0
      %2451 = vmatpush1.msra.mxu0 0.0
      %2452 = vmatprep.subr.mxu0 0.0
      %2453 = vmatpush1.msra.mxu0 0.0
      %2454 = vmatprep.subr.mxu0 0.0
      %2455 = vmatpush1.msra.mxu0 0.0
      %2456 = vmatprep.subr.mxu0 0.0
      %2457 = vmatpush1.msra.mxu0 0.0
      %2458 = vmatprep.subr.mxu0 0.0
      %2459 = vmatpush1.msra.mxu0 0.0
      %2460 = vmatprep.subr.mxu0 0.0
      %2461 = vmatpush1.msra.mxu0 0.0
      %2462 = vmatprep.subr.mxu0 0.0
      %2463 = vmatpush1.msra.mxu0 0.0
      %2464 = vmatprep.subr.mxu0 0.0
      %2465 = vmatpush1.msra.mxu0 0.0
      %2466 = vmatprep.subr.mxu0 0.0
      %2467 = vmatpush1.msra.mxu0 0.0
      %2468 = vmatprep.subr.mxu0 0.0
      %2469 = vmatpush1.msra.mxu0 0.0
      %2470 = vmatprep.subr.mxu0 0.0
      %2471 = vmatpush1.msra.mxu0 0.0
      %2472 = vmatprep.subr.mxu0 0.0
      %2473 = vmatpush1.msra.mxu0 0.0
      %2474 = vmatprep.subr.mxu0 0.0
      %2475 = vmatpush1.msra.mxu0 0.0
      %2476 = vmatprep.subr.mxu0 0.0
      %2477 = vmatpush1.msra.mxu0 0.0
      %2478 = vmatprep.subr.mxu0 0.0
      %2479 = vmatpush1.msra.mxu0 0.0
      %2480 = vmatprep.subr.mxu0 0.0
      %2481 = vmatpush1.msra.mxu0 0.0
      %2482 = vmatprep.subr.mxu0 0.0
      %2483 = vmatpush1.msra.mxu0 0.0
      %2484 = vmatprep.subr.mxu0 0.0
      %2485 = vmatpush1.msra.mxu0 0.0
      %2486 = vmatprep.subr.mxu0 0.0
      %2487 = vmatpush1.msra.mxu0 0.0
      %2488 = vmatprep.subr.mxu0 0.0
      %2489 = vmatpush1.msra.mxu0 0.0
      %2490 = vmatprep.subr.mxu0 0.0
      %2491 = vmatpush1.msra.mxu0 0.0
      %2492 = vmatprep.subr.mxu0 0.0
      %2493 = vmatpush1.msra.mxu0 0.0
      %2494 = vmatprep.subr.mxu0 0.0
      %2495 = vmatpush1.msra.mxu0 0.0
      %2496 = vmatprep.subr.mxu0 0.0
      %2497 = vmatpush1.msra.mxu0 0.0
      %2498 = vmatprep.subr.mxu0 0.0
      %2499 = vmatpush1.msra.mxu0 0.0
      %2500 = vmatprep.subr.mxu0 0.0
      %2501 = vmatpush1.msra.mxu0 0.0
      %2502 = vmatprep.subr.mxu0 0.0
      %2503 = vmatpush1.msra.mxu0 0.0
      %2504 = vmatprep.subr.mxu0 0.0
      %2505 = vmatpush1.msra.mxu0 0.0
      %2506 = vmatprep.mubr.f32.mxu0 0.0
      %2507 = vmatmul.mubr.f32.gmra.mrb[0].mxu0 %v2440
      %v2508 = vpop.f32.mrb[0].mxu0
      %v2509 = vadd.f32 0.0, %v2508
      %v2510 = vpop.f32.mrb[0].mxu0
      %v2511 = vadd.f32 0.0, %v2510
      %2512 = vdwg.mxu0
      %v2513 = vadd.f32 %v2425, %v2509
      %v2514 = vadd.f32 %v2426, %v2511
      %s2515 = scalar_lea.vmem %s3, 64
      %v2516 = vld [vmem:[%s2515] sm:$0xff]
      %2517 = vrot.lane.b32.xlu0 %v1819, 94
      %v2518 = vpop.permute.xlu0 %2517
      %2519 = vrot.lane.b32.xlu0 %v1820, 94
      %v2520 = vpop.permute.xlu0 %2519
      %2521 = vrot.lane.b32.xlu0 %v1821, 94
      %v2522 = vpop.permute.xlu0 %2521
      %v2523 = vsel %vm1652, %v2518, %v2520
      %v2524 = vsel %vm1652, %v2520, %v2522
      %v2528 = vsel %vm1838, %v2516, 0
      %2530 = vmatprep.subr.mxu0 %v2524
      %2531 = vmatpush1.msra.mxu0 %v2523
      %2532 = vmatprep.subr.mxu0 0.0
      %2533 = vmatpush1.msra.mxu0 0.0
      %2534 = vmatprep.subr.mxu0 0.0
      %2535 = vmatpush1.msra.mxu0 0.0
      %2536 = vmatprep.subr.mxu0 0.0
      %2537 = vmatpush1.msra.mxu0 0.0
      %2538 = vmatprep.subr.mxu0 0.0
      %2539 = vmatpush1.msra.mxu0 0.0
      %2540 = vmatprep.subr.mxu0 0.0
      %2541 = vmatpush1.msra.mxu0 0.0
      %2542 = vmatprep.subr.mxu0 0.0
      %2543 = vmatpush1.msra.mxu0 0.0
      %2544 = vmatprep.subr.mxu0 0.0
      %2545 = vmatpush1.msra.mxu0 0.0
      %2546 = vmatprep.subr.mxu0 0.0
      %2547 = vmatpush1.msra.mxu0 0.0
      %2548 = vmatprep.subr.mxu0 0.0
      %2549 = vmatpush1.msra.mxu0 0.0
      %2550 = vmatprep.subr.mxu0 0.0
      %2551 = vmatpush1.msra.mxu0 0.0
      %2552 = vmatprep.subr.mxu0 0.0
      %2553 = vmatpush1.msra.mxu0 0.0
      %2554 = vmatprep.subr.mxu0 0.0
      %2555 = vmatpush1.msra.mxu0 0.0
      %2556 = vmatprep.subr.mxu0 0.0
      %2557 = vmatpush1.msra.mxu0 0.0
      %2558 = vmatprep.subr.mxu0 0.0
      %2559 = vmatpush1.msra.mxu0 0.0
      %2560 = vmatprep.subr.mxu0 0.0
      %2561 = vmatpush1.msra.mxu0 0.0
      %2562 = vmatprep.subr.mxu0 0.0
      %2563 = vmatpush1.msra.mxu0 0.0
      %2564 = vmatprep.subr.mxu0 0.0
      %2565 = vmatpush1.msra.mxu0 0.0
      %2566 = vmatprep.subr.mxu0 0.0
      %2567 = vmatpush1.msra.mxu0 0.0
      %2568 = vmatprep.subr.mxu0 0.0
      %2569 = vmatpush1.msra.mxu0 0.0
      %2570 = vmatprep.subr.mxu0 0.0
      %2571 = vmatpush1.msra.mxu0 0.0
      %2572 = vmatprep.subr.mxu0 0.0
      %2573 = vmatpush1.msra.mxu0 0.0
      %2574 = vmatprep.subr.mxu0 0.0
      %2575 = vmatpush1.msra.mxu0 0.0
      %2576 = vmatprep.subr.mxu0 0.0
      %2577 = vmatpush1.msra.mxu0 0.0
      %2578 = vmatprep.subr.mxu0 0.0
      %2579 = vmatpush1.msra.mxu0 0.0
      %2580 = vmatprep.subr.mxu0 0.0
      %2581 = vmatpush1.msra.mxu0 0.0
      %2582 = vmatprep.subr.mxu0 0.0
      %2583 = vmatpush1.msra.mxu0 0.0
      %2584 = vmatprep.subr.mxu0 0.0
      %2585 = vmatpush1.msra.mxu0 0.0
      %2586 = vmatprep.subr.mxu0 0.0
      %2587 = vmatpush1.msra.mxu0 0.0
      %2588 = vmatprep.subr.mxu0 0.0
      %2589 = vmatpush1.msra.mxu0 0.0
      %2590 = vmatprep.subr.mxu0 0.0
      %2591 = vmatpush1.msra.mxu0 0.0
      %2592 = vmatprep.subr.mxu0 0.0
      %2593 = vmatpush1.msra.mxu0 0.0
      %2594 = vmatprep.mubr.f32.mxu0 0.0
      %2595 = vmatmul.mubr.f32.gmra.mrb[0].mxu0 %v2528
      %v2596 = vpop.f32.mrb[0].mxu0
      %v2597 = vadd.f32 0.0, %v2596
      %v2598 = vpop.f32.mrb[0].mxu0
      %v2599 = vadd.f32 0.0, %v2598
      %2600 = vdwg.mxu0
      %v2601 = vadd.f32 %v2513, %v2597
      %v2602 = vadd.f32 %v2514, %v2599
      %v2603 = vld [vmem:[%s4] sm:$0xff]
      %2605 = vset.pattern.permute.xlu0 0
      %2606 = vperm.xlu0 %2605, %v2603
      %v2607 = vpop.permute.xlu0 %2606
      %v2609 = vadd.f32 %v2601, %v2607
      %v2610 = vadd.f32 %v2602, %v2607
      %v2611 = vld [vmem:[%s5] sm:$0xff]
      %v2612 = vld [vmem:[%s5 + $0x8] sm:$0xff]
      %v2613 = vld [vmem:[%s6] sm:$0xff]
      %v2614 = vld [vmem:[%s6 + $0x8] sm:$0xff]
      %2616 = vset.pattern.permute.xlu0 0
      %2617 = vperm.xlu0 %2616, %v2613
      %v2618 = vpop.permute.xlu0 %2617
      %2621 = vset.pattern.permute.xlu0 0
      %2622 = vperm.xlu0 %2621, %v2614
      %v2623 = vpop.permute.xlu0 %2622
      %v2626 = vsel %vm1838, %v2611, 0
      %v2629 = vsel %vm1838, %v2612, 0
      %2631 = vmatprep.subr.mxu0 %v2610
      %2632 = vmatpush1.msra.mxu0 %v2609
      %2633 = vmatprep.subr.mxu0 0.0
      %2634 = vmatpush1.msra.mxu0 0.0
      %2635 = vmatprep.subr.mxu0 0.0
      %2636 = vmatpush1.msra.mxu0 0.0
      %2637 = vmatprep.subr.mxu0 0.0
      %2638 = vmatpush1.msra.mxu0 0.0
      %2639 = vmatprep.subr.mxu0 0.0
      %2640 = vmatpush1.msra.mxu0 0.0
      %2641 = vmatprep.subr.mxu0 0.0
      %2642 = vmatpush1.msra.mxu0 0.0
      %2643 = vmatprep.subr.mxu0 0.0
      %2644 = vmatpush1.msra.mxu0 0.0
      %2645 = vmatprep.subr.mxu0 0.0
      %2646 = vmatpush1.msra.mxu0 0.0
      %2647 = vmatprep.subr.mxu0 0.0
      %2648 = vmatpush1.msra.mxu0 0.0
      %2649 = vmatprep.subr.mxu0 0.0
      %2650 = vmatpush1.msra.mxu0 0.0
      %2651 = vmatprep.subr.mxu0 0.0
      %2652 = vmatpush1.msra.mxu0 0.0
      %2653 = vmatprep.subr.mxu0 0.0
      %2654 = vmatpush1.msra.mxu0 0.0
      %2655 = vmatprep.subr.mxu0 0.0
      %2656 = vmatpush1.msra.mxu0 0.0
      %2657 = vmatprep.subr.mxu0 0.0
      %2658 = vmatpush1.msra.mxu0 0.0
      %2659 = vmatprep.subr.mxu0 0.0
      %2660 = vmatpush1.msra.mxu0 0.0
      %2661 = vmatprep.subr.mxu0 0.0
      %2662 = vmatpush1.msra.mxu0 0.0
      %2663 = vmatprep.subr.mxu0 0.0
      %2664 = vmatpush1.msra.mxu0 0.0
      %2665 = vmatprep.subr.mxu0 0.0
      %2666 = vmatpush1.msra.mxu0 0.0
      %2667 = vmatprep.subr.mxu0 0.0
      %2668 = vmatpush1.msra.mxu0 0.0
      %2669 = vmatprep.subr.mxu0 0.0
      %2670 = vmatpush1.msra.mxu0 0.0
      %2671 = vmatprep.subr.mxu0 0.0
      %2672 = vmatpush1.msra.mxu0 0.0
      %2673 = vmatprep.subr.mxu0 0.0
      %2674 = vmatpush1.msra.mxu0 0.0
      %2675 = vmatprep.subr.mxu0 0.0
      %2676 = vmatpush1.msra.mxu0 0.0
      %2677 = vmatprep.subr.mxu0 0.0
      %2678 = vmatpush1.msra.mxu0 0.0
      %2679 = vmatprep.subr.mxu0 0.0
      %2680 = vmatpush1.msra.mxu0 0.0
      %2681 = vmatprep.subr.mxu0 0.0
      %2682 = vmatpush1.msra.mxu0 0.0
      %2683 = vmatprep.subr.mxu0 0.0
      %2684 = vmatpush1.msra.mxu0 0.0
      %2685 = vmatprep.subr.mxu0 0.0
      %2686 = vmatpush1.msra.mxu0 0.0
      %2687 = vmatprep.subr.mxu0 0.0
      %2688 = vmatpush1.msra.mxu0 0.0
      %2689 = vmatprep.subr.mxu0 0.0
      %2690 = vmatpush1.msra.mxu0 0.0
      %2691 = vmatprep.subr.mxu0 0.0
      %2692 = vmatpush1.msra.mxu0 0.0
      %2693 = vmatprep.subr.mxu0 0.0
      %2694 = vmatpush1.msra.mxu0 0.0
      %2695 = vmatprep.mubr.f32.mxu0 0.0
      %2696 = vmatmul.mubr.f32.gmra.mrb[0].mxu0 %v2626
      %v2697 = vpop.f32.mrb[0].mxu0
      %v2698 = vadd.f32 %v2618, %v2697
      %v2699 = vpop.f32.mrb[0].mxu0
      %v2700 = vadd.f32 %v2618, %v2699
      %2701 = vmatprep.mubr.f32.mxu0 0.0
      %2702 = vmatmul.mubr.f32.gmra.mrb[0].mxu0 %v2629
      %v2703 = vpop.f32.mrb[0].mxu0
      %v2704 = vadd.f32 %v2623, %v2703
      %v2705 = vpop.f32.mrb[0].mxu0
      %v2706 = vadd.f32 %v2623, %v2705
      %2707 = vdwg.mxu0
      %2708 = vst [vmem:[%s278] sm:$0xff] %v2698
      %2709 = vst [vmem:[%s278 + $0x8] sm:$0xff] %v2700
      %2710 = vst [vmem:[%s278 + $0x10] sm:$0xff] %v2704
      %2711 = vst [vmem:[%s278 + $0x18] sm:$0xff] %v2706
      %p2712 = scmp.lt.s32.totalorder %s18, 1
      %s2713 = scalar_select %p2712, %s18, 1
      %s2714 = smul.addr %s2713, 4
      %s2715 = smul.addr %s2714, 8
      %s2716 = scalar_lea.vmem %s7, %s2715
      // Predicated region
      $region49: #{unet_decoder_forward.4} parent=47 // pred_check
        %p2717 = pneg %p188
      $region50: #{unet_decoder_forward.4} parent=47 // pred_check_branch
        %2719 = sbr.rel (%p2717) target = $region52
      $region51: #{unet_decoder_forward.4} parent=47 // pred_region
        _
      $region52: #{unet_decoder_forward.4} parent=47 // pred_fallthru
        _
    $region48: #{unet_decoder_forward.4} parent=5 // pred_fallthru
      _
    %p2720 = scmp.le.s32.totalorder 2, %s13
    // Predicated region
    $region53: #{unet_decoder_forward.4} parent=5 // pred_check
      %p2721 = pneg %p2720
    $region54: #{unet_decoder_forward.4} parent=5 // pred_check_branch
      %2723 = sbr.rel (%p2721) target = $region56
    $region55: #{unet_decoder_forward.4} parent=5 // pred_region
      %s2724 = ssub.s32 %s13, 2
      // Predicated region
      $region57: #{unet_decoder_forward.4} parent=55 // pred_check
        %p2725 = pneg %p194
      $region58: #{unet_decoder_forward.4} parent=55 // pred_check_branch
        %2727 = sbr.rel (%p2725) target = $region60
      $region59: #{unet_decoder_forward.4} parent=55 // pred_region
        %p2728 = scmp.lt.s32.totalorder %s19, 1
        %s2729 = scalar_select %p2728, %s19, 1
        %s2730 = smul.addr %s2729, 4
        %s2731 = smul.addr %s2730, 8
        %s2732 = scalar_lea.vmem %s7, %s2731
      $region60: #{unet_decoder_forward.4} parent=55 // pred_fallthru
        _
    $region56: #{unet_decoder_forward.4} parent=5 // pred_fallthru
      _
  $region6: #{unet_decoder_forward.4} parent=0 // loop_footer
    %s17 = sadd.s32 1, %s13
  $region7: #{unet_decoder_forward.4} parent=0 // loop_footer_branch
    %12 = sbr.rel target = $region3
  $region8: #{unet_decoder_forward.4} parent=0 // loop_exit
    _

// kernel: unet_decoder_forward.5
$region0: #{unet_decoder_forward.5}
  #allocation0 [shape = 'u32[]', space=smem, size = 0x4, offset = 0x4, fixed_abs, tag = 'smem constant byte address 0x4 - core index']
  #allocation1 [shape = 'u32[144,128]{1,0:T(1,128)}', space=vmem, size = 0x12000, scoped, tag = 'internal scratch']
  %s0 = inlined_call_operand.vmem [shape: f32[2,8,676], index: 0, kind: input, shape index: {}]
  %s1 = inlined_call_operand.vmem [shape: f32[9,4,8], index: 1, kind: input, shape index: {}]
  %s2 = inlined_call_operand.vmem [shape: f32[4,1], index: 2, kind: input, shape index: {}]
  %s3 = inlined_call_operand.vmem [shape: f32[9,4,4], index: 3, kind: input, shape index: {}]
  %s4 = inlined_call_operand.vmem [shape: f32[4,1], index: 4, kind: input, shape index: {}]
  %s5 = inlined_call_operand.vmem [shape: f32[2,4,576], index: 5, kind: output, shape index: {}]
  %s6 = sld [smem:[#allocation0]]
  $region53: #{unet_decoder_forward.5} parent=0
    _
  %s8 = ssub.s32 1, %s6
  %s9 = scalar_select 0, %s8, %s6
  loop: start=0, step=1, limit=4
  $region2: #{unet_decoder_forward.5} parent=0 // loop_pre_header
    _
  $region3: #{unet_decoder_forward.5} parent=0 // loop_header
    %s11 = sphi 0, %s15
    %p12 = scmp.ge.s32.totalorder %s11, 4
    %s21 = sphi 0, %s23
    %s24 = sphi 0, %s21
    %s25 = sphi 0, %s24
    %s41 = sphi 0, %s25
    %s45 = sphi 0, %s45
    %s47 = sphi 0, %s45
    %s48 = sphi 0, %s47
    %s62 = sphi 0, %s48
    %s66 = sphi 0, %s66
    %s68 = sphi 0, %s66
    %s69 = sphi 0, %s68
    %s83 = sphi 0, %s69
    %s87 = sphi 0, %s87
    %s89 = sphi 0, %s87
    %s90 = sphi 0, %s89
    %s104 = sphi 0, %s90
    %s108 = sphi 0, %s108
    %s110 = sphi 0, %s108
    %s111 = sphi 0, %s110
    %s125 = sphi 0, %s111
    %s131 = sphi 0, %s133
    %s134 = sphi 0, %s131
    %s135 = sphi 0, %s134
    %s151 = sphi 0, %s135
  $region4: #{unet_decoder_forward.5} parent=0 // loop_header_branch
    %14 = sbr.rel (%p12) target = $region8
  $region5: #{unet_decoder_forward.5} parent=0 // loop_body
    %s16 = ssub.s32 %s11, 1
    %s17 = ssub.s32 %s11, 2
    %s18 = sadd.s32 %s11, 1
    %s19 = ssub.s32 %s11, %s18
    %p20 = scmp.eq.s32.totalorder %s19, 0
    %s22 = sadd.s32 %s21, 1
    %s23 = scalar_select %p20, %s21, %s22
    %p26 = pneg %p20
    %p27 = scmp.eq.s32.totalorder %s11, 1
    %p28 = por %p26, %p27
    %p29 = scmp.ne.s32.totalorder %s21, %s24
    %p30 = scmp.eq.s32.totalorder %s11, 0
    %p31 = por %p29, %p30
    %p32 = scmp.ne.s32.totalorder %s21, %s24
    %p33 = scmp.eq.s32.totalorder %s16, 1
    %p34 = por %p32, %p33
    %p35 = scmp.ne.s32.totalorder %s24, %s25
    %p36 = scmp.eq.s32.totalorder %s16, 0
    %p37 = por %p35, %p36
    %p38 = scmp.ne.s32.totalorder %s24, %s25
    %p39 = scmp.eq.s32.totalorder %s17, 1
    %p40 = por %p38, %p39
    %p42 = scmp.ne.s32.totalorder %s25, %s41
    %p43 = scmp.eq.s32.totalorder %s17, 0
    %p44 = por %p42, %p43
    %s46 = sadd.s32 %s45, 1
    %p49 = scmp.eq.s32.totalorder %s11, 1
    %p50 = scmp.ne.s32.totalorder %s45, %s47
    %p51 = scmp.eq.s32.totalorder %s11, 0
    %p52 = por %p50, %p51
    %p53 = scmp.ne.s32.totalorder %s45, %s47
    %p54 = scmp.eq.s32.totalorder %s16, 1
    %p55 = por %p53, %p54
    %p56 = scmp.ne.s32.totalorder %s47, %s48
    %p57 = scmp.eq.s32.totalorder %s16, 0
    %p58 = por %p56, %p57
    %p59 = scmp.ne.s32.totalorder %s47, %s48
    %p60 = scmp.eq.s32.totalorder %s17, 1
    %p61 = por %p59, %p60
    %p63 = scmp.ne.s32.totalorder %s48, %s62
    %p64 = scmp.eq.s32.totalorder %s17, 0
    %p65 = por %p63, %p64
    %s67 = sadd.s32 %s66, 1
    %p70 = scmp.eq.s32.totalorder %s11, 1
    %p71 = scmp.ne.s32.totalorder %s66, %s68
    %p72 = scmp.eq.s32.totalorder %s11, 0
    %p73 = por %p71, %p72
    %p74 = scmp.ne.s32.totalorder %s66, %s68
    %p75 = scmp.eq.s32.totalorder %s16, 1
    %p76 = por %p74, %p75
    %p77 = scmp.ne.s32.totalorder %s68, %s69
    %p78 = scmp.eq.s32.totalorder %s16, 0
    %p79 = por %p77, %p78
    %p80 = scmp.ne.s32.totalorder %s68, %s69
    %p81 = scmp.eq.s32.totalorder %s17, 1
    %p82 = por %p80, %p81
    %p84 = scmp.ne.s32.totalorder %s69, %s83
    %p85 = scmp.eq.s32.totalorder %s17, 0
    %p86 = por %p84, %p85
    %s88 = sadd.s32 %s87, 1
    %p91 = scmp.eq.s32.totalorder %s11, 1
    %p92 = scmp.ne.s32.totalorder %s87, %s89
    %p93 = scmp.eq.s32.totalorder %s11, 0
    %p94 = por %p92, %p93
    %p95 = scmp.ne.s32.totalorder %s87, %s89
    %p96 = scmp.eq.s32.totalorder %s16, 1
    %p97 = por %p95, %p96
    %p98 = scmp.ne.s32.totalorder %s89, %s90
    %p99 = scmp.eq.s32.totalorder %s16, 0
    %p100 = por %p98, %p99
    %p101 = scmp.ne.s32.totalorder %s89, %s90
    %p102 = scmp.eq.s32.totalorder %s17, 1
    %p103 = por %p101, %p102
    %p105 = scmp.ne.s32.totalorder %s90, %s104
    %p106 = scmp.eq.s32.totalorder %s17, 0
    %p107 = por %p105, %p106
    %s109 = sadd.s32 %s108, 1
    %p112 = scmp.eq.s32.totalorder %s11, 1
    %p113 = scmp.ne.s32.totalorder %s108, %s110
    %p114 = scmp.eq.s32.totalorder %s11, 0
    %p115 = por %p113, %p114
    %p116 = scmp.ne.s32.totalorder %s108, %s110
    %p117 = scmp.eq.s32.totalorder %s16, 1
    %p118 = por %p116, %p117
    %p119 = scmp.ne.s32.totalorder %s110, %s111
    %p120 = scmp.eq.s32.totalorder %s16, 0
    %p121 = por %p119, %p120
    %p122 = scmp.ne.s32.totalorder %s110, %s111
    %p123 = scmp.eq.s32.totalorder %s17, 1
    %p124 = por %p122, %p123
    %p126 = scmp.ne.s32.totalorder %s111, %s125
    %p127 = scmp.eq.s32.totalorder %s17, 0
    %p128 = por %p126, %p127
    %s129 = ssub.s32 %s11, %s18
    %p130 = scmp.eq.s32.totalorder %s129, 0
    %s132 = sadd.s32 %s131, 1
    %s133 = scalar_select %p130, %s131, %s132
    %p136 = pneg %p130
    %p137 = scmp.eq.s32.totalorder %s11, 1
    %p138 = por %p136, %p137
    %p139 = scmp.ne.s32.totalorder %s131, %s134
    %p140 = scmp.eq.s32.totalorder %s11, 0
    %p141 = por %p139, %p140
    %p142 = scmp.ne.s32.totalorder %s131, %s134
    %p143 = scmp.eq.s32.totalorder %s16, 1
    %p144 = por %p142, %p143
    %p145 = scmp.ne.s32.totalorder %s134, %s135
    %p146 = scmp.eq.s32.totalorder %s16, 0
    %p147 = por %p145, %p146
    %p148 = scmp.ne.s32.totalorder %s134, %s135
    %p149 = scmp.eq.s32.totalorder %s17, 1
    %p150 = por %p148, %p149
    %p152 = scmp.ne.s32.totalorder %s135, %s151
    %p153 = scmp.eq.s32.totalorder %s17, 0
    %p154 = por %p152, %p153
    %p155 = scmp.le.s32.totalorder 1, %s11
    %p156 = scmp.lt.s32.totalorder %s11, 3
    %p157 = pnand %p155, %p156
    %p158 = pneg %p157
    // Predicated region
    $region9: #{unet_decoder_forward.5} parent=5 // pred_check
      _
    $region10: #{unet_decoder_forward.5} parent=5 // pred_check_branch
      %160 = sbr.rel (%p157) target = $region12
    $region11: #{unet_decoder_forward.5} parent=5 // pred_region
      %s161 = ssub.s32 %s11, 1
      // Predicated region
      $region13: #{unet_decoder_forward.5} parent=11 // pred_check
        %p162 = pneg %p58
      $region14: #{unet_decoder_forward.5} parent=11 // pred_check_branch
        %164 = sbr.rel (%p162) target = $region16
      $region15: #{unet_decoder_forward.5} parent=11 // pred_region
        _
      $region16: #{unet_decoder_forward.5} parent=11 // pred_fallthru
        _
      // Predicated region
      $region17: #{unet_decoder_forward.5} parent=11 // pred_check
        %p165 = pneg %p79
      $region18: #{unet_decoder_forward.5} parent=11 // pred_check_branch
        %167 = sbr.rel (%p165) target = $region20
      $region19: #{unet_decoder_forward.5} parent=11 // pred_region
        _
      $region20: #{unet_decoder_forward.5} parent=11 // pred_fallthru
        _
      // Predicated region
      $region21: #{unet_decoder_forward.5} parent=11 // pred_check
        %p168 = pneg %p100
      $region22: #{unet_decoder_forward.5} parent=11 // pred_check_branch
        %170 = sbr.rel (%p168) target = $region24
      $region23: #{unet_decoder_forward.5} parent=11 // pred_region
        _
      $region24: #{unet_decoder_forward.5} parent=11 // pred_fallthru
        _
      // Predicated region
      $region25: #{unet_decoder_forward.5} parent=11 // pred_check
        %p171 = pneg %p121
      $region26: #{unet_decoder_forward.5} parent=11 // pred_check_branch
        %173 = sbr.rel (%p171) target = $region28
      $region27: #{unet_decoder_forward.5} parent=11 // pred_region
        _
      $region28: #{unet_decoder_forward.5} parent=11 // pred_fallthru
        _
    $region12: #{unet_decoder_forward.5} parent=5 // pred_fallthru
      _
    %p174 = scmp.lt.s32.totalorder %s11, 2
    // Predicated region
    $region29: #{unet_decoder_forward.5} parent=5 // pred_check
      %p175 = pneg %p174
    $region30: #{unet_decoder_forward.5} parent=5 // pred_check_branch
      %177 = sbr.rel (%p175) target = $region32
    $region31: #{unet_decoder_forward.5} parent=5 // pred_region
      // Predicated region
      $region33: #{unet_decoder_forward.5} parent=31 // pred_check
        %p178 = pneg %p31
      $region34: #{unet_decoder_forward.5} parent=31 // pred_check_branch
        %180 = sbr.rel (%p178) target = $region36
      $region35: #{unet_decoder_forward.5} parent=31 // pred_region
        %p181 = scmp.lt.s32.totalorder %s11, 1
        %s182 = scalar_select %p181, %s11, 1
        %s183 = smul.addr %s182, 6
        %s184 = smul.addr %s183, 8
        %s185 = scalar_lea.vmem %s0, %s184
      $region36: #{unet_decoder_forward.5} parent=31 // pred_fallthru
        _
    $region32: #{unet_decoder_forward.5} parent=5 // pred_fallthru
      _
    %p186 = scmp.le.s32.totalorder 1, %s11
    %p187 = scmp.lt.s32.totalorder %s11, 3
    %p188 = pnand %p186, %p187
    %p189 = pneg %p188
    // Predicated region
    $region37: #{unet_decoder_forward.5} parent=5 // pred_check
      _
    $region38: #{unet_decoder_forward.5} parent=5 // pred_check_branch
      %191 = sbr.rel (%p188) target = $region40
    $region39: #{unet_decoder_forward.5} parent=5 // pred_region
      %s192 = ssub.s32 %s11, 1
      %p193 = scmp.lt.s32.totalorder %s16, 1
      %s194 = scalar_select %p193, %s16, 1
      %s195 = smul.addr %s194, 6
      %s196 = smul.addr %s195, 8
      %s197 = scalar_lea.vmem %s0, %s196
      %p198 = pneg %p37
      %p199 = pneg %p34
      %p200 = pneg %p58
      %p201 = pneg %p55
      %p202 = pneg %p79
      %p203 = pneg %p76
      %p204 = pneg %p100
      %p205 = pneg %p97
      %p206 = pneg %p121
      %p207 = pneg %p118
      %p208 = pneg %p147
      %p209 = pneg %p144
      %p210 = scmp.lt.s32.totalorder %s16, 1
      %s211 = scalar_select %p210, %s16, 1
      %s212 = smul.addr %s211, 5
      %s213 = smul.addr %s212, 4
      %s214 = scalar_lea.vmem %s5, %s213
      %p215 = scmp.lt.s32.totalorder %s16, 1
      %s216 = scalar_select %p215, %s16, 1
      %s217 = smul.addr %s216, 6
      %s218 = smul.addr %s217, 8
      %s219 = scalar_lea.vmem %s0, %s218
      %p220 = scmp.lt.s32.totalorder %s16, 1
      %s221 = scalar_select %p220, %s16, 1
      %s222 = smul.addr %s221, 5
      %s223 = smul.addr %s222, 4
      %s224 = scalar_lea.vmem %s5, %s223
      %v225 = vld [vmem:[%s219] sm:$0xff]
      %v226 = vld [vmem:[%s219 + $0x8] sm:$0xff]
      %v227 = vld [vmem:[%s219 + $0x10] sm:$0xff]
      %v228 = vld [vmem:[%s219 + $0x18] sm:$0xff]
      %v229 = vld [vmem:[%s219 + $0x20] sm:$0xff]
      %v230 = vld [vmem:[%s219 + $0x28] sm:$0xff]
      %v231 = vld [vmem:[%s1] sm:$0xf]
      %s232 = scalar_lea.vmem %s1, 4
      %v233 = vld [vmem:[%s232] sm:$0xf]
      %239 = vrot.lane.b32.xlu0 %v225, 127
      %v240 = vpop.permute.xlu0 %239
      %241 = vrot.lane.b32.xlu0 %v226, 127
      %v242 = vpop.permute.xlu0 %241
      %243 = vrot.lane.b32.xlu0 %v227, 127
      %v244 = vpop.permute.xlu0 %243
      %245 = vrot.lane.b32.xlu0 %v228, 127
      %v246 = vpop.permute.xlu0 %245
      %247 = vrot.lane.b32.xlu0 %v229, 127
      %v248 = vpop.permute.xlu0 %247
      %vm249 = vcmask 1039360
      %v250 = vsel %vm249, %v240, %v242
      %v251 = vsel %vm249, %v242, %v244
      %v252 = vsel %vm249, %v244, %v246
      %v253 = vsel %vm249, %v246, %v248
      %vm259 = vcmask 64512
      %v261 = vsel %vm259, %v233, 0
      %263 = vmatprep.subr.mxu0 %v251
      %264 = vmatpush1.msra.mxu0 %v250
      %265 = vmatprep.subr.mxu0 0.0
      %266 = vmatpush1.msra.mxu0 0.0
      %267 = vmatprep.subr.mxu0 0.0
      %268 = vmatpush1.msra.mxu0 0.0
      %269 = vmatprep.subr.mxu0 0.0
      %270 = vmatpush1.msra.mxu0 0.0
      %271 = vmatprep.subr.mxu0 0.0
      %272 = vmatpush1.msra.mxu0 0.0
      %273 = vmatprep.subr.mxu0 0.0
      %274 = vmatpush1.msra.mxu0 0.0
      %275 = vmatprep.subr.mxu0 0.0
      %276 = vmatpush1.msra.mxu0 0.0
      %277 = vmatprep.subr.mxu0 0.0
      %278 = vmatpush1.msra.mxu0 0.0
      %279 = vmatprep.subr.mxu0 0.0
      %280 = vmatpush1.msra.mxu0 0.0
      %281 = vmatprep.subr.mxu0 0.0
      %282 = vmatpush1.msra.mxu0 0.0
      %283 = vmatprep.subr.mxu0 0.0
      %284 = vmatpush1.msra.mxu0 0.0
      %285 = vmatprep.subr.mxu0 0.0
      %286 = vmatpush1.msra.mxu0 0.0
      %287 = vmatprep.subr.mxu0 0.0
      %288 = vmatpush1.msra.mxu0 0.0
      %289 = vmatprep.subr.mxu0 0.0
      %290 = vmatpush1.msra.mxu0 0.0
      %291 = vmatprep.subr.mxu0 0.0
      %292 = vmatpush1.msra.mxu0 0.0
      %293 = vmatprep.subr.mxu0 0.0
      %294 = vmatpush1.msra.mxu0 0.0
      %295 = vmatprep.subr.mxu0 0.0
      %296 = vmatpush1.msra.mxu0 0.0
      %297 = vmatprep.subr.mxu0 0.0
      %298 = vmatpush1.msra.mxu0 0.0
      %299 = vmatprep.subr.mxu0 0.0
      %300 = vmatpush1.msra.mxu0 0.0
      %301 = vmatprep.subr.mxu0 0.0
      %302 = vmatpush1.msra.mxu0 0.0
      %303 = vmatprep.subr.mxu0 0.0
      %304 = vmatpush1.msra.mxu0 0.0
      %305 = vmatprep.subr.mxu0 0.0
      %306 = vmatpush1.msra.mxu0 0.0
      %307 = vmatprep.subr.mxu0 0.0
      %308 = vmatpush1.msra.mxu0 0.0
      %309 = vmatprep.subr.mxu0 0.0
      %310 = vmatpush1.msra.mxu0 0.0
      %311 = vmatprep.subr.mxu0 0.0
      %312 = vmatpush1.msra.mxu0 0.0
      %313 = vmatprep.subr.mxu0 0.0
      %314 = vmatpush1.msra.mxu0 0.0
      %315 = vmatprep.subr.mxu0 0.0
      %316 = vmatpush1.msra.mxu0 0.0
      %317 = vmatprep.subr.mxu0 0.0
      %318 = vmatpush1.msra.mxu0 0.0
      %319 = vmatprep.subr.mxu0 0.0
      %320 = vmatpush1.msra.mxu0 0.0
      %321 = vmatprep.subr.mxu0 0.0
      %322 = vmatpush1.msra.mxu0 0.0
      %323 = vmatprep.subr.mxu0 0.0
      %324 = vmatpush1.msra.mxu0 0.0
      %325 = vmatprep.subr.mxu0 0.0
      %326 = vmatpush1.msra.mxu0 0.0
      %327 = vmatprep.mubr.f32.mxu0 0.0
      %328 = vmatmul.mubr.f32.gmra.mrb[0].mxu0 %v261
      %v329 = vpop.f32.mrb[0].mxu0
      %v330 = vadd.f32 0.0, %v329
      %v331 = vpop.f32.mrb[0].mxu0
      %v332 = vadd.f32 0.0, %v331
      %333 = vdwg.mxu0
      %334 = vmatprep.subr.mxu0 %v253
      %335 = vmatpush1.msra.mxu0 %v252
      %336 = vmatprep.subr.mxu0 0.0
      %337 = vmatpush1.msra.mxu0 0.0
      %338 = vmatprep.subr.mxu0 0.0
      %339 = vmatpush1.msra.mxu0 0.0
      %340 = vmatprep.subr.mxu0 0.0
      %341 = vmatpush1.msra.mxu0 0.0
      %342 = vmatprep.subr.mxu0 0.0
      %343 = vmatpush1.msra.mxu0 0.0
      %344 = vmatprep.subr.mxu0 0.0
      %345 = vmatpush1.msra.mxu0 0.0
      %346 = vmatprep.subr.mxu0 0.0
      %347 = vmatpush1.msra.mxu0 0.0
      %348 = vmatprep.subr.mxu0 0.0
      %349 = vmatpush1.msra.mxu0 0.0
      %350 = vmatprep.subr.mxu0 0.0
      %351 = vmatpush1.msra.mxu0 0.0
      %352 = vmatprep.subr.mxu0 0.0
      %353 = vmatpush1.msra.mxu0 0.0
      %354 = vmatprep.subr.mxu0 0.0
      %355 = vmatpush1.msra.mxu0 0.0
      %356 = vmatprep.subr.mxu0 0.0
      %357 = vmatpush1.msra.mxu0 0.0
      %358 = vmatprep.subr.mxu0 0.0
      %359 = vmatpush1.msra.mxu0 0.0
      %360 = vmatprep.subr.mxu0 0.0
      %361 = vmatpush1.msra.mxu0 0.0
      %362 = vmatprep.subr.mxu0 0.0
      %363 = vmatpush1.msra.mxu0 0.0
      %364 = vmatprep.subr.mxu0 0.0
      %365 = vmatpush1.msra.mxu0 0.0
      %366 = vmatprep.subr.mxu0 0.0
      %367 = vmatpush1.msra.mxu0 0.0
      %368 = vmatprep.subr.mxu0 0.0
      %369 = vmatpush1.msra.mxu0 0.0
      %370 = vmatprep.subr.mxu0 0.0
      %371 = vmatpush1.msra.mxu0 0.0
      %372 = vmatprep.subr.mxu0 0.0
      %373 = vmatpush1.msra.mxu0 0.0
      %374 = vmatprep.subr.mxu0 0.0
      %375 = vmatpush1.msra.mxu0 0.0
      %376 = vmatprep.subr.mxu0 0.0
      %377 = vmatpush1.msra.mxu0 0.0
      %378 = vmatprep.subr.mxu0 0.0
      %379 = vmatpush1.msra.mxu0 0.0
      %380 = vmatprep.subr.mxu0 0.0
      %381 = vmatpush1.msra.mxu0 0.0
      %382 = vmatprep.subr.mxu0 0.0
      %383 = vmatpush1.msra.mxu0 0.0
      %384 = vmatprep.subr.mxu0 0.0
      %385 = vmatpush1.msra.mxu0 0.0
      %386 = vmatprep.subr.mxu0 0.0
      %387 = vmatpush1.msra.mxu0 0.0
      %388 = vmatprep.subr.mxu0 0.0
      %389 = vmatpush1.msra.mxu0 0.0
      %390 = vmatprep.subr.mxu0 0.0
      %391 = vmatpush1.msra.mxu0 0.0
      %392 = vmatprep.subr.mxu0 0.0
      %393 = vmatpush1.msra.mxu0 0.0
      %394 = vmatprep.subr.mxu0 0.0
      %395 = vmatpush1.msra.mxu0 0.0
      %396 = vmatprep.subr.mxu0 0.0
      %397 = vmatpush1.msra.mxu0 0.0
      %398 = vmatprep.mubr.f32.mxu0 0.0
      %399 = vmatmul.mubr.f32.gmra.mrb[0].mxu0 %v261
      %v400 = vpop.f32.mrb[0].mxu0
      %v401 = vadd.f32 0.0, %v400
      %v402 = vpop.f32.mrb[0].mxu0
      %v403 = vadd.f32 0.0, %v402
      %404 = vdwg.mxu0
      %405 = vmatprep.subr.mxu0 0.0
      %406 = vmatpush1.msra.mxu0 %v248
      %407 = vmatprep.subr.mxu0 0.0
      %408 = vmatpush1.msra.mxu0 0.0
      %409 = vmatprep.subr.mxu0 0.0
      %410 = vmatpush1.msra.mxu0 0.0
      %411 = vmatprep.subr.mxu0 0.0
      %412 = vmatpush1.msra.mxu0 0.0
      %413 = vmatprep.subr.mxu0 0.0
      %414 = vmatpush1.msra.mxu0 0.0
      %415 = vmatprep.subr.mxu0 0.0
      %416 = vmatpush1.msra.mxu0 0.0
      %417 = vmatprep.subr.mxu0 0.0
      %418 = vmatpush1.msra.mxu0 0.0
      %419 = vmatprep.subr.mxu0 0.0
      %420 = vmatpush1.msra.mxu0 0.0
      %421 = vmatprep.subr.mxu0 0.0
      %422 = vmatpush1.msra.mxu0 0.0
      %423 = vmatprep.subr.mxu0 0.0
      %424 = vmatpush1.msra.mxu0 0.0
      %425 = vmatprep.subr.mxu0 0.0
      %426 = vmatpush1.msra.mxu0 0.0
      %427 = vmatprep.subr.mxu0 0.0
      %428 = vmatpush1.msra.mxu0 0.0
      %429 = vmatprep.subr.mxu0 0.0
      %430 = vmatpush1.msra.mxu0 0.0
      %431 = vmatprep.subr.mxu0 0.0
      %432 = vmatpush1.msra.mxu0 0.0
      %433 = vmatprep.subr.mxu0 0.0
      %434 = vmatpush1.msra.mxu0 0.0
      %435 = vmatprep.subr.mxu0 0.0
      %436 = vmatpush1.msra.mxu0 0.0
      %437 = vmatprep.subr.mxu0 0.0
      %438 = vmatpush1.msra.mxu0 0.0
      %439 = vmatprep.subr.mxu0 0.0
      %440 = vmatpush1.msra.mxu0 0.0
      %441 = vmatprep.subr.mxu0 0.0
      %442 = vmatpush1.msra.mxu0 0.0
      %443 = vmatprep.subr.mxu0 0.0
      %444 = vmatpush1.msra.mxu0 0.0
      %445 = vmatprep.subr.mxu0 0.0
      %446 = vmatpush1.msra.mxu0 0.0
      %447 = vmatprep.subr.mxu0 0.0
      %448 = vmatpush1.msra.mxu0 0.0
      %449 = vmatprep.subr.mxu0 0.0
      %450 = vmatpush1.msra.mxu0 0.0
      %451 = vmatprep.subr.mxu0 0.0
      %452 = vmatpush1.msra.mxu0 0.0
      %453 = vmatprep.subr.mxu0 0.0
      %454 = vmatpush1.msra.mxu0 0.0
      %455 = vmatprep.subr.mxu0 0.0
      %456 = vmatpush1.msra.mxu0 0.0
      %457 = vmatprep.subr.mxu0 0.0
      %458 = vmatpush1.msra.mxu0 0.0
      %459 = vmatprep.subr.mxu0 0.0
      %460 = vmatpush1.msra.mxu0 0.0
      %461 = vmatprep.subr.mxu0 0.0
      %462 = vmatpush1.msra.mxu0 0.0
      %463 = vmatprep.subr.mxu0 0.0
      %464 = vmatpush1.msra.mxu0 0.0
      %465 = vmatprep.subr.mxu0 0.0
      %466 = vmatpush1.msra.mxu0 0.0
      %467 = vmatprep.subr.mxu0 0.0
      %468 = vmatpush1.msra.mxu0 0.0
      %469 = vmatprep.mubr.f32.mxu0 0.0
      %470 = vmatmul.mubr.f32.gmra.mrb[0].mxu0 %v261
      %v471 = vpop.f32.mrb[0].mxu0
      %v472 = vadd.f32 0.0, %v471
      %v473 = vpop.f32.mrb[0].mxu0
      %474 = vdwg.mxu0
      %v476 = vsel %vm259, %v231, 0
      %478 = vmatprep.subr.mxu0 %v226
      %479 = vmatpush1.msra.mxu0 %v225
      %480 = vmatprep.subr.mxu0 0.0
      %481 = vmatpush1.msra.mxu0 0.0
      %482 = vmatprep.subr.mxu0 0.0
      %483 = vmatpush1.msra.mxu0 0.0
      %484 = vmatprep.subr.mxu0 0.0
      %485 = vmatpush1.msra.mxu0 0.0
      %486 = vmatprep.subr.mxu0 0.0
      %487 = vmatpush1.msra.mxu0 0.0
      %488 = vmatprep.subr.mxu0 0.0
      %489 = vmatpush1.msra.mxu0 0.0
      %490 = vmatprep.subr.mxu0 0.0
      %491 = vmatpush1.msra.mxu0 0.0
      %492 = vmatprep.subr.mxu0 0.0
      %493 = vmatpush1.msra.mxu0 0.0
      %494 = vmatprep.subr.mxu0 0.0
      %495 = vmatpush1.msra.mxu0 0.0
      %496 = vmatprep.subr.mxu0 0.0
      %497 = vmatpush1.msra.mxu0 0.0
      %498 = vmatprep.subr.mxu0 0.0
      %499 = vmatpush1.msra.mxu0 0.0
      %500 = vmatprep.subr.mxu0 0.0
      %501 = vmatpush1.msra.mxu0 0.0
      %502 = vmatprep.subr.mxu0 0.0
      %503 = vmatpush1.msra.mxu0 0.0
      %504 = vmatprep.subr.mxu0 0.0
      %505 = vmatpush1.msra.mxu0 0.0
      %506 = vmatprep.subr.mxu0 0.0
      %507 = vmatpush1.msra.mxu0 0.0
      %508 = vmatprep.subr.mxu0 0.0
      %509 = vmatpush1.msra.mxu0 0.0
      %510 = vmatprep.subr.mxu0 0.0
      %511 = vmatpush1.msra.mxu0 0.0
      %512 = vmatprep.subr.mxu0 0.0
      %513 = vmatpush1.msra.mxu0 0.0
      %514 = vmatprep.subr.mxu0 0.0
      %515 = vmatpush1.msra.mxu0 0.0
      %516 = vmatprep.subr.mxu0 0.0
      %517 = vmatpush1.msra.mxu0 0.0
      %518 = vmatprep.subr.mxu0 0.0
      %519 = vmatpush1.msra.mxu0 0.0
      %520 = vmatprep.subr.mxu0 0.0
      %521 = vmatpush1.msra.mxu0 0.0
      %522 = vmatprep.subr.mxu0 0.0
      %523 = vmatpush1.msra.mxu0 0.0
      %524 = vmatprep.subr.mxu0 0.0
      %525 = vmatpush1.msra.mxu0 0.0
      %526 = vmatprep.subr.mxu0 0.0
      %527 = vmatpush1.msra.mxu0 0.0
      %528 = vmatprep.subr.mxu0 0.0
      %529 = vmatpush1.msra.mxu0 0.0
      %530 = vmatprep.subr.mxu0 0.0
      %531 = vmatpush1.msra.mxu0 0.0
      %532 = vmatprep.subr.mxu0 0.0
      %533 = vmatpush1.msra.mxu0 0.0
      %534 = vmatprep.subr.mxu0 0.0
      %535 = vmatpush1.msra.mxu0 0.0
      %536 = vmatprep.subr.mxu0 0.0
      %537 = vmatpush1.msra.mxu0 0.0
      %538 = vmatprep.subr.mxu0 0.0
      %539 = vmatpush1.msra.mxu0 0.0
      %540 = vmatprep.subr.mxu0 0.0
      %541 = vmatpush1.msra.mxu0 0.0
      %542 = vmatprep.mubr.f32.mxu0 0.0
      %543 = vmatmul.mubr.f32.gmra.mrb[0].mxu0 %v476
      %v544 = vpop.f32.mrb[0].mxu0
      %v545 = vadd.f32 %v330, %v544
      %v546 = vpop.f32.mrb[0].mxu0
      %v547 = vadd.f32 %v332, %v546
      %548 = vdwg.mxu0
      %549 = vmatprep.subr.mxu0 %v228
      %550 = vmatpush1.msra.mxu0 %v227
      %551 = vmatprep.subr.mxu0 0.0
      %552 = vmatpush1.msra.mxu0 0.0
      %553 = vmatprep.subr.mxu0 0.0
      %554 = vmatpush1.msra.mxu0 0.0
      %555 = vmatprep.subr.mxu0 0.0
      %556 = vmatpush1.msra.mxu0 0.0
      %557 = vmatprep.subr.mxu0 0.0
      %558 = vmatpush1.msra.mxu0 0.0
      %559 = vmatprep.subr.mxu0 0.0
      %560 = vmatpush1.msra.mxu0 0.0
      %561 = vmatprep.subr.mxu0 0.0
      %562 = vmatpush1.msra.mxu0 0.0
      %563 = vmatprep.subr.mxu0 0.0
      %564 = vmatpush1.msra.mxu0 0.0
      %565 = vmatprep.subr.mxu0 0.0
      %566 = vmatpush1.msra.mxu0 0.0
      %567 = vmatprep.subr.mxu0 0.0
      %568 = vmatpush1.msra.mxu0 0.0
      %569 = vmatprep.subr.mxu0 0.0
      %570 = vmatpush1.msra.mxu0 0.0
      %571 = vmatprep.subr.mxu0 0.0
      %572 = vmatpush1.msra.mxu0 0.0
      %573 = vmatprep.subr.mxu0 0.0
      %574 = vmatpush1.msra.mxu0 0.0
      %575 = vmatprep.subr.mxu0 0.0
      %576 = vmatpush1.msra.mxu0 0.0
      %577 = vmatprep.subr.mxu0 0.0
      %578 = vmatpush1.msra.mxu0 0.0
      %579 = vmatprep.subr.mxu0 0.0
      %580 = vmatpush1.msra.mxu0 0.0
      %581 = vmatprep.subr.mxu0 0.0
      %582 = vmatpush1.msra.mxu0 0.0
      %583 = vmatprep.subr.mxu0 0.0
      %584 = vmatpush1.msra.mxu0 0.0
      %585 = vmatprep.subr.mxu0 0.0
      %586 = vmatpush1.msra.mxu0 0.0
      %587 = vmatprep.subr.mxu0 0.0
      %588 = vmatpush1.msra.mxu0 0.0
      %589 = vmatprep.subr.mxu0 0.0
      %590 = vmatpush1.msra.mxu0 0.0
      %591 = vmatprep.subr.mxu0 0.0
      %592 = vmatpush1.msra.mxu0 0.0
      %593 = vmatprep.subr.mxu0 0.0
      %594 = vmatpush1.msra.mxu0 0.0
      %595 = vmatprep.subr.mxu0 0.0
      %596 = vmatpush1.msra.mxu0 0.0
      %597 = vmatprep.subr.mxu0 0.0
      %598 = vmatpush1.msra.mxu0 0.0
      %599 = vmatprep.subr.mxu0 0.0
      %600 = vmatpush1.msra.mxu0 0.0
      %601 = vmatprep.subr.mxu0 0.0
      %602 = vmatpush1.msra.mxu0 0.0
      %603 = vmatprep.subr.mxu0 0.0
      %604 = vmatpush1.msra.mxu0 0.0
      %605 = vmatprep.subr.mxu0 0.0
      %606 = vmatpush1.msra.mxu0 0.0
      %607 = vmatprep.subr.mxu0 0.0
      %608 = vmatpush1.msra.mxu0 0.0
      %609 = vmatprep.subr.mxu0 0.0
      %610 = vmatpush1.msra.mxu0 0.0
      %611 = vmatprep.subr.mxu0 0.0
      %612 = vmatpush1.msra.mxu0 0.0
      %613 = vmatprep.mubr.f32.mxu0 0.0
      %614 = vmatmul.mubr.f32.gmra.mrb[0].mxu0 %v476
      %v615 = vpop.f32.mrb[0].mxu0
      %v616 = vadd.f32 %v401, %v615
      %v617 = vpop.f32.mrb[0].mxu0
      %v618 = vadd.f32 %v403, %v617
      %619 = vdwg.mxu0
      %620 = vmatprep.subr.mxu0 0.0
      %621 = vmatpush1.msra.mxu0 %v229
      %622 = vmatprep.subr.mxu0 0.0
      %623 = vmatpush1.msra.mxu0 0.0
      %624 = vmatprep.subr.mxu0 0.0
      %625 = vmatpush1.msra.mxu0 0.0
      %626 = vmatprep.subr.mxu0 0.0
      %627 = vmatpush1.msra.mxu0 0.0
      %628 = vmatprep.subr.mxu0 0.0
      %629 = vmatpush1.msra.mxu0 0.0
      %630 = vmatprep.subr.mxu0 0.0
      %631 = vmatpush1.msra.mxu0 0.0
      %632 = vmatprep.subr.mxu0 0.0
      %633 = vmatpush1.msra.mxu0 0.0
      %634 = vmatprep.subr.mxu0 0.0
      %635 = vmatpush1.msra.mxu0 0.0
      %636 = vmatprep.subr.mxu0 0.0
      %637 = vmatpush1.msra.mxu0 0.0
      %638 = vmatprep.subr.mxu0 0.0
      %639 = vmatpush1.msra.mxu0 0.0
      %640 = vmatprep.subr.mxu0 0.0
      %641 = vmatpush1.msra.mxu0 0.0
      %642 = vmatprep.subr.mxu0 0.0
      %643 = vmatpush1.msra.mxu0 0.0
      %644 = vmatprep.subr.mxu0 0.0
      %645 = vmatpush1.msra.mxu0 0.0
      %646 = vmatprep.subr.mxu0 0.0
      %647 = vmatpush1.msra.mxu0 0.0
      %648 = vmatprep.subr.mxu0 0.0
      %649 = vmatpush1.msra.mxu0 0.0
      %650 = vmatprep.subr.mxu0 0.0
      %651 = vmatpush1.msra.mxu0 0.0
      %652 = vmatprep.subr.mxu0 0.0
      %653 = vmatpush1.msra.mxu0 0.0
      %654 = vmatprep.subr.mxu0 0.0
      %655 = vmatpush1.msra.mxu0 0.0
      %656 = vmatprep.subr.mxu0 0.0
      %657 = vmatpush1.msra.mxu0 0.0
      %658 = vmatprep.subr.mxu0 0.0
      %659 = vmatpush1.msra.mxu0 0.0
      %660 = vmatprep.subr.mxu0 0.0
      %661 = vmatpush1.msra.mxu0 0.0
      %662 = vmatprep.subr.mxu0 0.0
      %663 = vmatpush1.msra.mxu0 0.0
      %664 = vmatprep.subr.mxu0 0.0
      %665 = vmatpush1.msra.mxu0 0.0
      %666 = vmatprep.subr.mxu0 0.0
      %667 = vmatpush1.msra.mxu0 0.0
      %668 = vmatprep.subr.mxu0 0.0
      %669 = vmatpush1.msra.mxu0 0.0
      %670 = vmatprep.subr.mxu0 0.0
      %671 = vmatpush1.msra.mxu0 0.0
      %672 = vmatprep.subr.mxu0 0.0
      %673 = vmatpush1.msra.mxu0 0.0
      %674 = vmatprep.subr.mxu0 0.0
      %675 = vmatpush1.msra.mxu0 0.0
      %676 = vmatprep.subr.mxu0 0.0
      %677 = vmatpush1.msra.mxu0 0.0
      %678 = vmatprep.subr.mxu0 0.0
      %679 = vmatpush1.msra.mxu0 0.0
      %680 = vmatprep.subr.mxu0 0.0
      %681 = vmatpush1.msra.mxu0 0.0
      %682 = vmatprep.subr.mxu0 0.0
      %683 = vmatpush1.msra.mxu0 0.0
      %684 = vmatprep.mubr.f32.mxu0 0.0
      %685 = vmatmul.mubr.f32.gmra.mrb[0].mxu0 %v476
      %v686 = vpop.f32.mrb[0].mxu0
      %v687 = vadd.f32 %v472, %v686
      %v688 = vpop.f32.mrb[0].mxu0
      %689 = vdwg.mxu0
      %s690 = scalar_lea.vmem %s1, 8
      %v691 = vld [vmem:[%s690] sm:$0xf]
      %692 = vrot.lane.b32.xlu0 %v225, 126
      %v693 = vpop.permute.xlu0 %692
      %694 = vrot.lane.b32.xlu0 %v226, 126
      %v695 = vpop.permute.xlu0 %694
      %696 = vrot.lane.b32.xlu0 %v227, 126
      %v697 = vpop.permute.xlu0 %696
      %698 = vrot.lane.b32.xlu0 %v228, 126
      %v699 = vpop.permute.xlu0 %698
      %700 = vrot.lane.b32.xlu0 %v229, 126
      %v701 = vpop.permute.xlu0 %700
      %vm702 = vcmask 1031168
      %v703 = vsel %vm702, %v693, %v695
      %v704 = vsel %vm702, %v695, %v697
      %v705 = vsel %vm702, %v697, %v699
      %v706 = vsel %vm702, %v699, %v701
      %v713 = vsel %vm259, %v691, 0
      %715 = vmatprep.subr.mxu0 %v704
      %716 = vmatpush1.msra.mxu0 %v703
      %717 = vmatprep.subr.mxu0 0.0
      %718 = vmatpush1.msra.mxu0 0.0
      %719 = vmatprep.subr.mxu0 0.0
      %720 = vmatpush1.msra.mxu0 0.0
      %721 = vmatprep.subr.mxu0 0.0
      %722 = vmatpush1.msra.mxu0 0.0
      %723 = vmatprep.subr.mxu0 0.0
      %724 = vmatpush1.msra.mxu0 0.0
      %725 = vmatprep.subr.mxu0 0.0
      %726 = vmatpush1.msra.mxu0 0.0
      %727 = vmatprep.subr.mxu0 0.0
      %728 = vmatpush1.msra.mxu0 0.0
      %729 = vmatprep.subr.mxu0 0.0
      %730 = vmatpush1.msra.mxu0 0.0
      %731 = vmatprep.subr.mxu0 0.0
      %732 = vmatpush1.msra.mxu0 0.0
      %733 = vmatprep.subr.mxu0 0.0
      %734 = vmatpush1.msra.mxu0 0.0
      %735 = vmatprep.subr.mxu0 0.0
      %736 = vmatpush1.msra.mxu0 0.0
      %737 = vmatprep.subr.mxu0 0.0
      %738 = vmatpush1.msra.mxu0 0.0
      %739 = vmatprep.subr.mxu0 0.0
      %740 = vmatpush1.msra.mxu0 0.0
      %741 = vmatprep.subr.mxu0 0.0
      %742 = vmatpush1.msra.mxu0 0.0
      %743 = vmatprep.subr.mxu0 0.0
      %744 = vmatpush1.msra.mxu0 0.0
      %745 = vmatprep.subr.mxu0 0.0
      %746 = vmatpush1.msra.mxu0 0.0
      %747 = vmatprep.subr.mxu0 0.0
      %748 = vmatpush1.msra.mxu0 0.0
      %749 = vmatprep.subr.mxu0 0.0
      %750 = vmatpush1.msra.mxu0 0.0
      %751 = vmatprep.subr.mxu0 0.0
      %752 = vmatpush1.msra.mxu0 0.0
      %753 = vmatprep.subr.mxu0 0.0
      %754 = vmatpush1.msra.mxu0 0.0
      %755 = vmatprep.subr.mxu0 0.0
      %756 = vmatpush1.msra.mxu0 0.0
      %757 = vmatprep.subr.mxu0 0.0
      %758 = vmatpush1.msra.mxu0 0.0
      %759 = vmatprep.subr.mxu0 0.0
      %760 = vmatpush1.msra.mxu0 0.0
      %761 = vmatprep.subr.mxu0 0.0
      %762 = vmatpush1.msra.mxu0 0.0
      %763 = vmatprep.subr.mxu0 0.0
      %764 = vmatpush1.msra.mxu0 0.0
      %765 = vmatprep.subr.mxu0 0.0
      %766 = vmatpush1.msra.mxu0 0.0
      %767 = vmatprep.subr.mxu0 0.0
      %768 = vmatpush1.msra.mxu0 0.0
      %769 = vmatprep.subr.mxu0 0.0
      %770 = vmatpush1.msra.mxu0 0.0
      %771 = vmatprep.subr.mxu0 0.0
      %772 = vmatpush1.msra.mxu0 0.0
      %773 = vmatprep.subr.mxu0 0.0
      %774 = vmatpush1.msra.mxu0 0.0
      %775 = vmatprep.subr.mxu0 0.0
      %776 = vmatpush1.msra.mxu0 0.0
      %777 = vmatprep.subr.mxu0 0.0
      %778 = vmatpush1.msra.mxu0 0.0
      %779 = vmatprep.mubr.f32.mxu0 0.0
      %780 = vmatmul.mubr.f32.gmra.mrb[0].mxu0 %v713
      %v781 = vpop.f32.mrb[0].mxu0
      %v782 = vadd.f32 0.0, %v781
      %v783 = vpop.f32.mrb[0].mxu0
      %v784 = vadd.f32 0.0, %v783
      %785 = vdwg.mxu0
      %786 = vmatprep.subr.mxu0 %v706
      %787 = vmatpush1.msra.mxu0 %v705
      %788 = vmatprep.subr.mxu0 0.0
      %789 = vmatpush1.msra.mxu0 0.0
      %790 = vmatprep.subr.mxu0 0.0
      %791 = vmatpush1.msra.mxu0 0.0
      %792 = vmatprep.subr.mxu0 0.0
      %793 = vmatpush1.msra.mxu0 0.0
      %794 = vmatprep.subr.mxu0 0.0
      %795 = vmatpush1.msra.mxu0 0.0
      %796 = vmatprep.subr.mxu0 0.0
      %797 = vmatpush1.msra.mxu0 0.0
      %798 = vmatprep.subr.mxu0 0.0
      %799 = vmatpush1.msra.mxu0 0.0
      %800 = vmatprep.subr.mxu0 0.0
      %801 = vmatpush1.msra.mxu0 0.0
      %802 = vmatprep.subr.mxu0 0.0
      %803 = vmatpush1.msra.mxu0 0.0
      %804 = vmatprep.subr.mxu0 0.0
      %805 = vmatpush1.msra.mxu0 0.0
      %806 = vmatprep.subr.mxu0 0.0
      %807 = vmatpush1.msra.mxu0 0.0
      %808 = vmatprep.subr.mxu0 0.0
      %809 = vmatpush1.msra.mxu0 0.0
      %810 = vmatprep.subr.mxu0 0.0
      %811 = vmatpush1.msra.mxu0 0.0
      %812 = vmatprep.subr.mxu0 0.0
      %813 = vmatpush1.msra.mxu0 0.0
      %814 = vmatprep.subr.mxu0 0.0
      %815 = vmatpush1.msra.mxu0 0.0
      %816 = vmatprep.subr.mxu0 0.0
      %817 = vmatpush1.msra.mxu0 0.0
      %818 = vmatprep.subr.mxu0 0.0
      %819 = vmatpush1.msra.mxu0 0.0
      %820 = vmatprep.subr.mxu0 0.0
      %821 = vmatpush1.msra.mxu0 0.0
      %822 = vmatprep.subr.mxu0 0.0
      %823 = vmatpush1.msra.mxu0 0.0
      %824 = vmatprep.subr.mxu0 0.0
      %825 = vmatpush1.msra.mxu0 0.0
      %826 = vmatprep.subr.mxu0 0.0
      %827 = vmatpush1.msra.mxu0 0.0
      %828 = vmatprep.subr.mxu0 0.0
      %829 = vmatpush1.msra.mxu0 0.0
      %830 = vmatprep.subr.mxu0 0.0
      %831 = vmatpush1.msra.mxu0 0.0
      %832 = vmatprep.subr.mxu0 0.0
      %833 = vmatpush1.msra.mxu0 0.0
      %834 = vmatprep.subr.mxu0 0.0
      %835 = vmatpush1.msra.mxu0 0.0
      %836 = vmatprep.subr.mxu0 0.0
      %837 = vmatpush1.msra.mxu0 0.0
      %838 = vmatprep.subr.mxu0 0.0
      %839 = vmatpush1.msra.mxu0 0.0
      %840 = vmatprep.subr.mxu0 0.0
      %841 = vmatpush1.msra.mxu0 0.0
      %842 = vmatprep.subr.mxu0 0.0
      %843 = vmatpush1.msra.mxu0 0.0
      %844 = vmatprep.subr.mxu0 0.0
      %845 = vmatpush1.msra.mxu0 0.0
      %846 = vmatprep.subr.mxu0 0.0
      %847 = vmatpush1.msra.mxu0 0.0
      %848 = vmatprep.subr.mxu0 0.0
      %849 = vmatpush1.msra.mxu0 0.0
      %850 = vmatprep.mubr.f32.mxu0 0.0
      %851 = vmatmul.mubr.f32.gmra.mrb[0].mxu0 %v713
      %v852 = vpop.f32.mrb[0].mxu0
      %v853 = vadd.f32 0.0, %v852
      %v854 = vpop.f32.mrb[0].mxu0
      %v855 = vadd.f32 0.0, %v854
      %856 = vdwg.mxu0
      %857 = vmatprep.subr.mxu0 0.0
      %858 = vmatpush1.msra.mxu0 %v701
      %859 = vmatprep.subr.mxu0 0.0
      %860 = vmatpush1.msra.mxu0 0.0
      %861 = vmatprep.subr.mxu0 0.0
      %862 = vmatpush1.msra.mxu0 0.0
      %863 = vmatprep.subr.mxu0 0.0
      %864 = vmatpush1.msra.mxu0 0.0
      %865 = vmatprep.subr.mxu0 0.0
      %866 = vmatpush1.msra.mxu0 0.0
      %867 = vmatprep.subr.mxu0 0.0
      %868 = vmatpush1.msra.mxu0 0.0
      %869 = vmatprep.subr.mxu0 0.0
      %870 = vmatpush1.msra.mxu0 0.0
      %871 = vmatprep.subr.mxu0 0.0
      %872 = vmatpush1.msra.mxu0 0.0
      %873 = vmatprep.subr.mxu0 0.0
      %874 = vmatpush1.msra.mxu0 0.0
      %875 = vmatprep.subr.mxu0 0.0
      %876 = vmatpush1.msra.mxu0 0.0
      %877 = vmatprep.subr.mxu0 0.0
      %878 = vmatpush1.msra.mxu0 0.0
      %879 = vmatprep.subr.mxu0 0.0
      %880 = vmatpush1.msra.mxu0 0.0
      %881 = vmatprep.subr.mxu0 0.0
      %882 = vmatpush1.msra.mxu0 0.0
      %883 = vmatprep.subr.mxu0 0.0
      %884 = vmatpush1.msra.mxu0 0.0
      %885 = vmatprep.subr.mxu0 0.0
      %886 = vmatpush1.msra.mxu0 0.0
      %887 = vmatprep.subr.mxu0 0.0
      %888 = vmatpush1.msra.mxu0 0.0
      %889 = vmatprep.subr.mxu0 0.0
      %890 = vmatpush1.msra.mxu0 0.0
      %891 = vmatprep.subr.mxu0 0.0
      %892 = vmatpush1.msra.mxu0 0.0
      %893 = vmatprep.subr.mxu0 0.0
      %894 = vmatpush1.msra.mxu0 0.0
      %895 = vmatprep.subr.mxu0 0.0
      %896 = vmatpush1.msra.mxu0 0.0
      %897 = vmatprep.subr.mxu0 0.0
      %898 = vmatpush1.msra.mxu0 0.0
      %899 = vmatprep.subr.mxu0 0.0
      %900 = vmatpush1.msra.mxu0 0.0
      %901 = vmatprep.subr.mxu0 0.0
      %902 = vmatpush1.msra.mxu0 0.0
      %903 = vmatprep.subr.mxu0 0.0
      %904 = vmatpush1.msra.mxu0 0.0
      %905 = vmatprep.subr.mxu0 0.0
      %906 = vmatpush1.msra.mxu0 0.0
      %907 = vmatprep.subr.mxu0 0.0
      %908 = vmatpush1.msra.mxu0 0.0
      %909 = vmatprep.subr.mxu0 0.0
      %910 = vmatpush1.msra.mxu0 0.0
      %911 = vmatprep.subr.mxu0 0.0
      %912 = vmatpush1.msra.mxu0 0.0
      %913 = vmatprep.subr.mxu0 0.0
      %914 = vmatpush1.msra.mxu0 0.0
      %915 = vmatprep.subr.mxu0 0.0
      %916 = vmatpush1.msra.mxu0 0.0
      %917 = vmatprep.subr.mxu0 0.0
      %918 = vmatpush1.msra.mxu0 0.0
      %919 = vmatprep.subr.mxu0 0.0
      %920 = vmatpush1.msra.mxu0 0.0
      %921 = vmatprep.mubr.f32.mxu0 0.0
      %922 = vmatmul.mubr.f32.gmra.mrb[0].mxu0 %v713
      %v923 = vpop.f32.mrb[0].mxu0
      %v924 = vadd.f32 0.0, %v923
      %v925 = vpop.f32.mrb[0].mxu0
      %926 = vdwg.mxu0
      %v927 = vadd.f32 %v545, %v782
      %v928 = vadd.f32 %v547, %v784
      %v929 = vadd.f32 %v616, %v853
      %v930 = vadd.f32 %v618, %v855
      %v931 = vadd.f32 %v687, %v924
      %s932 = scalar_lea.vmem %s1, 12
      %v933 = vld [vmem:[%s932] sm:$0xf]
      %935 = vrot.lane.b32.xlu0 %v225, 104
      %v936 = vpop.permute.xlu0 %935
      %937 = vrot.lane.b32.xlu0 %v226, 104
      %v938 = vpop.permute.xlu0 %937
      %939 = vrot.lane.b32.xlu0 %v227, 104
      %v940 = vpop.permute.xlu0 %939
      %941 = vrot.lane.b32.xlu0 %v228, 104
      %v942 = vpop.permute.xlu0 %941
      %943 = vrot.lane.b32.xlu0 %v229, 104
      %v944 = vpop.permute.xlu0 %943
      %945 = vrot.lane.b32.xlu0 %v230, 104
      %v946 = vpop.permute.xlu0 %945
      %vm947 = vcmask 850944
      %v948 = vsel %vm947, %v936, %v938
      %v949 = vsel %vm947, %v938, %v940
      %v950 = vsel %vm947, %v940, %v942
      %v951 = vsel %vm947, %v942, %v944
      %v952 = vsel %vm947, %v944, %v946
      %v959 = vsel %vm259, %v933, 0
      %961 = vmatprep.subr.mxu0 %v949
      %962 = vmatpush1.msra.mxu0 %v948
      %963 = vmatprep.subr.mxu0 0.0
      %964 = vmatpush1.msra.mxu0 0.0
      %965 = vmatprep.subr.mxu0 0.0
      %966 = vmatpush1.msra.mxu0 0.0
      %967 = vmatprep.subr.mxu0 0.0
      %968 = vmatpush1.msra.mxu0 0.0
      %969 = vmatprep.subr.mxu0 0.0
      %970 = vmatpush1.msra.mxu0 0.0
      %971 = vmatprep.subr.mxu0 0.0
      %972 = vmatpush1.msra.mxu0 0.0
      %973 = vmatprep.subr.mxu0 0.0
      %974 = vmatpush1.msra.mxu0 0.0
      %975 = vmatprep.subr.mxu0 0.0
      %976 = vmatpush1.msra.mxu0 0.0
      %977 = vmatprep.subr.mxu0 0.0
      %978 = vmatpush1.msra.mxu0 0.0
      %979 = vmatprep.subr.mxu0 0.0
      %980 = vmatpush1.msra.mxu0 0.0
      %981 = vmatprep.subr.mxu0 0.0
      %982 = vmatpush1.msra.mxu0 0.0
      %983 = vmatprep.subr.mxu0 0.0
      %984 = vmatpush1.msra.mxu0 0.0
      %985 = vmatprep.subr.mxu0 0.0
      %986 = vmatpush1.msra.mxu0 0.0
      %987 = vmatprep.subr.mxu0 0.0
      %988 = vmatpush1.msra.mxu0 0.0
      %989 = vmatprep.subr.mxu0 0.0
      %990 = vmatpush1.msra.mxu0 0.0
      %991 = vmatprep.subr.mxu0 0.0
      %992 = vmatpush1.msra.mxu0 0.0
      %993 = vmatprep.subr.mxu0 0.0
      %994 = vmatpush1.msra.mxu0 0.0
      %995 = vmatprep.subr.mxu0 0.0
      %996 = vmatpush1.msra.mxu0 0.0
      %997 = vmatprep.subr.mxu0 0.0
      %998 = vmatpush1.msra.mxu0 0.0
      %999 = vmatprep.subr.mxu0 0.0
      %1000 = vmatpush1.msra.mxu0 0.0
      %1001 = vmatprep.subr.mxu0 0.0
      %1002 = vmatpush1.msra.mxu0 0.0
      %1003 = vmatprep.subr.mxu0 0.0
      %1004 = vmatpush1.msra.mxu0 0.0
      %1005 = vmatprep.subr.mxu0 0.0
      %1006 = vmatpush1.msra.mxu0 0.0
      %1007 = vmatprep.subr.mxu0 0.0
      %1008 = vmatpush1.msra.mxu0 0.0
      %1009 = vmatprep.subr.mxu0 0.0
      %1010 = vmatpush1.msra.mxu0 0.0
      %1011 = vmatprep.subr.mxu0 0.0
      %1012 = vmatpush1.msra.mxu0 0.0
      %1013 = vmatprep.subr.mxu0 0.0
      %1014 = vmatpush1.msra.mxu0 0.0
      %1015 = vmatprep.subr.mxu0 0.0
      %1016 = vmatpush1.msra.mxu0 0.0
      %1017 = vmatprep.subr.mxu0 0.0
      %1018 = vmatpush1.msra.mxu0 0.0
      %1019 = vmatprep.subr.mxu0 0.0
      %1020 = vmatpush1.msra.mxu0 0.0
      %1021 = vmatprep.subr.mxu0 0.0
      %1022 = vmatpush1.msra.mxu0 0.0
      %1023 = vmatprep.subr.mxu0 0.0
      %1024 = vmatpush1.msra.mxu0 0.0
      %1025 = vmatprep.mubr.f32.mxu0 0.0
      %1026 = vmatmul.mubr.f32.gmra.mrb[0].mxu0 %v959
      %v1027 = vpop.f32.mrb[0].mxu0
      %v1028 = vadd.f32 0.0, %v1027
      %v1029 = vpop.f32.mrb[0].mxu0
      %v1030 = vadd.f32 0.0, %v1029
      %1031 = vdwg.mxu0
      %1032 = vmatprep.subr.mxu0 %v951
      %1033 = vmatpush1.msra.mxu0 %v950
      %1034 = vmatprep.subr.mxu0 0.0
      %1035 = vmatpush1.msra.mxu0 0.0
      %1036 = vmatprep.subr.mxu0 0.0
      %1037 = vmatpush1.msra.mxu0 0.0
      %1038 = vmatprep.subr.mxu0 0.0
      %1039 = vmatpush1.msra.mxu0 0.0
      %1040 = vmatprep.subr.mxu0 0.0
      %1041 = vmatpush1.msra.mxu0 0.0
      %1042 = vmatprep.subr.mxu0 0.0
      %1043 = vmatpush1.msra.mxu0 0.0
      %1044 = vmatprep.subr.mxu0 0.0
      %1045 = vmatpush1.msra.mxu0 0.0
      %1046 = vmatprep.subr.mxu0 0.0
      %1047 = vmatpush1.msra.mxu0 0.0
      %1048 = vmatprep.subr.mxu0 0.0
      %1049 = vmatpush1.msra.mxu0 0.0
      %1050 = vmatprep.subr.mxu0 0.0
      %1051 = vmatpush1.msra.mxu0 0.0
      %1052 = vmatprep.subr.mxu0 0.0
      %1053 = vmatpush1.msra.mxu0 0.0
      %1054 = vmatprep.subr.mxu0 0.0
      %1055 = vmatpush1.msra.mxu0 0.0
      %1056 = vmatprep.subr.mxu0 0.0
      %1057 = vmatpush1.msra.mxu0 0.0
      %1058 = vmatprep.subr.mxu0 0.0
      %1059 = vmatpush1.msra.mxu0 0.0
      %1060 = vmatprep.subr.mxu0 0.0
      %1061 = vmatpush1.msra.mxu0 0.0
      %1062 = vmatprep.subr.mxu0 0.0
      %1063 = vmatpush1.msra.mxu0 0.0
      %1064 = vmatprep.subr.mxu0 0.0
      %1065 = vmatpush1.msra.mxu0 0.0
      %1066 = vmatprep.subr.mxu0 0.0
      %1067 = vmatpush1.msra.mxu0 0.0
      %1068 = vmatprep.subr.mxu0 0.0
      %1069 = vmatpush1.msra.mxu0 0.0
      %1070 = vmatprep.subr.mxu0 0.0
      %1071 = vmatpush1.msra.mxu0 0.0
      %1072 = vmatprep.subr.mxu0 0.0
      %1073 = vmatpush1.msra.mxu0 0.0
      %1074 = vmatprep.subr.mxu0 0.0
      %1075 = vmatpush1.msra.mxu0 0.0
      %1076 = vmatprep.subr.mxu0 0.0
      %1077 = vmatpush1.msra.mxu0 0.0
      %1078 = vmatprep.subr.mxu0 0.0
      %1079 = vmatpush1.msra.mxu0 0.0
      %1080 = vmatprep.subr.mxu0 0.0
      %1081 = vmatpush1.msra.mxu0 0.0
      %1082 = vmatprep.subr.mxu0 0.0
      %1083 = vmatpush1.msra.mxu0 0.0
      %1084 = vmatprep.subr.mxu0 0.0
      %1085 = vmatpush1.msra.mxu0 0.0
      %1086 = vmatprep.subr.mxu0 0.0
      %1087 = vmatpush1.msra.mxu0 0.0
      %1088 = vmatprep.subr.mxu0 0.0
      %1089 = vmatpush1.msra.mxu0 0.0
      %1090 = vmatprep.subr.mxu0 0.0
      %1091 = vmatpush1.msra.mxu0 0.0
      %1092 = vmatprep.subr.mxu0 0.0
      %1093 = vmatpush1.msra.mxu0 0.0
      %1094 = vmatprep.subr.mxu0 0.0
      %1095 = vmatpush1.msra.mxu0 0.0
      %1096 = vmatprep.mubr.f32.mxu0 0.0
      %1097 = vmatmul.mubr.f32.gmra.mrb[0].mxu0 %v959
      %v1098 = vpop.f32.mrb[0].mxu0
      %v1099 = vadd.f32 0.0, %v1098
      %v1100 = vpop.f32.mrb[0].mxu0
      %v1101 = vadd.f32 0.0, %v1100
      %1102 = vdwg.mxu0
      %1103 = vmatprep.subr.mxu0 0.0
      %1104 = vmatpush1.msra.mxu0 %v952
      %1105 = vmatprep.subr.mxu0 0.0
      %1106 = vmatpush1.msra.mxu0 0.0
      %1107 = vmatprep.subr.mxu0 0.0
      %1108 = vmatpush1.msra.mxu0 0.0
      %1109 = vmatprep.subr.mxu0 0.0
      %1110 = vmatpush1.msra.mxu0 0.0
      %1111 = vmatprep.subr.mxu0 0.0
      %1112 = vmatpush1.msra.mxu0 0.0
      %1113 = vmatprep.subr.mxu0 0.0
      %1114 = vmatpush1.msra.mxu0 0.0
      %1115 = vmatprep.subr.mxu0 0.0
      %1116 = vmatpush1.msra.mxu0 0.0
      %1117 = vmatprep.subr.mxu0 0.0
      %1118 = vmatpush1.msra.mxu0 0.0
      %1119 = vmatprep.subr.mxu0 0.0
      %1120 = vmatpush1.msra.mxu0 0.0
      %1121 = vmatprep.subr.mxu0 0.0
      %1122 = vmatpush1.msra.mxu0 0.0
      %1123 = vmatprep.subr.mxu0 0.0
      %1124 = vmatpush1.msra.mxu0 0.0
      %1125 = vmatprep.subr.mxu0 0.0
      %1126 = vmatpush1.msra.mxu0 0.0
      %1127 = vmatprep.subr.mxu0 0.0
      %1128 = vmatpush1.msra.mxu0 0.0
      %1129 = vmatprep.subr.mxu0 0.0
      %1130 = vmatpush1.msra.mxu0 0.0
      %1131 = vmatprep.subr.mxu0 0.0
      %1132 = vmatpush1.msra.mxu0 0.0
      %1133 = vmatprep.subr.mxu0 0.0
      %1134 = vmatpush1.msra.mxu0 0.0
      %1135 = vmatprep.subr.mxu0 0.0
      %1136 = vmatpush1.msra.mxu0 0.0
      %1137 = vmatprep.subr.mxu0 0.0
      %1138 = vmatpush1.msra.mxu0 0.0
      %1139 = vmatprep.subr.mxu0 0.0
      %1140 = vmatpush1.msra.mxu0 0.0
      %1141 = vmatprep.subr.mxu0 0.0
      %1142 = vmatpush1.msra.mxu0 0.0
      %1143 = vmatprep.subr.mxu0 0.0
      %1144 = vmatpush1.msra.mxu0 0.0
      %1145 = vmatprep.subr.mxu0 0.0
      %1146 = vmatpush1.msra.mxu0 0.0
      %1147 = vmatprep.subr.mxu0 0.0
      %1148 = vmatpush1.msra.mxu0 0.0
      %1149 = vmatprep.subr.mxu0 0.0
      %1150 = vmatpush1.msra.mxu0 0.0
      %1151 = vmatprep.subr.mxu0 0.0
      %1152 = vmatpush1.msra.mxu0 0.0
      %1153 = vmatprep.subr.mxu0 0.0
      %1154 = vmatpush1.msra.mxu0 0.0
      %1155 = vmatprep.subr.mxu0 0.0
      %1156 = vmatpush1.msra.mxu0 0.0
      %1157 = vmatprep.subr.mxu0 0.0
      %1158 = vmatpush1.msra.mxu0 0.0
      %1159 = vmatprep.subr.mxu0 0.0
      %1160 = vmatpush1.msra.mxu0 0.0
      %1161 = vmatprep.subr.mxu0 0.0
      %1162 = vmatpush1.msra.mxu0 0.0
      %1163 = vmatprep.subr.mxu0 0.0
      %1164 = vmatpush1.msra.mxu0 0.0
      %1165 = vmatprep.subr.mxu0 0.0
      %1166 = vmatpush1.msra.mxu0 0.0
      %1167 = vmatprep.mubr.f32.mxu0 0.0
      %1168 = vmatmul.mubr.f32.gmra.mrb[0].mxu0 %v959
      %v1169 = vpop.f32.mrb[0].mxu0
      %v1170 = vadd.f32 0.0, %v1169
      %v1171 = vpop.f32.mrb[0].mxu0
      %1172 = vdwg.mxu0
      %v1173 = vadd.f32 %v927, %v1028
      %v1174 = vadd.f32 %v928, %v1030
      %v1175 = vadd.f32 %v929, %v1099
      %v1176 = vadd.f32 %v930, %v1101
      %v1177 = vadd.f32 %v931, %v1170
      %s1178 = scalar_lea.vmem %s1, 16
      %v1179 = vld [vmem:[%s1178] sm:$0xf]
      %1180 = vrot.lane.b32.xlu0 %v225, 103
      %v1181 = vpop.permute.xlu0 %1180
      %1182 = vrot.lane.b32.xlu0 %v226, 103
      %v1183 = vpop.permute.xlu0 %1182
      %1184 = vrot.lane.b32.xlu0 %v227, 103
      %v1185 = vpop.permute.xlu0 %1184
      %1186 = vrot.lane.b32.xlu0 %v228, 103
      %v1187 = vpop.permute.xlu0 %1186
      %1188 = vrot.lane.b32.xlu0 %v229, 103
      %v1189 = vpop.permute.xlu0 %1188
      %1190 = vrot.lane.b32.xlu0 %v230, 103
      %v1191 = vpop.permute.xlu0 %1190
      %vm1192 = vcmask 842752
      %v1193 = vsel %vm1192, %v1181, %v1183
      %v1194 = vsel %vm1192, %v1183, %v1185
      %v1195 = vsel %vm1192, %v1185, %v1187
      %v1196 = vsel %vm1192, %v1187, %v1189
      %v1197 = vsel %vm1192, %v1189, %v1191
      %v1204 = vsel %vm259, %v1179, 0
      %1206 = vmatprep.subr.mxu0 %v1194
      %1207 = vmatpush1.msra.mxu0 %v1193
      %1208 = vmatprep.subr.mxu0 0.0
      %1209 = vmatpush1.msra.mxu0 0.0
      %1210 = vmatprep.subr.mxu0 0.0
      %1211 = vmatpush1.msra.mxu0 0.0
      %1212 = vmatprep.subr.mxu0 0.0
      %1213 = vmatpush1.msra.mxu0 0.0
      %1214 = vmatprep.subr.mxu0 0.0
      %1215 = vmatpush1.msra.mxu0 0.0
      %1216 = vmatprep.subr.mxu0 0.0
      %1217 = vmatpush1.msra.mxu0 0.0
      %1218 = vmatprep.subr.mxu0 0.0
      %1219 = vmatpush1.msra.mxu0 0.0
      %1220 = vmatprep.subr.mxu0 0.0
      %1221 = vmatpush1.msra.mxu0 0.0
      %1222 = vmatprep.subr.mxu0 0.0
      %1223 = vmatpush1.msra.mxu0 0.0
      %1224 = vmatprep.subr.mxu0 0.0
      %1225 = vmatpush1.msra.mxu0 0.0
      %1226 = vmatprep.subr.mxu0 0.0
      %1227 = vmatpush1.msra.mxu0 0.0
      %1228 = vmatprep.subr.mxu0 0.0
      %1229 = vmatpush1.msra.mxu0 0.0
      %1230 = vmatprep.subr.mxu0 0.0
      %1231 = vmatpush1.msra.mxu0 0.0
      %1232 = vmatprep.subr.mxu0 0.0
      %1233 = vmatpush1.msra.mxu0 0.0
      %1234 = vmatprep.subr.mxu0 0.0
      %1235 = vmatpush1.msra.mxu0 0.0
      %1236 = vmatprep.subr.mxu0 0.0
      %1237 = vmatpush1.msra.mxu0 0.0
      %1238 = vmatprep.subr.mxu0 0.0
      %1239 = vmatpush1.msra.mxu0 0.0
      %1240 = vmatprep.subr.mxu0 0.0
      %1241 = vmatpush1.msra.mxu0 0.0
      %1242 = vmatprep.subr.mxu0 0.0
      %1243 = vmatpush1.msra.mxu0 0.0
      %1244 = vmatprep.subr.mxu0 0.0
      %1245 = vmatpush1.msra.mxu0 0.0
      %1246 = vmatprep.subr.mxu0 0.0
      %1247 = vmatpush1.msra.mxu0 0.0
      %1248 = vmatprep.subr.mxu0 0.0
      %1249 = vmatpush1.msra.mxu0 0.0
      %1250 = vmatprep.subr.mxu0 0.0
      %1251 = vmatpush1.msra.mxu0 0.0
      %1252 = vmatprep.subr.mxu0 0.0
      %1253 = vmatpush1.msra.mxu0 0.0
      %1254 = vmatprep.subr.mxu0 0.0
      %1255 = vmatpush1.msra.mxu0 0.0
      %1256 = vmatprep.subr.mxu0 0.0
      %1257 = vmatpush1.msra.mxu0 0.0
      %1258 = vmatprep.subr.mxu0 0.0
      %1259 = vmatpush1.msra.mxu0 0.0
      %1260 = vmatprep.subr.mxu0 0.0
      %1261 = vmatpush1.msra.mxu0 0.0
      %1262 = vmatprep.subr.mxu0 0.0
      %1263 = vmatpush1.msra.mxu0 0.0
      %1264 = vmatprep.subr.mxu0 0.0
      %1265 = vmatpush1.msra.mxu0 0.0
      %1266 = vmatprep.subr.mxu0 0.0
      %1267 = vmatpush1.msra.mxu0 0.0
      %1268 = vmatprep.subr.mxu0 0.0
      %1269 = vmatpush1.msra.mxu0 0.0
      %1270 = vmatprep.mubr.f32.mxu0 0.0
      %1271 = vmatmul.mubr.f32.gmra.mrb[0].mxu0 %v1204
      %v1272 = vpop.f32.mrb[0].mxu0
      %v1273 = vadd.f32 0.0, %v1272
      %v1274 = vpop.f32.mrb[0].mxu0
      %v1275 = vadd.f32 0.0, %v1274
      %1276 = vdwg.mxu0
      %1277 = vmatprep.subr.mxu0 %v1196
      %1278 = vmatpush1.msra.mxu0 %v1195
      %1279 = vmatprep.subr.mxu0 0.0
      %1280 = vmatpush1.msra.mxu0 0.0
      %1281 = vmatprep.subr.mxu0 0.0
      %1282 = vmatpush1.msra.mxu0 0.0
      %1283 = vmatprep.subr.mxu0 0.0
      %1284 = vmatpush1.msra.mxu0 0.0
      %1285 = vmatprep.subr.mxu0 0.0
      %1286 = vmatpush1.msra.mxu0 0.0
      %1287 = vmatprep.subr.mxu0 0.0
      %1288 = vmatpush1.msra.mxu0 0.0
      %1289 = vmatprep.subr.mxu0 0.0
      %1290 = vmatpush1.msra.mxu0 0.0
      %1291 = vmatprep.subr.mxu0 0.0
      %1292 = vmatpush1.msra.mxu0 0.0
      %1293 = vmatprep.subr.mxu0 0.0
      %1294 = vmatpush1.msra.mxu0 0.0
      %1295 = vmatprep.subr.mxu0 0.0
      %1296 = vmatpush1.msra.mxu0 0.0
      %1297 = vmatprep.subr.mxu0 0.0
      %1298 = vmatpush1.msra.mxu0 0.0
      %1299 = vmatprep.subr.mxu0 0.0
      %1300 = vmatpush1.msra.mxu0 0.0
      %1301 = vmatprep.subr.mxu0 0.0
      %1302 = vmatpush1.msra.mxu0 0.0
      %1303 = vmatprep.subr.mxu0 0.0
      %1304 = vmatpush1.msra.mxu0 0.0
      %1305 = vmatprep.subr.mxu0 0.0
      %1306 = vmatpush1.msra.mxu0 0.0
      %1307 = vmatprep.subr.mxu0 0.0
      %1308 = vmatpush1.msra.mxu0 0.0
      %1309 = vmatprep.subr.mxu0 0.0
      %1310 = vmatpush1.msra.mxu0 0.0
      %1311 = vmatprep.subr.mxu0 0.0
      %1312 = vmatpush1.msra.mxu0 0.0
      %1313 = vmatprep.subr.mxu0 0.0
      %1314 = vmatpush1.msra.mxu0 0.0
      %1315 = vmatprep.subr.mxu0 0.0
      %1316 = vmatpush1.msra.mxu0 0.0
      %1317 = vmatprep.subr.mxu0 0.0
      %1318 = vmatpush1.msra.mxu0 0.0
      %1319 = vmatprep.subr.mxu0 0.0
      %1320 = vmatpush1.msra.mxu0 0.0
      %1321 = vmatprep.subr.mxu0 0.0
      %1322 = vmatpush1.msra.mxu0 0.0
      %1323 = vmatprep.subr.mxu0 0.0
      %1324 = vmatpush1.msra.mxu0 0.0
      %1325 = vmatprep.subr.mxu0 0.0
      %1326 = vmatpush1.msra.mxu0 0.0
      %1327 = vmatprep.subr.mxu0 0.0
      %1328 = vmatpush1.msra.mxu0 0.0
      %1329 = vmatprep.subr.mxu0 0.0
      %1330 = vmatpush1.msra.mxu0 0.0
      %1331 = vmatprep.subr.mxu0 0.0
      %1332 = vmatpush1.msra.mxu0 0.0
      %1333 = vmatprep.subr.mxu0 0.0
      %1334 = vmatpush1.msra.mxu0 0.0
      %1335 = vmatprep.subr.mxu0 0.0
      %1336 = vmatpush1.msra.mxu0 0.0
      %1337 = vmatprep.subr.mxu0 0.0
      %1338 = vmatpush1.msra.mxu0 0.0
      %1339 = vmatprep.subr.mxu0 0.0
      %1340 = vmatpush1.msra.mxu0 0.0
      %1341 = vmatprep.mubr.f32.mxu0 0.0
      %1342 = vmatmul.mubr.f32.gmra.mrb[0].mxu0 %v1204
      %v1343 = vpop.f32.mrb[0].mxu0
      %v1344 = vadd.f32 0.0, %v1343
      %v1345 = vpop.f32.mrb[0].mxu0
      %v1346 = vadd.f32 0.0, %v1345
      %1347 = vdwg.mxu0
      %1348 = vmatprep.subr.mxu0 0.0
      %1349 = vmatpush1.msra.mxu0 %v1197
      %1350 = vmatprep.subr.mxu0 0.0
      %1351 = vmatpush1.msra.mxu0 0.0
      %1352 = vmatprep.subr.mxu0 0.0
      %1353 = vmatpush1.msra.mxu0 0.0
      %1354 = vmatprep.subr.mxu0 0.0
      %1355 = vmatpush1.msra.mxu0 0.0
      %1356 = vmatprep.subr.mxu0 0.0
      %1357 = vmatpush1.msra.mxu0 0.0
      %1358 = vmatprep.subr.mxu0 0.0
      %1359 = vmatpush1.msra.mxu0 0.0
      %1360 = vmatprep.subr.mxu0 0.0
      %1361 = vmatpush1.msra.mxu0 0.0
      %1362 = vmatprep.subr.mxu0 0.0
      %1363 = vmatpush1.msra.mxu0 0.0
      %1364 = vmatprep.subr.mxu0 0.0
      %1365 = vmatpush1.msra.mxu0 0.0
      %1366 = vmatprep.subr.mxu0 0.0
      %1367 = vmatpush1.msra.mxu0 0.0
      %1368 = vmatprep.subr.mxu0 0.0
      %1369 = vmatpush1.msra.mxu0 0.0
      %1370 = vmatprep.subr.mxu0 0.0
      %1371 = vmatpush1.msra.mxu0 0.0
      %1372 = vmatprep.subr.mxu0 0.0
      %1373 = vmatpush1.msra.mxu0 0.0
      %1374 = vmatprep.subr.mxu0 0.0
      %1375 = vmatpush1.msra.mxu0 0.0
      %1376 = vmatprep.subr.mxu0 0.0
      %1377 = vmatpush1.msra.mxu0 0.0
      %1378 = vmatprep.subr.mxu0 0.0
      %1379 = vmatpush1.msra.mxu0 0.0
      %1380 = vmatprep.subr.mxu0 0.0
      %1381 = vmatpush1.msra.mxu0 0.0
      %1382 = vmatprep.subr.mxu0 0.0
      %1383 = vmatpush1.msra.mxu0 0.0
      %1384 = vmatprep.subr.mxu0 0.0
      %1385 = vmatpush1.msra.mxu0 0.0
      %1386 = vmatprep.subr.mxu0 0.0
      %1387 = vmatpush1.msra.mxu0 0.0
      %1388 = vmatprep.subr.mxu0 0.0
      %1389 = vmatpush1.msra.mxu0 0.0
      %1390 = vmatprep.subr.mxu0 0.0
      %1391 = vmatpush1.msra.mxu0 0.0
      %1392 = vmatprep.subr.mxu0 0.0
      %1393 = vmatpush1.msra.mxu0 0.0
      %1394 = vmatprep.subr.mxu0 0.0
      %1395 = vmatpush1.msra.mxu0 0.0
      %1396 = vmatprep.subr.mxu0 0.0
      %1397 = vmatpush1.msra.mxu0 0.0
      %1398 = vmatprep.subr.mxu0 0.0
      %1399 = vmatpush1.msra.mxu0 0.0
      %1400 = vmatprep.subr.mxu0 0.0
      %1401 = vmatpush1.msra.mxu0 0.0
      %1402 = vmatprep.subr.mxu0 0.0
      %1403 = vmatpush1.msra.mxu0 0.0
      %1404 = vmatprep.subr.mxu0 0.0
      %1405 = vmatpush1.msra.mxu0 0.0
      %1406 = vmatprep.subr.mxu0 0.0
      %1407 = vmatpush1.msra.mxu0 0.0
      %1408 = vmatprep.subr.mxu0 0.0
      %1409 = vmatpush1.msra.mxu0 0.0
      %1410 = vmatprep.subr.mxu0 0.0
      %1411 = vmatpush1.msra.mxu0 0.0
      %1412 = vmatprep.mubr.f32.mxu0 0.0
      %1413 = vmatmul.mubr.f32.gmra.mrb[0].mxu0 %v1204
      %v1414 = vpop.f32.mrb[0].mxu0
      %v1415 = vadd.f32 0.0, %v1414
      %v1416 = vpop.f32.mrb[0].mxu0
      %1417 = vdwg.mxu0
      %v1418 = vadd.f32 %v1173, %v1273
      %v1419 = vadd.f32 %v1174, %v1275
      %v1420 = vadd.f32 %v1175, %v1344
      %v1421 = vadd.f32 %v1176, %v1346
      %v1422 = vadd.f32 %v1177, %v1415
      %s1423 = scalar_lea.vmem %s1, 20
      %v1424 = vld [vmem:[%s1423] sm:$0xf]
      %1425 = vrot.lane.b32.xlu0 %v225, 102
      %v1426 = vpop.permute.xlu0 %1425
      %1427 = vrot.lane.b32.xlu0 %v226, 102
      %v1428 = vpop.permute.xlu0 %1427
      %1429 = vrot.lane.b32.xlu0 %v227, 102
      %v1430 = vpop.permute.xlu0 %1429
      %1431 = vrot.lane.b32.xlu0 %v228, 102
      %v1432 = vpop.permute.xlu0 %1431
      %1433 = vrot.lane.b32.xlu0 %v229, 102
      %v1434 = vpop.permute.xlu0 %1433
      %1435 = vrot.lane.b32.xlu0 %v230, 102
      %v1436 = vpop.permute.xlu0 %1435
      %vm1437 = vcmask 834560
      %v1438 = vsel %vm1437, %v1426, %v1428
      %v1439 = vsel %vm1437, %v1428, %v1430
      %v1440 = vsel %vm1437, %v1430, %v1432
      %v1441 = vsel %vm1437, %v1432, %v1434
      %v1442 = vsel %vm1437, %v1434, %v1436
      %v1449 = vsel %vm259, %v1424, 0
      %1451 = vmatprep.subr.mxu0 %v1439
      %1452 = vmatpush1.msra.mxu0 %v1438
      %1453 = vmatprep.subr.mxu0 0.0
      %1454 = vmatpush1.msra.mxu0 0.0
      %1455 = vmatprep.subr.mxu0 0.0
      %1456 = vmatpush1.msra.mxu0 0.0
      %1457 = vmatprep.subr.mxu0 0.0
      %1458 = vmatpush1.msra.mxu0 0.0
      %1459 = vmatprep.subr.mxu0 0.0
      %1460 = vmatpush1.msra.mxu0 0.0
      %1461 = vmatprep.subr.mxu0 0.0
      %1462 = vmatpush1.msra.mxu0 0.0
      %1463 = vmatprep.subr.mxu0 0.0
      %1464 = vmatpush1.msra.mxu0 0.0
      %1465 = vmatprep.subr.mxu0 0.0
      %1466 = vmatpush1.msra.mxu0 0.0
      %1467 = vmatprep.subr.mxu0 0.0
      %1468 = vmatpush1.msra.mxu0 0.0
      %1469 = vmatprep.subr.mxu0 0.0
      %1470 = vmatpush1.msra.mxu0 0.0
      %1471 = vmatprep.subr.mxu0 0.0
      %1472 = vmatpush1.msra.mxu0 0.0
      %1473 = vmatprep.subr.mxu0 0.0
      %1474 = vmatpush1.msra.mxu0 0.0
      %1475 = vmatprep.subr.mxu0 0.0
      %1476 = vmatpush1.msra.mxu0 0.0
      %1477 = vmatprep.subr.mxu0 0.0
      %1478 = vmatpush1.msra.mxu0 0.0
      %1479 = vmatprep.subr.mxu0 0.0
      %1480 = vmatpush1.msra.mxu0 0.0
      %1481 = vmatprep.subr.mxu0 0.0
      %1482 = vmatpush1.msra.mxu0 0.0
      %1483 = vmatprep.subr.mxu0 0.0
      %1484 = vmatpush1.msra.mxu0 0.0
      %1485 = vmatprep.subr.mxu0 0.0
      %1486 = vmatpush1.msra.mxu0 0.0
      %1487 = vmatprep.subr.mxu0 0.0
      %1488 = vmatpush1.msra.mxu0 0.0
      %1489 = vmatprep.subr.mxu0 0.0
      %1490 = vmatpush1.msra.mxu0 0.0
      %1491 = vmatprep.subr.mxu0 0.0
      %1492 = vmatpush1.msra.mxu0 0.0
      %1493 = vmatprep.subr.mxu0 0.0
      %1494 = vmatpush1.msra.mxu0 0.0
      %1495 = vmatprep.subr.mxu0 0.0
      %1496 = vmatpush1.msra.mxu0 0.0
      %1497 = vmatprep.subr.mxu0 0.0
      %1498 = vmatpush1.msra.mxu0 0.0
      %1499 = vmatprep.subr.mxu0 0.0
      %1500 = vmatpush1.msra.mxu0 0.0
      %1501 = vmatprep.subr.mxu0 0.0
      %1502 = vmatpush1.msra.mxu0 0.0
      %1503 = vmatprep.subr.mxu0 0.0
      %1504 = vmatpush1.msra.mxu0 0.0
      %1505 = vmatprep.subr.mxu0 0.0
      %1506 = vmatpush1.msra.mxu0 0.0
      %1507 = vmatprep.subr.mxu0 0.0
      %1508 = vmatpush1.msra.mxu0 0.0
      %1509 = vmatprep.subr.mxu0 0.0
      %1510 = vmatpush1.msra.mxu0 0.0
      %1511 = vmatprep.subr.mxu0 0.0
      %1512 = vmatpush1.msra.mxu0 0.0
      %1513 = vmatprep.subr.mxu0 0.0
      %1514 = vmatpush1.msra.mxu0 0.0
      %1515 = vmatprep.mubr.f32.mxu0 0.0
      %1516 = vmatmul.mubr.f32.gmra.mrb[0].mxu0 %v1449
      %v1517 = vpop.f32.mrb[0].mxu0
      %v1518 = vadd.f32 0.0, %v1517
      %v1519 = vpop.f32.mrb[0].mxu0
      %v1520 = vadd.f32 0.0, %v1519
      %1521 = vdwg.mxu0
      %1522 = vmatprep.subr.mxu0 %v1441
      %1523 = vmatpush1.msra.mxu0 %v1440
      %1524 = vmatprep.subr.mxu0 0.0
      %1525 = vmatpush1.msra.mxu0 0.0
      %1526 = vmatprep.subr.mxu0 0.0
      %1527 = vmatpush1.msra.mxu0 0.0
      %1528 = vmatprep.subr.mxu0 0.0
      %1529 = vmatpush1.msra.mxu0 0.0
      %1530 = vmatprep.subr.mxu0 0.0
      %1531 = vmatpush1.msra.mxu0 0.0
      %1532 = vmatprep.subr.mxu0 0.0
      %1533 = vmatpush1.msra.mxu0 0.0
      %1534 = vmatprep.subr.mxu0 0.0
      %1535 = vmatpush1.msra.mxu0 0.0
      %1536 = vmatprep.subr.mxu0 0.0
      %1537 = vmatpush1.msra.mxu0 0.0
      %1538 = vmatprep.subr.mxu0 0.0
      %1539 = vmatpush1.msra.mxu0 0.0
      %1540 = vmatprep.subr.mxu0 0.0
      %1541 = vmatpush1.msra.mxu0 0.0
      %1542 = vmatprep.subr.mxu0 0.0
      %1543 = vmatpush1.msra.mxu0 0.0
      %1544 = vmatprep.subr.mxu0 0.0
      %1545 = vmatpush1.msra.mxu0 0.0
      %1546 = vmatprep.subr.mxu0 0.0
      %1547 = vmatpush1.msra.mxu0 0.0
      %1548 = vmatprep.subr.mxu0 0.0
      %1549 = vmatpush1.msra.mxu0 0.0
      %1550 = vmatprep.subr.mxu0 0.0
      %1551 = vmatpush1.msra.mxu0 0.0
      %1552 = vmatprep.subr.mxu0 0.0
      %1553 = vmatpush1.msra.mxu0 0.0
      %1554 = vmatprep.subr.mxu0 0.0
      %1555 = vmatpush1.msra.mxu0 0.0
      %1556 = vmatprep.subr.mxu0 0.0
      %1557 = vmatpush1.msra.mxu0 0.0
      %1558 = vmatprep.subr.mxu0 0.0
      %1559 = vmatpush1.msra.mxu0 0.0
      %1560 = vmatprep.subr.mxu0 0.0
      %1561 = vmatpush1.msra.mxu0 0.0
      %1562 = vmatprep.subr.mxu0 0.0
      %1563 = vmatpush1.msra.mxu0 0.0
      %1564 = vmatprep.subr.mxu0 0.0
      %1565 = vmatpush1.msra.mxu0 0.0
      %1566 = vmatprep.subr.mxu0 0.0
      %1567 = vmatpush1.msra.mxu0 0.0
      %1568 = vmatprep.subr.mxu0 0.0
      %1569 = vmatpush1.msra.mxu0 0.0
      %1570 = vmatprep.subr.mxu0 0.0
      %1571 = vmatpush1.msra.mxu0 0.0
      %1572 = vmatprep.subr.mxu0 0.0
      %1573 = vmatpush1.msra.mxu0 0.0
      %1574 = vmatprep.subr.mxu0 0.0
      %1575 = vmatpush1.msra.mxu0 0.0
      %1576 = vmatprep.subr.mxu0 0.0
      %1577 = vmatpush1.msra.mxu0 0.0
      %1578 = vmatprep.subr.mxu0 0.0
      %1579 = vmatpush1.msra.mxu0 0.0
      %1580 = vmatprep.subr.mxu0 0.0
      %1581 = vmatpush1.msra.mxu0 0.0
      %1582 = vmatprep.subr.mxu0 0.0
      %1583 = vmatpush1.msra.mxu0 0.0
      %1584 = vmatprep.subr.mxu0 0.0
      %1585 = vmatpush1.msra.mxu0 0.0
      %1586 = vmatprep.mubr.f32.mxu0 0.0
      %1587 = vmatmul.mubr.f32.gmra.mrb[0].mxu0 %v1449
      %v1588 = vpop.f32.mrb[0].mxu0
      %v1589 = vadd.f32 0.0, %v1588
      %v1590 = vpop.f32.mrb[0].mxu0
      %v1591 = vadd.f32 0.0, %v1590
      %1592 = vdwg.mxu0
      %1593 = vmatprep.subr.mxu0 0.0
      %1594 = vmatpush1.msra.mxu0 %v1442
      %1595 = vmatprep.subr.mxu0 0.0
      %1596 = vmatpush1.msra.mxu0 0.0
      %1597 = vmatprep.subr.mxu0 0.0
      %1598 = vmatpush1.msra.mxu0 0.0
      %1599 = vmatprep.subr.mxu0 0.0
      %1600 = vmatpush1.msra.mxu0 0.0
      %1601 = vmatprep.subr.mxu0 0.0
      %1602 = vmatpush1.msra.mxu0 0.0
      %1603 = vmatprep.subr.mxu0 0.0
      %1604 = vmatpush1.msra.mxu0 0.0
      %1605 = vmatprep.subr.mxu0 0.0
      %1606 = vmatpush1.msra.mxu0 0.0
      %1607 = vmatprep.subr.mxu0 0.0
      %1608 = vmatpush1.msra.mxu0 0.0
      %1609 = vmatprep.subr.mxu0 0.0
      %1610 = vmatpush1.msra.mxu0 0.0
      %1611 = vmatprep.subr.mxu0 0.0
      %1612 = vmatpush1.msra.mxu0 0.0
      %1613 = vmatprep.subr.mxu0 0.0
      %1614 = vmatpush1.msra.mxu0 0.0
      %1615 = vmatprep.subr.mxu0 0.0
      %1616 = vmatpush1.msra.mxu0 0.0
      %1617 = vmatprep.subr.mxu0 0.0
      %1618 = vmatpush1.msra.mxu0 0.0
      %1619 = vmatprep.subr.mxu0 0.0
      %1620 = vmatpush1.msra.mxu0 0.0
      %1621 = vmatprep.subr.mxu0 0.0
      %1622 = vmatpush1.msra.mxu0 0.0
      %1623 = vmatprep.subr.mxu0 0.0
      %1624 = vmatpush1.msra.mxu0 0.0
      %1625 = vmatprep.subr.mxu0 0.0
      %1626 = vmatpush1.msra.mxu0 0.0
      %1627 = vmatprep.subr.mxu0 0.0
      %1628 = vmatpush1.msra.mxu0 0.0
      %1629 = vmatprep.subr.mxu0 0.0
      %1630 = vmatpush1.msra.mxu0 0.0
      %1631 = vmatprep.subr.mxu0 0.0
      %1632 = vmatpush1.msra.mxu0 0.0
      %1633 = vmatprep.subr.mxu0 0.0
      %1634 = vmatpush1.msra.mxu0 0.0
      %1635 = vmatprep.subr.mxu0 0.0
      %1636 = vmatpush1.msra.mxu0 0.0
      %1637 = vmatprep.subr.mxu0 0.0
      %1638 = vmatpush1.msra.mxu0 0.0
      %1639 = vmatprep.subr.mxu0 0.0
      %1640 = vmatpush1.msra.mxu0 0.0
      %1641 = vmatprep.subr.mxu0 0.0
      %1642 = vmatpush1.msra.mxu0 0.0
      %1643 = vmatprep.subr.mxu0 0.0
      %1644 = vmatpush1.msra.mxu0 0.0
      %1645 = vmatprep.subr.mxu0 0.0
      %1646 = vmatpush1.msra.mxu0 0.0
      %1647 = vmatprep.subr.mxu0 0.0
      %1648 = vmatpush1.msra.mxu0 0.0
      %1649 = vmatprep.subr.mxu0 0.0
      %1650 = vmatpush1.msra.mxu0 0.0
      %1651 = vmatprep.subr.mxu0 0.0
      %1652 = vmatpush1.msra.mxu0 0.0
      %1653 = vmatprep.subr.mxu0 0.0
      %1654 = vmatpush1.msra.mxu0 0.0
      %1655 = vmatprep.subr.mxu0 0.0
      %1656 = vmatpush1.msra.mxu0 0.0
      %1657 = vmatprep.mubr.f32.mxu0 0.0
      %1658 = vmatmul.mubr.f32.gmra.mrb[0].mxu0 %v1449
      %v1659 = vpop.f32.mrb[0].mxu0
      %v1660 = vadd.f32 0.0, %v1659
      %v1661 = vpop.f32.mrb[0].mxu0
      %1662 = vdwg.mxu0
      %v1663 = vadd.f32 %v1418, %v1518
      %v1664 = vadd.f32 %v1419, %v1520
      %v1665 = vadd.f32 %v1420, %v1589
      %v1666 = vadd.f32 %v1421, %v1591
      %v1667 = vadd.f32 %v1422, %v1660
      %s1668 = scalar_lea.vmem %s1, 24
      %v1669 = vld [vmem:[%s1668] sm:$0xf]
      %1670 = vrot.lane.b32.xlu0 %v225, 80
      %v1671 = vpop.permute.xlu0 %1670
      %1672 = vrot.lane.b32.xlu0 %v226, 80
      %v1673 = vpop.permute.xlu0 %1672
      %1674 = vrot.lane.b32.xlu0 %v227, 80
      %v1675 = vpop.permute.xlu0 %1674
      %1676 = vrot.lane.b32.xlu0 %v228, 80
      %v1677 = vpop.permute.xlu0 %1676
      %1678 = vrot.lane.b32.xlu0 %v229, 80
      %v1679 = vpop.permute.xlu0 %1678
      %1680 = vrot.lane.b32.xlu0 %v230, 80
      %v1681 = vpop.permute.xlu0 %1680
      %vm1682 = vcmask 654336
      %v1683 = vsel %vm1682, %v1671, %v1673
      %v1684 = vsel %vm1682, %v1673, %v1675
      %v1685 = vsel %vm1682, %v1675, %v1677
      %v1686 = vsel %vm1682, %v1677, %v1679
      %v1687 = vsel %vm1682, %v1679, %v1681
      %v1694 = vsel %vm259, %v1669, 0
      %1696 = vmatprep.subr.mxu0 %v1684
      %1697 = vmatpush1.msra.mxu0 %v1683
      %1698 = vmatprep.subr.mxu0 0.0
      %1699 = vmatpush1.msra.mxu0 0.0
      %1700 = vmatprep.subr.mxu0 0.0
      %1701 = vmatpush1.msra.mxu0 0.0
      %1702 = vmatprep.subr.mxu0 0.0
      %1703 = vmatpush1.msra.mxu0 0.0
      %1704 = vmatprep.subr.mxu0 0.0
      %1705 = vmatpush1.msra.mxu0 0.0
      %1706 = vmatprep.subr.mxu0 0.0
      %1707 = vmatpush1.msra.mxu0 0.0
      %1708 = vmatprep.subr.mxu0 0.0
      %1709 = vmatpush1.msra.mxu0 0.0
      %1710 = vmatprep.subr.mxu0 0.0
      %1711 = vmatpush1.msra.mxu0 0.0
      %1712 = vmatprep.subr.mxu0 0.0
      %1713 = vmatpush1.msra.mxu0 0.0
      %1714 = vmatprep.subr.mxu0 0.0
      %1715 = vmatpush1.msra.mxu0 0.0
      %1716 = vmatprep.subr.mxu0 0.0
      %1717 = vmatpush1.msra.mxu0 0.0
      %1718 = vmatprep.subr.mxu0 0.0
      %1719 = vmatpush1.msra.mxu0 0.0
      %1720 = vmatprep.subr.mxu0 0.0
      %1721 = vmatpush1.msra.mxu0 0.0
      %1722 = vmatprep.subr.mxu0 0.0
      %1723 = vmatpush1.msra.mxu0 0.0
      %1724 = vmatprep.subr.mxu0 0.0
      %1725 = vmatpush1.msra.mxu0 0.0
      %1726 = vmatprep.subr.mxu0 0.0
      %1727 = vmatpush1.msra.mxu0 0.0
      %1728 = vmatprep.subr.mxu0 0.0
      %1729 = vmatpush1.msra.mxu0 0.0
      %1730 = vmatprep.subr.mxu0 0.0
      %1731 = vmatpush1.msra.mxu0 0.0
      %1732 = vmatprep.subr.mxu0 0.0
      %1733 = vmatpush1.msra.mxu0 0.0
      %1734 = vmatprep.subr.mxu0 0.0
      %1735 = vmatpush1.msra.mxu0 0.0
      %1736 = vmatprep.subr.mxu0 0.0
      %1737 = vmatpush1.msra.mxu0 0.0
      %1738 = vmatprep.subr.mxu0 0.0
      %1739 = vmatpush1.msra.mxu0 0.0
      %1740 = vmatprep.subr.mxu0 0.0
      %1741 = vmatpush1.msra.mxu0 0.0
      %1742 = vmatprep.subr.mxu0 0.0
      %1743 = vmatpush1.msra.mxu0 0.0
      %1744 = vmatprep.subr.mxu0 0.0
      %1745 = vmatpush1.msra.mxu0 0.0
      %1746 = vmatprep.subr.mxu0 0.0
      %1747 = vmatpush1.msra.mxu0 0.0
      %1748 = vmatprep.subr.mxu0 0.0
      %1749 = vmatpush1.msra.mxu0 0.0
      %1750 = vmatprep.subr.mxu0 0.0
      %1751 = vmatpush1.msra.mxu0 0.0
      %1752 = vmatprep.subr.mxu0 0.0
      %1753 = vmatpush1.msra.mxu0 0.0
      %1754 = vmatprep.subr.mxu0 0.0
      %1755 = vmatpush1.msra.mxu0 0.0
      %1756 = vmatprep.subr.mxu0 0.0
      %1757 = vmatpush1.msra.mxu0 0.0
      %1758 = vmatprep.subr.mxu0 0.0
      %1759 = vmatpush1.msra.mxu0 0.0
      %1760 = vmatprep.mubr.f32.mxu0 0.0
      %1761 = vmatmul.mubr.f32.gmra.mrb[0].mxu0 %v1694
      %v1762 = vpop.f32.mrb[0].mxu0
      %v1763 = vadd.f32 0.0, %v1762
      %v1764 = vpop.f32.mrb[0].mxu0
      %v1765 = vadd.f32 0.0, %v1764
      %1766 = vdwg.mxu0
      %1767 = vmatprep.subr.mxu0 %v1686
      %1768 = vmatpush1.msra.mxu0 %v1685
      %1769 = vmatprep.subr.mxu0 0.0
      %1770 = vmatpush1.msra.mxu0 0.0
      %1771 = vmatprep.subr.mxu0 0.0
      %1772 = vmatpush1.msra.mxu0 0.0
      %1773 = vmatprep.subr.mxu0 0.0
      %1774 = vmatpush1.msra.mxu0 0.0
      %1775 = vmatprep.subr.mxu0 0.0
      %1776 = vmatpush1.msra.mxu0 0.0
      %1777 = vmatprep.subr.mxu0 0.0
      %1778 = vmatpush1.msra.mxu0 0.0
      %1779 = vmatprep.subr.mxu0 0.0
      %1780 = vmatpush1.msra.mxu0 0.0
      %1781 = vmatprep.subr.mxu0 0.0
      %1782 = vmatpush1.msra.mxu0 0.0
      %1783 = vmatprep.subr.mxu0 0.0
      %1784 = vmatpush1.msra.mxu0 0.0
      %1785 = vmatprep.subr.mxu0 0.0
      %1786 = vmatpush1.msra.mxu0 0.0
      %1787 = vmatprep.subr.mxu0 0.0
      %1788 = vmatpush1.msra.mxu0 0.0
      %1789 = vmatprep.subr.mxu0 0.0
      %1790 = vmatpush1.msra.mxu0 0.0
      %1791 = vmatprep.subr.mxu0 0.0
      %1792 = vmatpush1.msra.mxu0 0.0
      %1793 = vmatprep.subr.mxu0 0.0
      %1794 = vmatpush1.msra.mxu0 0.0
      %1795 = vmatprep.subr.mxu0 0.0
      %1796 = vmatpush1.msra.mxu0 0.0
      %1797 = vmatprep.subr.mxu0 0.0
      %1798 = vmatpush1.msra.mxu0 0.0
      %1799 = vmatprep.subr.mxu0 0.0
      %1800 = vmatpush1.msra.mxu0 0.0
      %1801 = vmatprep.subr.mxu0 0.0
      %1802 = vmatpush1.msra.mxu0 0.0
      %1803 = vmatprep.subr.mxu0 0.0
      %1804 = vmatpush1.msra.mxu0 0.0
      %1805 = vmatprep.subr.mxu0 0.0
      %1806 = vmatpush1.msra.mxu0 0.0
      %1807 = vmatprep.subr.mxu0 0.0
      %1808 = vmatpush1.msra.mxu0 0.0
      %1809 = vmatprep.subr.mxu0 0.0
      %1810 = vmatpush1.msra.mxu0 0.0
      %1811 = vmatprep.subr.mxu0 0.0
      %1812 = vmatpush1.msra.mxu0 0.0
      %1813 = vmatprep.subr.mxu0 0.0
      %1814 = vmatpush1.msra.mxu0 0.0
      %1815 = vmatprep.subr.mxu0 0.0
      %1816 = vmatpush1.msra.mxu0 0.0
      %1817 = vmatprep.subr.mxu0 0.0
      %1818 = vmatpush1.msra.mxu0 0.0
      %1819 = vmatprep.subr.mxu0 0.0
      %1820 = vmatpush1.msra.mxu0 0.0
      %1821 = vmatprep.subr.mxu0 0.0
      %1822 = vmatpush1.msra.mxu0 0.0
      %1823 = vmatprep.subr.mxu0 0.0
      %1824 = vmatpush1.msra.mxu0 0.0
      %1825 = vmatprep.subr.mxu0 0.0
      %1826 = vmatpush1.msra.mxu0 0.0
      %1827 = vmatprep.subr.mxu0 0.0
      %1828 = vmatpush1.msra.mxu0 0.0
      %1829 = vmatprep.subr.mxu0 0.0
      %1830 = vmatpush1.msra.mxu0 0.0
      %1831 = vmatprep.mubr.f32.mxu0 0.0
      %1832 = vmatmul.mubr.f32.gmra.mrb[0].mxu0 %v1694
      %v1833 = vpop.f32.mrb[0].mxu0
      %v1834 = vadd.f32 0.0, %v1833
      %v1835 = vpop.f32.mrb[0].mxu0
      %v1836 = vadd.f32 0.0, %v1835
      %1837 = vdwg.mxu0
      %1838 = vmatprep.subr.mxu0 0.0
      %1839 = vmatpush1.msra.mxu0 %v1687
      %1840 = vmatprep.subr.mxu0 0.0
      %1841 = vmatpush1.msra.mxu0 0.0
      %1842 = vmatprep.subr.mxu0 0.0
      %1843 = vmatpush1.msra.mxu0 0.0
      %1844 = vmatprep.subr.mxu0 0.0
      %1845 = vmatpush1.msra.mxu0 0.0
      %1846 = vmatprep.subr.mxu0 0.0
      %1847 = vmatpush1.msra.mxu0 0.0
      %1848 = vmatprep.subr.mxu0 0.0
      %1849 = vmatpush1.msra.mxu0 0.0
      %1850 = vmatprep.subr.mxu0 0.0
      %1851 = vmatpush1.msra.mxu0 0.0
      %1852 = vmatprep.subr.mxu0 0.0
      %1853 = vmatpush1.msra.mxu0 0.0
      %1854 = vmatprep.subr.mxu0 0.0
      %1855 = vmatpush1.msra.mxu0 0.0
      %1856 = vmatprep.subr.mxu0 0.0
      %1857 = vmatpush1.msra.mxu0 0.0
      %1858 = vmatprep.subr.mxu0 0.0
      %1859 = vmatpush1.msra.mxu0 0.0
      %1860 = vmatprep.subr.mxu0 0.0
      %1861 = vmatpush1.msra.mxu0 0.0
      %1862 = vmatprep.subr.mxu0 0.0
      %1863 = vmatpush1.msra.mxu0 0.0
      %1864 = vmatprep.subr.mxu0 0.0
      %1865 = vmatpush1.msra.mxu0 0.0
      %1866 = vmatprep.subr.mxu0 0.0
      %1867 = vmatpush1.msra.mxu0 0.0
      %1868 = vmatprep.subr.mxu0 0.0
      %1869 = vmatpush1.msra.mxu0 0.0
      %1870 = vmatprep.subr.mxu0 0.0
      %1871 = vmatpush1.msra.mxu0 0.0
      %1872 = vmatprep.subr.mxu0 0.0
      %1873 = vmatpush1.msra.mxu0 0.0
      %1874 = vmatprep.subr.mxu0 0.0
      %1875 = vmatpush1.msra.mxu0 0.0
      %1876 = vmatprep.subr.mxu0 0.0
      %1877 = vmatpush1.msra.mxu0 0.0
      %1878 = vmatprep.subr.mxu0 0.0
      %1879 = vmatpush1.msra.mxu0 0.0
      %1880 = vmatprep.subr.mxu0 0.0
      %1881 = vmatpush1.msra.mxu0 0.0
      %1882 = vmatprep.subr.mxu0 0.0
      %1883 = vmatpush1.msra.mxu0 0.0
      %1884 = vmatprep.subr.mxu0 0.0
      %1885 = vmatpush1.msra.mxu0 0.0
      %1886 = vmatprep.subr.mxu0 0.0
      %1887 = vmatpush1.msra.mxu0 0.0
      %1888 = vmatprep.subr.mxu0 0.0
      %1889 = vmatpush1.msra.mxu0 0.0
      %1890 = vmatprep.subr.mxu0 0.0
      %1891 = vmatpush1.msra.mxu0 0.0
      %1892 = vmatprep.subr.mxu0 0.0
      %1893 = vmatpush1.msra.mxu0 0.0
      %1894 = vmatprep.subr.mxu0 0.0
      %1895 = vmatpush1.msra.mxu0 0.0
      %1896 = vmatprep.subr.mxu0 0.0
      %1897 = vmatpush1.msra.mxu0 0.0
      %1898 = vmatprep.subr.mxu0 0.0
      %1899 = vmatpush1.msra.mxu0 0.0
      %1900 = vmatprep.subr.mxu0 0.0
      %1901 = vmatpush1.msra.mxu0 0.0
      %1902 = vmatprep.mubr.f32.mxu0 0.0
      %1903 = vmatmul.mubr.f32.gmra.mrb[0].mxu0 %v1694
      %v1904 = vpop.f32.mrb[0].mxu0
      %v1905 = vadd.f32 0.0, %v1904
      %v1906 = vpop.f32.mrb[0].mxu0
      %1907 = vdwg.mxu0
      %v1908 = vadd.f32 %v1663, %v1763
      %v1909 = vadd.f32 %v1664, %v1765
      %v1910 = vadd.f32 %v1665, %v1834
      %v1911 = vadd.f32 %v1666, %v1836
      %v1912 = vadd.f32 %v1667, %v1905
      %s1913 = scalar_lea.vmem %s1, 28
      %v1914 = vld [vmem:[%s1913] sm:$0xf]
      %1915 = vrot.lane.b32.xlu0 %v225, 79
      %v1916 = vpop.permute.xlu0 %1915
      %1917 = vrot.lane.b32.xlu0 %v226, 79
      %v1918 = vpop.permute.xlu0 %1917
      %1919 = vrot.lane.b32.xlu0 %v227, 79
      %v1920 = vpop.permute.xlu0 %1919
      %1921 = vrot.lane.b32.xlu0 %v228, 79
      %v1922 = vpop.permute.xlu0 %1921
      %1923 = vrot.lane.b32.xlu0 %v229, 79
      %v1924 = vpop.permute.xlu0 %1923
      %1925 = vrot.lane.b32.xlu0 %v230, 79
      %v1926 = vpop.permute.xlu0 %1925
      %vm1927 = vcmask 646144
      %v1928 = vsel %vm1927, %v1916, %v1918
      %v1929 = vsel %vm1927, %v1918, %v1920
      %v1930 = vsel %vm1927, %v1920, %v1922
      %v1931 = vsel %vm1927, %v1922, %v1924
      %v1932 = vsel %vm1927, %v1924, %v1926
      %v1939 = vsel %vm259, %v1914, 0
      %1941 = vmatprep.subr.mxu0 %v1929
      %1942 = vmatpush1.msra.mxu0 %v1928
      %1943 = vmatprep.subr.mxu0 0.0
      %1944 = vmatpush1.msra.mxu0 0.0
      %1945 = vmatprep.subr.mxu0 0.0
      %1946 = vmatpush1.msra.mxu0 0.0
      %1947 = vmatprep.subr.mxu0 0.0
      %1948 = vmatpush1.msra.mxu0 0.0
      %1949 = vmatprep.subr.mxu0 0.0
      %1950 = vmatpush1.msra.mxu0 0.0
      %1951 = vmatprep.subr.mxu0 0.0
      %1952 = vmatpush1.msra.mxu0 0.0
      %1953 = vmatprep.subr.mxu0 0.0
      %1954 = vmatpush1.msra.mxu0 0.0
      %1955 = vmatprep.subr.mxu0 0.0
      %1956 = vmatpush1.msra.mxu0 0.0
      %1957 = vmatprep.subr.mxu0 0.0
      %1958 = vmatpush1.msra.mxu0 0.0
      %1959 = vmatprep.subr.mxu0 0.0
      %1960 = vmatpush1.msra.mxu0 0.0
      %1961 = vmatprep.subr.mxu0 0.0
      %1962 = vmatpush1.msra.mxu0 0.0
      %1963 = vmatprep.subr.mxu0 0.0
      %1964 = vmatpush1.msra.mxu0 0.0
      %1965 = vmatprep.subr.mxu0 0.0
      %1966 = vmatpush1.msra.mxu0 0.0
      %1967 = vmatprep.subr.mxu0 0.0
      %1968 = vmatpush1.msra.mxu0 0.0
      %1969 = vmatprep.subr.mxu0 0.0
      %1970 = vmatpush1.msra.mxu0 0.0
      %1971 = vmatprep.subr.mxu0 0.0
      %1972 = vmatpush1.msra.mxu0 0.0
      %1973 = vmatprep.subr.mxu0 0.0
      %1974 = vmatpush1.msra.mxu0 0.0
      %1975 = vmatprep.subr.mxu0 0.0
      %1976 = vmatpush1.msra.mxu0 0.0
      %1977 = vmatprep.subr.mxu0 0.0
      %1978 = vmatpush1.msra.mxu0 0.0
      %1979 = vmatprep.subr.mxu0 0.0
      %1980 = vmatpush1.msra.mxu0 0.0
      %1981 = vmatprep.subr.mxu0 0.0
      %1982 = vmatpush1.msra.mxu0 0.0
      %1983 = vmatprep.subr.mxu0 0.0
      %1984 = vmatpush1.msra.mxu0 0.0
      %1985 = vmatprep.subr.mxu0 0.0
      %1986 = vmatpush1.msra.mxu0 0.0
      %1987 = vmatprep.subr.mxu0 0.0
      %1988 = vmatpush1.msra.mxu0 0.0
      %1989 = vmatprep.subr.mxu0 0.0
      %1990 = vmatpush1.msra.mxu0 0.0
      %1991 = vmatprep.subr.mxu0 0.0
      %1992 = vmatpush1.msra.mxu0 0.0
      %1993 = vmatprep.subr.mxu0 0.0
      %1994 = vmatpush1.msra.mxu0 0.0
      %1995 = vmatprep.subr.mxu0 0.0
      %1996 = vmatpush1.msra.mxu0 0.0
      %1997 = vmatprep.subr.mxu0 0.0
      %1998 = vmatpush1.msra.mxu0 0.0
      %1999 = vmatprep.subr.mxu0 0.0
      %2000 = vmatpush1.msra.mxu0 0.0
      %2001 = vmatprep.subr.mxu0 0.0
      %2002 = vmatpush1.msra.mxu0 0.0
      %2003 = vmatprep.subr.mxu0 0.0
      %2004 = vmatpush1.msra.mxu0 0.0
      %2005 = vmatprep.mubr.f32.mxu0 0.0
      %2006 = vmatmul.mubr.f32.gmra.mrb[0].mxu0 %v1939
      %v2007 = vpop.f32.mrb[0].mxu0
      %v2008 = vadd.f32 0.0, %v2007
      %v2009 = vpop.f32.mrb[0].mxu0
      %v2010 = vadd.f32 0.0, %v2009
      %2011 = vdwg.mxu0
      %2012 = vmatprep.subr.mxu0 %v1931
      %2013 = vmatpush1.msra.mxu0 %v1930
      %2014 = vmatprep.subr.mxu0 0.0
      %2015 = vmatpush1.msra.mxu0 0.0
      %2016 = vmatprep.subr.mxu0 0.0
      %2017 = vmatpush1.msra.mxu0 0.0
      %2018 = vmatprep.subr.mxu0 0.0
      %2019 = vmatpush1.msra.mxu0 0.0
      %2020 = vmatprep.subr.mxu0 0.0
      %2021 = vmatpush1.msra.mxu0 0.0
      %2022 = vmatprep.subr.mxu0 0.0
      %2023 = vmatpush1.msra.mxu0 0.0
      %2024 = vmatprep.subr.mxu0 0.0
      %2025 = vmatpush1.msra.mxu0 0.0
      %2026 = vmatprep.subr.mxu0 0.0
      %2027 = vmatpush1.msra.mxu0 0.0
      %2028 = vmatprep.subr.mxu0 0.0
      %2029 = vmatpush1.msra.mxu0 0.0
      %2030 = vmatprep.subr.mxu0 0.0
      %2031 = vmatpush1.msra.mxu0 0.0
      %2032 = vmatprep.subr.mxu0 0.0
      %2033 = vmatpush1.msra.mxu0 0.0
      %2034 = vmatprep.subr.mxu0 0.0
      %2035 = vmatpush1.msra.mxu0 0.0
      %2036 = vmatprep.subr.mxu0 0.0
      %2037 = vmatpush1.msra.mxu0 0.0
      %2038 = vmatprep.subr.mxu0 0.0
      %2039 = vmatpush1.msra.mxu0 0.0
      %2040 = vmatprep.subr.mxu0 0.0
      %2041 = vmatpush1.msra.mxu0 0.0
      %2042 = vmatprep.subr.mxu0 0.0
      %2043 = vmatpush1.msra.mxu0 0.0
      %2044 = vmatprep.subr.mxu0 0.0
      %2045 = vmatpush1.msra.mxu0 0.0
      %2046 = vmatprep.subr.mxu0 0.0
      %2047 = vmatpush1.msra.mxu0 0.0
      %2048 = vmatprep.subr.mxu0 0.0
      %2049 = vmatpush1.msra.mxu0 0.0
      %2050 = vmatprep.subr.mxu0 0.0
      %2051 = vmatpush1.msra.mxu0 0.0
      %2052 = vmatprep.subr.mxu0 0.0
      %2053 = vmatpush1.msra.mxu0 0.0
      %2054 = vmatprep.subr.mxu0 0.0
      %2055 = vmatpush1.msra.mxu0 0.0
      %2056 = vmatprep.subr.mxu0 0.0
      %2057 = vmatpush1.msra.mxu0 0.0
      %2058 = vmatprep.subr.mxu0 0.0
      %2059 = vmatpush1.msra.mxu0 0.0
      %2060 = vmatprep.subr.mxu0 0.0
      %2061 = vmatpush1.msra.mxu0 0.0
      %2062 = vmatprep.subr.mxu0 0.0
      %2063 = vmatpush1.msra.mxu0 0.0
      %2064 = vmatprep.subr.mxu0 0.0
      %2065 = vmatpush1.msra.mxu0 0.0
      %2066 = vmatprep.subr.mxu0 0.0
      %2067 = vmatpush1.msra.mxu0 0.0
      %2068 = vmatprep.subr.mxu0 0.0
      %2069 = vmatpush1.msra.mxu0 0.0
      %2070 = vmatprep.subr.mxu0 0.0
      %2071 = vmatpush1.msra.mxu0 0.0
      %2072 = vmatprep.subr.mxu0 0.0
      %2073 = vmatpush1.msra.mxu0 0.0
      %2074 = vmatprep.subr.mxu0 0.0
      %2075 = vmatpush1.msra.mxu0 0.0
      %2076 = vmatprep.mubr.f32.mxu0 0.0
      %2077 = vmatmul.mubr.f32.gmra.mrb[0].mxu0 %v1939
      %v2078 = vpop.f32.mrb[0].mxu0
      %v2079 = vadd.f32 0.0, %v2078
      %v2080 = vpop.f32.mrb[0].mxu0
      %v2081 = vadd.f32 0.0, %v2080
      %2082 = vdwg.mxu0
      %2083 = vmatprep.subr.mxu0 0.0
      %2084 = vmatpush1.msra.mxu0 %v1932
      %2085 = vmatprep.subr.mxu0 0.0
      %2086 = vmatpush1.msra.mxu0 0.0
      %2087 = vmatprep.subr.mxu0 0.0
      %2088 = vmatpush1.msra.mxu0 0.0
      %2089 = vmatprep.subr.mxu0 0.0
      %2090 = vmatpush1.msra.mxu0 0.0
      %2091 = vmatprep.subr.mxu0 0.0
      %2092 = vmatpush1.msra.mxu0 0.0
      %2093 = vmatprep.subr.mxu0 0.0
      %2094 = vmatpush1.msra.mxu0 0.0
      %2095 = vmatprep.subr.mxu0 0.0
      %2096 = vmatpush1.msra.mxu0 0.0
      %2097 = vmatprep.subr.mxu0 0.0
      %2098 = vmatpush1.msra.mxu0 0.0
      %2099 = vmatprep.subr.mxu0 0.0
      %2100 = vmatpush1.msra.mxu0 0.0
      %2101 = vmatprep.subr.mxu0 0.0
      %2102 = vmatpush1.msra.mxu0 0.0
      %2103 = vmatprep.subr.mxu0 0.0
      %2104 = vmatpush1.msra.mxu0 0.0
      %2105 = vmatprep.subr.mxu0 0.0
      %2106 = vmatpush1.msra.mxu0 0.0
      %2107 = vmatprep.subr.mxu0 0.0
      %2108 = vmatpush1.msra.mxu0 0.0
      %2109 = vmatprep.subr.mxu0 0.0
      %2110 = vmatpush1.msra.mxu0 0.0
      %2111 = vmatprep.subr.mxu0 0.0
      %2112 = vmatpush1.msra.mxu0 0.0
      %2113 = vmatprep.subr.mxu0 0.0
      %2114 = vmatpush1.msra.mxu0 0.0
      %2115 = vmatprep.subr.mxu0 0.0
      %2116 = vmatpush1.msra.mxu0 0.0
      %2117 = vmatprep.subr.mxu0 0.0
      %2118 = vmatpush1.msra.mxu0 0.0
      %2119 = vmatprep.subr.mxu0 0.0
      %2120 = vmatpush1.msra.mxu0 0.0
      %2121 = vmatprep.subr.mxu0 0.0
      %2122 = vmatpush1.msra.mxu0 0.0
      %2123 = vmatprep.subr.mxu0 0.0
      %2124 = vmatpush1.msra.mxu0 0.0
      %2125 = vmatprep.subr.mxu0 0.0
      %2126 = vmatpush1.msra.mxu0 0.0
      %2127 = vmatprep.subr.mxu0 0.0
      %2128 = vmatpush1.msra.mxu0 0.0
      %2129 = vmatprep.subr.mxu0 0.0
      %2130 = vmatpush1.msra.mxu0 0.0
      %2131 = vmatprep.subr.mxu0 0.0
      %2132 = vmatpush1.msra.mxu0 0.0
      %2133 = vmatprep.subr.mxu0 0.0
      %2134 = vmatpush1.msra.mxu0 0.0
      %2135 = vmatprep.subr.mxu0 0.0
      %2136 = vmatpush1.msra.mxu0 0.0
      %2137 = vmatprep.subr.mxu0 0.0
      %2138 = vmatpush1.msra.mxu0 0.0
      %2139 = vmatprep.subr.mxu0 0.0
      %2140 = vmatpush1.msra.mxu0 0.0
      %2141 = vmatprep.subr.mxu0 0.0
      %2142 = vmatpush1.msra.mxu0 0.0
      %2143 = vmatprep.subr.mxu0 0.0
      %2144 = vmatpush1.msra.mxu0 0.0
      %2145 = vmatprep.subr.mxu0 0.0
      %2146 = vmatpush1.msra.mxu0 0.0
      %2147 = vmatprep.mubr.f32.mxu0 0.0
      %2148 = vmatmul.mubr.f32.gmra.mrb[0].mxu0 %v1939
      %v2149 = vpop.f32.mrb[0].mxu0
      %v2150 = vadd.f32 0.0, %v2149
      %v2151 = vpop.f32.mrb[0].mxu0
      %2152 = vdwg.mxu0
      %v2153 = vadd.f32 %v1908, %v2008
      %v2154 = vadd.f32 %v1909, %v2010
      %v2155 = vadd.f32 %v1910, %v2079
      %v2156 = vadd.f32 %v1911, %v2081
      %v2157 = vadd.f32 %v1912, %v2150
      %s2158 = scalar_lea.vmem %s1, 32
      %v2159 = vld [vmem:[%s2158] sm:$0xf]
      %2160 = vrot.lane.b32.xlu0 %v225, 78
      %v2161 = vpop.permute.xlu0 %2160
      %2162 = vrot.lane.b32.xlu0 %v226, 78
      %v2163 = vpop.permute.xlu0 %2162
      %2164 = vrot.lane.b32.xlu0 %v227, 78
      %v2165 = vpop.permute.xlu0 %2164
      %2166 = vrot.lane.b32.xlu0 %v228, 78
      %v2167 = vpop.permute.xlu0 %2166
      %2168 = vrot.lane.b32.xlu0 %v229, 78
      %v2169 = vpop.permute.xlu0 %2168
      %2170 = vrot.lane.b32.xlu0 %v230, 78
      %v2171 = vpop.permute.xlu0 %2170
      %vm2172 = vcmask 637952
      %v2173 = vsel %vm2172, %v2161, %v2163
      %v2174 = vsel %vm2172, %v2163, %v2165
      %v2175 = vsel %vm2172, %v2165, %v2167
      %v2176 = vsel %vm2172, %v2167, %v2169
      %v2177 = vsel %vm2172, %v2169, %v2171
      %v2184 = vsel %vm259, %v2159, 0
      %2186 = vmatprep.subr.mxu0 %v2174
      %2187 = vmatpush1.msra.mxu0 %v2173
      %2188 = vmatprep.subr.mxu0 0.0
      %2189 = vmatpush1.msra.mxu0 0.0
      %2190 = vmatprep.subr.mxu0 0.0
      %2191 = vmatpush1.msra.mxu0 0.0
      %2192 = vmatprep.subr.mxu0 0.0
      %2193 = vmatpush1.msra.mxu0 0.0
      %2194 = vmatprep.subr.mxu0 0.0
      %2195 = vmatpush1.msra.mxu0 0.0
      %2196 = vmatprep.subr.mxu0 0.0
      %2197 = vmatpush1.msra.mxu0 0.0
      %2198 = vmatprep.subr.mxu0 0.0
      %2199 = vmatpush1.msra.mxu0 0.0
      %2200 = vmatprep.subr.mxu0 0.0
      %2201 = vmatpush1.msra.mxu0 0.0
      %2202 = vmatprep.subr.mxu0 0.0
      %2203 = vmatpush1.msra.mxu0 0.0
      %2204 = vmatprep.subr.mxu0 0.0
      %2205 = vmatpush1.msra.mxu0 0.0
      %2206 = vmatprep.subr.mxu0 0.0
      %2207 = vmatpush1.msra.mxu0 0.0
      %2208 = vmatprep.subr.mxu0 0.0
      %2209 = vmatpush1.msra.mxu0 0.0
      %2210 = vmatprep.subr.mxu0 0.0
      %2211 = vmatpush1.msra.mxu0 0.0
      %2212 = vmatprep.subr.mxu0 0.0
      %2213 = vmatpush1.msra.mxu0 0.0
      %2214 = vmatprep.subr.mxu0 0.0
      %2215 = vmatpush1.msra.mxu0 0.0
      %2216 = vmatprep.subr.mxu0 0.0
      %2217 = vmatpush1.msra.mxu0 0.0
      %2218 = vmatprep.subr.mxu0 0.0
      %2219 = vmatpush1.msra.mxu0 0.0
      %2220 = vmatprep.subr.mxu0 0.0
      %2221 = vmatpush1.msra.mxu0 0.0
      %2222 = vmatprep.subr.mxu0 0.0
      %2223 = vmatpush1.msra.mxu0 0.0
      %2224 = vmatprep.subr.mxu0 0.0
      %2225 = vmatpush1.msra.mxu0 0.0
      %2226 = vmatprep.subr.mxu0 0.0
      %2227 = vmatpush1.msra.mxu0 0.0
      %2228 = vmatprep.subr.mxu0 0.0
      %2229 = vmatpush1.msra.mxu0 0.0
      %2230 = vmatprep.subr.mxu0 0.0
      %2231 = vmatpush1.msra.mxu0 0.0
      %2232 = vmatprep.subr.mxu0 0.0
      %2233 = vmatpush1.msra.mxu0 0.0
      %2234 = vmatprep.subr.mxu0 0.0
      %2235 = vmatpush1.msra.mxu0 0.0
      %2236 = vmatprep.subr.mxu0 0.0
      %2237 = vmatpush1.msra.mxu0 0.0
      %2238 = vmatprep.subr.mxu0 0.0
      %2239 = vmatpush1.msra.mxu0 0.0
      %2240 = vmatprep.subr.mxu0 0.0
      %2241 = vmatpush1.msra.mxu0 0.0
      %2242 = vmatprep.subr.mxu0 0.0
      %2243 = vmatpush1.msra.mxu0 0.0
      %2244 = vmatprep.subr.mxu0 0.0
      %2245 = vmatpush1.msra.mxu0 0.0
      %2246 = vmatprep.subr.mxu0 0.0
      %2247 = vmatpush1.msra.mxu0 0.0
      %2248 = vmatprep.subr.mxu0 0.0
      %2249 = vmatpush1.msra.mxu0 0.0
      %2250 = vmatprep.mubr.f32.mxu0 0.0
      %2251 = vmatmul.mubr.f32.gmra.mrb[0].mxu0 %v2184
      %v2252 = vpop.f32.mrb[0].mxu0
      %v2253 = vadd.f32 0.0, %v2252
      %v2254 = vpop.f32.mrb[0].mxu0
      %v2255 = vadd.f32 0.0, %v2254
      %2256 = vdwg.mxu0
      %2257 = vmatprep.subr.mxu0 %v2176
      %2258 = vmatpush1.msra.mxu0 %v2175
      %2259 = vmatprep.subr.mxu0 0.0
      %2260 = vmatpush1.msra.mxu0 0.0
      %2261 = vmatprep.subr.mxu0 0.0
      %2262 = vmatpush1.msra.mxu0 0.0
      %2263 = vmatprep.subr.mxu0 0.0
      %2264 = vmatpush1.msra.mxu0 0.0
      %2265 = vmatprep.subr.mxu0 0.0
      %2266 = vmatpush1.msra.mxu0 0.0
      %2267 = vmatprep.subr.mxu0 0.0
      %2268 = vmatpush1.msra.mxu0 0.0
      %2269 = vmatprep.subr.mxu0 0.0
      %2270 = vmatpush1.msra.mxu0 0.0
      %2271 = vmatprep.subr.mxu0 0.0
      %2272 = vmatpush1.msra.mxu0 0.0
      %2273 = vmatprep.subr.mxu0 0.0
      %2274 = vmatpush1.msra.mxu0 0.0
      %2275 = vmatprep.subr.mxu0 0.0
      %2276 = vmatpush1.msra.mxu0 0.0
      %2277 = vmatprep.subr.mxu0 0.0
      %2278 = vmatpush1.msra.mxu0 0.0
      %2279 = vmatprep.subr.mxu0 0.0
      %2280 = vmatpush1.msra.mxu0 0.0
      %2281 = vmatprep.subr.mxu0 0.0
      %2282 = vmatpush1.msra.mxu0 0.0
      %2283 = vmatprep.subr.mxu0 0.0
      %2284 = vmatpush1.msra.mxu0 0.0
      %2285 = vmatprep.subr.mxu0 0.0
      %2286 = vmatpush1.msra.mxu0 0.0
      %2287 = vmatprep.subr.mxu0 0.0
      %2288 = vmatpush1.msra.mxu0 0.0
      %2289 = vmatprep.subr.mxu0 0.0
      %2290 = vmatpush1.msra.mxu0 0.0
      %2291 = vmatprep.subr.mxu0 0.0
      %2292 = vmatpush1.msra.mxu0 0.0
      %2293 = vmatprep.subr.mxu0 0.0
      %2294 = vmatpush1.msra.mxu0 0.0
      %2295 = vmatprep.subr.mxu0 0.0
      %2296 = vmatpush1.msra.mxu0 0.0
      %2297 = vmatprep.subr.mxu0 0.0
      %2298 = vmatpush1.msra.mxu0 0.0
      %2299 = vmatprep.subr.mxu0 0.0
      %2300 = vmatpush1.msra.mxu0 0.0
      %2301 = vmatprep.subr.mxu0 0.0
      %2302 = vmatpush1.msra.mxu0 0.0
      %2303 = vmatprep.subr.mxu0 0.0
      %2304 = vmatpush1.msra.mxu0 0.0
      %2305 = vmatprep.subr.mxu0 0.0
      %2306 = vmatpush1.msra.mxu0 0.0
      %2307 = vmatprep.subr.mxu0 0.0
      %2308 = vmatpush1.msra.mxu0 0.0
      %2309 = vmatprep.subr.mxu0 0.0
      %2310 = vmatpush1.msra.mxu0 0.0
      %2311 = vmatprep.subr.mxu0 0.0
      %2312 = vmatpush1.msra.mxu0 0.0
      %2313 = vmatprep.subr.mxu0 0.0
      %2314 = vmatpush1.msra.mxu0 0.0
      %2315 = vmatprep.subr.mxu0 0.0
      %2316 = vmatpush1.msra.mxu0 0.0
      %2317 = vmatprep.subr.mxu0 0.0
      %2318 = vmatpush1.msra.mxu0 0.0
      %2319 = vmatprep.subr.mxu0 0.0
      %2320 = vmatpush1.msra.mxu0 0.0
      %2321 = vmatprep.mubr.f32.mxu0 0.0
      %2322 = vmatmul.mubr.f32.gmra.mrb[0].mxu0 %v2184
      %v2323 = vpop.f32.mrb[0].mxu0
      %v2324 = vadd.f32 0.0, %v2323
      %v2325 = vpop.f32.mrb[0].mxu0
      %v2326 = vadd.f32 0.0, %v2325
      %2327 = vdwg.mxu0
      %2328 = vmatprep.subr.mxu0 0.0
      %2329 = vmatpush1.msra.mxu0 %v2177
      %2330 = vmatprep.subr.mxu0 0.0
      %2331 = vmatpush1.msra.mxu0 0.0
      %2332 = vmatprep.subr.mxu0 0.0
      %2333 = vmatpush1.msra.mxu0 0.0
      %2334 = vmatprep.subr.mxu0 0.0
      %2335 = vmatpush1.msra.mxu0 0.0
      %2336 = vmatprep.subr.mxu0 0.0
      %2337 = vmatpush1.msra.mxu0 0.0
      %2338 = vmatprep.subr.mxu0 0.0
      %2339 = vmatpush1.msra.mxu0 0.0
      %2340 = vmatprep.subr.mxu0 0.0
      %2341 = vmatpush1.msra.mxu0 0.0
      %2342 = vmatprep.subr.mxu0 0.0
      %2343 = vmatpush1.msra.mxu0 0.0
      %2344 = vmatprep.subr.mxu0 0.0
      %2345 = vmatpush1.msra.mxu0 0.0
      %2346 = vmatprep.subr.mxu0 0.0
      %2347 = vmatpush1.msra.mxu0 0.0
      %2348 = vmatprep.subr.mxu0 0.0
      %2349 = vmatpush1.msra.mxu0 0.0
      %2350 = vmatprep.subr.mxu0 0.0
      %2351 = vmatpush1.msra.mxu0 0.0
      %2352 = vmatprep.subr.mxu0 0.0
      %2353 = vmatpush1.msra.mxu0 0.0
      %2354 = vmatprep.subr.mxu0 0.0
      %2355 = vmatpush1.msra.mxu0 0.0
      %2356 = vmatprep.subr.mxu0 0.0
      %2357 = vmatpush1.msra.mxu0 0.0
      %2358 = vmatprep.subr.mxu0 0.0
      %2359 = vmatpush1.msra.mxu0 0.0
      %2360 = vmatprep.subr.mxu0 0.0
      %2361 = vmatpush1.msra.mxu0 0.0
      %2362 = vmatprep.subr.mxu0 0.0
      %2363 = vmatpush1.msra.mxu0 0.0
      %2364 = vmatprep.subr.mxu0 0.0
      %2365 = vmatpush1.msra.mxu0 0.0
      %2366 = vmatprep.subr.mxu0 0.0
      %2367 = vmatpush1.msra.mxu0 0.0
      %2368 = vmatprep.subr.mxu0 0.0
      %2369 = vmatpush1.msra.mxu0 0.0
      %2370 = vmatprep.subr.mxu0 0.0
      %2371 = vmatpush1.msra.mxu0 0.0
      %2372 = vmatprep.subr.mxu0 0.0
      %2373 = vmatpush1.msra.mxu0 0.0
      %2374 = vmatprep.subr.mxu0 0.0
      %2375 = vmatpush1.msra.mxu0 0.0
      %2376 = vmatprep.subr.mxu0 0.0
      %2377 = vmatpush1.msra.mxu0 0.0
      %2378 = vmatprep.subr.mxu0 0.0
      %2379 = vmatpush1.msra.mxu0 0.0
      %2380 = vmatprep.subr.mxu0 0.0
      %2381 = vmatpush1.msra.mxu0 0.0
      %2382 = vmatprep.subr.mxu0 0.0
      %2383 = vmatpush1.msra.mxu0 0.0
      %2384 = vmatprep.subr.mxu0 0.0
      %2385 = vmatpush1.msra.mxu0 0.0
      %2386 = vmatprep.subr.mxu0 0.0
      %2387 = vmatpush1.msra.mxu0 0.0
      %2388 = vmatprep.subr.mxu0 0.0
      %2389 = vmatpush1.msra.mxu0 0.0
      %2390 = vmatprep.subr.mxu0 0.0
      %2391 = vmatpush1.msra.mxu0 0.0
      %2392 = vmatprep.mubr.f32.mxu0 0.0
      %2393 = vmatmul.mubr.f32.gmra.mrb[0].mxu0 %v2184
      %v2394 = vpop.f32.mrb[0].mxu0
      %v2395 = vadd.f32 0.0, %v2394
      %v2396 = vpop.f32.mrb[0].mxu0
      %2397 = vdwg.mxu0
      %v2398 = vadd.f32 %v2153, %v2253
      %v2399 = vadd.f32 %v2154, %v2255
      %v2400 = vadd.f32 %v2155, %v2324
      %v2401 = vadd.f32 %v2156, %v2326
      %v2402 = vadd.f32 %v2157, %v2395
      %v2403 = vld [vmem:[%s2] sm:$0xf]
      %2405 = vset.pattern.permute.xlu0 0
      %2406 = vperm.xlu0 %2405, %v2403
      %v2407 = vpop.permute.xlu0 %2406
      %v2409 = vadd.f32 %v2398, %v2407
      %v2410 = vadd.f32 %v2399, %v2407
      %v2411 = vadd.f32 %v2400, %v2407
      %v2412 = vadd.f32 %v2401, %v2407
      %v2413 = vadd.f32 %v2402, %v2407
      %v2414 = vmax.f32 %v2409, 0.0
      %v2415 = vmax.f32 %v2410, 0.0
      %v2416 = vmax.f32 %v2411, 0.0
      %v2417 = vmax.f32 %v2412, 0.0
      %v2418 = vmax.f32 %v2413, 0.0
      %v2419 = vld [vmem:[%s3] sm:$0xf]
      %s2420 = scalar_lea.vmem %s3, 4
      %v2421 = vld [vmem:[%s2420] sm:$0xf]
      %2427 = vrot.lane.b32.xlu0 %v2414, 127
      %v2428 = vpop.permute.xlu0 %2427
      %2429 = vrot.lane.b32.xlu0 %v2415, 127
      %v2430 = vpop.permute.xlu0 %2429
      %2431 = vrot.lane.b32.xlu0 %v2416, 127
      %v2432 = vpop.permute.xlu0 %2431
      %2433 = vrot.lane.b32.xlu0 %v2417, 127
      %v2434 = vpop.permute.xlu0 %2433
      %2435 = vrot.lane.b32.xlu0 %v2418, 127
      %v2436 = vpop.permute.xlu0 %2435
      %v2437 = vsel %vm249, %v2428, %v2430
      %v2438 = vsel %vm249, %v2430, %v2432
      %v2439 = vsel %vm249, %v2432, %v2434
      %v2440 = vsel %vm249, %v2434, %v2436
      %vm2441 = vcmask 31744
      %v2443 = vsel %vm2441, %v2421, 0
      %vm2445 = vcmask 1043456
      %v2446 = vsel %vm2445, %v2437, 0
      %v2448 = vsel %vm2445, %v2438, 0
      %v2450 = vsel %vm2445, %v2439, 0
      %v2452 = vsel %vm2445, %v2440, 0
      %v2454 = vsel %vm2445, %v2436, 0
      %2456 = vmatprep.subr.mxu0 %v2448
      %2457 = vmatpush1.msra.mxu0 %v2446
      %2458 = vmatprep.subr.mxu0 0.0
      %2459 = vmatpush1.msra.mxu0 0.0
      %2460 = vmatprep.subr.mxu0 0.0
      %2461 = vmatpush1.msra.mxu0 0.0
      %2462 = vmatprep.subr.mxu0 0.0
      %2463 = vmatpush1.msra.mxu0 0.0
      %2464 = vmatprep.subr.mxu0 0.0
      %2465 = vmatpush1.msra.mxu0 0.0
      %2466 = vmatprep.subr.mxu0 0.0
      %2467 = vmatpush1.msra.mxu0 0.0
      %2468 = vmatprep.subr.mxu0 0.0
      %2469 = vmatpush1.msra.mxu0 0.0
      %2470 = vmatprep.subr.mxu0 0.0
      %2471 = vmatpush1.msra.mxu0 0.0
      %2472 = vmatprep.subr.mxu0 0.0
      %2473 = vmatpush1.msra.mxu0 0.0
      %2474 = vmatprep.subr.mxu0 0.0
      %2475 = vmatpush1.msra.mxu0 0.0
      %2476 = vmatprep.subr.mxu0 0.0
      %2477 = vmatpush1.msra.mxu0 0.0
      %2478 = vmatprep.subr.mxu0 0.0
      %2479 = vmatpush1.msra.mxu0 0.0
      %2480 = vmatprep.subr.mxu0 0.0
      %2481 = vmatpush1.msra.mxu0 0.0
      %2482 = vmatprep.subr.mxu0 0.0
      %2483 = vmatpush1.msra.mxu0 0.0
      %2484 = vmatprep.subr.mxu0 0.0
      %2485 = vmatpush1.msra.mxu0 0.0
      %2486 = vmatprep.subr.mxu0 0.0
      %2487 = vmatpush1.msra.mxu0 0.0
      %2488 = vmatprep.subr.mxu0 0.0
      %2489 = vmatpush1.msra.mxu0 0.0
      %2490 = vmatprep.subr.mxu0 0.0
      %2491 = vmatpush1.msra.mxu0 0.0
      %2492 = vmatprep.subr.mxu0 0.0
      %2493 = vmatpush1.msra.mxu0 0.0
      %2494 = vmatprep.subr.mxu0 0.0
      %2495 = vmatpush1.msra.mxu0 0.0
      %2496 = vmatprep.subr.mxu0 0.0
      %2497 = vmatpush1.msra.mxu0 0.0
      %2498 = vmatprep.subr.mxu0 0.0
      %2499 = vmatpush1.msra.mxu0 0.0
      %2500 = vmatprep.subr.mxu0 0.0
      %2501 = vmatpush1.msra.mxu0 0.0
      %2502 = vmatprep.subr.mxu0 0.0
      %2503 = vmatpush1.msra.mxu0 0.0
      %2504 = vmatprep.subr.mxu0 0.0
      %2505 = vmatpush1.msra.mxu0 0.0
      %2506 = vmatprep.subr.mxu0 0.0
      %2507 = vmatpush1.msra.mxu0 0.0
      %2508 = vmatprep.subr.mxu0 0.0
      %2509 = vmatpush1.msra.mxu0 0.0
      %2510 = vmatprep.subr.mxu0 0.0
      %2511 = vmatpush1.msra.mxu0 0.0
      %2512 = vmatprep.subr.mxu0 0.0
      %2513 = vmatpush1.msra.mxu0 0.0
      %2514 = vmatprep.subr.mxu0 0.0
      %2515 = vmatpush1.msra.mxu0 0.0
      %2516 = vmatprep.subr.mxu0 0.0
      %2517 = vmatpush1.msra.mxu0 0.0
      %2518 = vmatprep.subr.mxu0 0.0
      %2519 = vmatpush1.msra.mxu0 0.0
      %2520 = vmatprep.mubr.f32.mxu0 0.0
      %2521 = vmatmul.mubr.f32.gmra.mrb[0].mxu0 %v2443
      %v2522 = vpop.f32.mrb[0].mxu0
      %v2523 = vadd.f32 0.0, %v2522
      %v2524 = vpop.f32.mrb[0].mxu0
      %v2525 = vadd.f32 0.0, %v2524
      %2526 = vdwg.mxu0
      %2527 = vmatprep.subr.mxu0 %v2452
      %2528 = vmatpush1.msra.mxu0 %v2450
      %2529 = vmatprep.subr.mxu0 0.0
      %2530 = vmatpush1.msra.mxu0 0.0
      %2531 = vmatprep.subr.mxu0 0.0
      %2532 = vmatpush1.msra.mxu0 0.0
      %2533 = vmatprep.subr.mxu0 0.0
      %2534 = vmatpush1.msra.mxu0 0.0
      %2535 = vmatprep.subr.mxu0 0.0
      %2536 = vmatpush1.msra.mxu0 0.0
      %2537 = vmatprep.subr.mxu0 0.0
      %2538 = vmatpush1.msra.mxu0 0.0
      %2539 = vmatprep.subr.mxu0 0.0
      %2540 = vmatpush1.msra.mxu0 0.0
      %2541 = vmatprep.subr.mxu0 0.0
      %2542 = vmatpush1.msra.mxu0 0.0
      %2543 = vmatprep.subr.mxu0 0.0
      %2544 = vmatpush1.msra.mxu0 0.0
      %2545 = vmatprep.subr.mxu0 0.0
      %2546 = vmatpush1.msra.mxu0 0.0
      %2547 = vmatprep.subr.mxu0 0.0
      %2548 = vmatpush1.msra.mxu0 0.0
      %2549 = vmatprep.subr.mxu0 0.0
      %2550 = vmatpush1.msra.mxu0 0.0
      %2551 = vmatprep.subr.mxu0 0.0
      %2552 = vmatpush1.msra.mxu0 0.0
      %2553 = vmatprep.subr.mxu0 0.0
      %2554 = vmatpush1.msra.mxu0 0.0
      %2555 = vmatprep.subr.mxu0 0.0
      %2556 = vmatpush1.msra.mxu0 0.0
      %2557 = vmatprep.subr.mxu0 0.0
      %2558 = vmatpush1.msra.mxu0 0.0
      %2559 = vmatprep.subr.mxu0 0.0
      %2560 = vmatpush1.msra.mxu0 0.0
      %2561 = vmatprep.subr.mxu0 0.0
      %2562 = vmatpush1.msra.mxu0 0.0
      %2563 = vmatprep.subr.mxu0 0.0
      %2564 = vmatpush1.msra.mxu0 0.0
      %2565 = vmatprep.subr.mxu0 0.0
      %2566 = vmatpush1.msra.mxu0 0.0
      %2567 = vmatprep.subr.mxu0 0.0
      %2568 = vmatpush1.msra.mxu0 0.0
      %2569 = vmatprep.subr.mxu0 0.0
      %2570 = vmatpush1.msra.mxu0 0.0
      %2571 = vmatprep.subr.mxu0 0.0
      %2572 = vmatpush1.msra.mxu0 0.0
      %2573 = vmatprep.subr.mxu0 0.0
      %2574 = vmatpush1.msra.mxu0 0.0
      %2575 = vmatprep.subr.mxu0 0.0
      %2576 = vmatpush1.msra.mxu0 0.0
      %2577 = vmatprep.subr.mxu0 0.0
      %2578 = vmatpush1.msra.mxu0 0.0
      %2579 = vmatprep.subr.mxu0 0.0
      %2580 = vmatpush1.msra.mxu0 0.0
      %2581 = vmatprep.subr.mxu0 0.0
      %2582 = vmatpush1.msra.mxu0 0.0
      %2583 = vmatprep.subr.mxu0 0.0
      %2584 = vmatpush1.msra.mxu0 0.0
      %2585 = vmatprep.subr.mxu0 0.0
      %2586 = vmatpush1.msra.mxu0 0.0
      %2587 = vmatprep.subr.mxu0 0.0
      %2588 = vmatpush1.msra.mxu0 0.0
      %2589 = vmatprep.subr.mxu0 0.0
      %2590 = vmatpush1.msra.mxu0 0.0
      %2591 = vmatprep.mubr.f32.mxu0 0.0
      %2592 = vmatmul.mubr.f32.gmra.mrb[0].mxu0 %v2443
      %v2593 = vpop.f32.mrb[0].mxu0
      %v2594 = vadd.f32 0.0, %v2593
      %v2595 = vpop.f32.mrb[0].mxu0
      %v2596 = vadd.f32 0.0, %v2595
      %2597 = vdwg.mxu0
      %2598 = vmatprep.subr.mxu0 0.0
      %2599 = vmatpush1.msra.mxu0 %v2454
      %2600 = vmatprep.subr.mxu0 0.0
      %2601 = vmatpush1.msra.mxu0 0.0
      %2602 = vmatprep.subr.mxu0 0.0
      %2603 = vmatpush1.msra.mxu0 0.0
      %2604 = vmatprep.subr.mxu0 0.0
      %2605 = vmatpush1.msra.mxu0 0.0
      %2606 = vmatprep.subr.mxu0 0.0
      %2607 = vmatpush1.msra.mxu0 0.0
      %2608 = vmatprep.subr.mxu0 0.0
      %2609 = vmatpush1.msra.mxu0 0.0
      %2610 = vmatprep.subr.mxu0 0.0
      %2611 = vmatpush1.msra.mxu0 0.0
      %2612 = vmatprep.subr.mxu0 0.0
      %2613 = vmatpush1.msra.mxu0 0.0
      %2614 = vmatprep.subr.mxu0 0.0
      %2615 = vmatpush1.msra.mxu0 0.0
      %2616 = vmatprep.subr.mxu0 0.0
      %2617 = vmatpush1.msra.mxu0 0.0
      %2618 = vmatprep.subr.mxu0 0.0
      %2619 = vmatpush1.msra.mxu0 0.0
      %2620 = vmatprep.subr.mxu0 0.0
      %2621 = vmatpush1.msra.mxu0 0.0
      %2622 = vmatprep.subr.mxu0 0.0
      %2623 = vmatpush1.msra.mxu0 0.0
      %2624 = vmatprep.subr.mxu0 0.0
      %2625 = vmatpush1.msra.mxu0 0.0
      %2626 = vmatprep.subr.mxu0 0.0
      %2627 = vmatpush1.msra.mxu0 0.0
      %2628 = vmatprep.subr.mxu0 0.0
      %2629 = vmatpush1.msra.mxu0 0.0
      %2630 = vmatprep.subr.mxu0 0.0
      %2631 = vmatpush1.msra.mxu0 0.0
      %2632 = vmatprep.subr.mxu0 0.0
      %2633 = vmatpush1.msra.mxu0 0.0
      %2634 = vmatprep.subr.mxu0 0.0
      %2635 = vmatpush1.msra.mxu0 0.0
      %2636 = vmatprep.subr.mxu0 0.0
      %2637 = vmatpush1.msra.mxu0 0.0
      %2638 = vmatprep.subr.mxu0 0.0
      %2639 = vmatpush1.msra.mxu0 0.0
      %2640 = vmatprep.subr.mxu0 0.0
      %2641 = vmatpush1.msra.mxu0 0.0
      %2642 = vmatprep.subr.mxu0 0.0
      %2643 = vmatpush1.msra.mxu0 0.0
      %2644 = vmatprep.subr.mxu0 0.0
      %2645 = vmatpush1.msra.mxu0 0.0
      %2646 = vmatprep.subr.mxu0 0.0
      %2647 = vmatpush1.msra.mxu0 0.0
      %2648 = vmatprep.subr.mxu0 0.0
      %2649 = vmatpush1.msra.mxu0 0.0
      %2650 = vmatprep.subr.mxu0 0.0
      %2651 = vmatpush1.msra.mxu0 0.0
      %2652 = vmatprep.subr.mxu0 0.0
      %2653 = vmatpush1.msra.mxu0 0.0
      %2654 = vmatprep.subr.mxu0 0.0
      %2655 = vmatpush1.msra.mxu0 0.0
      %2656 = vmatprep.subr.mxu0 0.0
      %2657 = vmatpush1.msra.mxu0 0.0
      %2658 = vmatprep.subr.mxu0 0.0
      %2659 = vmatpush1.msra.mxu0 0.0
      %2660 = vmatprep.subr.mxu0 0.0
      %2661 = vmatpush1.msra.mxu0 0.0
      %2662 = vmatprep.mubr.f32.mxu0 0.0
      %2663 = vmatmul.mubr.f32.gmra.mrb[0].mxu0 %v2443
      %v2664 = vpop.f32.mrb[0].mxu0
      %v2665 = vadd.f32 0.0, %v2664
      %v2666 = vpop.f32.mrb[0].mxu0
      %2667 = vdwg.mxu0
      %v2669 = vsel %vm2441, %v2419, 0
      %v2671 = vsel %vm2445, %v2414, 0
      %v2673 = vsel %vm2445, %v2415, 0
      %v2675 = vsel %vm2445, %v2416, 0
      %v2677 = vsel %vm2445, %v2417, 0
      %v2679 = vsel %vm2445, %v2418, 0
      %2681 = vmatprep.subr.mxu0 %v2673
      %2682 = vmatpush1.msra.mxu0 %v2671
      %2683 = vmatprep.subr.mxu0 0.0
      %2684 = vmatpush1.msra.mxu0 0.0
      %2685 = vmatprep.subr.mxu0 0.0
      %2686 = vmatpush1.msra.mxu0 0.0
      %2687 = vmatprep.subr.mxu0 0.0
      %2688 = vmatpush1.msra.mxu0 0.0
      %2689 = vmatprep.subr.mxu0 0.0
      %2690 = vmatpush1.msra.mxu0 0.0
      %2691 = vmatprep.subr.mxu0 0.0
      %2692 = vmatpush1.msra.mxu0 0.0
      %2693 = vmatprep.subr.mxu0 0.0
      %2694 = vmatpush1.msra.mxu0 0.0
      %2695 = vmatprep.subr.mxu0 0.0
      %2696 = vmatpush1.msra.mxu0 0.0
      %2697 = vmatprep.subr.mxu0 0.0
      %2698 = vmatpush1.msra.mxu0 0.0
      %2699 = vmatprep.subr.mxu0 0.0
      %2700 = vmatpush1.msra.mxu0 0.0
      %2701 = vmatprep.subr.mxu0 0.0
      %2702 = vmatpush1.msra.mxu0 0.0
      %2703 = vmatprep.subr.mxu0 0.0
      %2704 = vmatpush1.msra.mxu0 0.0
      %2705 = vmatprep.subr.mxu0 0.0
      %2706 = vmatpush1.msra.mxu0 0.0
      %2707 = vmatprep.subr.mxu0 0.0
      %2708 = vmatpush1.msra.mxu0 0.0
      %2709 = vmatprep.subr.mxu0 0.0
      %2710 = vmatpush1.msra.mxu0 0.0
      %2711 = vmatprep.subr.mxu0 0.0
      %2712 = vmatpush1.msra.mxu0 0.0
      %2713 = vmatprep.subr.mxu0 0.0
      %2714 = vmatpush1.msra.mxu0 0.0
      %2715 = vmatprep.subr.mxu0 0.0
      %2716 = vmatpush1.msra.mxu0 0.0
      %2717 = vmatprep.subr.mxu0 0.0
      %2718 = vmatpush1.msra.mxu0 0.0
      %2719 = vmatprep.subr.mxu0 0.0
      %2720 = vmatpush1.msra.mxu0 0.0
      %2721 = vmatprep.subr.mxu0 0.0
      %2722 = vmatpush1.msra.mxu0 0.0
      %2723 = vmatprep.subr.mxu0 0.0
      %2724 = vmatpush1.msra.mxu0 0.0
      %2725 = vmatprep.subr.mxu0 0.0
      %2726 = vmatpush1.msra.mxu0 0.0
      %2727 = vmatprep.subr.mxu0 0.0
      %2728 = vmatpush1.msra.mxu0 0.0
      %2729 = vmatprep.subr.mxu0 0.0
      %2730 = vmatpush1.msra.mxu0 0.0
      %2731 = vmatprep.subr.mxu0 0.0
      %2732 = vmatpush1.msra.mxu0 0.0
      %2733 = vmatprep.subr.mxu0 0.0
      %2734 = vmatpush1.msra.mxu0 0.0
      %2735 = vmatprep.subr.mxu0 0.0
      %2736 = vmatpush1.msra.mxu0 0.0
      %2737 = vmatprep.subr.mxu0 0.0
      %2738 = vmatpush1.msra.mxu0 0.0
      %2739 = vmatprep.subr.mxu0 0.0
      %2740 = vmatpush1.msra.mxu0 0.0
      %2741 = vmatprep.subr.mxu0 0.0
      %2742 = vmatpush1.msra.mxu0 0.0
      %2743 = vmatprep.subr.mxu0 0.0
      %2744 = vmatpush1.msra.mxu0 0.0
      %2745 = vmatprep.mubr.f32.mxu0 0.0
      %2746 = vmatmul.mubr.f32.gmra.mrb[0].mxu0 %v2669
      %v2747 = vpop.f32.mrb[0].mxu0
      %v2748 = vadd.f32 %v2523, %v2747
      %v2749 = vpop.f32.mrb[0].mxu0
      %v2750 = vadd.f32 %v2525, %v2749
      %2751 = vdwg.mxu0
      %2752 = vmatprep.subr.mxu0 %v2677
      %2753 = vmatpush1.msra.mxu0 %v2675
      %2754 = vmatprep.subr.mxu0 0.0
      %2755 = vmatpush1.msra.mxu0 0.0
      %2756 = vmatprep.subr.mxu0 0.0
      %2757 = vmatpush1.msra.mxu0 0.0
      %2758 = vmatprep.subr.mxu0 0.0
      %2759 = vmatpush1.msra.mxu0 0.0
      %2760 = vmatprep.subr.mxu0 0.0
      %2761 = vmatpush1.msra.mxu0 0.0
      %2762 = vmatprep.subr.mxu0 0.0
      %2763 = vmatpush1.msra.mxu0 0.0
      %2764 = vmatprep.subr.mxu0 0.0
      %2765 = vmatpush1.msra.mxu0 0.0
      %2766 = vmatprep.subr.mxu0 0.0
      %2767 = vmatpush1.msra.mxu0 0.0
      %2768 = vmatprep.subr.mxu0 0.0
      %2769 = vmatpush1.msra.mxu0 0.0
      %2770 = vmatprep.subr.mxu0 0.0
      %2771 = vmatpush1.msra.mxu0 0.0
      %2772 = vmatprep.subr.mxu0 0.0
      %2773 = vmatpush1.msra.mxu0 0.0
      %2774 = vmatprep.subr.mxu0 0.0
      %2775 = vmatpush1.msra.mxu0 0.0
      %2776 = vmatprep.subr.mxu0 0.0
      %2777 = vmatpush1.msra.mxu0 0.0
      %2778 = vmatprep.subr.mxu0 0.0
      %2779 = vmatpush1.msra.mxu0 0.0
      %2780 = vmatprep.subr.mxu0 0.0
      %2781 = vmatpush1.msra.mxu0 0.0
      %2782 = vmatprep.subr.mxu0 0.0
      %2783 = vmatpush1.msra.mxu0 0.0
      %2784 = vmatprep.subr.mxu0 0.0
      %2785 = vmatpush1.msra.mxu0 0.0
      %2786 = vmatprep.subr.mxu0 0.0
      %2787 = vmatpush1.msra.mxu0 0.0
      %2788 = vmatprep.subr.mxu0 0.0
      %2789 = vmatpush1.msra.mxu0 0.0
      %2790 = vmatprep.subr.mxu0 0.0
      %2791 = vmatpush1.msra.mxu0 0.0
      %2792 = vmatprep.subr.mxu0 0.0
      %2793 = vmatpush1.msra.mxu0 0.0
      %2794 = vmatprep.subr.mxu0 0.0
      %2795 = vmatpush1.msra.mxu0 0.0
      %2796 = vmatprep.subr.mxu0 0.0
      %2797 = vmatpush1.msra.mxu0 0.0
      %2798 = vmatprep.subr.mxu0 0.0
      %2799 = vmatpush1.msra.mxu0 0.0
      %2800 = vmatprep.subr.mxu0 0.0
      %2801 = vmatpush1.msra.mxu0 0.0
      %2802 = vmatprep.subr.mxu0 0.0
      %2803 = vmatpush1.msra.mxu0 0.0
      %2804 = vmatprep.subr.mxu0 0.0
      %2805 = vmatpush1.msra.mxu0 0.0
      %2806 = vmatprep.subr.mxu0 0.0
      %2807 = vmatpush1.msra.mxu0 0.0
      %2808 = vmatprep.subr.mxu0 0.0
      %2809 = vmatpush1.msra.mxu0 0.0
      %2810 = vmatprep.subr.mxu0 0.0
      %2811 = vmatpush1.msra.mxu0 0.0
      %2812 = vmatprep.subr.mxu0 0.0
      %2813 = vmatpush1.msra.mxu0 0.0
      %2814 = vmatprep.subr.mxu0 0.0
      %2815 = vmatpush1.msra.mxu0 0.0
      %2816 = vmatprep.mubr.f32.mxu0 0.0
      %2817 = vmatmul.mubr.f32.gmra.mrb[0].mxu0 %v2669
      %v2818 = vpop.f32.mrb[0].mxu0
      %v2819 = vadd.f32 %v2594, %v2818
      %v2820 = vpop.f32.mrb[0].mxu0
      %v2821 = vadd.f32 %v2596, %v2820
      %2822 = vdwg.mxu0
      %2823 = vmatprep.subr.mxu0 0.0
      %2824 = vmatpush1.msra.mxu0 %v2679
      %2825 = vmatprep.subr.mxu0 0.0
      %2826 = vmatpush1.msra.mxu0 0.0
      %2827 = vmatprep.subr.mxu0 0.0
      %2828 = vmatpush1.msra.mxu0 0.0
      %2829 = vmatprep.subr.mxu0 0.0
      %2830 = vmatpush1.msra.mxu0 0.0
      %2831 = vmatprep.subr.mxu0 0.0
      %2832 = vmatpush1.msra.mxu0 0.0
      %2833 = vmatprep.subr.mxu0 0.0
      %2834 = vmatpush1.msra.mxu0 0.0
      %2835 = vmatprep.subr.mxu0 0.0
      %2836 = vmatpush1.msra.mxu0 0.0
      %2837 = vmatprep.subr.mxu0 0.0
      %2838 = vmatpush1.msra.mxu0 0.0
      %2839 = vmatprep.subr.mxu0 0.0
      %2840 = vmatpush1.msra.mxu0 0.0
      %2841 = vmatprep.subr.mxu0 0.0
      %2842 = vmatpush1.msra.mxu0 0.0
      %2843 = vmatprep.subr.mxu0 0.0
      %2844 = vmatpush1.msra.mxu0 0.0
      %2845 = vmatprep.subr.mxu0 0.0
      %2846 = vmatpush1.msra.mxu0 0.0
      %2847 = vmatprep.subr.mxu0 0.0
      %2848 = vmatpush1.msra.mxu0 0.0
      %2849 = vmatprep.subr.mxu0 0.0
      %2850 = vmatpush1.msra.mxu0 0.0
      %2851 = vmatprep.subr.mxu0 0.0
      %2852 = vmatpush1.msra.mxu0 0.0
      %2853 = vmatprep.subr.mxu0 0.0
      %2854 = vmatpush1.msra.mxu0 0.0
      %2855 = vmatprep.subr.mxu0 0.0
      %2856 = vmatpush1.msra.mxu0 0.0
      %2857 = vmatprep.subr.mxu0 0.0
      %2858 = vmatpush1.msra.mxu0 0.0
      %2859 = vmatprep.subr.mxu0 0.0
      %2860 = vmatpush1.msra.mxu0 0.0
      %2861 = vmatprep.subr.mxu0 0.0
      %2862 = vmatpush1.msra.mxu0 0.0
      %2863 = vmatprep.subr.mxu0 0.0
      %2864 = vmatpush1.msra.mxu0 0.0
      %2865 = vmatprep.subr.mxu0 0.0
      %2866 = vmatpush1.msra.mxu0 0.0
      %2867 = vmatprep.subr.mxu0 0.0
      %2868 = vmatpush1.msra.mxu0 0.0
      %2869 = vmatprep.subr.mxu0 0.0
      %2870 = vmatpush1.msra.mxu0 0.0
      %2871 = vmatprep.subr.mxu0 0.0
      %2872 = vmatpush1.msra.mxu0 0.0
      %2873 = vmatprep.subr.mxu0 0.0
      %2874 = vmatpush1.msra.mxu0 0.0
      %2875 = vmatprep.subr.mxu0 0.0
      %2876 = vmatpush1.msra.mxu0 0.0
      %2877 = vmatprep.subr.mxu0 0.0
      %2878 = vmatpush1.msra.mxu0 0.0
      %2879 = vmatprep.subr.mxu0 0.0
      %2880 = vmatpush1.msra.mxu0 0.0
      %2881 = vmatprep.subr.mxu0 0.0
      %2882 = vmatpush1.msra.mxu0 0.0
      %2883 = vmatprep.subr.mxu0 0.0
      %2884 = vmatpush1.msra.mxu0 0.0
      %2885 = vmatprep.subr.mxu0 0.0
      %2886 = vmatpush1.msra.mxu0 0.0
      %2887 = vmatprep.mubr.f32.mxu0 0.0
      %2888 = vmatmul.mubr.f32.gmra.mrb[0].mxu0 %v2669
      %v2889 = vpop.f32.mrb[0].mxu0
      %v2890 = vadd.f32 %v2665, %v2889
      %v2891 = vpop.f32.mrb[0].mxu0
      %2892 = vdwg.mxu0
      %s2893 = scalar_lea.vmem %s3, 8
      %v2894 = vld [vmem:[%s2893] sm:$0xf]
      %2895 = vrot.lane.b32.xlu0 %v2414, 126
      %v2896 = vpop.permute.xlu0 %2895
      %2897 = vrot.lane.b32.xlu0 %v2415, 126
      %v2898 = vpop.permute.xlu0 %2897
      %2899 = vrot.lane.b32.xlu0 %v2416, 126
      %v2900 = vpop.permute.xlu0 %2899
      %2901 = vrot.lane.b32.xlu0 %v2417, 126
      %v2902 = vpop.permute.xlu0 %2901
      %2903 = vrot.lane.b32.xlu0 %v2418, 126
      %v2904 = vpop.permute.xlu0 %2903
      %v2905 = vsel %vm702, %v2896, %v2898
      %v2906 = vsel %vm702, %v2898, %v2900
      %v2907 = vsel %vm702, %v2900, %v2902
      %v2908 = vsel %vm702, %v2902, %v2904
      %v2910 = vsel %vm2441, %v2894, 0
      %v2912 = vsel %vm2445, %v2905, 0
      %v2914 = vsel %vm2445, %v2906, 0
      %v2916 = vsel %vm2445, %v2907, 0
      %v2918 = vsel %vm2445, %v2908, 0
      %v2920 = vsel %vm2445, %v2904, 0
      %2922 = vmatprep.subr.mxu0 %v2914
      %2923 = vmatpush1.msra.mxu0 %v2912
      %2924 = vmatprep.subr.mxu0 0.0
      %2925 = vmatpush1.msra.mxu0 0.0
      %2926 = vmatprep.subr.mxu0 0.0
      %2927 = vmatpush1.msra.mxu0 0.0
      %2928 = vmatprep.subr.mxu0 0.0
      %2929 = vmatpush1.msra.mxu0 0.0
      %2930 = vmatprep.subr.mxu0 0.0
      %2931 = vmatpush1.msra.mxu0 0.0
      %2932 = vmatprep.subr.mxu0 0.0
      %2933 = vmatpush1.msra.mxu0 0.0
      %2934 = vmatprep.subr.mxu0 0.0
      %2935 = vmatpush1.msra.mxu0 0.0
      %2936 = vmatprep.subr.mxu0 0.0
      %2937 = vmatpush1.msra.mxu0 0.0
      %2938 = vmatprep.subr.mxu0 0.0
      %2939 = vmatpush1.msra.mxu0 0.0
      %2940 = vmatprep.subr.mxu0 0.0
      %2941 = vmatpush1.msra.mxu0 0.0
      %2942 = vmatprep.subr.mxu0 0.0
      %2943 = vmatpush1.msra.mxu0 0.0
      %2944 = vmatprep.subr.mxu0 0.0
      %2945 = vmatpush1.msra.mxu0 0.0
      %2946 = vmatprep.subr.mxu0 0.0
      %2947 = vmatpush1.msra.mxu0 0.0
      %2948 = vmatprep.subr.mxu0 0.0
      %2949 = vmatpush1.msra.mxu0 0.0
      %2950 = vmatprep.subr.mxu0 0.0
      %2951 = vmatpush1.msra.mxu0 0.0
      %2952 = vmatprep.subr.mxu0 0.0
      %2953 = vmatpush1.msra.mxu0 0.0
      %2954 = vmatprep.subr.mxu0 0.0
      %2955 = vmatpush1.msra.mxu0 0.0
      %2956 = vmatprep.subr.mxu0 0.0
      %2957 = vmatpush1.msra.mxu0 0.0
      %2958 = vmatprep.subr.mxu0 0.0
      %2959 = vmatpush1.msra.mxu0 0.0
      %2960 = vmatprep.subr.mxu0 0.0
      %2961 = vmatpush1.msra.mxu0 0.0
      %2962 = vmatprep.subr.mxu0 0.0
      %2963 = vmatpush1.msra.mxu0 0.0
      %2964 = vmatprep.subr.mxu0 0.0
      %2965 = vmatpush1.msra.mxu0 0.0
      %2966 = vmatprep.subr.mxu0 0.0
      %2967 = vmatpush1.msra.mxu0 0.0
      %2968 = vmatprep.subr.mxu0 0.0
      %2969 = vmatpush1.msra.mxu0 0.0
      %2970 = vmatprep.subr.mxu0 0.0
      %2971 = vmatpush1.msra.mxu0 0.0
      %2972 = vmatprep.subr.mxu0 0.0
      %2973 = vmatpush1.msra.mxu0 0.0
      %2974 = vmatprep.subr.mxu0 0.0
      %2975 = vmatpush1.msra.mxu0 0.0
      %2976 = vmatprep.subr.mxu0 0.0
      %2977 = vmatpush1.msra.mxu0 0.0
      %2978 = vmatprep.subr.mxu0 0.0
      %2979 = vmatpush1.msra.mxu0 0.0
      %2980 = vmatprep.subr.mxu0 0.0
      %2981 = vmatpush1.msra.mxu0 0.0
      %2982 = vmatprep.subr.mxu0 0.0
      %2983 = vmatpush1.msra.mxu0 0.0
      %2984 = vmatprep.subr.mxu0 0.0
      %2985 = vmatpush1.msra.mxu0 0.0
      %2986 = vmatprep.mubr.f32.mxu0 0.0
      %2987 = vmatmul.mubr.f32.gmra.mrb[0].mxu0 %v2910
      %v2988 = vpop.f32.mrb[0].mxu0
      %v2989 = vadd.f32 0.0, %v2988
      %v2990 = vpop.f32.mrb[0].mxu0
      %v2991 = vadd.f32 0.0, %v2990
      %2992 = vdwg.mxu0
      %2993 = vmatprep.subr.mxu0 %v2918
      %2994 = vmatpush1.msra.mxu0 %v2916
      %2995 = vmatprep.subr.mxu0 0.0
      %2996 = vmatpush1.msra.mxu0 0.0
      %2997 = vmatprep.subr.mxu0 0.0
      %2998 = vmatpush1.msra.mxu0 0.0
      %2999 = vmatprep.subr.mxu0 0.0
      %3000 = vmatpush1.msra.mxu0 0.0
      %3001 = vmatprep.subr.mxu0 0.0
      %3002 = vmatpush1.msra.mxu0 0.0
      %3003 = vmatprep.subr.mxu0 0.0
      %3004 = vmatpush1.msra.mxu0 0.0
      %3005 = vmatprep.subr.mxu0 0.0
      %3006 = vmatpush1.msra.mxu0 0.0
      %3007 = vmatprep.subr.mxu0 0.0
      %3008 = vmatpush1.msra.mxu0 0.0
      %3009 = vmatprep.subr.mxu0 0.0
      %3010 = vmatpush1.msra.mxu0 0.0
      %3011 = vmatprep.subr.mxu0 0.0
      %3012 = vmatpush1.msra.mxu0 0.0
      %3013 = vmatprep.subr.mxu0 0.0
      %3014 = vmatpush1.msra.mxu0 0.0
      %3015 = vmatprep.subr.mxu0 0.0
      %3016 = vmatpush1.msra.mxu0 0.0
      %3017 = vmatprep.subr.mxu0 0.0
      %3018 = vmatpush1.msra.mxu0 0.0
      %3019 = vmatprep.subr.mxu0 0.0
      %3020 = vmatpush1.msra.mxu0 0.0
      %3021 = vmatprep.subr.mxu0 0.0
      %3022 = vmatpush1.msra.mxu0 0.0
      %3023 = vmatprep.subr.mxu0 0.0
      %3024 = vmatpush1.msra.mxu0 0.0
      %3025 = vmatprep.subr.mxu0 0.0
      %3026 = vmatpush1.msra.mxu0 0.0
      %3027 = vmatprep.subr.mxu0 0.0
      %3028 = vmatpush1.msra.mxu0 0.0
      %3029 = vmatprep.subr.mxu0 0.0
      %3030 = vmatpush1.msra.mxu0 0.0
      %3031 = vmatprep.subr.mxu0 0.0
      %3032 = vmatpush1.msra.mxu0 0.0
      %3033 = vmatprep.subr.mxu0 0.0
      %3034 = vmatpush1.msra.mxu0 0.0
      %3035 = vmatprep.subr.mxu0 0.0
      %3036 = vmatpush1.msra.mxu0 0.0
      %3037 = vmatprep.subr.mxu0 0.0
      %3038 = vmatpush1.msra.mxu0 0.0
      %3039 = vmatprep.subr.mxu0 0.0
      %3040 = vmatpush1.msra.mxu0 0.0
      %3041 = vmatprep.subr.mxu0 0.0
      %3042 = vmatpush1.msra.mxu0 0.0
      %3043 = vmatprep.subr.mxu0 0.0
      %3044 = vmatpush1.msra.mxu0 0.0
      %3045 = vmatprep.subr.mxu0 0.0
      %3046 = vmatpush1.msra.mxu0 0.0
      %3047 = vmatprep.subr.mxu0 0.0
      %3048 = vmatpush1.msra.mxu0 0.0
      %3049 = vmatprep.subr.mxu0 0.0
      %3050 = vmatpush1.msra.mxu0 0.0
      %3051 = vmatprep.subr.mxu0 0.0
      %3052 = vmatpush1.msra.mxu0 0.0
      %3053 = vmatprep.subr.mxu0 0.0
      %3054 = vmatpush1.msra.mxu0 0.0
      %3055 = vmatprep.subr.mxu0 0.0
      %3056 = vmatpush1.msra.mxu0 0.0
      %3057 = vmatprep.mubr.f32.mxu0 0.0
      %3058 = vmatmul.mubr.f32.gmra.mrb[0].mxu0 %v2910
      %v3059 = vpop.f32.mrb[0].mxu0
      %v3060 = vadd.f32 0.0, %v3059
      %v3061 = vpop.f32.mrb[0].mxu0
      %v3062 = vadd.f32 0.0, %v3061
      %3063 = vdwg.mxu0
      %3064 = vmatprep.subr.mxu0 0.0
      %3065 = vmatpush1.msra.mxu0 %v2920
      %3066 = vmatprep.subr.mxu0 0.0
      %3067 = vmatpush1.msra.mxu0 0.0
      %3068 = vmatprep.subr.mxu0 0.0
      %3069 = vmatpush1.msra.mxu0 0.0
      %3070 = vmatprep.subr.mxu0 0.0
      %3071 = vmatpush1.msra.mxu0 0.0
      %3072 = vmatprep.subr.mxu0 0.0
      %3073 = vmatpush1.msra.mxu0 0.0
      %3074 = vmatprep.subr.mxu0 0.0
      %3075 = vmatpush1.msra.mxu0 0.0
      %3076 = vmatprep.subr.mxu0 0.0
      %3077 = vmatpush1.msra.mxu0 0.0
      %3078 = vmatprep.subr.mxu0 0.0
      %3079 = vmatpush1.msra.mxu0 0.0
      %3080 = vmatprep.subr.mxu0 0.0
      %3081 = vmatpush1.msra.mxu0 0.0
      %3082 = vmatprep.subr.mxu0 0.0
      %3083 = vmatpush1.msra.mxu0 0.0
      %3084 = vmatprep.subr.mxu0 0.0
      %3085 = vmatpush1.msra.mxu0 0.0
      %3086 = vmatprep.subr.mxu0 0.0
      %3087 = vmatpush1.msra.mxu0 0.0
      %3088 = vmatprep.subr.mxu0 0.0
      %3089 = vmatpush1.msra.mxu0 0.0
      %3090 = vmatprep.subr.mxu0 0.0
      %3091 = vmatpush1.msra.mxu0 0.0
      %3092 = vmatprep.subr.mxu0 0.0
      %3093 = vmatpush1.msra.mxu0 0.0
      %3094 = vmatprep.subr.mxu0 0.0
      %3095 = vmatpush1.msra.mxu0 0.0
      %3096 = vmatprep.subr.mxu0 0.0
      %3097 = vmatpush1.msra.mxu0 0.0
      %3098 = vmatprep.subr.mxu0 0.0
      %3099 = vmatpush1.msra.mxu0 0.0
      %3100 = vmatprep.subr.mxu0 0.0
      %3101 = vmatpush1.msra.mxu0 0.0
      %3102 = vmatprep.subr.mxu0 0.0
      %3103 = vmatpush1.msra.mxu0 0.0
      %3104 = vmatprep.subr.mxu0 0.0
      %3105 = vmatpush1.msra.mxu0 0.0
      %3106 = vmatprep.subr.mxu0 0.0
      %3107 = vmatpush1.msra.mxu0 0.0
      %3108 = vmatprep.subr.mxu0 0.0
      %3109 = vmatpush1.msra.mxu0 0.0
      %3110 = vmatprep.subr.mxu0 0.0
      %3111 = vmatpush1.msra.mxu0 0.0
      %3112 = vmatprep.subr.mxu0 0.0
      %3113 = vmatpush1.msra.mxu0 0.0
      %3114 = vmatprep.subr.mxu0 0.0
      %3115 = vmatpush1.msra.mxu0 0.0
      %3116 = vmatprep.subr.mxu0 0.0
      %3117 = vmatpush1.msra.mxu0 0.0
      %3118 = vmatprep.subr.mxu0 0.0
      %3119 = vmatpush1.msra.mxu0 0.0
      %3120 = vmatprep.subr.mxu0 0.0
      %3121 = vmatpush1.msra.mxu0 0.0
      %3122 = vmatprep.subr.mxu0 0.0
      %3123 = vmatpush1.msra.mxu0 0.0
      %3124 = vmatprep.subr.mxu0 0.0
      %3125 = vmatpush1.msra.mxu0 0.0
      %3126 = vmatprep.subr.mxu0 0.0
      %3127 = vmatpush1.msra.mxu0 0.0
      %3128 = vmatprep.mubr.f32.mxu0 0.0
      %3129 = vmatmul.mubr.f32.gmra.mrb[0].mxu0 %v2910
      %v3130 = vpop.f32.mrb[0].mxu0
      %v3131 = vadd.f32 0.0, %v3130
      %v3132 = vpop.f32.mrb[0].mxu0
      %3133 = vdwg.mxu0
      %v3134 = vadd.f32 %v2748, %v2989
      %v3135 = vadd.f32 %v2750, %v2991
      %v3136 = vadd.f32 %v2819, %v3060
      %v3137 = vadd.f32 %v2821, %v3062
      %v3138 = vadd.f32 %v2890, %v3131
      %s3139 = scalar_lea.vmem %s3, 12
      %v3140 = vld [vmem:[%s3139] sm:$0xf]
      %3141 = vrot.lane.b32.xlu0 %v2414, 104
      %v3142 = vpop.permute.xlu0 %3141
      %3143 = vrot.lane.b32.xlu0 %v2415, 104
      %v3144 = vpop.permute.xlu0 %3143
      %3145 = vrot.lane.b32.xlu0 %v2416, 104
      %v3146 = vpop.permute.xlu0 %3145
      %3147 = vrot.lane.b32.xlu0 %v2417, 104
      %v3148 = vpop.permute.xlu0 %3147
      %3149 = vrot.lane.b32.xlu0 %v2418, 104
      %v3150 = vpop.permute.xlu0 %3149
      %v3151 = vsel %vm947, %v3142, %v3144
      %v3152 = vsel %vm947, %v3144, %v3146
      %v3153 = vsel %vm947, %v3146, %v3148
      %v3154 = vsel %vm947, %v3148, %v3150
      %v3156 = vsel %vm2441, %v3140, 0
      %v3158 = vsel %vm2445, %v3151, 0
      %v3160 = vsel %vm2445, %v3152, 0
      %v3162 = vsel %vm2445, %v3153, 0
      %v3164 = vsel %vm2445, %v3154, 0
      %v3166 = vsel %vm2445, %v3150, 0
      %3168 = vmatprep.subr.mxu0 %v3160
      %3169 = vmatpush1.msra.mxu0 %v3158
      %3170 = vmatprep.subr.mxu0 0.0
      %3171 = vmatpush1.msra.mxu0 0.0
      %3172 = vmatprep.subr.mxu0 0.0
      %3173 = vmatpush1.msra.mxu0 0.0
      %3174 = vmatprep.subr.mxu0 0.0
      %3175 = vmatpush1.msra.mxu0 0.0
      %3176 = vmatprep.subr.mxu0 0.0
      %3177 = vmatpush1.msra.mxu0 0.0
      %3178 = vmatprep.subr.mxu0 0.0
      %3179 = vmatpush1.msra.mxu0 0.0
      %3180 = vmatprep.subr.mxu0 0.0
      %3181 = vmatpush1.msra.mxu0 0.0
      %3182 = vmatprep.subr.mxu0 0.0
      %3183 = vmatpush1.msra.mxu0 0.0
      %3184 = vmatprep.subr.mxu0 0.0
      %3185 = vmatpush1.msra.mxu0 0.0
      %3186 = vmatprep.subr.mxu0 0.0
      %3187 = vmatpush1.msra.mxu0 0.0
      %3188 = vmatprep.subr.mxu0 0.0
      %3189 = vmatpush1.msra.mxu0 0.0
      %3190 = vmatprep.subr.mxu0 0.0
      %3191 = vmatpush1.msra.mxu0 0.0
      %3192 = vmatprep.subr.mxu0 0.0
      %3193 = vmatpush1.msra.mxu0 0.0
      %3194 = vmatprep.subr.mxu0 0.0
      %3195 = vmatpush1.msra.mxu0 0.0
      %3196 = vmatprep.subr.mxu0 0.0
      %3197 = vmatpush1.msra.mxu0 0.0
      %3198 = vmatprep.subr.mxu0 0.0
      %3199 = vmatpush1.msra.mxu0 0.0
      %3200 = vmatprep.subr.mxu0 0.0
      %3201 = vmatpush1.msra.mxu0 0.0
      %3202 = vmatprep.subr.mxu0 0.0
      %3203 = vmatpush1.msra.mxu0 0.0
      %3204 = vmatprep.subr.mxu0 0.0
      %3205 = vmatpush1.msra.mxu0 0.0
      %3206 = vmatprep.subr.mxu0 0.0
      %3207 = vmatpush1.msra.mxu0 0.0
      %3208 = vmatprep.subr.mxu0 0.0
      %3209 = vmatpush1.msra.mxu0 0.0
      %3210 = vmatprep.subr.mxu0 0.0
      %3211 = vmatpush1.msra.mxu0 0.0
      %3212 = vmatprep.subr.mxu0 0.0
      %3213 = vmatpush1.msra.mxu0 0.0
      %3214 = vmatprep.subr.mxu0 0.0
      %3215 = vmatpush1.msra.mxu0 0.0
      %3216 = vmatprep.subr.mxu0 0.0
      %3217 = vmatpush1.msra.mxu0 0.0
      %3218 = vmatprep.subr.mxu0 0.0
      %3219 = vmatpush1.msra.mxu0 0.0
      %3220 = vmatprep.subr.mxu0 0.0
      %3221 = vmatpush1.msra.mxu0 0.0
      %3222 = vmatprep.subr.mxu0 0.0
      %3223 = vmatpush1.msra.mxu0 0.0
      %3224 = vmatprep.subr.mxu0 0.0
      %3225 = vmatpush1.msra.mxu0 0.0
      %3226 = vmatprep.subr.mxu0 0.0
      %3227 = vmatpush1.msra.mxu0 0.0
      %3228 = vmatprep.subr.mxu0 0.0
      %3229 = vmatpush1.msra.mxu0 0.0
      %3230 = vmatprep.subr.mxu0 0.0
      %3231 = vmatpush1.msra.mxu0 0.0
      %3232 = vmatprep.mubr.f32.mxu0 0.0
      %3233 = vmatmul.mubr.f32.gmra.mrb[0].mxu0 %v3156
      %v3234 = vpop.f32.mrb[0].mxu0
      %v3235 = vadd.f32 0.0, %v3234
      %v3236 = vpop.f32.mrb[0].mxu0
      %v3237 = vadd.f32 0.0, %v3236
      %3238 = vdwg.mxu0
      %3239 = vmatprep.subr.mxu0 %v3164
      %3240 = vmatpush1.msra.mxu0 %v3162
      %3241 = vmatprep.subr.mxu0 0.0
      %3242 = vmatpush1.msra.mxu0 0.0
      %3243 = vmatprep.subr.mxu0 0.0
      %3244 = vmatpush1.msra.mxu0 0.0
      %3245 = vmatprep.subr.mxu0 0.0
      %3246 = vmatpush1.msra.mxu0 0.0
      %3247 = vmatprep.subr.mxu0 0.0
      %3248 = vmatpush1.msra.mxu0 0.0
      %3249 = vmatprep.subr.mxu0 0.0
      %3250 = vmatpush1.msra.mxu0 0.0
      %3251 = vmatprep.subr.mxu0 0.0
      %3252 = vmatpush1.msra.mxu0 0.0
      %3253 = vmatprep.subr.mxu0 0.0
      %3254 = vmatpush1.msra.mxu0 0.0
      %3255 = vmatprep.subr.mxu0 0.0
      %3256 = vmatpush1.msra.mxu0 0.0
      %3257 = vmatprep.subr.mxu0 0.0
      %3258 = vmatpush1.msra.mxu0 0.0
      %3259 = vmatprep.subr.mxu0 0.0
      %3260 = vmatpush1.msra.mxu0 0.0
      %3261 = vmatprep.subr.mxu0 0.0
      %3262 = vmatpush1.msra.mxu0 0.0
      %3263 = vmatprep.subr.mxu0 0.0
      %3264 = vmatpush1.msra.mxu0 0.0
      %3265 = vmatprep.subr.mxu0 0.0
      %3266 = vmatpush1.msra.mxu0 0.0
      %3267 = vmatprep.subr.mxu0 0.0
      %3268 = vmatpush1.msra.mxu0 0.0
      %3269 = vmatprep.subr.mxu0 0.0
      %3270 = vmatpush1.msra.mxu0 0.0
      %3271 = vmatprep.subr.mxu0 0.0
      %3272 = vmatpush1.msra.mxu0 0.0
      %3273 = vmatprep.subr.mxu0 0.0
      %3274 = vmatpush1.msra.mxu0 0.0
      %3275 = vmatprep.subr.mxu0 0.0
      %3276 = vmatpush1.msra.mxu0 0.0
      %3277 = vmatprep.subr.mxu0 0.0
      %3278 = vmatpush1.msra.mxu0 0.0
      %3279 = vmatprep.subr.mxu0 0.0
      %3280 = vmatpush1.msra.mxu0 0.0
      %3281 = vmatprep.subr.mxu0 0.0
      %3282 = vmatpush1.msra.mxu0 0.0
      %3283 = vmatprep.subr.mxu0 0.0
      %3284 = vmatpush1.msra.mxu0 0.0
      %3285 = vmatprep.subr.mxu0 0.0
      %3286 = vmatpush1.msra.mxu0 0.0
      %3287 = vmatprep.subr.mxu0 0.0
      %3288 = vmatpush1.msra.mxu0 0.0
      %3289 = vmatprep.subr.mxu0 0.0
      %3290 = vmatpush1.msra.mxu0 0.0
      %3291 = vmatprep.subr.mxu0 0.0
      %3292 = vmatpush1.msra.mxu0 0.0
      %3293 = vmatprep.subr.mxu0 0.0
      %3294 = vmatpush1.msra.mxu0 0.0
      %3295 = vmatprep.subr.mxu0 0.0
      %3296 = vmatpush1.msra.mxu0 0.0
      %3297 = vmatprep.subr.mxu0 0.0
      %3298 = vmatpush1.msra.mxu0 0.0
      %3299 = vmatprep.subr.mxu0 0.0
      %3300 = vmatpush1.msra.mxu0 0.0
      %3301 = vmatprep.subr.mxu0 0.0
      %3302 = vmatpush1.msra.mxu0 0.0
      %3303 = vmatprep.mubr.f32.mxu0 0.0
      %3304 = vmatmul.mubr.f32.gmra.mrb[0].mxu0 %v3156
      %v3305 = vpop.f32.mrb[0].mxu0
      %v3306 = vadd.f32 0.0, %v3305
      %v3307 = vpop.f32.mrb[0].mxu0
      %v3308 = vadd.f32 0.0, %v3307
      %3309 = vdwg.mxu0
      %3310 = vmatprep.subr.mxu0 0.0
      %3311 = vmatpush1.msra.mxu0 %v3166
      %3312 = vmatprep.subr.mxu0 0.0
      %3313 = vmatpush1.msra.mxu0 0.0
      %3314 = vmatprep.subr.mxu0 0.0
      %3315 = vmatpush1.msra.mxu0 0.0
      %3316 = vmatprep.subr.mxu0 0.0
      %3317 = vmatpush1.msra.mxu0 0.0
      %3318 = vmatprep.subr.mxu0 0.0
      %3319 = vmatpush1.msra.mxu0 0.0
      %3320 = vmatprep.subr.mxu0 0.0
      %3321 = vmatpush1.msra.mxu0 0.0
      %3322 = vmatprep.subr.mxu0 0.0
      %3323 = vmatpush1.msra.mxu0 0.0
      %3324 = vmatprep.subr.mxu0 0.0
      %3325 = vmatpush1.msra.mxu0 0.0
      %3326 = vmatprep.subr.mxu0 0.0
      %3327 = vmatpush1.msra.mxu0 0.0
      %3328 = vmatprep.subr.mxu0 0.0
      %3329 = vmatpush1.msra.mxu0 0.0
      %3330 = vmatprep.subr.mxu0 0.0
      %3331 = vmatpush1.msra.mxu0 0.0
      %3332 = vmatprep.subr.mxu0 0.0
      %3333 = vmatpush1.msra.mxu0 0.0
      %3334 = vmatprep.subr.mxu0 0.0
      %3335 = vmatpush1.msra.mxu0 0.0
      %3336 = vmatprep.subr.mxu0 0.0
      %3337 = vmatpush1.msra.mxu0 0.0
      %3338 = vmatprep.subr.mxu0 0.0
      %3339 = vmatpush1.msra.mxu0 0.0
      %3340 = vmatprep.subr.mxu0 0.0
      %3341 = vmatpush1.msra.mxu0 0.0
      %3342 = vmatprep.subr.mxu0 0.0
      %3343 = vmatpush1.msra.mxu0 0.0
      %3344 = vmatprep.subr.mxu0 0.0
      %3345 = vmatpush1.msra.mxu0 0.0
      %3346 = vmatprep.subr.mxu0 0.0
      %3347 = vmatpush1.msra.mxu0 0.0
      %3348 = vmatprep.subr.mxu0 0.0
      %3349 = vmatpush1.msra.mxu0 0.0
      %3350 = vmatprep.subr.mxu0 0.0
      %3351 = vmatpush1.msra.mxu0 0.0
      %3352 = vmatprep.subr.mxu0 0.0
      %3353 = vmatpush1.msra.mxu0 0.0
      %3354 = vmatprep.subr.mxu0 0.0
      %3355 = vmatpush1.msra.mxu0 0.0
      %3356 = vmatprep.subr.mxu0 0.0
      %3357 = vmatpush1.msra.mxu0 0.0
      %3358 = vmatprep.subr.mxu0 0.0
      %3359 = vmatpush1.msra.mxu0 0.0
      %3360 = vmatprep.subr.mxu0 0.0
      %3361 = vmatpush1.msra.mxu0 0.0
      %3362 = vmatprep.subr.mxu0 0.0
      %3363 = vmatpush1.msra.mxu0 0.0
      %3364 = vmatprep.subr.mxu0 0.0
      %3365 = vmatpush1.msra.mxu0 0.0
      %3366 = vmatprep.subr.mxu0 0.0
      %3367 = vmatpush1.msra.mxu0 0.0
      %3368 = vmatprep.subr.mxu0 0.0
      %3369 = vmatpush1.msra.mxu0 0.0
      %3370 = vmatprep.subr.mxu0 0.0
      %3371 = vmatpush1.msra.mxu0 0.0
      %3372 = vmatprep.subr.mxu0 0.0
      %3373 = vmatpush1.msra.mxu0 0.0
      %3374 = vmatprep.mubr.f32.mxu0 0.0
      %3375 = vmatmul.mubr.f32.gmra.mrb[0].mxu0 %v3156
      %v3376 = vpop.f32.mrb[0].mxu0
      %v3377 = vadd.f32 0.0, %v3376
      %v3378 = vpop.f32.mrb[0].mxu0
      %3379 = vdwg.mxu0
      %v3380 = vadd.f32 %v3134, %v3235
      %v3381 = vadd.f32 %v3135, %v3237
      %v3382 = vadd.f32 %v3136, %v3306
      %v3383 = vadd.f32 %v3137, %v3308
      %v3384 = vadd.f32 %v3138, %v3377
      %s3385 = scalar_lea.vmem %s3, 16
      %v3386 = vld [vmem:[%s3385] sm:$0xf]
      %3387 = vrot.lane.b32.xlu0 %v2414, 103
      %v3388 = vpop.permute.xlu0 %3387
      %3389 = vrot.lane.b32.xlu0 %v2415, 103
      %v3390 = vpop.permute.xlu0 %3389
      %3391 = vrot.lane.b32.xlu0 %v2416, 103
      %v3392 = vpop.permute.xlu0 %3391
      %3393 = vrot.lane.b32.xlu0 %v2417, 103
      %v3394 = vpop.permute.xlu0 %3393
      %3395 = vrot.lane.b32.xlu0 %v2418, 103
      %v3396 = vpop.permute.xlu0 %3395
      %v3397 = vsel %vm1192, %v3388, %v3390
      %v3398 = vsel %vm1192, %v3390, %v3392
      %v3399 = vsel %vm1192, %v3392, %v3394
      %v3400 = vsel %vm1192, %v3394, %v3396
      %v3402 = vsel %vm2441, %v3386, 0
      %v3404 = vsel %vm2445, %v3397, 0
      %v3406 = vsel %vm2445, %v3398, 0
      %v3408 = vsel %vm2445, %v3399, 0
      %v3410 = vsel %vm2445, %v3400, 0
      %v3412 = vsel %vm2445, %v3396, 0
      %3414 = vmatprep.subr.mxu0 %v3406
      %3415 = vmatpush1.msra.mxu0 %v3404
      %3416 = vmatprep.subr.mxu0 0.0
      %3417 = vmatpush1.msra.mxu0 0.0
      %3418 = vmatprep.subr.mxu0 0.0
      %3419 = vmatpush1.msra.mxu0 0.0
      %3420 = vmatprep.subr.mxu0 0.0
      %3421 = vmatpush1.msra.mxu0 0.0
      %3422 = vmatprep.subr.mxu0 0.0
      %3423 = vmatpush1.msra.mxu0 0.0
      %3424 = vmatprep.subr.mxu0 0.0
      %3425 = vmatpush1.msra.mxu0 0.0
      %3426 = vmatprep.subr.mxu0 0.0
      %3427 = vmatpush1.msra.mxu0 0.0
      %3428 = vmatprep.subr.mxu0 0.0
      %3429 = vmatpush1.msra.mxu0 0.0
      %3430 = vmatprep.subr.mxu0 0.0
      %3431 = vmatpush1.msra.mxu0 0.0
      %3432 = vmatprep.subr.mxu0 0.0
      %3433 = vmatpush1.msra.mxu0 0.0
      %3434 = vmatprep.subr.mxu0 0.0
      %3435 = vmatpush1.msra.mxu0 0.0
      %3436 = vmatprep.subr.mxu0 0.0
      %3437 = vmatpush1.msra.mxu0 0.0
      %3438 = vmatprep.subr.mxu0 0.0
      %3439 = vmatpush1.msra.mxu0 0.0
      %3440 = vmatprep.subr.mxu0 0.0
      %3441 = vmatpush1.msra.mxu0 0.0
      %3442 = vmatprep.subr.mxu0 0.0
      %3443 = vmatpush1.msra.mxu0 0.0
      %3444 = vmatprep.subr.mxu0 0.0
      %3445 = vmatpush1.msra.mxu0 0.0
      %3446 = vmatprep.subr.mxu0 0.0
      %3447 = vmatpush1.msra.mxu0 0.0
      %3448 = vmatprep.subr.mxu0 0.0
      %3449 = vmatpush1.msra.mxu0 0.0
      %3450 = vmatprep.subr.mxu0 0.0
      %3451 = vmatpush1.msra.mxu0 0.0
      %3452 = vmatprep.subr.mxu0 0.0
      %3453 = vmatpush1.msra.mxu0 0.0
      %3454 = vmatprep.subr.mxu0 0.0
      %3455 = vmatpush1.msra.mxu0 0.0
      %3456 = vmatprep.subr.mxu0 0.0
      %3457 = vmatpush1.msra.mxu0 0.0
      %3458 = vmatprep.subr.mxu0 0.0
      %3459 = vmatpush1.msra.mxu0 0.0
      %3460 = vmatprep.subr.mxu0 0.0
      %3461 = vmatpush1.msra.mxu0 0.0
      %3462 = vmatprep.subr.mxu0 0.0
      %3463 = vmatpush1.msra.mxu0 0.0
      %3464 = vmatprep.subr.mxu0 0.0
      %3465 = vmatpush1.msra.mxu0 0.0
      %3466 = vmatprep.subr.mxu0 0.0
      %3467 = vmatpush1.msra.mxu0 0.0
      %3468 = vmatprep.subr.mxu0 0.0
      %3469 = vmatpush1.msra.mxu0 0.0
      %3470 = vmatprep.subr.mxu0 0.0
      %3471 = vmatpush1.msra.mxu0 0.0
      %3472 = vmatprep.subr.mxu0 0.0
      %3473 = vmatpush1.msra.mxu0 0.0
      %3474 = vmatprep.subr.mxu0 0.0
      %3475 = vmatpush1.msra.mxu0 0.0
      %3476 = vmatprep.subr.mxu0 0.0
      %3477 = vmatpush1.msra.mxu0 0.0
      %3478 = vmatprep.mubr.f32.mxu0 0.0
      %3479 = vmatmul.mubr.f32.gmra.mrb[0].mxu0 %v3402
      %v3480 = vpop.f32.mrb[0].mxu0
      %v3481 = vadd.f32 0.0, %v3480
      %v3482 = vpop.f32.mrb[0].mxu0
      %v3483 = vadd.f32 0.0, %v3482
      %3484 = vdwg.mxu0
      %3485 = vmatprep.subr.mxu0 %v3410
      %3486 = vmatpush1.msra.mxu0 %v3408
      %3487 = vmatprep.subr.mxu0 0.0
      %3488 = vmatpush1.msra.mxu0 0.0
      %3489 = vmatprep.subr.mxu0 0.0
      %3490 = vmatpush1.msra.mxu0 0.0
      %3491 = vmatprep.subr.mxu0 0.0
      %3492 = vmatpush1.msra.mxu0 0.0
      %3493 = vmatprep.subr.mxu0 0.0
      %3494 = vmatpush1.msra.mxu0 0.0
      %3495 = vmatprep.subr.mxu0 0.0
      %3496 = vmatpush1.msra.mxu0 0.0
      %3497 = vmatprep.subr.mxu0 0.0
      %3498 = vmatpush1.msra.mxu0 0.0
      %3499 = vmatprep.subr.mxu0 0.0
      %3500 = vmatpush1.msra.mxu0 0.0
      %3501 = vmatprep.subr.mxu0 0.0
      %3502 = vmatpush1.msra.mxu0 0.0
      %3503 = vmatprep.subr.mxu0 0.0
      %3504 = vmatpush1.msra.mxu0 0.0
      %3505 = vmatprep.subr.mxu0 0.0
      %3506 = vmatpush1.msra.mxu0 0.0
      %3507 = vmatprep.subr.mxu0 0.0
      %3508 = vmatpush1.msra.mxu0 0.0
      %3509 = vmatprep.subr.mxu0 0.0
      %3510 = vmatpush1.msra.mxu0 0.0
      %3511 = vmatprep.subr.mxu0 0.0
      %3512 = vmatpush1.msra.mxu0 0.0
      %3513 = vmatprep.subr.mxu0 0.0
      %3514 = vmatpush1.msra.mxu0 0.0
      %3515 = vmatprep.subr.mxu0 0.0
      %3516 = vmatpush1.msra.mxu0 0.0
      %3517 = vmatprep.subr.mxu0 0.0
      %3518 = vmatpush1.msra.mxu0 0.0
      %3519 = vmatprep.subr.mxu0 0.0
      %3520 = vmatpush1.msra.mxu0 0.0
      %3521 = vmatprep.subr.mxu0 0.0
      %3522 = vmatpush1.msra.mxu0 0.0
      %3523 = vmatprep.subr.mxu0 0.0
      %3524 = vmatpush1.msra.mxu0 0.0
      %3525 = vmatprep.subr.mxu0 0.0
      %3526 = vmatpush1.msra.mxu0 0.0
      %3527 = vmatprep.subr.mxu0 0.0
      %3528 = vmatpush1.msra.mxu0 0.0
      %3529 = vmatprep.subr.mxu0 0.0
      %3530 = vmatpush1.msra.mxu0 0.0
      %3531 = vmatprep.subr.mxu0 0.0
      %3532 = vmatpush1.msra.mxu0 0.0
      %3533 = vmatprep.subr.mxu0 0.0
      %3534 = vmatpush1.msra.mxu0 0.0
      %3535 = vmatprep.subr.mxu0 0.0
      %3536 = vmatpush1.msra.mxu0 0.0
      %3537 = vmatprep.subr.mxu0 0.0
      %3538 = vmatpush1.msra.mxu0 0.0
      %3539 = vmatprep.subr.mxu0 0.0
      %3540 = vmatpush1.msra.mxu0 0.0
      %3541 = vmatprep.subr.mxu0 0.0
      %3542 = vmatpush1.msra.mxu0 0.0
      %3543 = vmatprep.subr.mxu0 0.0
      %3544 = vmatpush1.msra.mxu0 0.0
      %3545 = vmatprep.subr.mxu0 0.0
      %3546 = vmatpush1.msra.mxu0 0.0
      %3547 = vmatprep.subr.mxu0 0.0
      %3548 = vmatpush1.msra.mxu0 0.0
      %3549 = vmatprep.mubr.f32.mxu0 0.0
      %3550 = vmatmul.mubr.f32.gmra.mrb[0].mxu0 %v3402
      %v3551 = vpop.f32.mrb[0].mxu0
      %v3552 = vadd.f32 0.0, %v3551
      %v3553 = vpop.f32.mrb[0].mxu0
      %v3554 = vadd.f32 0.0, %v3553
      %3555 = vdwg.mxu0
      %3556 = vmatprep.subr.mxu0 0.0
      %3557 = vmatpush1.msra.mxu0 %v3412
      %3558 = vmatprep.subr.mxu0 0.0
      %3559 = vmatpush1.msra.mxu0 0.0
      %3560 = vmatprep.subr.mxu0 0.0
      %3561 = vmatpush1.msra.mxu0 0.0
      %3562 = vmatprep.subr.mxu0 0.0
      %3563 = vmatpush1.msra.mxu0 0.0
      %3564 = vmatprep.subr.mxu0 0.0
      %3565 = vmatpush1.msra.mxu0 0.0
      %3566 = vmatprep.subr.mxu0 0.0
      %3567 = vmatpush1.msra.mxu0 0.0
      %3568 = vmatprep.subr.mxu0 0.0
      %3569 = vmatpush1.msra.mxu0 0.0
      %3570 = vmatprep.subr.mxu0 0.0
      %3571 = vmatpush1.msra.mxu0 0.0
      %3572 = vmatprep.subr.mxu0 0.0
      %3573 = vmatpush1.msra.mxu0 0.0
      %3574 = vmatprep.subr.mxu0 0.0
      %3575 = vmatpush1.msra.mxu0 0.0
      %3576 = vmatprep.subr.mxu0 0.0
      %3577 = vmatpush1.msra.mxu0 0.0
      %3578 = vmatprep.subr.mxu0 0.0
      %3579 = vmatpush1.msra.mxu0 0.0
      %3580 = vmatprep.subr.mxu0 0.0
      %3581 = vmatpush1.msra.mxu0 0.0
      %3582 = vmatprep.subr.mxu0 0.0
      %3583 = vmatpush1.msra.mxu0 0.0
      %3584 = vmatprep.subr.mxu0 0.0
      %3585 = vmatpush1.msra.mxu0 0.0
      %3586 = vmatprep.subr.mxu0 0.0
      %3587 = vmatpush1.msra.mxu0 0.0
      %3588 = vmatprep.subr.mxu0 0.0
      %3589 = vmatpush1.msra.mxu0 0.0
      %3590 = vmatprep.subr.mxu0 0.0
      %3591 = vmatpush1.msra.mxu0 0.0
      %3592 = vmatprep.subr.mxu0 0.0
      %3593 = vmatpush1.msra.mxu0 0.0
      %3594 = vmatprep.subr.mxu0 0.0
      %3595 = vmatpush1.msra.mxu0 0.0
      %3596 = vmatprep.subr.mxu0 0.0
      %3597 = vmatpush1.msra.mxu0 0.0
      %3598 = vmatprep.subr.mxu0 0.0
      %3599 = vmatpush1.msra.mxu0 0.0
      %3600 = vmatprep.subr.mxu0 0.0
      %3601 = vmatpush1.msra.mxu0 0.0
      %3602 = vmatprep.subr.mxu0 0.0
      %3603 = vmatpush1.msra.mxu0 0.0
      %3604 = vmatprep.subr.mxu0 0.0
      %3605 = vmatpush1.msra.mxu0 0.0
      %3606 = vmatprep.subr.mxu0 0.0
      %3607 = vmatpush1.msra.mxu0 0.0
      %3608 = vmatprep.subr.mxu0 0.0
      %3609 = vmatpush1.msra.mxu0 0.0
      %3610 = vmatprep.subr.mxu0 0.0
      %3611 = vmatpush1.msra.mxu0 0.0
      %3612 = vmatprep.subr.mxu0 0.0
      %3613 = vmatpush1.msra.mxu0 0.0
      %3614 = vmatprep.subr.mxu0 0.0
      %3615 = vmatpush1.msra.mxu0 0.0
      %3616 = vmatprep.subr.mxu0 0.0
      %3617 = vmatpush1.msra.mxu0 0.0
      %3618 = vmatprep.subr.mxu0 0.0
      %3619 = vmatpush1.msra.mxu0 0.0
      %3620 = vmatprep.mubr.f32.mxu0 0.0
      %3621 = vmatmul.mubr.f32.gmra.mrb[0].mxu0 %v3402
      %v3622 = vpop.f32.mrb[0].mxu0
      %v3623 = vadd.f32 0.0, %v3622
      %v3624 = vpop.f32.mrb[0].mxu0
      %3625 = vdwg.mxu0
      %v3626 = vadd.f32 %v3380, %v3481
      %v3627 = vadd.f32 %v3381, %v3483
      %v3628 = vadd.f32 %v3382, %v3552
      %v3629 = vadd.f32 %v3383, %v3554
      %v3630 = vadd.f32 %v3384, %v3623
      %s3631 = scalar_lea.vmem %s3, 20
      %v3632 = vld [vmem:[%s3631] sm:$0xf]
      %3633 = vrot.lane.b32.xlu0 %v2414, 102
      %v3634 = vpop.permute.xlu0 %3633
      %3635 = vrot.lane.b32.xlu0 %v2415, 102
      %v3636 = vpop.permute.xlu0 %3635
      %3637 = vrot.lane.b32.xlu0 %v2416, 102
      %v3638 = vpop.permute.xlu0 %3637
      %3639 = vrot.lane.b32.xlu0 %v2417, 102
      %v3640 = vpop.permute.xlu0 %3639
      %3641 = vrot.lane.b32.xlu0 %v2418, 102
      %v3642 = vpop.permute.xlu0 %3641
      %v3643 = vsel %vm1437, %v3634, %v3636
      %v3644 = vsel %vm1437, %v3636, %v3638
      %v3645 = vsel %vm1437, %v3638, %v3640
      %v3646 = vsel %vm1437, %v3640, %v3642
      %v3648 = vsel %vm2441, %v3632, 0
      %v3650 = vsel %vm2445, %v3643, 0
      %v3652 = vsel %vm2445, %v3644, 0
      %v3654 = vsel %vm2445, %v3645, 0
      %v3656 = vsel %vm2445, %v3646, 0
      %v3658 = vsel %vm2445, %v3642, 0
      %3660 = vmatprep.subr.mxu0 %v3652
      %3661 = vmatpush1.msra.mxu0 %v3650
      %3662 = vmatprep.subr.mxu0 0.0
      %3663 = vmatpush1.msra.mxu0 0.0
      %3664 = vmatprep.subr.mxu0 0.0
      %3665 = vmatpush1.msra.mxu0 0.0
      %3666 = vmatprep.subr.mxu0 0.0
      %3667 = vmatpush1.msra.mxu0 0.0
      %3668 = vmatprep.subr.mxu0 0.0
      %3669 = vmatpush1.msra.mxu0 0.0
      %3670 = vmatprep.subr.mxu0 0.0
      %3671 = vmatpush1.msra.mxu0 0.0
      %3672 = vmatprep.subr.mxu0 0.0
      %3673 = vmatpush1.msra.mxu0 0.0
      %3674 = vmatprep.subr.mxu0 0.0
      %3675 = vmatpush1.msra.mxu0 0.0
      %3676 = vmatprep.subr.mxu0 0.0
      %3677 = vmatpush1.msra.mxu0 0.0
      %3678 = vmatprep.subr.mxu0 0.0
      %3679 = vmatpush1.msra.mxu0 0.0
      %3680 = vmatprep.subr.mxu0 0.0
      %3681 = vmatpush1.msra.mxu0 0.0
      %3682 = vmatprep.subr.mxu0 0.0
      %3683 = vmatpush1.msra.mxu0 0.0
      %3684 = vmatprep.subr.mxu0 0.0
      %3685 = vmatpush1.msra.mxu0 0.0
      %3686 = vmatprep.subr.mxu0 0.0
      %3687 = vmatpush1.msra.mxu0 0.0
      %3688 = vmatprep.subr.mxu0 0.0
      %3689 = vmatpush1.msra.mxu0 0.0
      %3690 = vmatprep.subr.mxu0 0.0
      %3691 = vmatpush1.msra.mxu0 0.0
      %3692 = vmatprep.subr.mxu0 0.0
      %3693 = vmatpush1.msra.mxu0 0.0
      %3694 = vmatprep.subr.mxu0 0.0
      %3695 = vmatpush1.msra.mxu0 0.0
      %3696 = vmatprep.subr.mxu0 0.0
      %3697 = vmatpush1.msra.mxu0 0.0
      %3698 = vmatprep.subr.mxu0 0.0
      %3699 = vmatpush1.msra.mxu0 0.0
      %3700 = vmatprep.subr.mxu0 0.0
      %3701 = vmatpush1.msra.mxu0 0.0
      %3702 = vmatprep.subr.mxu0 0.0
      %3703 = vmatpush1.msra.mxu0 0.0
      %3704 = vmatprep.subr.mxu0 0.0
      %3705 = vmatpush1.msra.mxu0 0.0
      %3706 = vmatprep.subr.mxu0 0.0
      %3707 = vmatpush1.msra.mxu0 0.0
      %3708 = vmatprep.subr.mxu0 0.0
      %3709 = vmatpush1.msra.mxu0 0.0
      %3710 = vmatprep.subr.mxu0 0.0
      %3711 = vmatpush1.msra.mxu0 0.0
      %3712 = vmatprep.subr.mxu0 0.0
      %3713 = vmatpush1.msra.mxu0 0.0
      %3714 = vmatprep.subr.mxu0 0.0
      %3715 = vmatpush1.msra.mxu0 0.0
      %3716 = vmatprep.subr.mxu0 0.0
      %3717 = vmatpush1.msra.mxu0 0.0
      %3718 = vmatprep.subr.mxu0 0.0
      %3719 = vmatpush1.msra.mxu0 0.0
      %3720 = vmatprep.subr.mxu0 0.0
      %3721 = vmatpush1.msra.mxu0 0.0
      %3722 = vmatprep.subr.mxu0 0.0
      %3723 = vmatpush1.msra.mxu0 0.0
      %3724 = vmatprep.mubr.f32.mxu0 0.0
      %3725 = vmatmul.mubr.f32.gmra.mrb[0].mxu0 %v3648
      %v3726 = vpop.f32.mrb[0].mxu0
      %v3727 = vadd.f32 0.0, %v3726
      %v3728 = vpop.f32.mrb[0].mxu0
      %v3729 = vadd.f32 0.0, %v3728
      %3730 = vdwg.mxu0
      %3731 = vmatprep.subr.mxu0 %v3656
      %3732 = vmatpush1.msra.mxu0 %v3654
      %3733 = vmatprep.subr.mxu0 0.0
      %3734 = vmatpush1.msra.mxu0 0.0
      %3735 = vmatprep.subr.mxu0 0.0
      %3736 = vmatpush1.msra.mxu0 0.0
      %3737 = vmatprep.subr.mxu0 0.0
      %3738 = vmatpush1.msra.mxu0 0.0
      %3739 = vmatprep.subr.mxu0 0.0
      %3740 = vmatpush1.msra.mxu0 0.0
      %3741 = vmatprep.subr.mxu0 0.0
      %3742 = vmatpush1.msra.mxu0 0.0
      %3743 = vmatprep.subr.mxu0 0.0
      %3744 = vmatpush1.msra.mxu0 0.0
      %3745 = vmatprep.subr.mxu0 0.0
      %3746 = vmatpush1.msra.mxu0 0.0
      %3747 = vmatprep.subr.mxu0 0.0
      %3748 = vmatpush1.msra.mxu0 0.0
      %3749 = vmatprep.subr.mxu0 0.0
      %3750 = vmatpush1.msra.mxu0 0.0
      %3751 = vmatprep.subr.mxu0 0.0
      %3752 = vmatpush1.msra.mxu0 0.0
      %3753 = vmatprep.subr.mxu0 0.0
      %3754 = vmatpush1.msra.mxu0 0.0
      %3755 = vmatprep.subr.mxu0 0.0
      %3756 = vmatpush1.msra.mxu0 0.0
      %3757 = vmatprep.subr.mxu0 0.0
      %3758 = vmatpush1.msra.mxu0 0.0
      %3759 = vmatprep.subr.mxu0 0.0
      %3760 = vmatpush1.msra.mxu0 0.0
      %3761 = vmatprep.subr.mxu0 0.0
      %3762 = vmatpush1.msra.mxu0 0.0
      %3763 = vmatprep.subr.mxu0 0.0
      %3764 = vmatpush1.msra.mxu0 0.0
      %3765 = vmatprep.subr.mxu0 0.0
      %3766 = vmatpush1.msra.mxu0 0.0
      %3767 = vmatprep.subr.mxu0 0.0
      %3768 = vmatpush1.msra.mxu0 0.0
      %3769 = vmatprep.subr.mxu0 0.0
      %3770 = vmatpush1.msra.mxu0 0.0
      %3771 = vmatprep.subr.mxu0 0.0
      %3772 = vmatpush1.msra.mxu0 0.0
      %3773 = vmatprep.subr.mxu0 0.0
      %3774 = vmatpush1.msra.mxu0 0.0
      %3775 = vmatprep.subr.mxu0 0.0
      %3776 = vmatpush1.msra.mxu0 0.0
      %3777 = vmatprep.subr.mxu0 0.0
      %3778 = vmatpush1.msra.mxu0 0.0
      %3779 = vmatprep.subr.mxu0 0.0
      %3780 = vmatpush1.msra.mxu0 0.0
      %3781 = vmatprep.subr.mxu0 0.0
      %3782 = vmatpush1.msra.mxu0 0.0
      %3783 = vmatprep.subr.mxu0 0.0
      %3784 = vmatpush1.msra.mxu0 0.0
      %3785 = vmatprep.subr.mxu0 0.0
      %3786 = vmatpush1.msra.mxu0 0.0
      %3787 = vmatprep.subr.mxu0 0.0
      %3788 = vmatpush1.msra.mxu0 0.0
      %3789 = vmatprep.subr.mxu0 0.0
      %3790 = vmatpush1.msra.mxu0 0.0
      %3791 = vmatprep.subr.mxu0 0.0
      %3792 = vmatpush1.msra.mxu0 0.0
      %3793 = vmatprep.subr.mxu0 0.0
      %3794 = vmatpush1.msra.mxu0 0.0
      %3795 = vmatprep.mubr.f32.mxu0 0.0
      %3796 = vmatmul.mubr.f32.gmra.mrb[0].mxu0 %v3648
      %v3797 = vpop.f32.mrb[0].mxu0
      %v3798 = vadd.f32 0.0, %v3797
      %v3799 = vpop.f32.mrb[0].mxu0
      %v3800 = vadd.f32 0.0, %v3799
      %3801 = vdwg.mxu0
      %3802 = vmatprep.subr.mxu0 0.0
      %3803 = vmatpush1.msra.mxu0 %v3658
      %3804 = vmatprep.subr.mxu0 0.0
      %3805 = vmatpush1.msra.mxu0 0.0
      %3806 = vmatprep.subr.mxu0 0.0
      %3807 = vmatpush1.msra.mxu0 0.0
      %3808 = vmatprep.subr.mxu0 0.0
      %3809 = vmatpush1.msra.mxu0 0.0
      %3810 = vmatprep.subr.mxu0 0.0
      %3811 = vmatpush1.msra.mxu0 0.0
      %3812 = vmatprep.subr.mxu0 0.0
      %3813 = vmatpush1.msra.mxu0 0.0
      %3814 = vmatprep.subr.mxu0 0.0
      %3815 = vmatpush1.msra.mxu0 0.0
      %3816 = vmatprep.subr.mxu0 0.0
      %3817 = vmatpush1.msra.mxu0 0.0
      %3818 = vmatprep.subr.mxu0 0.0
      %3819 = vmatpush1.msra.mxu0 0.0
      %3820 = vmatprep.subr.mxu0 0.0
      %3821 = vmatpush1.msra.mxu0 0.0
      %3822 = vmatprep.subr.mxu0 0.0
      %3823 = vmatpush1.msra.mxu0 0.0
      %3824 = vmatprep.subr.mxu0 0.0
      %3825 = vmatpush1.msra.mxu0 0.0
      %3826 = vmatprep.subr.mxu0 0.0
      %3827 = vmatpush1.msra.mxu0 0.0
      %3828 = vmatprep.subr.mxu0 0.0
      %3829 = vmatpush1.msra.mxu0 0.0
      %3830 = vmatprep.subr.mxu0 0.0
      %3831 = vmatpush1.msra.mxu0 0.0
      %3832 = vmatprep.subr.mxu0 0.0
      %3833 = vmatpush1.msra.mxu0 0.0
      %3834 = vmatprep.subr.mxu0 0.0
      %3835 = vmatpush1.msra.mxu0 0.0
      %3836 = vmatprep.subr.mxu0 0.0
      %3837 = vmatpush1.msra.mxu0 0.0
      %3838 = vmatprep.subr.mxu0 0.0
      %3839 = vmatpush1.msra.mxu0 0.0
      %3840 = vmatprep.subr.mxu0 0.0
      %3841 = vmatpush1.msra.mxu0 0.0
      %3842 = vmatprep.subr.mxu0 0.0
      %3843 = vmatpush1.msra.mxu0 0.0
      %3844 = vmatprep.subr.mxu0 0.0
      %3845 = vmatpush1.msra.mxu0 0.0
      %3846 = vmatprep.subr.mxu0 0.0
      %3847 = vmatpush1.msra.mxu0 0.0
      %3848 = vmatprep.subr.mxu0 0.0
      %3849 = vmatpush1.msra.mxu0 0.0
      %3850 = vmatprep.subr.mxu0 0.0
      %3851 = vmatpush1.msra.mxu0 0.0
      %3852 = vmatprep.subr.mxu0 0.0
      %3853 = vmatpush1.msra.mxu0 0.0
      %3854 = vmatprep.subr.mxu0 0.0
      %3855 = vmatpush1.msra.mxu0 0.0
      %3856 = vmatprep.subr.mxu0 0.0
      %3857 = vmatpush1.msra.mxu0 0.0
      %3858 = vmatprep.subr.mxu0 0.0
      %3859 = vmatpush1.msra.mxu0 0.0
      %3860 = vmatprep.subr.mxu0 0.0
      %3861 = vmatpush1.msra.mxu0 0.0
      %3862 = vmatprep.subr.mxu0 0.0
      %3863 = vmatpush1.msra.mxu0 0.0
      %3864 = vmatprep.subr.mxu0 0.0
      %3865 = vmatpush1.msra.mxu0 0.0
      %3866 = vmatprep.mubr.f32.mxu0 0.0
      %3867 = vmatmul.mubr.f32.gmra.mrb[0].mxu0 %v3648
      %v3868 = vpop.f32.mrb[0].mxu0
      %v3869 = vadd.f32 0.0, %v3868
      %v3870 = vpop.f32.mrb[0].mxu0
      %3871 = vdwg.mxu0
      %v3872 = vadd.f32 %v3626, %v3727
      %v3873 = vadd.f32 %v3627, %v3729
      %v3874 = vadd.f32 %v3628, %v3798
      %v3875 = vadd.f32 %v3629, %v3800
      %v3876 = vadd.f32 %v3630, %v3869
      %s3877 = scalar_lea.vmem %s3, 24
      %v3878 = vld [vmem:[%s3877] sm:$0xf]
      %3879 = vrot.lane.b32.xlu0 %v2414, 80
      %v3880 = vpop.permute.xlu0 %3879
      %3881 = vrot.lane.b32.xlu0 %v2415, 80
      %v3882 = vpop.permute.xlu0 %3881
      %3883 = vrot.lane.b32.xlu0 %v2416, 80
      %v3884 = vpop.permute.xlu0 %3883
      %3885 = vrot.lane.b32.xlu0 %v2417, 80
      %v3886 = vpop.permute.xlu0 %3885
      %3887 = vrot.lane.b32.xlu0 %v2418, 80
      %v3888 = vpop.permute.xlu0 %3887
      %v3889 = vsel %vm1682, %v3880, %v3882
      %v3890 = vsel %vm1682, %v3882, %v3884
      %v3891 = vsel %vm1682, %v3884, %v3886
      %v3892 = vsel %vm1682, %v3886, %v3888
      %v3894 = vsel %vm2441, %v3878, 0
      %v3896 = vsel %vm2445, %v3889, 0
      %v3898 = vsel %vm2445, %v3890, 0
      %v3900 = vsel %vm2445, %v3891, 0
      %v3902 = vsel %vm2445, %v3892, 0
      %v3904 = vsel %vm2445, %v3888, 0
      %3906 = vmatprep.subr.mxu0 %v3898
      %3907 = vmatpush1.msra.mxu0 %v3896
      %3908 = vmatprep.subr.mxu0 0.0
      %3909 = vmatpush1.msra.mxu0 0.0
      %3910 = vmatprep.subr.mxu0 0.0
      %3911 = vmatpush1.msra.mxu0 0.0
      %3912 = vmatprep.subr.mxu0 0.0
      %3913 = vmatpush1.msra.mxu0 0.0
      %3914 = vmatprep.subr.mxu0 0.0
      %3915 = vmatpush1.msra.mxu0 0.0
      %3916 = vmatprep.subr.mxu0 0.0
      %3917 = vmatpush1.msra.mxu0 0.0
      %3918 = vmatprep.subr.mxu0 0.0
      %3919 = vmatpush1.msra.mxu0 0.0
      %3920 = vmatprep.subr.mxu0 0.0
      %3921 = vmatpush1.msra.mxu0 0.0
      %3922 = vmatprep.subr.mxu0 0.0
      %3923 = vmatpush1.msra.mxu0 0.0
      %3924 = vmatprep.subr.mxu0 0.0
      %3925 = vmatpush1.msra.mxu0 0.0
      %3926 = vmatprep.subr.mxu0 0.0
      %3927 = vmatpush1.msra.mxu0 0.0
      %3928 = vmatprep.subr.mxu0 0.0
      %3929 = vmatpush1.msra.mxu0 0.0
      %3930 = vmatprep.subr.mxu0 0.0
      %3931 = vmatpush1.msra.mxu0 0.0
      %3932 = vmatprep.subr.mxu0 0.0
      %3933 = vmatpush1.msra.mxu0 0.0
      %3934 = vmatprep.subr.mxu0 0.0
      %3935 = vmatpush1.msra.mxu0 0.0
      %3936 = vmatprep.subr.mxu0 0.0
      %3937 = vmatpush1.msra.mxu0 0.0
      %3938 = vmatprep.subr.mxu0 0.0
      %3939 = vmatpush1.msra.mxu0 0.0
      %3940 = vmatprep.subr.mxu0 0.0
      %3941 = vmatpush1.msra.mxu0 0.0
      %3942 = vmatprep.subr.mxu0 0.0
      %3943 = vmatpush1.msra.mxu0 0.0
      %3944 = vmatprep.subr.mxu0 0.0
      %3945 = vmatpush1.msra.mxu0 0.0
      %3946 = vmatprep.subr.mxu0 0.0
      %3947 = vmatpush1.msra.mxu0 0.0
      %3948 = vmatprep.subr.mxu0 0.0
      %3949 = vmatpush1.msra.mxu0 0.0
      %3950 = vmatprep.subr.mxu0 0.0
      %3951 = vmatpush1.msra.mxu0 0.0
      %3952 = vmatprep.subr.mxu0 0.0
      %3953 = vmatpush1.msra.mxu0 0.0
      %3954 = vmatprep.subr.mxu0 0.0
      %3955 = vmatpush1.msra.mxu0 0.0
      %3956 = vmatprep.subr.mxu0 0.0
      %3957 = vmatpush1.msra.mxu0 0.0
      %3958 = vmatprep.subr.mxu0 0.0
      %3959 = vmatpush1.msra.mxu0 0.0
      %3960 = vmatprep.subr.mxu0 0.0
      %3961 = vmatpush1.msra.mxu0 0.0
      %3962 = vmatprep.subr.mxu0 0.0
      %3963 = vmatpush1.msra.mxu0 0.0
      %3964 = vmatprep.subr.mxu0 0.0
      %3965 = vmatpush1.msra.mxu0 0.0
      %3966 = vmatprep.subr.mxu0 0.0
      %3967 = vmatpush1.msra.mxu0 0.0
      %3968 = vmatprep.subr.mxu0 0.0
      %3969 = vmatpush1.msra.mxu0 0.0
      %3970 = vmatprep.mubr.f32.mxu0 0.0
      %3971 = vmatmul.mubr.f32.gmra.mrb[0].mxu0 %v3894
      %v3972 = vpop.f32.mrb[0].mxu0
      %v3973 = vadd.f32 0.0, %v3972
      %v3974 = vpop.f32.mrb[0].mxu0
      %v3975 = vadd.f32 0.0, %v3974
      %3976 = vdwg.mxu0
      %3977 = vmatprep.subr.mxu0 %v3902
      %3978 = vmatpush1.msra.mxu0 %v3900
      %3979 = vmatprep.subr.mxu0 0.0
      %3980 = vmatpush1.msra.mxu0 0.0
      %3981 = vmatprep.subr.mxu0 0.0
      %3982 = vmatpush1.msra.mxu0 0.0
      %3983 = vmatprep.subr.mxu0 0.0
      %3984 = vmatpush1.msra.mxu0 0.0
      %3985 = vmatprep.subr.mxu0 0.0
      %3986 = vmatpush1.msra.mxu0 0.0
      %3987 = vmatprep.subr.mxu0 0.0
      %3988 = vmatpush1.msra.mxu0 0.0
      %3989 = vmatprep.subr.mxu0 0.0
      %3990 = vmatpush1.msra.mxu0 0.0
      %3991 = vmatprep.subr.mxu0 0.0
      %3992 = vmatpush1.msra.mxu0 0.0
      %3993 = vmatprep.subr.mxu0 0.0
      %3994 = vmatpush1.msra.mxu0 0.0
      %3995 = vmatprep.subr.mxu0 0.0
      %3996 = vmatpush1.msra.mxu0 0.0
      %3997 = vmatprep.subr.mxu0 0.0
      %3998 = vmatpush1.msra.mxu0 0.0
      %3999 = vmatprep.subr.mxu0 0.0
      %4000 = vmatpush1.msra.mxu0 0.0
      %4001 = vmatprep.subr.mxu0 0.0
      %4002 = vmatpush1.msra.mxu0 0.0
      %4003 = vmatprep.subr.mxu0 0.0
      %4004 = vmatpush1.msra.mxu0 0.0
      %4005 = vmatprep.subr.mxu0 0.0
      %4006 = vmatpush1.msra.mxu0 0.0
      %4007 = vmatprep.subr.mxu0 0.0
      %4008 = vmatpush1.msra.mxu0 0.0
      %4009 = vmatprep.subr.mxu0 0.0
      %4010 = vmatpush1.msra.mxu0 0.0
      %4011 = vmatprep.subr.mxu0 0.0
      %4012 = vmatpush1.msra.mxu0 0.0
      %4013 = vmatprep.subr.mxu0 0.0
      %4014 = vmatpush1.msra.mxu0 0.0
      %4015 = vmatprep.subr.mxu0 0.0
      %4016 = vmatpush1.msra.mxu0 0.0
      %4017 = vmatprep.subr.mxu0 0.0
      %4018 = vmatpush1.msra.mxu0 0.0
      %4019 = vmatprep.subr.mxu0 0.0
      %4020 = vmatpush1.msra.mxu0 0.0
      %4021 = vmatprep.subr.mxu0 0.0
      %4022 = vmatpush1.msra.mxu0 0.0
      %4023 = vmatprep.subr.mxu0 0.0
      %4024 = vmatpush1.msra.mxu0 0.0
      %4025 = vmatprep.subr.mxu0 0.0
      %4026 = vmatpush1.msra.mxu0 0.0
      %4027 = vmatprep.subr.mxu0 0.0
      %4028 = vmatpush1.msra.mxu0 0.0
      %4029 = vmatprep.subr.mxu0 0.0
      %4030 = vmatpush1.msra.mxu0 0.0
      %4031 = vmatprep.subr.mxu0 0.0
      %4032 = vmatpush1.msra.mxu0 0.0
      %4033 = vmatprep.subr.mxu0 0.0
      %4034 = vmatpush1.msra.mxu0 0.0
      %4035 = vmatprep.subr.mxu0 0.0
      %4036 = vmatpush1.msra.mxu0 0.0
      %4037 = vmatprep.subr.mxu0 0.0
      %4038 = vmatpush1.msra.mxu0 0.0
      %4039 = vmatprep.subr.mxu0 0.0
      %4040 = vmatpush1.msra.mxu0 0.0
      %4041 = vmatprep.mubr.f32.mxu0 0.0
      %4042 = vmatmul.mubr.f32.gmra.mrb[0].mxu0 %v3894
      %v4043 = vpop.f32.mrb[0].mxu0
      %v4044 = vadd.f32 0.0, %v4043
      %v4045 = vpop.f32.mrb[0].mxu0
      %v4046 = vadd.f32 0.0, %v4045
      %4047 = vdwg.mxu0
      %4048 = vmatprep.subr.mxu0 0.0
      %4049 = vmatpush1.msra.mxu0 %v3904
      %4050 = vmatprep.subr.mxu0 0.0
      %4051 = vmatpush1.msra.mxu0 0.0
      %4052 = vmatprep.subr.mxu0 0.0
      %4053 = vmatpush1.msra.mxu0 0.0
      %4054 = vmatprep.subr.mxu0 0.0
      %4055 = vmatpush1.msra.mxu0 0.0
      %4056 = vmatprep.subr.mxu0 0.0
      %4057 = vmatpush1.msra.mxu0 0.0
      %4058 = vmatprep.subr.mxu0 0.0
      %4059 = vmatpush1.msra.mxu0 0.0
      %4060 = vmatprep.subr.mxu0 0.0
      %4061 = vmatpush1.msra.mxu0 0.0
      %4062 = vmatprep.subr.mxu0 0.0
      %4063 = vmatpush1.msra.mxu0 0.0
      %4064 = vmatprep.subr.mxu0 0.0
      %4065 = vmatpush1.msra.mxu0 0.0
      %4066 = vmatprep.subr.mxu0 0.0
      %4067 = vmatpush1.msra.mxu0 0.0
      %4068 = vmatprep.subr.mxu0 0.0
      %4069 = vmatpush1.msra.mxu0 0.0
      %4070 = vmatprep.subr.mxu0 0.0
      %4071 = vmatpush1.msra.mxu0 0.0
      %4072 = vmatprep.subr.mxu0 0.0
      %4073 = vmatpush1.msra.mxu0 0.0
      %4074 = vmatprep.subr.mxu0 0.0
      %4075 = vmatpush1.msra.mxu0 0.0
      %4076 = vmatprep.subr.mxu0 0.0
      %4077 = vmatpush1.msra.mxu0 0.0
      %4078 = vmatprep.subr.mxu0 0.0
      %4079 = vmatpush1.msra.mxu0 0.0
      %4080 = vmatprep.subr.mxu0 0.0
      %4081 = vmatpush1.msra.mxu0 0.0
      %4082 = vmatprep.subr.mxu0 0.0
      %4083 = vmatpush1.msra.mxu0 0.0
      %4084 = vmatprep.subr.mxu0 0.0
      %4085 = vmatpush1.msra.mxu0 0.0
      %4086 = vmatprep.subr.mxu0 0.0
      %4087 = vmatpush1.msra.mxu0 0.0
      %4088 = vmatprep.subr.mxu0 0.0
      %4089 = vmatpush1.msra.mxu0 0.0
      %4090 = vmatprep.subr.mxu0 0.0
      %4091 = vmatpush1.msra.mxu0 0.0
      %4092 = vmatprep.subr.mxu0 0.0
      %4093 = vmatpush1.msra.mxu0 0.0
      %4094 = vmatprep.subr.mxu0 0.0
      %4095 = vmatpush1.msra.mxu0 0.0
      %4096 = vmatprep.subr.mxu0 0.0
      %4097 = vmatpush1.msra.mxu0 0.0
      %4098 = vmatprep.subr.mxu0 0.0
      %4099 = vmatpush1.msra.mxu0 0.0
      %4100 = vmatprep.subr.mxu0 0.0
      %4101 = vmatpush1.msra.mxu0 0.0
      %4102 = vmatprep.subr.mxu0 0.0
      %4103 = vmatpush1.msra.mxu0 0.0
      %4104 = vmatprep.subr.mxu0 0.0
      %4105 = vmatpush1.msra.mxu0 0.0
      %4106 = vmatprep.subr.mxu0 0.0
      %4107 = vmatpush1.msra.mxu0 0.0
      %4108 = vmatprep.subr.mxu0 0.0
      %4109 = vmatpush1.msra.mxu0 0.0
      %4110 = vmatprep.subr.mxu0 0.0
      %4111 = vmatpush1.msra.mxu0 0.0
      %4112 = vmatprep.mubr.f32.mxu0 0.0
      %4113 = vmatmul.mubr.f32.gmra.mrb[0].mxu0 %v3894
      %v4114 = vpop.f32.mrb[0].mxu0
      %v4115 = vadd.f32 0.0, %v4114
      %v4116 = vpop.f32.mrb[0].mxu0
      %4117 = vdwg.mxu0
      %v4118 = vadd.f32 %v3872, %v3973
      %v4119 = vadd.f32 %v3873, %v3975
      %v4120 = vadd.f32 %v3874, %v4044
      %v4121 = vadd.f32 %v3875, %v4046
      %v4122 = vadd.f32 %v3876, %v4115
      %s4123 = scalar_lea.vmem %s3, 28
      %v4124 = vld [vmem:[%s4123] sm:$0xf]
      %4125 = vrot.lane.b32.xlu0 %v2414, 79
      %v4126 = vpop.permute.xlu0 %4125
      %4127 = vrot.lane.b32.xlu0 %v2415, 79
      %v4128 = vpop.permute.xlu0 %4127
      %4129 = vrot.lane.b32.xlu0 %v2416, 79
      %v4130 = vpop.permute.xlu0 %4129
      %4131 = vrot.lane.b32.xlu0 %v2417, 79
      %v4132 = vpop.permute.xlu0 %4131
      %4133 = vrot.lane.b32.xlu0 %v2418, 79
      %v4134 = vpop.permute.xlu0 %4133
      %v4135 = vsel %vm1927, %v4126, %v4128
      %v4136 = vsel %vm1927, %v4128, %v4130
      %v4137 = vsel %vm1927, %v4130, %v4132
      %v4138 = vsel %vm1927, %v4132, %v4134
      %v4140 = vsel %vm2441, %v4124, 0
      %v4142 = vsel %vm2445, %v4135, 0
      %v4144 = vsel %vm2445, %v4136, 0
      %v4146 = vsel %vm2445, %v4137, 0
      %v4148 = vsel %vm2445, %v4138, 0
      %v4150 = vsel %vm2445, %v4134, 0
      %4152 = vmatprep.subr.mxu0 %v4144
      %4153 = vmatpush1.msra.mxu0 %v4142
      %4154 = vmatprep.subr.mxu0 0.0
      %4155 = vmatpush1.msra.mxu0 0.0
      %4156 = vmatprep.subr.mxu0 0.0
      %4157 = vmatpush1.msra.mxu0 0.0
      %4158 = vmatprep.subr.mxu0 0.0
      %4159 = vmatpush1.msra.mxu0 0.0
      %4160 = vmatprep.subr.mxu0 0.0
      %4161 = vmatpush1.msra.mxu0 0.0
      %4162 = vmatprep.subr.mxu0 0.0
      %4163 = vmatpush1.msra.mxu0 0.0
      %4164 = vmatprep.subr.mxu0 0.0
      %4165 = vmatpush1.msra.mxu0 0.0
      %4166 = vmatprep.subr.mxu0 0.0
      %4167 = vmatpush1.msra.mxu0 0.0
      %4168 = vmatprep.subr.mxu0 0.0
      %4169 = vmatpush1.msra.mxu0 0.0
      %4170 = vmatprep.subr.mxu0 0.0
      %4171 = vmatpush1.msra.mxu0 0.0
      %4172 = vmatprep.subr.mxu0 0.0
      %4173 = vmatpush1.msra.mxu0 0.0
      %4174 = vmatprep.subr.mxu0 0.0
      %4175 = vmatpush1.msra.mxu0 0.0
      %4176 = vmatprep.subr.mxu0 0.0
      %4177 = vmatpush1.msra.mxu0 0.0
      %4178 = vmatprep.subr.mxu0 0.0
      %4179 = vmatpush1.msra.mxu0 0.0
      %4180 = vmatprep.subr.mxu0 0.0
      %4181 = vmatpush1.msra.mxu0 0.0
      %4182 = vmatprep.subr.mxu0 0.0
      %4183 = vmatpush1.msra.mxu0 0.0
      %4184 = vmatprep.subr.mxu0 0.0
      %4185 = vmatpush1.msra.mxu0 0.0
      %4186 = vmatprep.subr.mxu0 0.0
      %4187 = vmatpush1.msra.mxu0 0.0
      %4188 = vmatprep.subr.mxu0 0.0
      %4189 = vmatpush1.msra.mxu0 0.0
      %4190 = vmatprep.subr.mxu0 0.0
      %4191 = vmatpush1.msra.mxu0 0.0
      %4192 = vmatprep.subr.mxu0 0.0
      %4193 = vmatpush1.msra.mxu0 0.0
      %4194 = vmatprep.subr.mxu0 0.0
      %4195 = vmatpush1.msra.mxu0 0.0
      %4196 = vmatprep.subr.mxu0 0.0
      %4197 = vmatpush1.msra.mxu0 0.0
      %4198 = vmatprep.subr.mxu0 0.0
      %4199 = vmatpush1.msra.mxu0 0.0
      %4200 = vmatprep.subr.mxu0 0.0
      %4201 = vmatpush1.msra.mxu0 0.0
      %4202 = vmatprep.subr.mxu0 0.0
      %4203 = vmatpush1.msra.mxu0 0.0
      %4204 = vmatprep.subr.mxu0 0.0
      %4205 = vmatpush1.msra.mxu0 0.0
      %4206 = vmatprep.subr.mxu0 0.0
      %4207 = vmatpush1.msra.mxu0 0.0
      %4208 = vmatprep.subr.mxu0 0.0
      %4209 = vmatpush1.msra.mxu0 0.0
      %4210 = vmatprep.subr.mxu0 0.0
      %4211 = vmatpush1.msra.mxu0 0.0
      %4212 = vmatprep.subr.mxu0 0.0
      %4213 = vmatpush1.msra.mxu0 0.0
      %4214 = vmatprep.subr.mxu0 0.0
      %4215 = vmatpush1.msra.mxu0 0.0
      %4216 = vmatprep.mubr.f32.mxu0 0.0
      %4217 = vmatmul.mubr.f32.gmra.mrb[0].mxu0 %v4140
      %v4218 = vpop.f32.mrb[0].mxu0
      %v4219 = vadd.f32 0.0, %v4218
      %v4220 = vpop.f32.mrb[0].mxu0
      %v4221 = vadd.f32 0.0, %v4220
      %4222 = vdwg.mxu0
      %4223 = vmatprep.subr.mxu0 %v4148
      %4224 = vmatpush1.msra.mxu0 %v4146
      %4225 = vmatprep.subr.mxu0 0.0
      %4226 = vmatpush1.msra.mxu0 0.0
      %4227 = vmatprep.subr.mxu0 0.0
      %4228 = vmatpush1.msra.mxu0 0.0
      %4229 = vmatprep.subr.mxu0 0.0
      %4230 = vmatpush1.msra.mxu0 0.0
      %4231 = vmatprep.subr.mxu0 0.0
      %4232 = vmatpush1.msra.mxu0 0.0
      %4233 = vmatprep.subr.mxu0 0.0
      %4234 = vmatpush1.msra.mxu0 0.0
      %4235 = vmatprep.subr.mxu0 0.0
      %4236 = vmatpush1.msra.mxu0 0.0
      %4237 = vmatprep.subr.mxu0 0.0
      %4238 = vmatpush1.msra.mxu0 0.0
      %4239 = vmatprep.subr.mxu0 0.0
      %4240 = vmatpush1.msra.mxu0 0.0
      %4241 = vmatprep.subr.mxu0 0.0
      %4242 = vmatpush1.msra.mxu0 0.0
      %4243 = vmatprep.subr.mxu0 0.0
      %4244 = vmatpush1.msra.mxu0 0.0
      %4245 = vmatprep.subr.mxu0 0.0
      %4246 = vmatpush1.msra.mxu0 0.0
      %4247 = vmatprep.subr.mxu0 0.0
      %4248 = vmatpush1.msra.mxu0 0.0
      %4249 = vmatprep.subr.mxu0 0.0
      %4250 = vmatpush1.msra.mxu0 0.0
      %4251 = vmatprep.subr.mxu0 0.0
      %4252 = vmatpush1.msra.mxu0 0.0
      %4253 = vmatprep.subr.mxu0 0.0
      %4254 = vmatpush1.msra.mxu0 0.0
      %4255 = vmatprep.subr.mxu0 0.0
      %4256 = vmatpush1.msra.mxu0 0.0
      %4257 = vmatprep.subr.mxu0 0.0
      %4258 = vmatpush1.msra.mxu0 0.0
      %4259 = vmatprep.subr.mxu0 0.0
      %4260 = vmatpush1.msra.mxu0 0.0
      %4261 = vmatprep.subr.mxu0 0.0
      %4262 = vmatpush1.msra.mxu0 0.0
      %4263 = vmatprep.subr.mxu0 0.0
      %4264 = vmatpush1.msra.mxu0 0.0
      %4265 = vmatprep.subr.mxu0 0.0
      %4266 = vmatpush1.msra.mxu0 0.0
      %4267 = vmatprep.subr.mxu0 0.0
      %4268 = vmatpush1.msra.mxu0 0.0
      %4269 = vmatprep.subr.mxu0 0.0
      %4270 = vmatpush1.msra.mxu0 0.0
      %4271 = vmatprep.subr.mxu0 0.0
      %4272 = vmatpush1.msra.mxu0 0.0
      %4273 = vmatprep.subr.mxu0 0.0
      %4274 = vmatpush1.msra.mxu0 0.0
      %4275 = vmatprep.subr.mxu0 0.0
      %4276 = vmatpush1.msra.mxu0 0.0
      %4277 = vmatprep.subr.mxu0 0.0
      %4278 = vmatpush1.msra.mxu0 0.0
      %4279 = vmatprep.subr.mxu0 0.0
      %4280 = vmatpush1.msra.mxu0 0.0
      %4281 = vmatprep.subr.mxu0 0.0
      %4282 = vmatpush1.msra.mxu0 0.0
      %4283 = vmatprep.subr.mxu0 0.0
      %4284 = vmatpush1.msra.mxu0 0.0
      %4285 = vmatprep.subr.mxu0 0.0
      %4286 = vmatpush1.msra.mxu0 0.0
      %4287 = vmatprep.mubr.f32.mxu0 0.0
      %4288 = vmatmul.mubr.f32.gmra.mrb[0].mxu0 %v4140
      %v4289 = vpop.f32.mrb[0].mxu0
      %v4290 = vadd.f32 0.0, %v4289
      %v4291 = vpop.f32.mrb[0].mxu0
      %v4292 = vadd.f32 0.0, %v4291
      %4293 = vdwg.mxu0
      %4294 = vmatprep.subr.mxu0 0.0
      %4295 = vmatpush1.msra.mxu0 %v4150
      %4296 = vmatprep.subr.mxu0 0.0
      %4297 = vmatpush1.msra.mxu0 0.0
      %4298 = vmatprep.subr.mxu0 0.0
      %4299 = vmatpush1.msra.mxu0 0.0
      %4300 = vmatprep.subr.mxu0 0.0
      %4301 = vmatpush1.msra.mxu0 0.0
      %4302 = vmatprep.subr.mxu0 0.0
      %4303 = vmatpush1.msra.mxu0 0.0
      %4304 = vmatprep.subr.mxu0 0.0
      %4305 = vmatpush1.msra.mxu0 0.0
      %4306 = vmatprep.subr.mxu0 0.0
      %4307 = vmatpush1.msra.mxu0 0.0
      %4308 = vmatprep.subr.mxu0 0.0
      %4309 = vmatpush1.msra.mxu0 0.0
      %4310 = vmatprep.subr.mxu0 0.0
      %4311 = vmatpush1.msra.mxu0 0.0
      %4312 = vmatprep.subr.mxu0 0.0
      %4313 = vmatpush1.msra.mxu0 0.0
      %4314 = vmatprep.subr.mxu0 0.0
      %4315 = vmatpush1.msra.mxu0 0.0
      %4316 = vmatprep.subr.mxu0 0.0
      %4317 = vmatpush1.msra.mxu0 0.0
      %4318 = vmatprep.subr.mxu0 0.0
      %4319 = vmatpush1.msra.mxu0 0.0
      %4320 = vmatprep.subr.mxu0 0.0
      %4321 = vmatpush1.msra.mxu0 0.0
      %4322 = vmatprep.subr.mxu0 0.0
      %4323 = vmatpush1.msra.mxu0 0.0
      %4324 = vmatprep.subr.mxu0 0.0
      %4325 = vmatpush1.msra.mxu0 0.0
      %4326 = vmatprep.subr.mxu0 0.0
      %4327 = vmatpush1.msra.mxu0 0.0
      %4328 = vmatprep.subr.mxu0 0.0
      %4329 = vmatpush1.msra.mxu0 0.0
      %4330 = vmatprep.subr.mxu0 0.0
      %4331 = vmatpush1.msra.mxu0 0.0
      %4332 = vmatprep.subr.mxu0 0.0
      %4333 = vmatpush1.msra.mxu0 0.0
      %4334 = vmatprep.subr.mxu0 0.0
      %4335 = vmatpush1.msra.mxu0 0.0
      %4336 = vmatprep.subr.mxu0 0.0
      %4337 = vmatpush1.msra.mxu0 0.0
      %4338 = vmatprep.subr.mxu0 0.0
      %4339 = vmatpush1.msra.mxu0 0.0
      %4340 = vmatprep.subr.mxu0 0.0
      %4341 = vmatpush1.msra.mxu0 0.0
      %4342 = vmatprep.subr.mxu0 0.0
      %4343 = vmatpush1.msra.mxu0 0.0
      %4344 = vmatprep.subr.mxu0 0.0
      %4345 = vmatpush1.msra.mxu0 0.0
      %4346 = vmatprep.subr.mxu0 0.0
      %4347 = vmatpush1.msra.mxu0 0.0
      %4348 = vmatprep.subr.mxu0 0.0
      %4349 = vmatpush1.msra.mxu0 0.0
      %4350 = vmatprep.subr.mxu0 0.0
      %4351 = vmatpush1.msra.mxu0 0.0
      %4352 = vmatprep.subr.mxu0 0.0
      %4353 = vmatpush1.msra.mxu0 0.0
      %4354 = vmatprep.subr.mxu0 0.0
      %4355 = vmatpush1.msra.mxu0 0.0
      %4356 = vmatprep.subr.mxu0 0.0
      %4357 = vmatpush1.msra.mxu0 0.0
      %4358 = vmatprep.mubr.f32.mxu0 0.0
      %4359 = vmatmul.mubr.f32.gmra.mrb[0].mxu0 %v4140
      %v4360 = vpop.f32.mrb[0].mxu0
      %v4361 = vadd.f32 0.0, %v4360
      %v4362 = vpop.f32.mrb[0].mxu0
      %4363 = vdwg.mxu0
      %v4364 = vadd.f32 %v4118, %v4219
      %v4365 = vadd.f32 %v4119, %v4221
      %v4366 = vadd.f32 %v4120, %v4290
      %v4367 = vadd.f32 %v4121, %v4292
      %v4368 = vadd.f32 %v4122, %v4361
      %s4369 = scalar_lea.vmem %s3, 32
      %v4370 = vld [vmem:[%s4369] sm:$0xf]
      %4371 = vrot.lane.b32.xlu0 %v2414, 78
      %v4372 = vpop.permute.xlu0 %4371
      %4373 = vrot.lane.b32.xlu0 %v2415, 78
      %v4374 = vpop.permute.xlu0 %4373
      %4375 = vrot.lane.b32.xlu0 %v2416, 78
      %v4376 = vpop.permute.xlu0 %4375
      %4377 = vrot.lane.b32.xlu0 %v2417, 78
      %v4378 = vpop.permute.xlu0 %4377
      %4379 = vrot.lane.b32.xlu0 %v2418, 78
      %v4380 = vpop.permute.xlu0 %4379
      %v4381 = vsel %vm2172, %v4372, %v4374
      %v4382 = vsel %vm2172, %v4374, %v4376
      %v4383 = vsel %vm2172, %v4376, %v4378
      %v4384 = vsel %vm2172, %v4378, %v4380
      %v4386 = vsel %vm2441, %v4370, 0
      %v4388 = vsel %vm2445, %v4381, 0
      %v4390 = vsel %vm2445, %v4382, 0
      %v4392 = vsel %vm2445, %v4383, 0
      %v4394 = vsel %vm2445, %v4384, 0
      %v4396 = vsel %vm2445, %v4380, 0
      %4398 = vmatprep.subr.mxu0 %v4390
      %4399 = vmatpush1.msra.mxu0 %v4388
      %4400 = vmatprep.subr.mxu0 0.0
      %4401 = vmatpush1.msra.mxu0 0.0
      %4402 = vmatprep.subr.mxu0 0.0
      %4403 = vmatpush1.msra.mxu0 0.0
      %4404 = vmatprep.subr.mxu0 0.0
      %4405 = vmatpush1.msra.mxu0 0.0
      %4406 = vmatprep.subr.mxu0 0.0
      %4407 = vmatpush1.msra.mxu0 0.0
      %4408 = vmatprep.subr.mxu0 0.0
      %4409 = vmatpush1.msra.mxu0 0.0
      %4410 = vmatprep.subr.mxu0 0.0
      %4411 = vmatpush1.msra.mxu0 0.0
      %4412 = vmatprep.subr.mxu0 0.0
      %4413 = vmatpush1.msra.mxu0 0.0
      %4414 = vmatprep.subr.mxu0 0.0
      %4415 = vmatpush1.msra.mxu0 0.0
      %4416 = vmatprep.subr.mxu0 0.0
      %4417 = vmatpush1.msra.mxu0 0.0
      %4418 = vmatprep.subr.mxu0 0.0
      %4419 = vmatpush1.msra.mxu0 0.0
      %4420 = vmatprep.subr.mxu0 0.0
      %4421 = vmatpush1.msra.mxu0 0.0
      %4422 = vmatprep.subr.mxu0 0.0
      %4423 = vmatpush1.msra.mxu0 0.0
      %4424 = vmatprep.subr.mxu0 0.0
      %4425 = vmatpush1.msra.mxu0 0.0
      %4426 = vmatprep.subr.mxu0 0.0
      %4427 = vmatpush1.msra.mxu0 0.0
      %4428 = vmatprep.subr.mxu0 0.0
      %4429 = vmatpush1.msra.mxu0 0.0
      %4430 = vmatprep.subr.mxu0 0.0
      %4431 = vmatpush1.msra.mxu0 0.0
      %4432 = vmatprep.subr.mxu0 0.0
      %4433 = vmatpush1.msra.mxu0 0.0
      %4434 = vmatprep.subr.mxu0 0.0
      %4435 = vmatpush1.msra.mxu0 0.0
      %4436 = vmatprep.subr.mxu0 0.0
      %4437 = vmatpush1.msra.mxu0 0.0
      %4438 = vmatprep.subr.mxu0 0.0
      %4439 = vmatpush1.msra.mxu0 0.0
      %4440 = vmatprep.subr.mxu0 0.0
      %4441 = vmatpush1.msra.mxu0 0.0
      %4442 = vmatprep.subr.mxu0 0.0
      %4443 = vmatpush1.msra.mxu0 0.0
      %4444 = vmatprep.subr.mxu0 0.0
      %4445 = vmatpush1.msra.mxu0 0.0
      %4446 = vmatprep.subr.mxu0 0.0
      %4447 = vmatpush1.msra.mxu0 0.0
      %4448 = vmatprep.subr.mxu0 0.0
      %4449 = vmatpush1.msra.mxu0 0.0
      %4450 = vmatprep.subr.mxu0 0.0
      %4451 = vmatpush1.msra.mxu0 0.0
      %4452 = vmatprep.subr.mxu0 0.0
      %4453 = vmatpush1.msra.mxu0 0.0
      %4454 = vmatprep.subr.mxu0 0.0
      %4455 = vmatpush1.msra.mxu0 0.0
      %4456 = vmatprep.subr.mxu0 0.0
      %4457 = vmatpush1.msra.mxu0 0.0
      %4458 = vmatprep.subr.mxu0 0.0
      %4459 = vmatpush1.msra.mxu0 0.0
      %4460 = vmatprep.subr.mxu0 0.0
      %4461 = vmatpush1.msra.mxu0 0.0
      %4462 = vmatprep.mubr.f32.mxu0 0.0
      %4463 = vmatmul.mubr.f32.gmra.mrb[0].mxu0 %v4386
      %v4464 = vpop.f32.mrb[0].mxu0
      %v4465 = vadd.f32 0.0, %v4464
      %v4466 = vpop.f32.mrb[0].mxu0
      %v4467 = vadd.f32 0.0, %v4466
      %4468 = vdwg.mxu0
      %4469 = vmatprep.subr.mxu0 %v4394
      %4470 = vmatpush1.msra.mxu0 %v4392
      %4471 = vmatprep.subr.mxu0 0.0
      %4472 = vmatpush1.msra.mxu0 0.0
      %4473 = vmatprep.subr.mxu0 0.0
      %4474 = vmatpush1.msra.mxu0 0.0
      %4475 = vmatprep.subr.mxu0 0.0
      %4476 = vmatpush1.msra.mxu0 0.0
      %4477 = vmatprep.subr.mxu0 0.0
      %4478 = vmatpush1.msra.mxu0 0.0
      %4479 = vmatprep.subr.mxu0 0.0
      %4480 = vmatpush1.msra.mxu0 0.0
      %4481 = vmatprep.subr.mxu0 0.0
      %4482 = vmatpush1.msra.mxu0 0.0
      %4483 = vmatprep.subr.mxu0 0.0
      %4484 = vmatpush1.msra.mxu0 0.0
      %4485 = vmatprep.subr.mxu0 0.0
      %4486 = vmatpush1.msra.mxu0 0.0
      %4487 = vmatprep.subr.mxu0 0.0
      %4488 = vmatpush1.msra.mxu0 0.0
      %4489 = vmatprep.subr.mxu0 0.0
      %4490 = vmatpush1.msra.mxu0 0.0
      %4491 = vmatprep.subr.mxu0 0.0
      %4492 = vmatpush1.msra.mxu0 0.0
      %4493 = vmatprep.subr.mxu0 0.0
      %4494 = vmatpush1.msra.mxu0 0.0
      %4495 = vmatprep.subr.mxu0 0.0
      %4496 = vmatpush1.msra.mxu0 0.0
      %4497 = vmatprep.subr.mxu0 0.0
      %4498 = vmatpush1.msra.mxu0 0.0
      %4499 = vmatprep.subr.mxu0 0.0
      %4500 = vmatpush1.msra.mxu0 0.0
      %4501 = vmatprep.subr.mxu0 0.0
      %4502 = vmatpush1.msra.mxu0 0.0
      %4503 = vmatprep.subr.mxu0 0.0
      %4504 = vmatpush1.msra.mxu0 0.0
      %4505 = vmatprep.subr.mxu0 0.0
      %4506 = vmatpush1.msra.mxu0 0.0
      %4507 = vmatprep.subr.mxu0 0.0
      %4508 = vmatpush1.msra.mxu0 0.0
      %4509 = vmatprep.subr.mxu0 0.0
      %4510 = vmatpush1.msra.mxu0 0.0
      %4511 = vmatprep.subr.mxu0 0.0
      %4512 = vmatpush1.msra.mxu0 0.0
      %4513 = vmatprep.subr.mxu0 0.0
      %4514 = vmatpush1.msra.mxu0 0.0
      %4515 = vmatprep.subr.mxu0 0.0
      %4516 = vmatpush1.msra.mxu0 0.0
      %4517 = vmatprep.subr.mxu0 0.0
      %4518 = vmatpush1.msra.mxu0 0.0
      %4519 = vmatprep.subr.mxu0 0.0
      %4520 = vmatpush1.msra.mxu0 0.0
      %4521 = vmatprep.subr.mxu0 0.0
      %4522 = vmatpush1.msra.mxu0 0.0
      %4523 = vmatprep.subr.mxu0 0.0
      %4524 = vmatpush1.msra.mxu0 0.0
      %4525 = vmatprep.subr.mxu0 0.0
      %4526 = vmatpush1.msra.mxu0 0.0
      %4527 = vmatprep.subr.mxu0 0.0
      %4528 = vmatpush1.msra.mxu0 0.0
      %4529 = vmatprep.subr.mxu0 0.0
      %4530 = vmatpush1.msra.mxu0 0.0
      %4531 = vmatprep.subr.mxu0 0.0
      %4532 = vmatpush1.msra.mxu0 0.0
      %4533 = vmatprep.mubr.f32.mxu0 0.0
      %4534 = vmatmul.mubr.f32.gmra.mrb[0].mxu0 %v4386
      %v4535 = vpop.f32.mrb[0].mxu0
      %v4536 = vadd.f32 0.0, %v4535
      %v4537 = vpop.f32.mrb[0].mxu0
      %v4538 = vadd.f32 0.0, %v4537
      %4539 = vdwg.mxu0
      %4540 = vmatprep.subr.mxu0 0.0
      %4541 = vmatpush1.msra.mxu0 %v4396
      %4542 = vmatprep.subr.mxu0 0.0
      %4543 = vmatpush1.msra.mxu0 0.0
      %4544 = vmatprep.subr.mxu0 0.0
      %4545 = vmatpush1.msra.mxu0 0.0
      %4546 = vmatprep.subr.mxu0 0.0
      %4547 = vmatpush1.msra.mxu0 0.0
      %4548 = vmatprep.subr.mxu0 0.0
      %4549 = vmatpush1.msra.mxu0 0.0
      %4550 = vmatprep.subr.mxu0 0.0
      %4551 = vmatpush1.msra.mxu0 0.0
      %4552 = vmatprep.subr.mxu0 0.0
      %4553 = vmatpush1.msra.mxu0 0.0
      %4554 = vmatprep.subr.mxu0 0.0
      %4555 = vmatpush1.msra.mxu0 0.0
      %4556 = vmatprep.subr.mxu0 0.0
      %4557 = vmatpush1.msra.mxu0 0.0
      %4558 = vmatprep.subr.mxu0 0.0
      %4559 = vmatpush1.msra.mxu0 0.0
      %4560 = vmatprep.subr.mxu0 0.0
      %4561 = vmatpush1.msra.mxu0 0.0
      %4562 = vmatprep.subr.mxu0 0.0
      %4563 = vmatpush1.msra.mxu0 0.0
      %4564 = vmatprep.subr.mxu0 0.0
      %4565 = vmatpush1.msra.mxu0 0.0
      %4566 = vmatprep.subr.mxu0 0.0
      %4567 = vmatpush1.msra.mxu0 0.0
      %4568 = vmatprep.subr.mxu0 0.0
      %4569 = vmatpush1.msra.mxu0 0.0
      %4570 = vmatprep.subr.mxu0 0.0
      %4571 = vmatpush1.msra.mxu0 0.0
      %4572 = vmatprep.subr.mxu0 0.0
      %4573 = vmatpush1.msra.mxu0 0.0
      %4574 = vmatprep.subr.mxu0 0.0
      %4575 = vmatpush1.msra.mxu0 0.0
      %4576 = vmatprep.subr.mxu0 0.0
      %4577 = vmatpush1.msra.mxu0 0.0
      %4578 = vmatprep.subr.mxu0 0.0
      %4579 = vmatpush1.msra.mxu0 0.0
      %4580 = vmatprep.subr.mxu0 0.0
      %4581 = vmatpush1.msra.mxu0 0.0
      %4582 = vmatprep.subr.mxu0 0.0
      %4583 = vmatpush1.msra.mxu0 0.0
      %4584 = vmatprep.subr.mxu0 0.0
      %4585 = vmatpush1.msra.mxu0 0.0
      %4586 = vmatprep.subr.mxu0 0.0
      %4587 = vmatpush1.msra.mxu0 0.0
      %4588 = vmatprep.subr.mxu0 0.0
      %4589 = vmatpush1.msra.mxu0 0.0
      %4590 = vmatprep.subr.mxu0 0.0
      %4591 = vmatpush1.msra.mxu0 0.0
      %4592 = vmatprep.subr.mxu0 0.0
      %4593 = vmatpush1.msra.mxu0 0.0
      %4594 = vmatprep.subr.mxu0 0.0
      %4595 = vmatpush1.msra.mxu0 0.0
      %4596 = vmatprep.subr.mxu0 0.0
      %4597 = vmatpush1.msra.mxu0 0.0
      %4598 = vmatprep.subr.mxu0 0.0
      %4599 = vmatpush1.msra.mxu0 0.0
      %4600 = vmatprep.subr.mxu0 0.0
      %4601 = vmatpush1.msra.mxu0 0.0
      %4602 = vmatprep.subr.mxu0 0.0
      %4603 = vmatpush1.msra.mxu0 0.0
      %4604 = vmatprep.mubr.f32.mxu0 0.0
      %4605 = vmatmul.mubr.f32.gmra.mrb[0].mxu0 %v4386
      %v4606 = vpop.f32.mrb[0].mxu0
      %v4607 = vadd.f32 0.0, %v4606
      %v4608 = vpop.f32.mrb[0].mxu0
      %4609 = vdwg.mxu0
      %v4610 = vadd.f32 %v4364, %v4465
      %v4611 = vadd.f32 %v4365, %v4467
      %v4612 = vadd.f32 %v4366, %v4536
      %v4613 = vadd.f32 %v4367, %v4538
      %v4614 = vadd.f32 %v4368, %v4607
      %v4615 = vld [vmem:[%s4] sm:$0xf]
      %4617 = vset.pattern.permute.xlu0 0
      %4618 = vperm.xlu0 %4617, %v4615
      %v4619 = vpop.permute.xlu0 %4618
      %v4621 = vadd.f32 %v4610, %v4619
      %v4622 = vadd.f32 %v4611, %v4619
      %v4623 = vadd.f32 %v4612, %v4619
      %v4624 = vadd.f32 %v4613, %v4619
      %v4625 = vadd.f32 %v4614, %v4619
      %v4630 = vcombine.low %v4621, %v4622
      %v4631 = vcombine.low %v4623, %v4624
      %4634 = vst [vmem:[%s224] sm:$0xff] %v4630
      %4635 = vst [vmem:[%s224 + $0x8] sm:$0xff] %v4631
      %vm4636 = vcmask 519168
      %4637 = vst.msk [vmem:[%s224 + $0x10] sm:$0xf] %vm4636, %v4625
      %p4638 = scmp.lt.s32.totalorder %s16, 1
      %s4639 = scalar_select %p4638, %s16, 1
      %s4640 = smul.addr %s4639, 5
      %s4641 = smul.addr %s4640, 4
      %s4642 = scalar_lea.vmem %s5, %s4641
      // Predicated region
      $region41: #{unet_decoder_forward.5} parent=39 // pred_check
        %p4643 = pneg %p144
      $region42: #{unet_decoder_forward.5} parent=39 // pred_check_branch
        %4645 = sbr.rel (%p4643) target = $region44
      $region43: #{unet_decoder_forward.5} parent=39 // pred_region
        _
      $region44: #{unet_decoder_forward.5} parent=39 // pred_fallthru
        _
    $region40: #{unet_decoder_forward.5} parent=5 // pred_fallthru
      _
    %p4646 = scmp.le.s32.totalorder 2, %s11
    // Predicated region
    $region45: #{unet_decoder_forward.5} parent=5 // pred_check
      %p4647 = pneg %p4646
    $region46: #{unet_decoder_forward.5} parent=5 // pred_check_branch
      %4649 = sbr.rel (%p4647) target = $region48
    $region47: #{unet_decoder_forward.5} parent=5 // pred_region
      %s4650 = ssub.s32 %s11, 2
      // Predicated region
      $region49: #{unet_decoder_forward.5} parent=47 // pred_check
        %p4651 = pneg %p150
      $region50: #{unet_decoder_forward.5} parent=47 // pred_check_branch
        %4653 = sbr.rel (%p4651) target = $region52
      $region51: #{unet_decoder_forward.5} parent=47 // pred_region
        %p4654 = scmp.lt.s32.totalorder %s17, 1
        %s4655 = scalar_select %p4654, %s17, 1
        %s4656 = smul.addr %s4655, 5
        %s4657 = smul.addr %s4656, 4
        %s4658 = scalar_lea.vmem %s5, %s4657
      $region52: #{unet_decoder_forward.5} parent=47 // pred_fallthru
        _
    $region48: #{unet_decoder_forward.5} parent=5 // pred_fallthru
      _
  $region6: #{unet_decoder_forward.5} parent=0 // loop_footer
    %s15 = sadd.s32 1, %s11
  $region7: #{unet_decoder_forward.5} parent=0 // loop_footer_branch
    %10 = sbr.rel target = $region3
  $region8: #{unet_decoder_forward.5} parent=0 // loop_exit
    _

</llo_original>
